<compile_context>
chip_gen: v6e
topology: v6e:2x2x1
jax: 0.10.0
libtpu: 0.0.40
codegen_flags: <defaults>
</compile_context>

<pallas_src>
import functools

import jax
import jax.numpy as jnp
from jax.experimental import pallas as pl
from jax.experimental.pallas import tpu as pltpu

EPS = 1e-5
# bf16 MXU inputs for the spectral MLP (numerically safe: irfft averages rounding
# error down by ~1/(H*W)).  The conv branch stays f32 at these tiny channel counts
# for numerical headroom vs the f32 reference; flip CONV_DTYPE to jnp.bfloat16 on
# v6e/v7x at production channel counts (accumulation is f32 either way).
MLP_DTYPE = jnp.bfloat16
CONV_DTYPE = jnp.float32
VMEM_LIMIT = 32 * 1024 * 1024


def _round_up(n, m):
    return ((n + m - 1) // m) * m


# --------------------------- fused conv-branch kernel ------------------------

def _conv_branch_kernel(xp_ref, w1_ref, b2_ref, s3_ref, b3_ref, w2_ref, b4_ref,
                        o_ref, mid_ref, *, H, W, C, M):
    # xp_ref : (1, H+2, W+2, C)  BN1-applied, zero-padded NHWC image
    # w1_ref : (9, C, M)         3x3 conv1 taps, BN2 scale folded in
    # w2_ref : (9, M, C)         3x3 conv2 taps, BN4 scale folded in
    # mid_ref: (H+2, W+2, M)     VMEM scratch = zero-padded BN3 output
    acc1 = jnp.zeros((H * W, M), jnp.float32)
    for t in range(9):                      # in-kernel im2col: 9 shifted dots
        dy, dx = divmod(t, 3)
        patch = xp_ref[0, dy:dy + H, dx:dx + W, :].reshape(H * W, C)
        acc1 = acc1 + jnp.dot(patch, w1_ref[t],
                              preferred_element_type=jnp.float32)
    h = jnp.maximum(acc1 + b2_ref[...], 0.0)          # conv1 + BN2 + ReLU
    h = h * s3_ref[...] + b3_ref[...]                 # BN3 (before zero-padding)

    # stage-1 output stays resident in VMEM, zero-padded for the second conv
    mid_ref[...] = jnp.zeros(mid_ref.shape, mid_ref.dtype)
    mid_ref[1:H + 1, 1:W + 1, :] = h.reshape(H, W, M)

    acc2 = jnp.zeros((H * W, C), jnp.float32)
    for t in range(9):
        dy, dx = divmod(t, 3)
        patch = mid_ref[dy:dy + H, dx:dx + W, :].reshape(H * W, M)
        acc2 = acc2 + jnp.dot(patch, w2_ref[t],
                              preferred_element_type=jnp.float32)
    o_ref[0] = (acc2 + b4_ref[...]).astype(o_ref.dtype)   # conv2 + BN4


def conv_branch(xpad, w1f, b2, s3, b3, w2f, b4, *, H, W):
    B, Hp, Wp, C = xpad.shape
    M = w1f.shape[-1]
    kern = functools.partial(_conv_branch_kernel, H=H, W=W, C=C, M=M)
    return pl.pallas_call(
        kern,
        out_shape=jax.ShapeDtypeStruct((B, H * W, C), jnp.float32),
        grid=(B,),
        in_specs=[
            pl.BlockSpec((1, Hp, Wp, C), lambda b: (b, 0, 0, 0)),
            pl.BlockSpec((9, C, M), lambda b: (0, 0, 0)),
            pl.BlockSpec((1, M), lambda b: (0, 0)),
            pl.BlockSpec((1, M), lambda b: (0, 0)),
            pl.BlockSpec((1, M), lambda b: (0, 0)),
            pl.BlockSpec((9, M, C), lambda b: (0, 0, 0)),
            pl.BlockSpec((1, C), lambda b: (0, 0)),
        ],
        out_specs=pl.BlockSpec((1, H * W, C), lambda b: (b, 0, 0)),
        scratch_shapes=[pltpu.VMEM((Hp, Wp, M), jnp.float32)],
        compiler_params=pltpu.CompilerParams(
            dimension_semantics=("parallel",),
            vmem_limit_bytes=VMEM_LIMIT),
    )(xpad, w1f, b2, s3, b3, w2f, b4)


# ----------------------- spectral MLP kernel (fft branch) --------------------

def _mlp_kernel(f_ref, wa_ref, ba_ref, wb_ref, bb_ref, o_ref):
    # channel-major spectral MLP: (2C, Np) -> (2C, Np); all 4 BNs folded in glue.
    f = f_ref[0]                                                     # (2C, Np)
    h = jnp.dot(wa_ref[...], f, preferred_element_type=jnp.float32)  # (2M, Np)
    h = jnp.maximum(h + ba_ref[...], 0.0)
    h = h.astype(wb_ref.dtype)
    g = jnp.dot(wb_ref[...], h, preferred_element_type=jnp.float32)  # (2C, Np)
    o_ref[0] = (g + bb_ref[...]).astype(o_ref.dtype)


def mlp_apply(f2, wa, ba, wb, bb):
    B, C2, Np = f2.shape
    M2 = wa.shape[0]
    return pl.pallas_call(
        _mlp_kernel,
        out_shape=jax.ShapeDtypeStruct((B, C2, Np), jnp.float32),
        grid=(B,),
        in_specs=[
            pl.BlockSpec((1, C2, Np), lambda b: (b, 0, 0)),
            pl.BlockSpec((M2, C2), lambda b: (0, 0)),
            pl.BlockSpec((M2, 1), lambda b: (0, 0)),
            pl.BlockSpec((C2, M2), lambda b: (0, 0)),
            pl.BlockSpec((C2, 1), lambda b: (0, 0)),
        ],
        out_specs=pl.BlockSpec((1, C2, Np), lambda b: (b, 0, 0)),
        compiler_params=pltpu.CompilerParams(
            dimension_semantics=("parallel",),
            vmem_limit_bytes=VMEM_LIMIT),
    )(f2, wa, ba, wb, bb)


# ------------------------------ residual combine -----------------------------

def _combine_kernel(g_ref, x_ref, yc_ref, yf_ref, o_ref):
    # out = x + g1 * y_conv + g2 * y_fft   (lane-dense (rows, H*W) layout)
    o_ref[...] = x_ref[...] + g_ref[0] * yc_ref[...] + g_ref[1] * yf_ref[...]


def combine_apply(gamma, x2d, yc2d, yf2d, row_tile=512):
    N, K = x2d.shape
    rt = min(row_tile, _round_up(N, 8))
    Np = _round_up(N, rt)
    if Np != N:
        pad = ((0, Np - N), (0, 0))
        x2d, yc2d, yf2d = (jnp.pad(x2d, pad), jnp.pad(yc2d, pad), jnp.pad(yf2d, pad))
    out = pl.pallas_call(
        _combine_kernel,
        out_shape=jax.ShapeDtypeStruct((Np, K), x2d.dtype),
        grid=(pl.cdiv(Np, rt),),
        in_specs=[
            pl.BlockSpec(memory_space=pltpu.MemorySpace.SMEM),
            pl.BlockSpec((rt, K), lambda i: (i, 0)),
            pl.BlockSpec((rt, K), lambda i: (i, 0)),
            pl.BlockSpec((rt, K), lambda i: (i, 0)),
        ],
        out_specs=pl.BlockSpec((rt, K), lambda i: (i, 0)),
        input_output_aliases={1: 0},     # write the result in place over x
        compiler_params=pltpu.CompilerParams(dimension_semantics=("parallel",)),
    )(gamma, x2d, yc2d, yf2d)
    return out[:N] if Np != N else out


# ----------------------------------- glue ------------------------------------

def bn_fold(w, b, m, v):
    # eval-mode BatchNorm as per-channel affine: x*scale + shift
    scale = w / jnp.sqrt(v + EPS)
    return scale, b - m * scale


def block_forward(x, P):
    B, C, H, W = x.shape

    # ---- conv branch: BN1 -> 3x3 conv -> BN2 -> ReLU -> BN3 -> 3x3 conv -> BN4 ----
    s1, b1 = bn_fold(*P["cbn1"])
    s2, b2 = bn_fold(*P["cbn2"])
    s3, b3 = bn_fold(*P["cbn3"])
    s4, b4 = bn_fold(*P["cbn4"])
    M = P["cw1"].shape[0]
    # BN1 applied before the conv's zero padding (exact); BN2/BN4 scales folded
    # into the conv weights, their shifts become in-kernel biases.
    x_nhwc = jnp.transpose(x, (0, 2, 3, 1))
    xpad = jnp.pad(x_nhwc * s1 + b1, ((0, 0), (1, 1), (1, 1), (0, 0)))
    w1f = (jnp.transpose(P["cw1"], (2, 3, 1, 0)).reshape(9, C, M)
           * s2[None, None, :]).astype(CONV_DTYPE)
    w2f = (jnp.transpose(P["cw2"], (2, 3, 1, 0)).reshape(9, M, C)
           * s4[None, None, :]).astype(CONV_DTYPE)
    yc = conv_branch(xpad.astype(CONV_DTYPE), w1f,
                     b2.reshape(1, M), s3.reshape(1, M), b3.reshape(1, M),
                     w2f, b4.reshape(1, C), H=H, W=W)        # (B, H*W, C)
    yc = jnp.transpose(yc, (0, 2, 1))                        # (B, C, H*W), one transpose

    # ---- fft branch: rfft -> spectral MLP (1x1 convs, channel-major) -> irfft ----
    ms1, mb1 = bn_fold(*P["mbn1"])
    ms2, mb2 = bn_fold(*P["mbn2"])
    ms3, mb3 = bn_fold(*P["mbn3"])
    ms4, mb4 = bn_fold(*P["mbn4"])
    W1m = P["mw1"][:, :, 0, 0]                               # (2M, 2C)
    W2m = P["mw2"][:, :, 0, 0]                               # (2C, 2M)
    wa = ms2[:, None] * W1m * ms1[None, :]                   # BN1+BN2 folded (exact, 1x1)
    ba = ms2 * (W1m @ mb1) + mb2
    wb = ms4[:, None] * W2m * ms3[None, :]                   # BN3+BN4 folded (exact, 1x1)
    bb = ms4 * (W2m @ mb3) + mb4
    # TODO(synk): no Pallas FFT primitive; rfft2/irfft2 stay in XLA (glue).
    f = jnp.fft.rfft2(x, axes=(2, 3))                        # (B, C, H, Wr)
    fcat = jnp.concatenate([f.real, f.imag], axis=1)         # (B, 2C, H, Wr)
    Wr = fcat.shape[-1]
    f2 = fcat.reshape(B, 2 * C, H * Wr).astype(MLP_DTYPE)    # channel-major, no transpose
    g = mlp_apply(f2, wa.astype(MLP_DTYPE), ba.reshape(-1, 1).astype(jnp.float32),
                  wb.astype(MLP_DTYPE), bb.reshape(-1, 1).astype(jnp.float32))
    g = g.reshape(B, 2 * C, H, Wr)
    gc = g[:, :C] + 1j * g[:, C:]
    yfft = jnp.fft.irfft2(gc, s=(H, W), axes=(2, 3)).astype(jnp.float32)

    # ---- residual combine in the lane-dense flattened-NCHW layout ----
    out2d = combine_apply(P["gamma"], x.reshape(B * C, H * W),
                          yc.reshape(B * C, H * W),
                          yfft.reshape(B * C, H * W))
    return out2d.reshape(B, C, H, W).astype(x.dtype)


# ------------------------- pure-JAX reference check --------------------------

def ref_forward(x, P):
    def bn(t, p):
        w, b, m, v = p
        sh = (1, -1, 1, 1)
        return (t - m.reshape(sh)) / jnp.sqrt(v.reshape(sh) + EPS) * w.reshape(sh) + b.reshape(sh)

    def conv(t, w, pad):
        return jax.lax.conv_general_dilated(
            t, w, (1, 1), [(pad, pad), (pad, pad)],
            dimension_numbers=("NCHW", "OIHW", "NCHW"),
            precision=jax.lax.Precision.HIGHEST)

    yc = bn(x, P["cbn1"]); yc = conv(yc, P["cw1"], 1); yc = bn(yc, P["cbn2"])
    yc = jnp.maximum(yc, 0.0); yc = bn(yc, P["cbn3"]); yc = conv(yc, P["cw2"], 1)
    yc = bn(yc, P["cbn4"])

    f = jnp.fft.rfft2(x, axes=(2, 3))
    fc = jnp.concatenate([f.real, f.imag], axis=1)
    g = bn(fc, P["mbn1"]); g = conv(g, P["mw1"], 0); g = bn(g, P["mbn2"])
    g = jnp.maximum(g, 0.0); g = bn(g, P["mbn3"]); g = conv(g, P["mw2"], 0)
    g = bn(g, P["mbn4"])
    C = x.shape[1]
    gc = g[:, :C] + 1j * g[:, C:]
    yf = jnp.fft.irfft2(gc, s=(x.shape[2], x.shape[3]), axes=(2, 3))
    return x + P["gamma"][0] * yc + P["gamma"][1] * yf


# ------------------------------ parameter init -------------------------------

def init_params(key, C, expand, k=3):
    M = round(C * expand)
    keys = jax.random.split(key, 12)

    def bn_params(kk, ch):
        k1, k2, k3, k4 = jax.random.split(kk, 4)
        return (1.0 + 0.1 * jax.random.normal(k1, (ch,), jnp.float32),
                0.1 * jax.random.normal(k2, (ch,), jnp.float32),
                0.1 * jax.random.normal(k3, (ch,), jnp.float32),
                0.5 + jax.random.uniform(k4, (ch,), jnp.float32))

    P = {}
    P["cbn1"] = bn_params(keys[0], C)
    P["cw1"] = 0.2 * jax.random.normal(keys[1], (M, C, k, k), jnp.float32)
    P["cbn2"] = bn_params(keys[2], M)
    P["cbn3"] = bn_params(keys[3], M)
    P["cw2"] = 0.2 * jax.random.normal(keys[4], (C, M, k, k), jnp.float32)
    P["cbn4"] = bn_params(keys[5], C)
    P["mbn1"] = bn_params(keys[6], 2 * C)
    P["mw1"] = 0.2 * jax.random.normal(keys[7], (2 * M, 2 * C, 1, 1), jnp.float32)
    P["mbn2"] = bn_params(keys[8], 2 * M)
    P["mbn3"] = bn_params(keys[9], 2 * M)
    P["mw2"] = 0.2 * jax.random.normal(keys[10], (2 * C, 2 * M, 1, 1), jnp.float32)
    P["mbn4"] = bn_params(keys[11], 2 * C)
    # Module __init__ has gamma = zeros(2); use nonzero values so both branches matter.
    P["gamma"] = jnp.array([0.7, -0.3], jnp.float32)
    return P


if __name__ == "__main__":
    key = jax.random.PRNGKey(0)
    kx, kp = jax.random.split(key)
    B, C, H, W = 2, 4, 16, 16
    expand = 2.0
    x = jax.random.normal(kx, (B, C, H, W), jnp.float32)
    P = init_params(kp, C, expand)

    out = jax.jit(block_forward)(x, P)
    out = jax.block_until_ready(out)

    assert out.shape == x.shape and out.dtype == x.dtype
    ref = ref_forward(x, P)
    err = float(jnp.max(jnp.abs(out - ref)))
    if not err < 5e-2:
        raise SystemExit(f"mismatch vs reference: max abs err = {err}")
    print("KERNEL_OK")
</pallas_src>

<mosaic_0001>
module attributes {stable_mosaic.version = 11 : i64} {
  func.func @_mlp_kernel(%arg0: i32, %arg1: memref<1x8x144xbf16, #tpu.memory_space<vmem>>, %arg2: memref<16x8xbf16, #tpu.memory_space<vmem>>, %arg3: memref<16x1xf32, #tpu.memory_space<vmem>>, %arg4: memref<8x16xbf16, #tpu.memory_space<vmem>>, %arg5: memref<8x1xf32, #tpu.memory_space<vmem>>, %arg6: memref<1x8x144xf32, #tpu.memory_space<vmem>>) attributes {dimension_semantics = [#tpu.dimension_semantics<parallel>], iteration_bounds = array<i64: 2>, scalar_prefetch = 0 : i64, scratch_operands = 0 : i64, tpu.core_type = #tpu.core_type<tc>, window_params = [{transform_indices = @transform_0, window_bounds = array<i64: 1, 8, 144>}, {pipeline_mode = #tpu.pipeline_mode<synchronous>, transform_indices = @transform_1, window_bounds = array<i64: 16, 8>}, {pipeline_mode = #tpu.pipeline_mode<synchronous>, transform_indices = @transform_2, window_bounds = array<i64: 16, 1>}, {pipeline_mode = #tpu.pipeline_mode<synchronous>, transform_indices = @transform_3, window_bounds = array<i64: 8, 16>}, {pipeline_mode = #tpu.pipeline_mode<synchronous>, transform_indices = @transform_4, window_bounds = array<i64: 8, 1>}, {transform_indices = @transform_5, window_bounds = array<i64: 1, 8, 144>}]} {
    %c0 = arith.constant 0 : index
    %c0_0 = arith.constant 0 : index
    %c0_1 = arith.constant 0 : index
    %0 = vector.load %arg1[%c0, %c0_0, %c0_1] : memref<1x8x144xbf16, #tpu.memory_space<vmem>>, vector<1x8x144xbf16>
    %1 = vector.shape_cast %0 : vector<1x8x144xbf16> to vector<8x144xbf16>
    %c0_2 = arith.constant 0 : index
    %c0_3 = arith.constant 0 : index
    %2 = vector.load %arg2[%c0_2, %c0_3] : memref<16x8xbf16, #tpu.memory_space<vmem>>, vector<16x8xbf16>
    %cst = arith.constant dense<0.000000e+00> : vector<16x144xf32>
    %3 = tpu.matmul %2, %1, %cst {dimension_numbers = #tpu.dot_dimension_numbers<[1], [0], [0], [1], [0, 0, 1, 1], [], []>} : vector<16x8xbf16>, vector<8x144xbf16>, vector<16x144xf32> -> vector<16x144xf32>
    %c0_4 = arith.constant 0 : index
    %c0_5 = arith.constant 0 : index
    %4 = vector.load %arg3[%c0_4, %c0_5] : memref<16x1xf32, #tpu.memory_space<vmem>>, vector<16x1xf32>
    %5 = vector.broadcast %4 : vector<16x1xf32> to vector<16x144xf32>
    %6 = arith.addf %3, %5 : vector<16x144xf32>
    %cst_6 = arith.constant 0.000000e+00 : f32
    %7 = vector.broadcast %cst_6 : f32 to vector<16x144xf32>
    %8 = arith.maximumf %6, %7 : vector<16x144xf32>
    %9 = arith.truncf %8 : vector<16x144xf32> to vector<16x144xbf16>
    %c0_7 = arith.constant 0 : index
    %c0_8 = arith.constant 0 : index
    %10 = vector.load %arg4[%c0_7, %c0_8] : memref<8x16xbf16, #tpu.memory_space<vmem>>, vector<8x16xbf16>
    %cst_9 = arith.constant dense<0.000000e+00> : vector<8x144xf32>
    %11 = tpu.matmul %10, %9, %cst_9 {dimension_numbers = #tpu.dot_dimension_numbers<[1], [0], [0], [1], [0, 0, 1, 1], [], []>} : vector<8x16xbf16>, vector<16x144xbf16>, vector<8x144xf32> -> vector<8x144xf32>
    %c0_10 = arith.constant 0 : index
    %c0_11 = arith.constant 0 : index
    %12 = vector.load %arg5[%c0_10, %c0_11] : memref<8x1xf32, #tpu.memory_space<vmem>>, vector<8x1xf32>
    %13 = vector.broadcast %12 : vector<8x1xf32> to vector<8x144xf32>
    %14 = arith.addf %11, %13 : vector<8x144xf32>
    %c0_12 = arith.constant 0 : index
    %c0_13 = arith.constant 0 : index
    %c0_14 = arith.constant 0 : index
    %15 = vector.load %arg6[%c0_12, %c0_13, %c0_14] : memref<1x8x144xf32, #tpu.memory_space<vmem>>, vector<1x8x144xf32>
    %16 = vector.shape_cast %15 : vector<1x8x144xf32> to vector<8x144xf32>
    %17 = vector.shape_cast %14 : vector<8x144xf32> to vector<1x8x144xf32>
    tpu.vector_store %arg6[%c0_12, %c0_13, %c0_14], %17 {strides = array<i32>} : memref<1x8x144xf32, #tpu.memory_space<vmem>>, vector<1x8x144xf32>,
    return
  }
  func.func @transform_0(%arg0: i32) -> (i32, i32, i32) {
    %c0_i32 = arith.constant 0 : i32
    %c0_i32_0 = arith.constant 0 : i32
    %c0_i32_1 = arith.constant 0 : i32
    return %arg0, %c0_i32, %c0_i32_0 : i32, i32, i32
  }
  func.func @transform_1(%arg0: i32) -> (i32, i32) {
    %c0_i32 = arith.constant 0 : i32
    %c0_i32_0 = arith.constant 0 : i32
    %c0_i32_1 = arith.constant 0 : i32
    return %c0_i32, %c0_i32_0 : i32, i32
  }
  func.func @transform_2(%arg0: i32) -> (i32, i32) {
    %c0_i32 = arith.constant 0 : i32
    %c0_i32_0 = arith.constant 0 : i32
    %c0_i32_1 = arith.constant 0 : i32
    return %c0_i32, %c0_i32_0 : i32, i32
  }
  func.func @transform_3(%arg0: i32) -> (i32, i32) {
    %c0_i32 = arith.constant 0 : i32
    %c0_i32_0 = arith.constant 0 : i32
    %c0_i32_1 = arith.constant 0 : i32
    return %c0_i32, %c0_i32_0 : i32, i32
  }
  func.func @transform_4(%arg0: i32) -> (i32, i32) {
    %c0_i32 = arith.constant 0 : i32
    %c0_i32_0 = arith.constant 0 : i32
    %c0_i32_1 = arith.constant 0 : i32
    return %c0_i32, %c0_i32_0 : i32, i32
  }
  func.func @transform_5(%arg0: i32) -> (i32, i32, i32) {
    %c0_i32 = arith.constant 0 : i32
    %c0_i32_0 = arith.constant 0 : i32
    %c0_i32_1 = arith.constant 0 : i32
    return %arg0, %c0_i32, %c0_i32_0 : i32, i32, i32
  }
}

module attributes {stable_mosaic.version = 11 : i64} {
  func.func @_conv_branch_kernel(%arg0: i32, %arg1: memref<1x18x18x4xf32, #tpu.memory_space<vmem>>, %arg2: memref<9x4x8xf32, #tpu.memory_space<vmem>>, %arg3: memref<1x8xf32, #tpu.memory_space<vmem>>, %arg4: memref<1x8xf32, #tpu.memory_space<vmem>>, %arg5: memref<1x8xf32, #tpu.memory_space<vmem>>, %arg6: memref<9x8x4xf32, #tpu.memory_space<vmem>>, %arg7: memref<1x4xf32, #tpu.memory_space<vmem>>, %arg8: memref<1x256x4xf32, #tpu.memory_space<vmem>>, %arg9: memref<18x18x8xf32, #tpu.memory_space<vmem>>) attributes {dimension_semantics = [#tpu.dimension_semantics<parallel>], iteration_bounds = array<i64: 2>, scalar_prefetch = 0 : i64, scratch_operands = 1 : i64, tpu.core_type = #tpu.core_type<tc>, window_params = [{transform_indices = @transform_0, window_bounds = array<i64: 1, 18, 18, 4>}, {pipeline_mode = #tpu.pipeline_mode<synchronous>, transform_indices = @transform_1, window_bounds = array<i64: 9, 4, 8>}, {pipeline_mode = #tpu.pipeline_mode<synchronous>, transform_indices = @transform_2, window_bounds = array<i64: 1, 8>}, {pipeline_mode = #tpu.pipeline_mode<synchronous>, transform_indices = @transform_3, window_bounds = array<i64: 1, 8>}, {pipeline_mode = #tpu.pipeline_mode<synchronous>, transform_indices = @transform_4, window_bounds = array<i64: 1, 8>}, {pipeline_mode = #tpu.pipeline_mode<synchronous>, transform_indices = @transform_5, window_bounds = array<i64: 9, 8, 4>}, {pipeline_mode = #tpu.pipeline_mode<synchronous>, transform_indices = @transform_6, window_bounds = array<i64: 1, 4>}, {transform_indices = @transform_7, window_bounds = array<i64: 1, 256, 4>}]} {
    %cst = arith.constant 0.000000e+00 : f32
    %0 = vector.broadcast %cst : f32 to vector<256x8xf32>
    %c0 = arith.constant 0 : index
    %c0_0 = arith.constant 0 : index
    %c0_1 = arith.constant 0 : index
    %c0_2 = arith.constant 0 : index
    %1 = vector.load %arg1[%c0, %c0_0, %c0_1, %c0_2] : memref<1x18x18x4xf32, #tpu.memory_space<vmem>>, vector<1x16x16x4xf32>
    %2 = vector.shape_cast %1 : vector<1x16x16x4xf32> to vector<16x16x4xf32>
    %3 = vector.shape_cast %2 : vector<16x16x4xf32> to vector<256x4xf32>
    %c0_3 = arith.constant 0 : index
    %c0_4 = arith.constant 0 : index
    %c0_5 = arith.constant 0 : index
    %4 = vector.load %arg2[%c0_3, %c0_4, %c0_5] : memref<9x4x8xf32, #tpu.memory_space<vmem>>, vector<1x4x8xf32>
    %5 = vector.shape_cast %4 : vector<1x4x8xf32> to vector<4x8xf32>
    %cst_6 = arith.constant dense<0.000000e+00> : vector<256x8xf32>
    %6 = tpu.matmul %3, %5, %cst_6 {dimension_numbers = #tpu.dot_dimension_numbers<[1], [0], [0], [1], [0, 0, 1, 1], [], []>} : vector<256x4xf32>, vector<4x8xf32>, vector<256x8xf32> -> vector<256x8xf32>
    %7 = arith.addf %0, %6 : vector<256x8xf32>
    %c0_7 = arith.constant 0 : index
    %c0_8 = arith.constant 0 : index
    %c1 = arith.constant 1 : index
    %c0_9 = arith.constant 0 : index
    %8 = vector.load %arg1[%c0_7, %c0_8, %c1, %c0_9] : memref<1x18x18x4xf32, #tpu.memory_space<vmem>>, vector<1x16x16x4xf32>
    %9 = vector.shape_cast %8 : vector<1x16x16x4xf32> to vector<16x16x4xf32>
    %10 = vector.shape_cast %9 : vector<16x16x4xf32> to vector<256x4xf32>
    %c1_10 = arith.constant 1 : index
    %c0_11 = arith.constant 0 : index
    %c0_12 = arith.constant 0 : index
    %11 = vector.load %arg2[%c1_10, %c0_11, %c0_12] : memref<9x4x8xf32, #tpu.memory_space<vmem>>, vector<1x4x8xf32>
    %12 = vector.shape_cast %11 : vector<1x4x8xf32> to vector<4x8xf32>
    %cst_13 = arith.constant dense<0.000000e+00> : vector<256x8xf32>
    %13 = tpu.matmul %10, %12, %cst_13 {dimension_numbers = #tpu.dot_dimension_numbers<[1], [0], [0], [1], [0, 0, 1, 1], [], []>} : vector<256x4xf32>, vector<4x8xf32>, vector<256x8xf32> -> vector<256x8xf32>
    %14 = arith.addf %7, %13 : vector<256x8xf32>
    %c0_14 = arith.constant 0 : index
    %c0_15 = arith.constant 0 : index
    %c2 = arith.constant 2 : index
    %c0_16 = arith.constant 0 : index
    %15 = vector.load %arg1[%c0_14, %c0_15, %c2, %c0_16] : memref<1x18x18x4xf32, #tpu.memory_space<vmem>>, vector<1x16x16x4xf32>
    %16 = vector.shape_cast %15 : vector<1x16x16x4xf32> to vector<16x16x4xf32>
    %17 = vector.shape_cast %16 : vector<16x16x4xf32> to vector<256x4xf32>
    %c2_17 = arith.constant 2 : index
    %c0_18 = arith.constant 0 : index
    %c0_19 = arith.constant 0 : index
    %18 = vector.load %arg2[%c2_17, %c0_18, %c0_19] : memref<9x4x8xf32, #tpu.memory_space<vmem>>, vector<1x4x8xf32>
    %19 = vector.shape_cast %18 : vector<1x4x8xf32> to vector<4x8xf32>
    %cst_20 = arith.constant dense<0.000000e+00> : vector<256x8xf32>
    %20 = tpu.matmul %17, %19, %cst_20 {dimension_numbers = #tpu.dot_dimension_numbers<[1], [0], [0], [1], [0, 0, 1, 1], [], []>} : vector<256x4xf32>, vector<4x8xf32>, vector<256x8xf32> -> vector<256x8xf32>
    %21 = arith.addf %14, %20 : vector<256x8xf32>
    %c0_21 = arith.constant 0 : index
    %c1_22 = arith.constant 1 : index
    %c0_23 = arith.constant 0 : index
    %c0_24 = arith.constant 0 : index
    %22 = vector.load %arg1[%c0_21, %c1_22, %c0_23, %c0_24] : memref<1x18x18x4xf32, #tpu.memory_space<vmem>>, vector<1x16x16x4xf32>
    %23 = vector.shape_cast %22 : vector<1x16x16x4xf32> to vector<16x16x4xf32>
    %24 = vector.shape_cast %23 : vector<16x16x4xf32> to vector<256x4xf32>
    %c3 = arith.constant 3 : index
    %c0_25 = arith.constant 0 : index
    %c0_26 = arith.constant 0 : index
    %25 = vector.load %arg2[%c3, %c0_25, %c0_26] : memref<9x4x8xf32, #tpu.memory_space<vmem>>, vector<1x4x8xf32>
    %26 = vector.shape_cast %25 : vector<1x4x8xf32> to vector<4x8xf32>
    %cst_27 = arith.constant dense<0.000000e+00> : vector<256x8xf32>
    %27 = tpu.matmul %24, %26, %cst_27 {dimension_numbers = #tpu.dot_dimension_numbers<[1], [0], [0], [1], [0, 0, 1, 1], [], []>} : vector<256x4xf32>, vector<4x8xf32>, vector<256x8xf32> -> vector<256x8xf32>
    %28 = arith.addf %21, %27 : vector<256x8xf32>
    %c0_28 = arith.constant 0 : index
    %c1_29 = arith.constant 1 : index
    %c1_30 = arith.constant 1 : index
    %c0_31 = arith.constant 0 : index
    %29 = vector.load %arg1[%c0_28, %c1_29, %c1_30, %c0_31] : memref<1x18x18x4xf32, #tpu.memory_space<vmem>>, vector<1x16x16x4xf32>
    %30 = vector.shape_cast %29 : vector<1x16x16x4xf32> to vector<16x16x4xf32>
    %31 = vector.shape_cast %30 : vector<16x16x4xf32> to vector<256x4xf32>
    %c4 = arith.constant 4 : index
    %c0_32 = arith.constant 0 : index
    %c0_33 = arith.constant 0 : index
    %32 = vector.load %arg2[%c4, %c0_32, %c0_33] : memref<9x4x8xf32, #tpu.memory_space<vmem>>, vector<1x4x8xf32>
    %33 = vector.shape_cast %32 : vector<1x4x8xf32> to vector<4x8xf32>
    %cst_34 = arith.constant dense<0.000000e+00> : vector<256x8xf32>
    %34 = tpu.matmul %31, %33, %cst_34 {dimension_numbers = #tpu.dot_dimension_numbers<[1], [0], [0], [1], [0, 0, 1, 1], [], []>} : vector<256x4xf32>, vector<4x8xf32>, vector<256x8xf32> -> vector<256x8xf32>
    %35 = arith.addf %28, %34 : vector<256x8xf32>
    %c0_35 = arith.constant 0 : index
    %c1_36 = arith.constant 1 : index
    %c2_37 = arith.constant 2 : index
    %c0_38 = arith.constant 0 : index
    %36 = vector.load %arg1[%c0_35, %c1_36, %c2_37, %c0_38] : memref<1x18x18x4xf32, #tpu.memory_space<vmem>>, vector<1x16x16x4xf32>
    %37 = vector.shape_cast %36 : vector<1x16x16x4xf32> to vector<16x16x4xf32>
    %38 = vector.shape_cast %37 : vector<16x16x4xf32> to vector<256x4xf32>
    %c5 = arith.constant 5 : index
    %c0_39 = arith.constant 0 : index
    %c0_40 = arith.constant 0 : index
    %39 = vector.load %arg2[%c5, %c0_39, %c0_40] : memref<9x4x8xf32, #tpu.memory_space<vmem>>, vector<1x4x8xf32>
    %40 = vector.shape_cast %39 : vector<1x4x8xf32> to vector<4x8xf32>
    %cst_41 = arith.constant dense<0.000000e+00> : vector<256x8xf32>
    %41 = tpu.matmul %38, %40, %cst_41 {dimension_numbers = #tpu.dot_dimension_numbers<[1], [0], [0], [1], [0, 0, 1, 1], [], []>} : vector<256x4xf32>, vector<4x8xf32>, vector<256x8xf32> -> vector<256x8xf32>
    %42 = arith.addf %35, %41 : vector<256x8xf32>
    %c0_42 = arith.constant 0 : index
    %c2_43 = arith.constant 2 : index
    %c0_44 = arith.constant 0 : index
    %c0_45 = arith.constant 0 : index
    %43 = vector.load %arg1[%c0_42, %c2_43, %c0_44, %c0_45] : memref<1x18x18x4xf32, #tpu.memory_space<vmem>>, vector<1x16x16x4xf32>
    %44 = vector.shape_cast %43 : vector<1x16x16x4xf32> to vector<16x16x4xf32>
    %45 = vector.shape_cast %44 : vector<16x16x4xf32> to vector<256x4xf32>
    %c6 = arith.constant 6 : index
    %c0_46 = arith.constant 0 : index
    %c0_47 = arith.constant 0 : index
    %46 = vector.load %arg2[%c6, %c0_46, %c0_47] : memref<9x4x8xf32, #tpu.memory_space<vmem>>, vector<1x4x8xf32>
    %47 = vector.shape_cast %46 : vector<1x4x8xf32> to vector<4x8xf32>
    %cst_48 = arith.constant dense<0.000000e+00> : vector<256x8xf32>
    %48 = tpu.matmul %45, %47, %cst_48 {dimension_numbers = #tpu.dot_dimension_numbers<[1], [0], [0], [1], [0, 0, 1, 1], [], []>} : vector<256x4xf32>, vector<4x8xf32>, vector<256x8xf32> -> vector<256x8xf32>
    %49 = arith.addf %42, %48 : vector<256x8xf32>
    %c0_49 = arith.constant 0 : index
    %c2_50 = arith.constant 2 : index
    %c1_51 = arith.constant 1 : index
    %c0_52 = arith.constant 0 : index
    %50 = vector.load %arg1[%c0_49, %c2_50, %c1_51, %c0_52] : memref<1x18x18x4xf32, #tpu.memory_space<vmem>>, vector<1x16x16x4xf32>
    %51 = vector.shape_cast %50 : vector<1x16x16x4xf32> to vector<16x16x4xf32>
    %52 = vector.shape_cast %51 : vector<16x16x4xf32> to vector<256x4xf32>
    %c7 = arith.constant 7 : index
    %c0_53 = arith.constant 0 : index
    %c0_54 = arith.constant 0 : index
    %53 = vector.load %arg2[%c7, %c0_53, %c0_54] : memref<9x4x8xf32, #tpu.memory_space<vmem>>, vector<1x4x8xf32>
    %54 = vector.shape_cast %53 : vector<1x4x8xf32> to vector<4x8xf32>
    %cst_55 = arith.constant dense<0.000000e+00> : vector<256x8xf32>
    %55 = tpu.matmul %52, %54, %cst_55 {dimension_numbers = #tpu.dot_dimension_numbers<[1], [0], [0], [1], [0, 0, 1, 1], [], []>} : vector<256x4xf32>, vector<4x8xf32>, vector<256x8xf32> -> vector<256x8xf32>
    %56 = arith.addf %49, %55 : vector<256x8xf32>
    %c0_56 = arith.constant 0 : index
    %c2_57 = arith.constant 2 : index
    %c2_58 = arith.constant 2 : index
    %c0_59 = arith.constant 0 : index
    %57 = vector.load %arg1[%c0_56, %c2_57, %c2_58, %c0_59] : memref<1x18x18x4xf32, #tpu.memory_space<vmem>>, vector<1x16x16x4xf32>
    %58 = vector.shape_cast %57 : vector<1x16x16x4xf32> to vector<16x16x4xf32>
    %59 = vector.shape_cast %58 : vector<16x16x4xf32> to vector<256x4xf32>
    %c8 = arith.constant 8 : index
    %c0_60 = arith.constant 0 : index
    %c0_61 = arith.constant 0 : index
    %60 = vector.load %arg2[%c8, %c0_60, %c0_61] : memref<9x4x8xf32, #tpu.memory_space<vmem>>, vector<1x4x8xf32>
    %61 = vector.shape_cast %60 : vector<1x4x8xf32> to vector<4x8xf32>
    %cst_62 = arith.constant dense<0.000000e+00> : vector<256x8xf32>
    %62 = tpu.matmul %59, %61, %cst_62 {dimension_numbers = #tpu.dot_dimension_numbers<[1], [0], [0], [1], [0, 0, 1, 1], [], []>} : vector<256x4xf32>, vector<4x8xf32>, vector<256x8xf32> -> vector<256x8xf32>
    %63 = arith.addf %56, %62 : vector<256x8xf32>
    %c0_63 = arith.constant 0 : index
    %c0_64 = arith.constant 0 : index
    %64 = vector.load %arg3[%c0_63, %c0_64] : memref<1x8xf32, #tpu.memory_space<vmem>>, vector<1x8xf32>
    %65 = vector.broadcast %64 : vector<1x8xf32> to vector<256x8xf32>
    %66 = arith.addf %63, %65 : vector<256x8xf32>
    %cst_65 = arith.constant 0.000000e+00 : f32
    %67 = vector.broadcast %cst_65 : f32 to vector<256x8xf32>
    %68 = arith.maximumf %66, %67 : vector<256x8xf32>
    %c0_66 = arith.constant 0 : index
    %c0_67 = arith.constant 0 : index
    %69 = vector.load %arg4[%c0_66, %c0_67] : memref<1x8xf32, #tpu.memory_space<vmem>>, vector<1x8xf32>
    %70 = vector.broadcast %69 : vector<1x8xf32> to vector<256x8xf32>
    %71 = arith.mulf %68, %70 : vector<256x8xf32>
    %c0_68 = arith.constant 0 : index
    %c0_69 = arith.constant 0 : index
    %72 = vector.load %arg5[%c0_68, %c0_69] : memref<1x8xf32, #tpu.memory_space<vmem>>, vector<1x8xf32>
    %73 = vector.broadcast %72 : vector<1x8xf32> to vector<256x8xf32>
    %74 = arith.addf %71, %73 : vector<256x8xf32>
    %cst_70 = arith.constant 0.000000e+00 : f32
    %75 = vector.broadcast %cst_70 : f32 to vector<18x18x8xf32>
    %c0_71 = arith.constant 0 : index
    %c0_72 = arith.constant 0 : index
    %c0_73 = arith.constant 0 : index
    %76 = vector.load %arg9[%c0_71, %c0_72, %c0_73] : memref<18x18x8xf32, #tpu.memory_space<vmem>>, vector<18x18x8xf32>
    tpu.vector_store %arg9[%c0_71, %c0_72, %c0_73], %75 {strides = array<i32>} : memref<18x18x8xf32, #tpu.memory_space<vmem>>, vector<18x18x8xf32>,
    %77 = vector.shape_cast %74 : vector<256x8xf32> to vector<16x16x8xf32>
    %c1_74 = arith.constant 1 : index
    %c1_75 = arith.constant 1 : index
    %c0_76 = arith.constant 0 : index
    %78 = vector.load %arg9[%c1_74, %c1_75, %c0_76] : memref<18x18x8xf32, #tpu.memory_space<vmem>>, vector<16x16x8xf32>
    tpu.vector_store %arg9[%c1_74, %c1_75, %c0_76], %77 {strides = array<i32>} : memref<18x18x8xf32, #tpu.memory_space<vmem>>, vector<16x16x8xf32>,
    %cst_77 = arith.constant 0.000000e+00 : f32
    %79 = vector.broadcast %cst_77 : f32 to vector<256x4xf32>
    %c0_78 = arith.constant 0 : index
    %c0_79 = arith.constant 0 : index
    %c0_80 = arith.constant 0 : index
    %80 = vector.load %arg9[%c0_78, %c0_79, %c0_80] : memref<18x18x8xf32, #tpu.memory_space<vmem>>, vector<16x16x8xf32>
    %81 = vector.shape_cast %80 : vector<16x16x8xf32> to vector<256x8xf32>
    %c0_81 = arith.constant 0 : index
    %c0_82 = arith.constant 0 : index
    %c0_83 = arith.constant 0 : index
    %82 = vector.load %arg6[%c0_81, %c0_82, %c0_83] : memref<9x8x4xf32, #tpu.memory_space<vmem>>, vector<1x8x4xf32>
    %83 = vector.shape_cast %82 : vector<1x8x4xf32> to vector<8x4xf32>
    %cst_84 = arith.constant dense<0.000000e+00> : vector<256x4xf32>
    %84 = tpu.matmul %81, %83, %cst_84 {dimension_numbers = #tpu.dot_dimension_numbers<[1], [0], [0], [1], [0, 0, 1, 1], [], []>} : vector<256x8xf32>, vector<8x4xf32>, vector<256x4xf32> -> vector<256x4xf32>
    %85 = arith.addf %79, %84 : vector<256x4xf32>
    %c0_85 = arith.constant 0 : index
    %c1_86 = arith.constant 1 : index
    %c0_87 = arith.constant 0 : index
    %86 = vector.load %arg9[%c0_85, %c1_86, %c0_87] : memref<18x18x8xf32, #tpu.memory_space<vmem>>, vector<16x16x8xf32>
    %87 = vector.shape_cast %86 : vector<16x16x8xf32> to vector<256x8xf32>
    %c1_88 = arith.constant 1 : index
    %c0_89 = arith.constant 0 : index
    %c0_90 = arith.constant 0 : index
    %88 = vector.load %arg6[%c1_88, %c0_89, %c0_90] : memref<9x8x4xf32, #tpu.memory_space<vmem>>, vector<1x8x4xf32>
    %89 = vector.shape_cast %88 : vector<1x8x4xf32> to vector<8x4xf32>
    %cst_91 = arith.constant dense<0.000000e+00> : vector<256x4xf32>
    %90 = tpu.matmul %87, %89, %cst_91 {dimension_numbers = #tpu.dot_dimension_numbers<[1], [0], [0], [1], [0, 0, 1, 1], [], []>} : vector<256x8xf32>, vector<8x4xf32>, vector<256x4xf32> -> vector<256x4xf32>
    %91 = arith.addf %85, %90 : vector<256x4xf32>
    %c0_92 = arith.constant 0 : index
    %c2_93 = arith.constant 2 : index
    %c0_94 = arith.constant 0 : index
    %92 = vector.load %arg9[%c0_92, %c2_93, %c0_94] : memref<18x18x8xf32, #tpu.memory_space<vmem>>, vector<16x16x8xf32>
    %93 = vector.shape_cast %92 : vector<16x16x8xf32> to vector<256x8xf32>
    %c2_95 = arith.constant 2 : index
    %c0_96 = arith.constant 0 : index
    %c0_97 = arith.constant 0 : index
    %94 = vector.load %arg6[%c2_95, %c0_96, %c0_97] : memref<9x8x4xf32, #tpu.memory_space<vmem>>, vector<1x8x4xf32>
    %95 = vector.shape_cast %94 : vector<1x8x4xf32> to vector<8x4xf32>
    %cst_98 = arith.constant dense<0.000000e+00> : vector<256x4xf32>
    %96 = tpu.matmul %93, %95, %cst_98 {dimension_numbers = #tpu.dot_dimension_numbers<[1], [0], [0], [1], [0, 0, 1, 1], [], []>} : vector<256x8xf32>, vector<8x4xf32>, vector<256x4xf32> -> vector<256x4xf32>
    %97 = arith.addf %91, %96 : vector<256x4xf32>
    %c1_99 = arith.constant 1 : index
    %c0_100 = arith.constant 0 : index
    %c0_101 = arith.constant 0 : index
    %98 = vector.load %arg9[%c1_99, %c0_100, %c0_101] : memref<18x18x8xf32, #tpu.memory_space<vmem>>, vector<16x16x8xf32>
    %99 = vector.shape_cast %98 : vector<16x16x8xf32> to vector<256x8xf32>
    %c3_102 = arith.constant 3 : index
    %c0_103 = arith.constant 0 : index
    %c0_104 = arith.constant 0 : index
    %100 = vector.load %arg6[%c3_102, %c0_103, %c0_104] : memref<9x8x4xf32, #tpu.memory_space<vmem>>, vector<1x8x4xf32>
    %101 = vector.shape_cast %100 : vector<1x8x4xf32> to vector<8x4xf32>
    %cst_105 = arith.constant dense<0.000000e+00> : vector<256x4xf32>
    %102 = tpu.matmul %99, %101, %cst_105 {dimension_numbers = #tpu.dot_dimension_numbers<[1], [0], [0], [1], [0, 0, 1, 1], [], []>} : vector<256x8xf32>, vector<8x4xf32>, vector<256x4xf32> -> vector<256x4xf32>
    %103 = arith.addf %97, %102 : vector<256x4xf32>
    %c1_106 = arith.constant 1 : index
    %c1_107 = arith.constant 1 : index
    %c0_108 = arith.constant 0 : index
    %104 = vector.load %arg9[%c1_106, %c1_107, %c0_108] : memref<18x18x8xf32, #tpu.memory_space<vmem>>, vector<16x16x8xf32>
    %105 = vector.shape_cast %104 : vector<16x16x8xf32> to vector<256x8xf32>
    %c4_109 = arith.constant 4 : index
    %c0_110 = arith.constant 0 : index
    %c0_111 = arith.constant 0 : index
    %106 = vector.load %arg6[%c4_109, %c0_110, %c0_111] : memref<9x8x4xf32, #tpu.memory_space<vmem>>, vector<1x8x4xf32>
    %107 = vector.shape_cast %106 : vector<1x8x4xf32> to vector<8x4xf32>
    %cst_112 = arith.constant dense<0.000000e+00> : vector<256x4xf32>
    %108 = tpu.matmul %105, %107, %cst_112 {dimension_numbers = #tpu.dot_dimension_numbers<[1], [0], [0], [1], [0, 0, 1, 1], [], []>} : vector<256x8xf32>, vector<8x4xf32>, vector<256x4xf32> -> vector<256x4xf32>
    %109 = arith.addf %103, %108 : vector<256x4xf32>
    %c1_113 = arith.constant 1 : index
    %c2_114 = arith.constant 2 : index
    %c0_115 = arith.constant 0 : index
    %110 = vector.load %arg9[%c1_113, %c2_114, %c0_115] : memref<18x18x8xf32, #tpu.memory_space<vmem>>, vector<16x16x8xf32>
    %111 = vector.shape_cast %110 : vector<16x16x8xf32> to vector<256x8xf32>
    %c5_116 = arith.constant 5 : index
    %c0_117 = arith.constant 0 : index
    %c0_118 = arith.constant 0 : index
    %112 = vector.load %arg6[%c5_116, %c0_117, %c0_118] : memref<9x8x4xf32, #tpu.memory_space<vmem>>, vector<1x8x4xf32>
    %113 = vector.shape_cast %112 : vector<1x8x4xf32> to vector<8x4xf32>
    %cst_119 = arith.constant dense<0.000000e+00> : vector<256x4xf32>
    %114 = tpu.matmul %111, %113, %cst_119 {dimension_numbers = #tpu.dot_dimension_numbers<[1], [0], [0], [1], [0, 0, 1, 1], [], []>} : vector<256x8xf32>, vector<8x4xf32>, vector<256x4xf32> -> vector<256x4xf32>
    %115 = arith.addf %109, %114 : vector<256x4xf32>
    %c2_120 = arith.constant 2 : index
    %c0_121 = arith.constant 0 : index
    %c0_122 = arith.constant 0 : index
    %116 = vector.load %arg9[%c2_120, %c0_121, %c0_122] : memref<18x18x8xf32, #tpu.memory_space<vmem>>, vector<16x16x8xf32>
    %117 = vector.shape_cast %116 : vector<16x16x8xf32> to vector<256x8xf32>
    %c6_123 = arith.constant 6 : index
    %c0_124 = arith.constant 0 : index
    %c0_125 = arith.constant 0 : index
    %118 = vector.load %arg6[%c6_123, %c0_124, %c0_125] : memref<9x8x4xf32, #tpu.memory_space<vmem>>, vector<1x8x4xf32>
    %119 = vector.shape_cast %118 : vector<1x8x4xf32> to vector<8x4xf32>
    %cst_126 = arith.constant dense<0.000000e+00> : vector<256x4xf32>
    %120 = tpu.matmul %117, %119, %cst_126 {dimension_numbers = #tpu.dot_dimension_numbers<[1], [0], [0], [1], [0, 0, 1, 1], [], []>} : vector<256x8xf32>, vector<8x4xf32>, vector<256x4xf32> -> vector<256x4xf32>
    %121 = arith.addf %115, %120 : vector<256x4xf32>
    %c2_127 = arith.constant 2 : index
    %c1_128 = arith.constant 1 : index
    %c0_129 = arith.constant 0 : index
    %122 = vector.load %arg9[%c2_127, %c1_128, %c0_129] : memref<18x18x8xf32, #tpu.memory_space<vmem>>, vector<16x16x8xf32>
    %123 = vector.shape_cast %122 : vector<16x16x8xf32> to vector<256x8xf32>
    %c7_130 = arith.constant 7 : index
    %c0_131 = arith.constant 0 : index
    %c0_132 = arith.constant 0 : index
    %124 = vector.load %arg6[%c7_130, %c0_131, %c0_132] : memref<9x8x4xf32, #tpu.memory_space<vmem>>, vector<1x8x4xf32>
    %125 = vector.shape_cast %124 : vector<1x8x4xf32> to vector<8x4xf32>
    %cst_133 = arith.constant dense<0.000000e+00> : vector<256x4xf32>
    %126 = tpu.matmul %123, %125, %cst_133 {dimension_numbers = #tpu.dot_dimension_numbers<[1], [0], [0], [1], [0, 0, 1, 1], [], []>} : vector<256x8xf32>, vector<8x4xf32>, vector<256x4xf32> -> vector<256x4xf32>
    %127 = arith.addf %121, %126 : vector<256x4xf32>
    %c2_134 = arith.constant 2 : index
    %c2_135 = arith.constant 2 : index
    %c0_136 = arith.constant 0 : index
    %128 = vector.load %arg9[%c2_134, %c2_135, %c0_136] : memref<18x18x8xf32, #tpu.memory_space<vmem>>, vector<16x16x8xf32>
    %129 = vector.shape_cast %128 : vector<16x16x8xf32> to vector<256x8xf32>
    %c8_137 = arith.constant 8 : index
    %c0_138 = arith.constant 0 : index
    %c0_139 = arith.constant 0 : index
    %130 = vector.load %arg6[%c8_137, %c0_138, %c0_139] : memref<9x8x4xf32, #tpu.memory_space<vmem>>, vector<1x8x4xf32>
    %131 = vector.shape_cast %130 : vector<1x8x4xf32> to vector<8x4xf32>
    %cst_140 = arith.constant dense<0.000000e+00> : vector<256x4xf32>
    %132 = tpu.matmul %129, %131, %cst_140 {dimension_numbers = #tpu.dot_dimension_numbers<[1], [0], [0], [1], [0, 0, 1, 1], [], []>} : vector<256x8xf32>, vector<8x4xf32>, vector<256x4xf32> -> vector<256x4xf32>
    %133 = arith.addf %127, %132 : vector<256x4xf32>
    %c0_141 = arith.constant 0 : index
    %c0_142 = arith.constant 0 : index
    %134 = vector.load %arg7[%c0_141, %c0_142] : memref<1x4xf32, #tpu.memory_space<vmem>>, vector<1x4xf32>
    %135 = vector.broadcast %134 : vector<1x4xf32> to vector<256x4xf32>
    %136 = arith.addf %133, %135 : vector<256x4xf32>
    %c0_143 = arith.constant 0 : index
    %c0_144 = arith.constant 0 : index
    %c0_145 = arith.constant 0 : index
    %137 = vector.load %arg8[%c0_143, %c0_144, %c0_145] : memref<1x256x4xf32, #tpu.memory_space<vmem>>, vector<1x256x4xf32>
    %138 = vector.shape_cast %137 : vector<1x256x4xf32> to vector<256x4xf32>
    %139 = vector.shape_cast %136 : vector<256x4xf32> to vector<1x256x4xf32>
    tpu.vector_store %arg8[%c0_143, %c0_144, %c0_145], %139 {strides = array<i32>} : memref<1x256x4xf32, #tpu.memory_space<vmem>>, vector<1x256x4xf32>,
    return
  }
  func.func @transform_0(%arg0: i32) -> (i32, i32, i32, i32) {
    %c0_i32 = arith.constant 0 : i32
    %c0_i32_0 = arith.constant 0 : i32
    %c0_i32_1 = arith.constant 0 : i32
    %c0_i32_2 = arith.constant 0 : i32
    return %arg0, %c0_i32, %c0_i32_0, %c0_i32_1 : i32, i32, i32, i32
  }
  func.func @transform_1(%arg0: i32) -> (i32, i32, i32) {
    %c0_i32 = arith.constant 0 : i32
    %c0_i32_0 = arith.constant 0 : i32
    %c0_i32_1 = arith.constant 0 : i32
    %c0_i32_2 = arith.constant 0 : i32
    return %c0_i32, %c0_i32_0, %c0_i32_1 : i32, i32, i32
  }
  func.func @transform_2(%arg0: i32) -> (i32, i32) {
    %c0_i32 = arith.constant 0 : i32
    %c0_i32_0 = arith.constant 0 : i32
    %c0_i32_1 = arith.constant 0 : i32
    return %c0_i32, %c0_i32_0 : i32, i32
  }
  func.func @transform_3(%arg0: i32) -> (i32, i32) {
    %c0_i32 = arith.constant 0 : i32
    %c0_i32_0 = arith.constant 0 : i32
    %c0_i32_1 = arith.constant 0 : i32
    return %c0_i32, %c0_i32_0 : i32, i32
  }
  func.func @transform_4(%arg0: i32) -> (i32, i32) {
    %c0_i32 = arith.constant 0 : i32
    %c0_i32_0 = arith.constant 0 : i32
    %c0_i32_1 = arith.constant 0 : i32
    return %c0_i32, %c0_i32_0 : i32, i32
  }
  func.func @transform_5(%arg0: i32) -> (i32, i32, i32) {
    %c0_i32 = arith.constant 0 : i32
    %c0_i32_0 = arith.constant 0 : i32
    %c0_i32_1 = arith.constant 0 : i32
    %c0_i32_2 = arith.constant 0 : i32
    return %c0_i32, %c0_i32_0, %c0_i32_1 : i32, i32, i32
  }
  func.func @transform_6(%arg0: i32) -> (i32, i32) {
    %c0_i32 = arith.constant 0 : i32
    %c0_i32_0 = arith.constant 0 : i32
    %c0_i32_1 = arith.constant 0 : i32
    return %c0_i32, %c0_i32_0 : i32, i32
  }
  func.func @transform_7(%arg0: i32) -> (i32, i32, i32) {
    %c0_i32 = arith.constant 0 : i32
    %c0_i32_0 = arith.constant 0 : i32
    %c0_i32_1 = arith.constant 0 : i32
    return %arg0, %c0_i32, %c0_i32_0 : i32, i32, i32
  }
}

module attributes {stable_mosaic.version = 11 : i64} {
  func.func @_combine_kernel(%arg0: i32, %arg1: memref<2xf32, #tpu.memory_space<smem>>, %arg2: memref<8x256xf32, #tpu.memory_space<vmem>>, %arg3: memref<8x256xf32, #tpu.memory_space<vmem>>, %arg4: memref<8x256xf32, #tpu.memory_space<vmem>>, %arg5: memref<8x256xf32, #tpu.memory_space<vmem>>) attributes {dimension_semantics = [#tpu.dimension_semantics<parallel>], iteration_bounds = array<i64: 1>, scalar_prefetch = 0 : i64, scratch_operands = 0 : i64, tpu.core_type = #tpu.core_type<tc>, window_params = [{transform_indices = @transform_0, window_bounds = array<i64: 2>}, {transform_indices = @transform_1, window_bounds = array<i64: 8, 256>}, {transform_indices = @transform_2, window_bounds = array<i64: 8, 256>}, {transform_indices = @transform_3, window_bounds = array<i64: 8, 256>}, {transform_indices = @transform_4, window_bounds = array<i64: 8, 256>}]} {
    %c0 = arith.constant 0 : index
    %c0_0 = arith.constant 0 : index
    %0 = vector.load %arg2[%c0, %c0_0] : memref<8x256xf32, #tpu.memory_space<vmem>>, vector<8x256xf32>
    %c0_1 = arith.constant 0 : index
    %1 = memref.load %arg1[%c0_1] : memref<2xf32, #tpu.memory_space<smem>>
    %c0_2 = arith.constant 0 : index
    %c0_3 = arith.constant 0 : index
    %2 = vector.load %arg3[%c0_2, %c0_3] : memref<8x256xf32, #tpu.memory_space<vmem>>, vector<8x256xf32>
    %3 = vector.broadcast %1 : f32 to vector<8x256xf32>
    %4 = arith.mulf %3, %2 : vector<8x256xf32>
    %5 = arith.addf %0, %4 : vector<8x256xf32>
    %c1 = arith.constant 1 : index
    %6 = memref.load %arg1[%c1] : memref<2xf32, #tpu.memory_space<smem>>
    %c0_4 = arith.constant 0 : index
    %c0_5 = arith.constant 0 : index
    %7 = vector.load %arg4[%c0_4, %c0_5] : memref<8x256xf32, #tpu.memory_space<vmem>>, vector<8x256xf32>
    %8 = vector.broadcast %6 : f32 to vector<8x256xf32>
    %9 = arith.mulf %8, %7 : vector<8x256xf32>
    %10 = arith.addf %5, %9 : vector<8x256xf32>
    %c0_6 = arith.constant 0 : index
    %c0_7 = arith.constant 0 : index
    %11 = vector.load %arg5[%c0_6, %c0_7] : memref<8x256xf32, #tpu.memory_space<vmem>>, vector<8x256xf32>
    tpu.vector_store %arg5[%c0_6, %c0_7], %10 {strides = array<i32>} : memref<8x256xf32, #tpu.memory_space<vmem>>, vector<8x256xf32>,
    return
  }
  func.func @transform_0(%arg0: i32) -> i32 {
    %c0_i32 = arith.constant 0 : i32
    %c0_i32_0 = arith.constant 0 : i32
    return %c0_i32 : i32
  }
  func.func @transform_1(%arg0: i32) -> (i32, i32) {
    %c0_i32 = arith.constant 0 : i32
    %c0_i32_0 = arith.constant 0 : i32
    return %arg0, %c0_i32 : i32, i32
  }
  func.func @transform_2(%arg0: i32) -> (i32, i32) {
    %c0_i32 = arith.constant 0 : i32
    %c0_i32_0 = arith.constant 0 : i32
    return %arg0, %c0_i32 : i32, i32
  }
  func.func @transform_3(%arg0: i32) -> (i32, i32) {
    %c0_i32 = arith.constant 0 : i32
    %c0_i32_0 = arith.constant 0 : i32
    return %arg0, %c0_i32 : i32, i32
  }
  func.func @transform_4(%arg0: i32) -> (i32, i32) {
    %c0_i32 = arith.constant 0 : i32
    %c0_i32_0 = arith.constant 0 : i32
    return %arg0, %c0_i32 : i32, i32
  }
}

</mosaic_0001>

<llo_original>
// kernel: reverse.0
$region0: #{reverse.0}
  %s0 = inlined_call_operand.vmem [shape: f32[2,4,16,7], index: 0, kind: input, shape index: {}]
  %s1 = inlined_call_operand.vmem [shape: f32[2,4,16,7], index: 1, kind: output, shape index: {}]
  $region1: #{reverse.0} parent=0
    #allocation0 [shape = 'u8[65536]{0}', space=vmem, size = 0x10000, scoped, tag = 'operand span for operand 0']
    #allocation1 [shape = 'u8[32768]{0}', space=vmem, size = 0x8000, scoped, tag = 'operand span for operand 1']
    %s2 = scalar_lea.vmem [#allocation0], 8
    // Predicated region
    $region2: #{reverse.0} parent=1 // pred_check
      _
    $region3: #{reverse.0} parent=1 // pred_check_branch
      %4 = sbr.rel (0) target = $region5
    $region4: #{reverse.0} parent=1 // pred_region
      // Predicated region
      $region6: #{reverse.0} parent=4 // pred_check
        _
      $region7: #{reverse.0} parent=4 // pred_check_branch
        %6 = sbr.rel (0) target = $region9
      $region8: #{reverse.0} parent=4 // pred_region
        // Predicated region
        $region21: #{reverse.0} parent=8 // pred_check
          _
        $region22: #{reverse.0} parent=8 // pred_check_branch
          %36 = sbr.rel (0) target = $region24
        $region23: #{reverse.0} parent=8 // pred_region
          loop: start=0, step=1, limit=1
          $region25: #{reverse.0} parent=23 // loop_pre_header
            _
          $region26: #{reverse.0} parent=23 // loop_header
            %s38 = sphi 0, %s42
            %p39 = scmp.ge.s32.totalorder %s38, 1
            %s43 = sphi %s0, %s0
            %s44 = sphi %s2, %s2
          $region27: #{reverse.0} parent=23 // loop_header_branch
            %41 = sbr.rel (%p39) target = $region31
          $region28: #{reverse.0} parent=23 // loop_body
            %v45 = vld [vmem:[%s43] sm:$0xff]
            %46 = vst [vmem:[%s44] sm:$0xff] %v45
            %v47 = vld [vmem:[%s43 + $0x8] sm:$0xff]
            %48 = vst [vmem:[%s44 + $0x10] sm:$0xff] %v47
            %v49 = vld [vmem:[%s43 + $0x10] sm:$0xff]
            %50 = vst [vmem:[%s44 + $0x20] sm:$0xff] %v49
            %v51 = vld [vmem:[%s43 + $0x18] sm:$0xff]
            %52 = vst [vmem:[%s44 + $0x30] sm:$0xff] %v51
            %v53 = vld [vmem:[%s43 + $0x20] sm:$0xff]
            %54 = vst [vmem:[%s44 + $0x40] sm:$0xff] %v53
            %v55 = vld [vmem:[%s43 + $0x28] sm:$0xff]
            %56 = vst [vmem:[%s44 + $0x50] sm:$0xff] %v55
            %v57 = vld [vmem:[%s43 + $0x30] sm:$0xff]
            %58 = vst [vmem:[%s44 + $0x60] sm:$0xff] %v57
            %v59 = vld [vmem:[%s43 + $0x38] sm:$0xff]
            %60 = vst [vmem:[%s44 + $0x70] sm:$0xff] %v59
          $region29: #{reverse.0} parent=23 // loop_footer
            %s42 = sadd.s32 1, %s38
          $region30: #{reverse.0} parent=23 // loop_footer_branch
            %37 = sbr.rel target = $region26
          $region31: #{reverse.0} parent=23 // loop_exit
            _
        $region24: #{reverse.0} parent=8 // pred_fallthru
          _
        // Predicated region
        $region32: #{reverse.0} parent=8 // pred_check
          _
        $region33: #{reverse.0} parent=8 // pred_check_branch
          %62 = sbr.rel target = $region35
        $region34: #{reverse.0} parent=8 // pred_region
          _
        $region35: #{reverse.0} parent=8 // pred_fallthru
          _
      $region9: #{reverse.0} parent=4 // pred_fallthru
        _
      // Predicated region
      $region10: #{reverse.0} parent=4 // pred_check
        _
      $region11: #{reverse.0} parent=4 // pred_check_branch
        %8 = sbr.rel target = $region13
      $region12: #{reverse.0} parent=4 // pred_region
        %s10 = ssub.s32 256, 1
        loop: start=0, step=1, limit=1
        $region14: #{reverse.0} parent=12 // loop_pre_header
          _
        $region15: #{reverse.0} parent=12 // loop_header
          %s12 = sphi 0, %s16
          %p13 = scmp.ge.s32.totalorder %s12, 1
          %s17 = sphi %s0, %s0
          %s18 = sphi %s2, %s2
        $region16: #{reverse.0} parent=12 // loop_header_branch
          %15 = sbr.rel (%p13) target = $region20
        $region17: #{reverse.0} parent=12 // loop_body
          %v19 = vld [vmem:[%s17] sm:%s10]
          %20 = vst [vmem:[%s18] sm:%s10] %v19
          %v21 = vld [vmem:[%s17 + $0x8] sm:%s10]
          %22 = vst [vmem:[%s18 + $0x10] sm:%s10] %v21
          %v23 = vld [vmem:[%s17 + $0x10] sm:%s10]
          %24 = vst [vmem:[%s18 + $0x20] sm:%s10] %v23
          %v25 = vld [vmem:[%s17 + $0x18] sm:%s10]
          %26 = vst [vmem:[%s18 + $0x30] sm:%s10] %v25
          %v27 = vld [vmem:[%s17 + $0x20] sm:%s10]
          %28 = vst [vmem:[%s18 + $0x40] sm:%s10] %v27
          %v29 = vld [vmem:[%s17 + $0x28] sm:%s10]
          %30 = vst [vmem:[%s18 + $0x50] sm:%s10] %v29
          %v31 = vld [vmem:[%s17 + $0x30] sm:%s10]
          %32 = vst [vmem:[%s18 + $0x60] sm:%s10] %v31
          %v33 = vld [vmem:[%s17 + $0x38] sm:%s10]
          %34 = vst [vmem:[%s18 + $0x70] sm:%s10] %v33
        $region18: #{reverse.0} parent=12 // loop_footer
          %s16 = sadd.s32 1, %s12
        $region19: #{reverse.0} parent=12 // loop_footer_branch
          %11 = sbr.rel target = $region15
        $region20: #{reverse.0} parent=12 // loop_exit
          _
      $region13: #{reverse.0} parent=4 // pred_fallthru
        _
    $region5: #{reverse.0} parent=1 // pred_fallthru
      _
    %63 = vnop
    %s64 = scalar_lea.vmem [#allocation0], 7
    %v65 = vld [vmem:[%s64] ss:$-1 sm:$0xff]
    %v66 = vrot.slane %v65, 1
    %67 = vst [vmem:[#allocation1] sm:$0xff] %v66
    %s68 = scalar_lea.vmem [#allocation0], 8
    %s69 = scalar_lea.vmem %s68, 7 [#allocation0]
    %v70 = vld [vmem:[%s69] ss:$-1 sm:$0xff]
    %v71 = vrot.slane %v70, 1
    %v72 = vlaneseq
    %v73 = vshrl.u32 %v72, 7
    %vm74 = vcmp.lt.s32.totalorder %v73, 7
    %75 = vst.msk [vmem:[#allocation1] sm:$0xff] %vm74, %v71
    %s76 = scalar_lea.vmem [#allocation1], 8
    %s77 = scalar_lea.vmem [#allocation0], 16
    %s78 = scalar_lea.vmem %s77, 7 [#allocation0]
    %v79 = vld [vmem:[%s78] ss:$-1 sm:$0xff]
    %v80 = vrot.slane %v79, 1
    %81 = vst [vmem:[%s76] sm:$0xff] %v80
    %s82 = scalar_lea.vmem %s77, 8 [#allocation0]
    %s83 = scalar_lea.vmem %s82, 7 [#allocation0]
    %v84 = vld [vmem:[%s83] ss:$-1 sm:$0xff]
    %v85 = vrot.slane %v84, 1
    %v86 = vlaneseq
    %v87 = vshrl.u32 %v86, 7
    %vm88 = vcmp.lt.s32.totalorder %v87, 7
    %89 = vst.msk [vmem:[%s76] sm:$0xff] %vm88, %v85
    %s90 = scalar_lea.vmem [#allocation1], 16
    %s91 = scalar_lea.vmem [#allocation0], 32
    %s92 = scalar_lea.vmem %s91, 7 [#allocation0]
    %v93 = vld [vmem:[%s92] ss:$-1 sm:$0xff]
    %v94 = vrot.slane %v93, 1
    %95 = vst [vmem:[%s90] sm:$0xff] %v94
    %s96 = scalar_lea.vmem %s91, 8 [#allocation0]
    %s97 = scalar_lea.vmem %s96, 7 [#allocation0]
    %v98 = vld [vmem:[%s97] ss:$-1 sm:$0xff]
    %v99 = vrot.slane %v98, 1
    %v100 = vlaneseq
    %v101 = vshrl.u32 %v100, 7
    %vm102 = vcmp.lt.s32.totalorder %v101, 7
    %103 = vst.msk [vmem:[%s90] sm:$0xff] %vm102, %v99
    %s104 = scalar_lea.vmem [#allocation1], 24
    %s105 = scalar_lea.vmem [#allocation0], 48
    %s106 = scalar_lea.vmem %s105, 7 [#allocation0]
    %v107 = vld [vmem:[%s106] ss:$-1 sm:$0xff]
    %v108 = vrot.slane %v107, 1
    %109 = vst [vmem:[%s104] sm:$0xff] %v108
    %s110 = scalar_lea.vmem %s105, 8 [#allocation0]
    %s111 = scalar_lea.vmem %s110, 7 [#allocation0]
    %v112 = vld [vmem:[%s111] ss:$-1 sm:$0xff]
    %v113 = vrot.slane %v112, 1
    %v114 = vlaneseq
    %v115 = vshrl.u32 %v114, 7
    %vm116 = vcmp.lt.s32.totalorder %v115, 7
    %117 = vst.msk [vmem:[%s104] sm:$0xff] %vm116, %v113
    %s118 = scalar_lea.vmem [#allocation1], 32
    %s119 = scalar_lea.vmem [#allocation0], 64
    %s120 = scalar_lea.vmem %s119, 7 [#allocation0]
    %v121 = vld [vmem:[%s120] ss:$-1 sm:$0xff]
    %v122 = vrot.slane %v121, 1
    %123 = vst [vmem:[%s118] sm:$0xff] %v122
    %s124 = scalar_lea.vmem %s119, 8 [#allocation0]
    %s125 = scalar_lea.vmem %s124, 7 [#allocation0]
    %v126 = vld [vmem:[%s125] ss:$-1 sm:$0xff]
    %v127 = vrot.slane %v126, 1
    %v128 = vlaneseq
    %v129 = vshrl.u32 %v128, 7
    %vm130 = vcmp.lt.s32.totalorder %v129, 7
    %131 = vst.msk [vmem:[%s118] sm:$0xff] %vm130, %v127
    %s132 = scalar_lea.vmem [#allocation1], 40
    %s133 = scalar_lea.vmem [#allocation0], 80
    %s134 = scalar_lea.vmem %s133, 7 [#allocation0]
    %v135 = vld [vmem:[%s134] ss:$-1 sm:$0xff]
    %v136 = vrot.slane %v135, 1
    %137 = vst [vmem:[%s132] sm:$0xff] %v136
    %s138 = scalar_lea.vmem %s133, 8 [#allocation0]
    %s139 = scalar_lea.vmem %s138, 7 [#allocation0]
    %v140 = vld [vmem:[%s139] ss:$-1 sm:$0xff]
    %v141 = vrot.slane %v140, 1
    %v142 = vlaneseq
    %v143 = vshrl.u32 %v142, 7
    %vm144 = vcmp.lt.s32.totalorder %v143, 7
    %145 = vst.msk [vmem:[%s132] sm:$0xff] %vm144, %v141
    %s146 = scalar_lea.vmem [#allocation1], 48
    %s147 = scalar_lea.vmem [#allocation0], 96
    %s148 = scalar_lea.vmem %s147, 7 [#allocation0]
    %v149 = vld [vmem:[%s148] ss:$-1 sm:$0xff]
    %v150 = vrot.slane %v149, 1
    %151 = vst [vmem:[%s146] sm:$0xff] %v150
    %s152 = scalar_lea.vmem %s147, 8 [#allocation0]
    %s153 = scalar_lea.vmem %s152, 7 [#allocation0]
    %v154 = vld [vmem:[%s153] ss:$-1 sm:$0xff]
    %v155 = vrot.slane %v154, 1
    %v156 = vlaneseq
    %v157 = vshrl.u32 %v156, 7
    %vm158 = vcmp.lt.s32.totalorder %v157, 7
    %159 = vst.msk [vmem:[%s146] sm:$0xff] %vm158, %v155
    %s160 = scalar_lea.vmem [#allocation1], 56
    %s161 = scalar_lea.vmem [#allocation0], 112
    %s162 = scalar_lea.vmem %s161, 7 [#allocation0]
    %v163 = vld [vmem:[%s162] ss:$-1 sm:$0xff]
    %v164 = vrot.slane %v163, 1
    %165 = vst [vmem:[%s160] sm:$0xff] %v164
    %s166 = scalar_lea.vmem %s161, 8 [#allocation0]
    %s167 = scalar_lea.vmem %s166, 7 [#allocation0]
    %v168 = vld [vmem:[%s167] ss:$-1 sm:$0xff]
    %v169 = vrot.slane %v168, 1
    %v170 = vlaneseq
    %v171 = vshrl.u32 %v170, 7
    %vm172 = vcmp.lt.s32.totalorder %v171, 7
    %173 = vst.msk [vmem:[%s160] sm:$0xff] %vm172, %v169
    // Predicated region
    $region36: #{reverse.0} parent=1 // pred_check
      _
    $region37: #{reverse.0} parent=1 // pred_check_branch
      %175 = sbr.rel (0) target = $region39
    $region38: #{reverse.0} parent=1 // pred_region
      // Predicated region
      $region40: #{reverse.0} parent=38 // pred_check
        _
      $region41: #{reverse.0} parent=38 // pred_check_branch
        %177 = sbr.rel (0) target = $region43
      $region42: #{reverse.0} parent=38 // pred_region
        // Predicated region
        $region55: #{reverse.0} parent=42 // pred_check
          _
        $region56: #{reverse.0} parent=42 // pred_check_branch
          %207 = sbr.rel (0) target = $region58
        $region57: #{reverse.0} parent=42 // pred_region
          loop: start=0, step=1, limit=1
          $region59: #{reverse.0} parent=57 // loop_pre_header
            _
          $region60: #{reverse.0} parent=57 // loop_header
            %s209 = sphi 0, %s213
            %p210 = scmp.ge.s32.totalorder %s209, 1
            %s214 = sphi [#allocation1], [#allocation1]
            %s215 = sphi %s1, %s1
          $region61: #{reverse.0} parent=57 // loop_header_branch
            %212 = sbr.rel (%p210) target = $region65
          $region62: #{reverse.0} parent=57 // loop_body
            %v216 = vld [vmem:[%s214] sm:$0xff]
            %217 = vst [vmem:[%s215] sm:$0xff] %v216
            %v218 = vld [vmem:[%s214 + $0x8] sm:$0xff]
            %219 = vst [vmem:[%s215 + $0x8] sm:$0xff] %v218
            %v220 = vld [vmem:[%s214 + $0x10] sm:$0xff]
            %221 = vst [vmem:[%s215 + $0x10] sm:$0xff] %v220
            %v222 = vld [vmem:[%s214 + $0x18] sm:$0xff]
            %223 = vst [vmem:[%s215 + $0x18] sm:$0xff] %v222
            %v224 = vld [vmem:[%s214 + $0x20] sm:$0xff]
            %225 = vst [vmem:[%s215 + $0x20] sm:$0xff] %v224
            %v226 = vld [vmem:[%s214 + $0x28] sm:$0xff]
            %227 = vst [vmem:[%s215 + $0x28] sm:$0xff] %v226
            %v228 = vld [vmem:[%s214 + $0x30] sm:$0xff]
            %229 = vst [vmem:[%s215 + $0x30] sm:$0xff] %v228
            %v230 = vld [vmem:[%s214 + $0x38] sm:$0xff]
            %231 = vst [vmem:[%s215 + $0x38] sm:$0xff] %v230
          $region63: #{reverse.0} parent=57 // loop_footer
            %s213 = sadd.s32 1, %s209
          $region64: #{reverse.0} parent=57 // loop_footer_branch
            %208 = sbr.rel target = $region60
          $region65: #{reverse.0} parent=57 // loop_exit
            _
        $region58: #{reverse.0} parent=42 // pred_fallthru
          _
        // Predicated region
        $region66: #{reverse.0} parent=42 // pred_check
          _
        $region67: #{reverse.0} parent=42 // pred_check_branch
          %233 = sbr.rel target = $region69
        $region68: #{reverse.0} parent=42 // pred_region
          _
        $region69: #{reverse.0} parent=42 // pred_fallthru
          _
      $region43: #{reverse.0} parent=38 // pred_fallthru
        _
      // Predicated region
      $region44: #{reverse.0} parent=38 // pred_check
        _
      $region45: #{reverse.0} parent=38 // pred_check_branch
        %179 = sbr.rel target = $region47
      $region46: #{reverse.0} parent=38 // pred_region
        %s181 = ssub.s32 256, 1
        loop: start=0, step=1, limit=1
        $region48: #{reverse.0} parent=46 // loop_pre_header
          _
        $region49: #{reverse.0} parent=46 // loop_header
          %s183 = sphi 0, %s187
          %p184 = scmp.ge.s32.totalorder %s183, 1
          %s188 = sphi [#allocation1], [#allocation1]
          %s189 = sphi %s1, %s1
        $region50: #{reverse.0} parent=46 // loop_header_branch
          %186 = sbr.rel (%p184) target = $region54
        $region51: #{reverse.0} parent=46 // loop_body
          %v190 = vld [vmem:[%s188] sm:%s181]
          %191 = vst [vmem:[%s189] sm:%s181] %v190
          %v192 = vld [vmem:[%s188 + $0x8] sm:%s181]
          %193 = vst [vmem:[%s189 + $0x8] sm:%s181] %v192
          %v194 = vld [vmem:[%s188 + $0x10] sm:%s181]
          %195 = vst [vmem:[%s189 + $0x10] sm:%s181] %v194
          %v196 = vld [vmem:[%s188 + $0x18] sm:%s181]
          %197 = vst [vmem:[%s189 + $0x18] sm:%s181] %v196
          %v198 = vld [vmem:[%s188 + $0x20] sm:%s181]
          %199 = vst [vmem:[%s189 + $0x20] sm:%s181] %v198
          %v200 = vld [vmem:[%s188 + $0x28] sm:%s181]
          %201 = vst [vmem:[%s189 + $0x28] sm:%s181] %v200
          %v202 = vld [vmem:[%s188 + $0x30] sm:%s181]
          %203 = vst [vmem:[%s189 + $0x30] sm:%s181] %v202
          %v204 = vld [vmem:[%s188 + $0x38] sm:%s181]
          %205 = vst [vmem:[%s189 + $0x38] sm:%s181] %v204
        $region52: #{reverse.0} parent=46 // loop_footer
          %s187 = sadd.s32 1, %s183
        $region53: #{reverse.0} parent=46 // loop_footer_branch
          %182 = sbr.rel target = $region49
        $region54: #{reverse.0} parent=46 // loop_exit
          _
      $region47: #{reverse.0} parent=38 // pred_fallthru
        _
    $region39: #{reverse.0} parent=1 // pred_fallthru
      _
    %234 = vnop

// kernel: block_forward.4
$region0: #{block_forward.4}
  #allocation0 [shape = 'u32[]', space=smem, size = 0x4, offset = 0x4, fixed_abs, tag = 'smem constant byte address 0x4 - core index']
  #allocation1 [shape = 'u32[144,128]{1,0:T(1,128)}', space=vmem, size = 0x12000, scoped, tag = 'internal scratch']
  %s0 = inlined_call_operand.vmem [shape: bf16[2,8,144], index: 0, kind: input, shape index: {}]
  %s1 = inlined_call_operand.vmem [shape: bf16[16,8], index: 1, kind: input, shape index: {}]
  %s2 = inlined_call_operand.vmem [shape: f32[16,1], index: 2, kind: input, shape index: {}]
  %s3 = inlined_call_operand.vmem [shape: bf16[8,16], index: 3, kind: input, shape index: {}]
  %s4 = inlined_call_operand.vmem [shape: f32[8,1], index: 4, kind: input, shape index: {}]
  %s5 = inlined_call_operand.vmem [shape: f32[2,8,144], index: 5, kind: output, shape index: {}]
  %s6 = sld [smem:[#allocation0]]
  $region53: #{block_forward.4} parent=0
    _
  %s8 = ssub.s32 1, %s6
  %s9 = scalar_select 0, %s8, %s6
  loop: start=0, step=1, limit=4
  $region2: #{block_forward.4} parent=0 // loop_pre_header
    _
  $region3: #{block_forward.4} parent=0 // loop_header
    %s11 = sphi 0, %s15
    %p12 = scmp.ge.s32.totalorder %s11, 4
    %s21 = sphi 0, %s23
    %s24 = sphi 0, %s21
    %s25 = sphi 0, %s24
    %s41 = sphi 0, %s25
    %s45 = sphi 0, %s45
    %s47 = sphi 0, %s45
    %s48 = sphi 0, %s47
    %s62 = sphi 0, %s48
    %s66 = sphi 0, %s66
    %s68 = sphi 0, %s66
    %s69 = sphi 0, %s68
    %s83 = sphi 0, %s69
    %s87 = sphi 0, %s87
    %s89 = sphi 0, %s87
    %s90 = sphi 0, %s89
    %s104 = sphi 0, %s90
    %s108 = sphi 0, %s108
    %s110 = sphi 0, %s108
    %s111 = sphi 0, %s110
    %s125 = sphi 0, %s111
    %s131 = sphi 0, %s133
    %s134 = sphi 0, %s131
    %s135 = sphi 0, %s134
    %s151 = sphi 0, %s135
  $region4: #{block_forward.4} parent=0 // loop_header_branch
    %14 = sbr.rel (%p12) target = $region8
  $region5: #{block_forward.4} parent=0 // loop_body
    %s16 = ssub.s32 %s11, 1
    %s17 = ssub.s32 %s11, 2
    %s18 = sadd.s32 %s11, 1
    %s19 = ssub.s32 %s11, %s18
    %p20 = scmp.eq.s32.totalorder %s19, 0
    %s22 = sadd.s32 %s21, 1
    %s23 = scalar_select %p20, %s21, %s22
    %p26 = pneg %p20
    %p27 = scmp.eq.s32.totalorder %s11, 1
    %p28 = por %p26, %p27
    %p29 = scmp.ne.s32.totalorder %s21, %s24
    %p30 = scmp.eq.s32.totalorder %s11, 0
    %p31 = por %p29, %p30
    %p32 = scmp.ne.s32.totalorder %s21, %s24
    %p33 = scmp.eq.s32.totalorder %s16, 1
    %p34 = por %p32, %p33
    %p35 = scmp.ne.s32.totalorder %s24, %s25
    %p36 = scmp.eq.s32.totalorder %s16, 0
    %p37 = por %p35, %p36
    %p38 = scmp.ne.s32.totalorder %s24, %s25
    %p39 = scmp.eq.s32.totalorder %s17, 1
    %p40 = por %p38, %p39
    %p42 = scmp.ne.s32.totalorder %s25, %s41
    %p43 = scmp.eq.s32.totalorder %s17, 0
    %p44 = por %p42, %p43
    %s46 = sadd.s32 %s45, 1
    %p49 = scmp.eq.s32.totalorder %s11, 1
    %p50 = scmp.ne.s32.totalorder %s45, %s47
    %p51 = scmp.eq.s32.totalorder %s11, 0
    %p52 = por %p50, %p51
    %p53 = scmp.ne.s32.totalorder %s45, %s47
    %p54 = scmp.eq.s32.totalorder %s16, 1
    %p55 = por %p53, %p54
    %p56 = scmp.ne.s32.totalorder %s47, %s48
    %p57 = scmp.eq.s32.totalorder %s16, 0
    %p58 = por %p56, %p57
    %p59 = scmp.ne.s32.totalorder %s47, %s48
    %p60 = scmp.eq.s32.totalorder %s17, 1
    %p61 = por %p59, %p60
    %p63 = scmp.ne.s32.totalorder %s48, %s62
    %p64 = scmp.eq.s32.totalorder %s17, 0
    %p65 = por %p63, %p64
    %s67 = sadd.s32 %s66, 1
    %p70 = scmp.eq.s32.totalorder %s11, 1
    %p71 = scmp.ne.s32.totalorder %s66, %s68
    %p72 = scmp.eq.s32.totalorder %s11, 0
    %p73 = por %p71, %p72
    %p74 = scmp.ne.s32.totalorder %s66, %s68
    %p75 = scmp.eq.s32.totalorder %s16, 1
    %p76 = por %p74, %p75
    %p77 = scmp.ne.s32.totalorder %s68, %s69
    %p78 = scmp.eq.s32.totalorder %s16, 0
    %p79 = por %p77, %p78
    %p80 = scmp.ne.s32.totalorder %s68, %s69
    %p81 = scmp.eq.s32.totalorder %s17, 1
    %p82 = por %p80, %p81
    %p84 = scmp.ne.s32.totalorder %s69, %s83
    %p85 = scmp.eq.s32.totalorder %s17, 0
    %p86 = por %p84, %p85
    %s88 = sadd.s32 %s87, 1
    %p91 = scmp.eq.s32.totalorder %s11, 1
    %p92 = scmp.ne.s32.totalorder %s87, %s89
    %p93 = scmp.eq.s32.totalorder %s11, 0
    %p94 = por %p92, %p93
    %p95 = scmp.ne.s32.totalorder %s87, %s89
    %p96 = scmp.eq.s32.totalorder %s16, 1
    %p97 = por %p95, %p96
    %p98 = scmp.ne.s32.totalorder %s89, %s90
    %p99 = scmp.eq.s32.totalorder %s16, 0
    %p100 = por %p98, %p99
    %p101 = scmp.ne.s32.totalorder %s89, %s90
    %p102 = scmp.eq.s32.totalorder %s17, 1
    %p103 = por %p101, %p102
    %p105 = scmp.ne.s32.totalorder %s90, %s104
    %p106 = scmp.eq.s32.totalorder %s17, 0
    %p107 = por %p105, %p106
    %s109 = sadd.s32 %s108, 1
    %p112 = scmp.eq.s32.totalorder %s11, 1
    %p113 = scmp.ne.s32.totalorder %s108, %s110
    %p114 = scmp.eq.s32.totalorder %s11, 0
    %p115 = por %p113, %p114
    %p116 = scmp.ne.s32.totalorder %s108, %s110
    %p117 = scmp.eq.s32.totalorder %s16, 1
    %p118 = por %p116, %p117
    %p119 = scmp.ne.s32.totalorder %s110, %s111
    %p120 = scmp.eq.s32.totalorder %s16, 0
    %p121 = por %p119, %p120
    %p122 = scmp.ne.s32.totalorder %s110, %s111
    %p123 = scmp.eq.s32.totalorder %s17, 1
    %p124 = por %p122, %p123
    %p126 = scmp.ne.s32.totalorder %s111, %s125
    %p127 = scmp.eq.s32.totalorder %s17, 0
    %p128 = por %p126, %p127
    %s129 = ssub.s32 %s11, %s18
    %p130 = scmp.eq.s32.totalorder %s129, 0
    %s132 = sadd.s32 %s131, 1
    %s133 = scalar_select %p130, %s131, %s132
    %p136 = pneg %p130
    %p137 = scmp.eq.s32.totalorder %s11, 1
    %p138 = por %p136, %p137
    %p139 = scmp.ne.s32.totalorder %s131, %s134
    %p140 = scmp.eq.s32.totalorder %s11, 0
    %p141 = por %p139, %p140
    %p142 = scmp.ne.s32.totalorder %s131, %s134
    %p143 = scmp.eq.s32.totalorder %s16, 1
    %p144 = por %p142, %p143
    %p145 = scmp.ne.s32.totalorder %s134, %s135
    %p146 = scmp.eq.s32.totalorder %s16, 0
    %p147 = por %p145, %p146
    %p148 = scmp.ne.s32.totalorder %s134, %s135
    %p149 = scmp.eq.s32.totalorder %s17, 1
    %p150 = por %p148, %p149
    %p152 = scmp.ne.s32.totalorder %s135, %s151
    %p153 = scmp.eq.s32.totalorder %s17, 0
    %p154 = por %p152, %p153
    %p155 = scmp.le.s32.totalorder 1, %s11
    %p156 = scmp.lt.s32.totalorder %s11, 3
    %p157 = pnand %p155, %p156
    %p158 = pneg %p157
    // Predicated region
    $region9: #{block_forward.4} parent=5 // pred_check
      _
    $region10: #{block_forward.4} parent=5 // pred_check_branch
      %160 = sbr.rel (%p157) target = $region12
    $region11: #{block_forward.4} parent=5 // pred_region
      %s161 = ssub.s32 %s11, 1
      // Predicated region
      $region13: #{block_forward.4} parent=11 // pred_check
        %p162 = pneg %p58
      $region14: #{block_forward.4} parent=11 // pred_check_branch
        %164 = sbr.rel (%p162) target = $region16
      $region15: #{block_forward.4} parent=11 // pred_region
        _
      $region16: #{block_forward.4} parent=11 // pred_fallthru
        _
      // Predicated region
      $region17: #{block_forward.4} parent=11 // pred_check
        %p165 = pneg %p79
      $region18: #{block_forward.4} parent=11 // pred_check_branch
        %167 = sbr.rel (%p165) target = $region20
      $region19: #{block_forward.4} parent=11 // pred_region
        _
      $region20: #{block_forward.4} parent=11 // pred_fallthru
        _
      // Predicated region
      $region21: #{block_forward.4} parent=11 // pred_check
        %p168 = pneg %p100
      $region22: #{block_forward.4} parent=11 // pred_check_branch
        %170 = sbr.rel (%p168) target = $region24
      $region23: #{block_forward.4} parent=11 // pred_region
        _
      $region24: #{block_forward.4} parent=11 // pred_fallthru
        _
      // Predicated region
      $region25: #{block_forward.4} parent=11 // pred_check
        %p171 = pneg %p121
      $region26: #{block_forward.4} parent=11 // pred_check_branch
        %173 = sbr.rel (%p171) target = $region28
      $region27: #{block_forward.4} parent=11 // pred_region
        _
      $region28: #{block_forward.4} parent=11 // pred_fallthru
        _
    $region12: #{block_forward.4} parent=5 // pred_fallthru
      _
    %p174 = scmp.lt.s32.totalorder %s11, 2
    // Predicated region
    $region29: #{block_forward.4} parent=5 // pred_check
      %p175 = pneg %p174
    $region30: #{block_forward.4} parent=5 // pred_check_branch
      %177 = sbr.rel (%p175) target = $region32
    $region31: #{block_forward.4} parent=5 // pred_region
      // Predicated region
      $region33: #{block_forward.4} parent=31 // pred_check
        %p178 = pneg %p31
      $region34: #{block_forward.4} parent=31 // pred_check_branch
        %180 = sbr.rel (%p178) target = $region36
      $region35: #{block_forward.4} parent=31 // pred_region
        %p181 = scmp.lt.s32.totalorder %s11, 1
        %s182 = scalar_select %p181, %s11, 1
        %s183 = smul.addr %s182, 2
        %s184 = smul.addr %s183, 4
        %s185 = scalar_lea.vmem %s0, %s184
      $region36: #{block_forward.4} parent=31 // pred_fallthru
        _
    $region32: #{block_forward.4} parent=5 // pred_fallthru
      _
    %p186 = scmp.le.s32.totalorder 1, %s11
    %p187 = scmp.lt.s32.totalorder %s11, 3
    %p188 = pnand %p186, %p187
    %p189 = pneg %p188
    // Predicated region
    $region37: #{block_forward.4} parent=5 // pred_check
      _
    $region38: #{block_forward.4} parent=5 // pred_check_branch
      %191 = sbr.rel (%p188) target = $region40
    $region39: #{block_forward.4} parent=5 // pred_region
      %s192 = ssub.s32 %s11, 1
      %p193 = scmp.lt.s32.totalorder %s16, 1
      %s194 = scalar_select %p193, %s16, 1
      %s195 = smul.addr %s194, 2
      %s196 = smul.addr %s195, 4
      %s197 = scalar_lea.vmem %s0, %s196
      %p198 = pneg %p37
      %p199 = pneg %p34
      %p200 = pneg %p58
      %p201 = pneg %p55
      %p202 = pneg %p79
      %p203 = pneg %p76
      %p204 = pneg %p100
      %p205 = pneg %p97
      %p206 = pneg %p121
      %p207 = pneg %p118
      %p208 = pneg %p147
      %p209 = pneg %p144
      %p210 = scmp.lt.s32.totalorder %s16, 1
      %s211 = scalar_select %p210, %s16, 1
      %s212 = smul.addr %s211, 2
      %s213 = smul.addr %s212, 8
      %s214 = scalar_lea.vmem %s5, %s213
      %p215 = scmp.lt.s32.totalorder %s16, 1
      %s216 = scalar_select %p215, %s16, 1
      %s217 = smul.addr %s216, 2
      %s218 = smul.addr %s217, 4
      %s219 = scalar_lea.vmem %s0, %s218
      %p220 = scmp.lt.s32.totalorder %s16, 1
      %s221 = scalar_select %p220, %s16, 1
      %s222 = smul.addr %s221, 2
      %s223 = smul.addr %s222, 8
      %s224 = scalar_lea.vmem %s5, %s223
      %v226 = vld [vmem:[%s219] sm:$0xff]
      %v227 = vld [vmem:[%s1] sm:$0xf]
      %v228 = vld [vmem:[%s1 + $0x4] sm:$0xf]
      %v229 = vld [vmem:[%s2] sm:$0xff]
      %v230 = vld [vmem:[%s2 + $0x8] sm:$0xff]
      %232 = vset.pattern.permute.xlu0 0
      %233 = vperm.xlu0 %232, %v229
      %v234 = vpop.permute.xlu0 %233
      %237 = vset.pattern.permute.xlu0 0
      %238 = vperm.xlu0 %237, %v230
      %v239 = vpop.permute.xlu0 %238
      %v243 = vunpack.c.l.b16 %v227
      %v244 = vunpack.c.l.b16 %v228
      %v245 = vpack.c.b16 %v244, %v243
      %v247 = vunpack.c.l.b16 %v226
      %v248 = vunpack.c.h.b16 %v226
      %v249 = vpack.c.b16 %v247, %v247
      %v250 = vpack.c.b16 %v248, %v248
      %vm251 = vcmask 64512
      %v253 = vsel %vm251, %v245, 0
      %vm255 = vcmask 1043456
      %v257 = vsel %vm255, %v249, 0
      %v260 = vsel %vm255, %v250, 0
      %262 = vmatprep.subr.bf16.mxu0 0
      %263 = vmatpush1.bf16.msra.mxu0 0
      %264 = vmatprep.subr.bf16.mxu0 0
      %265 = vmatpush1.bf16.msra.mxu0 0
      %266 = vmatprep.subr.bf16.mxu0 0
      %267 = vmatpush1.bf16.msra.mxu0 0
      %268 = vmatprep.subr.bf16.mxu0 0
      %269 = vmatpush1.bf16.msra.mxu0 0
      %270 = vmatprep.subr.bf16.mxu0 0
      %271 = vmatpush1.bf16.msra.mxu0 0
      %272 = vmatprep.subr.bf16.mxu0 0
      %273 = vmatpush1.bf16.msra.mxu0 0
      %274 = vmatprep.subr.bf16.mxu0 0
      %275 = vmatpush1.bf16.msra.mxu0 0
      %276 = vmatprep.subr.bf16.mxu0 %v260
      %277 = vmatpush1.bf16.msra.mxu0 %v257
      %278 = vmatprep.subr.bf16.mxu0 0
      %279 = vmatpush2.bf16.msra.mxu0 0
      %280 = vmatprep.subr.bf16.mxu0 0
      %281 = vmatpush2.bf16.msra.mxu0 0
      %282 = vmatprep.subr.bf16.mxu0 0
      %283 = vmatpush2.bf16.msra.mxu0 0
      %284 = vmatprep.subr.bf16.mxu0 0
      %285 = vmatpush2.bf16.msra.mxu0 0
      %286 = vmatprep.subr.bf16.mxu0 0
      %287 = vmatpush2.bf16.msra.mxu0 0
      %288 = vmatprep.subr.bf16.mxu0 0
      %289 = vmatpush2.bf16.msra.mxu0 0
      %290 = vmatprep.subr.bf16.mxu0 0
      %291 = vmatpush2.bf16.msra.mxu0 0
      %292 = vmatprep.subr.bf16.mxu0 0
      %293 = vmatpush2.bf16.msra.mxu0 0
      %294 = vmatprep.mubr.bf16.mxu0 0
      %295 = vmatmul.mubr.bf16.gmra.mxu0 %v253
      %v296 = vpop.f32.mrf.mxu0
      %v297 = vadd.f32 %v234, %v296
      %v298 = vpop.f32.mrf.mxu0
      %v299 = vadd.f32 %v234, %v298
      %v300 = vpop.f32.mrf.mxu0
      %v301 = vadd.f32 %v239, %v300
      %v302 = vpop.f32.mrf.mxu0
      %v303 = vadd.f32 %v239, %v302
      %304 = vdwg.mxu0
      %v305 = vmax.f32 %v297, 0.0
      %v306 = vmax.f32 %v299, 0.0
      %v307 = vmax.f32 %v301, 0.0
      %v308 = vmax.f32 %v303, 0.0
      %v309 = vpack.c.bf16 %v307, %v305
      %v310 = vpack.c.bf16 %v308, %v306
      %v311 = vld [vmem:[%s3] sm:$0xf]
      %v312 = vld [vmem:[%s4] sm:$0xff]
      %314 = vset.pattern.permute.xlu0 0
      %315 = vperm.xlu0 %314, %v312
      %v316 = vpop.permute.xlu0 %315
      %vm318 = vcmask 130048
      %v320 = vsel %vm318, %v311, 0
      %322 = vmatprep.subr.bf16.mxu0 0
      %323 = vmatpush1.bf16.msra.mxu0 0
      %324 = vmatprep.subr.bf16.mxu0 0
      %325 = vmatpush1.bf16.msra.mxu0 0
      %326 = vmatprep.subr.bf16.mxu0 0
      %327 = vmatpush1.bf16.msra.mxu0 0
      %328 = vmatprep.subr.bf16.mxu0 0
      %329 = vmatpush1.bf16.msra.mxu0 0
      %330 = vmatprep.subr.bf16.mxu0 0
      %331 = vmatpush1.bf16.msra.mxu0 0
      %332 = vmatprep.subr.bf16.mxu0 0
      %333 = vmatpush1.bf16.msra.mxu0 0
      %334 = vmatprep.subr.bf16.mxu0 0
      %335 = vmatpush1.bf16.msra.mxu0 0
      %336 = vmatprep.subr.bf16.mxu0 %v310
      %337 = vmatpush1.bf16.msra.mxu0 %v309
      %338 = vmatprep.subr.bf16.mxu0 0
      %339 = vmatpush2.bf16.msra.mxu0 0
      %340 = vmatprep.subr.bf16.mxu0 0
      %341 = vmatpush2.bf16.msra.mxu0 0
      %342 = vmatprep.subr.bf16.mxu0 0
      %343 = vmatpush2.bf16.msra.mxu0 0
      %344 = vmatprep.subr.bf16.mxu0 0
      %345 = vmatpush2.bf16.msra.mxu0 0
      %346 = vmatprep.subr.bf16.mxu0 0
      %347 = vmatpush2.bf16.msra.mxu0 0
      %348 = vmatprep.subr.bf16.mxu0 0
      %349 = vmatpush2.bf16.msra.mxu0 0
      %350 = vmatprep.subr.bf16.mxu0 0
      %351 = vmatpush2.bf16.msra.mxu0 0
      %352 = vmatprep.subr.bf16.mxu0 0
      %353 = vmatpush2.bf16.msra.mxu0 0
      %354 = vmatprep.mubr.bf16.mxu0 0
      %355 = vmatmul.mubr.bf16.gmra.mxu0 %v320
      %v356 = vpop.f32.mrf.mxu0
      %v357 = vadd.f32 %v316, %v356
      %v358 = vpop.f32.mrf.mxu0
      %v359 = vadd.f32 %v316, %v358
      %v360 = vpop.f32.mrf.mxu0
      %v361 = vpop.f32.mrf.mxu0
      %362 = vdwg.mxu0
      %363 = vst [vmem:[%s224] sm:$0xff] %v357
      %364 = vst.msk [vmem:[%s224 + $0x8] sm:$0xff] %vm318, %v359
      %p365 = scmp.lt.s32.totalorder %s16, 1
      %s366 = scalar_select %p365, %s16, 1
      %s367 = smul.addr %s366, 2
      %s368 = smul.addr %s367, 8
      %s369 = scalar_lea.vmem %s5, %s368
      // Predicated region
      $region41: #{block_forward.4} parent=39 // pred_check
        %p370 = pneg %p144
      $region42: #{block_forward.4} parent=39 // pred_check_branch
        %372 = sbr.rel (%p370) target = $region44
      $region43: #{block_forward.4} parent=39 // pred_region
        _
      $region44: #{block_forward.4} parent=39 // pred_fallthru
        _
    $region40: #{block_forward.4} parent=5 // pred_fallthru
      _
    %p373 = scmp.le.s32.totalorder 2, %s11
    // Predicated region
    $region45: #{block_forward.4} parent=5 // pred_check
      %p374 = pneg %p373
    $region46: #{block_forward.4} parent=5 // pred_check_branch
      %376 = sbr.rel (%p374) target = $region48
    $region47: #{block_forward.4} parent=5 // pred_region
      %s377 = ssub.s32 %s11, 2
      // Predicated region
      $region49: #{block_forward.4} parent=47 // pred_check
        %p378 = pneg %p150
      $region50: #{block_forward.4} parent=47 // pred_check_branch
        %380 = sbr.rel (%p378) target = $region52
      $region51: #{block_forward.4} parent=47 // pred_region
        %p381 = scmp.lt.s32.totalorder %s17, 1
        %s382 = scalar_select %p381, %s17, 1
        %s383 = smul.addr %s382, 2
        %s384 = smul.addr %s383, 8
        %s385 = scalar_lea.vmem %s5, %s384
      $region52: #{block_forward.4} parent=47 // pred_fallthru
        _
    $region48: #{block_forward.4} parent=5 // pred_fallthru
      _
  $region6: #{block_forward.4} parent=0 // loop_footer
    %s15 = sadd.s32 1, %s11
  $region7: #{block_forward.4} parent=0 // loop_footer_branch
    %10 = sbr.rel target = $region3
  $region8: #{block_forward.4} parent=0 // loop_exit
    _

// kernel: block_forward.5
$region0: #{block_forward.5}
  #allocation0 [shape = 'u32[]', space=smem, size = 0x4, offset = 0x4, fixed_abs, tag = 'smem constant byte address 0x4 - core index']
  #allocation1 [shape = 'u32[144,128]{1,0:T(1,128)}', space=vmem, size = 0x12000, scoped, tag = 'internal scratch']
  %s0 = inlined_call_operand.vmem [shape: f32[2], index: 0, kind: input, shape index: {}]
  %s1 = inlined_call_operand.vmem [shape: f32[8,256], index: 1, kind: input, shape index: {}, may-alias: {1,4}]
  %s2 = inlined_call_operand.vmem [shape: f32[8,256], index: 2, kind: input, shape index: {}]
  %s3 = inlined_call_operand.vmem [shape: f32[8,256], index: 3, kind: input, shape index: {}]
  %s4 = inlined_call_operand.vmem [shape: f32[8,256], index: 4, kind: output, shape index: {}, may-alias: {1,4}]
  %s5 = sld [smem:[#allocation0]]
  $region30: #{block_forward.5} parent=0
    _
  %s7 = ssub.s32 1, %s5
  %s8 = scalar_select 0, %s7, %s5
  $region1: #{block_forward.5} parent=0
    #allocation2 [shape = 'u8[512]{0}', space=smem, size = 0x200, scoped, tag = 'input window, operand 0, single buffered']
    #allocation3 [shape = 's32[1]{0}', space=sflag, size = 0x4, scoped, tag = 'scoped memory for block_forward.5']
    %9 = vsyncpa [#allocation3], 0
    // Predicated region
    $region2: #{block_forward.5} parent=1 // pred_check
      _
    $region3: #{block_forward.5} parent=1 // pred_check_branch
      %11 = sbr.rel (0) target = $region5
    $region4: #{block_forward.5} parent=1 // pred_region
      %s13 = ssub.s32 16, 16
      %14 = vsyncadd [#allocation3], %s13
      %s16 = sshll.u32 %s0, 4
      %s17 = int_to_ptr.vmem [resolvable:$true] %s16
      %19 = dma.vmem_to_smem %s17, 16, [#allocation2], [#allocation3]
    $region5: #{block_forward.5} parent=1 // pred_fallthru
      _
    // Predicated region
    $region6: #{block_forward.5} parent=1 // pred_check
      _
    $region7: #{block_forward.5} parent=1 // pred_check_branch
      %21 = sbr.rel (0) target = $region9
    $region8: #{block_forward.5} parent=1 // pred_region
      _
    $region9: #{block_forward.5} parent=1 // pred_fallthru
      _
    // Predicated region
    $region10: #{block_forward.5} parent=1 // pred_check
      _
    $region11: #{block_forward.5} parent=1 // pred_check_branch
      %23 = sbr.rel (0) target = $region13
    $region12: #{block_forward.5} parent=1 // pred_region
      _
    $region13: #{block_forward.5} parent=1 // pred_fallthru
      _
    // Predicated region
    $region14: #{block_forward.5} parent=1 // pred_check
      _
    $region15: #{block_forward.5} parent=1 // pred_check_branch
      %25 = sbr.rel (0) target = $region17
    $region16: #{block_forward.5} parent=1 // pred_region
      _
    $region17: #{block_forward.5} parent=1 // pred_fallthru
      _
    // Predicated region
    $region18: #{block_forward.5} parent=1 // pred_check
      _
    $region19: #{block_forward.5} parent=1 // pred_check_branch
      %27 = sbr.rel (0) target = $region21
    $region20: #{block_forward.5} parent=1 // pred_region
      %28 = dma.done [#allocation3], 16
    $region21: #{block_forward.5} parent=1 // pred_fallthru
      _
    %29 = sfence
    %v30 = vld [vmem:[%s1] sm:$0xff]
    %v31 = vld [vmem:[%s1 + $0x8] sm:$0xff]
    %s32 = sld [smem:[#allocation2]]
    %v33 = vld [vmem:[%s2] sm:$0xff]
    %v34 = vld [vmem:[%s2 + $0x8] sm:$0xff]
    %v35 = vstv %s32
    %v36 = vmul.f32 %v35, %v33
    %v37 = vmul.f32 %v35, %v34
    %v38 = vadd.f32 %v30, %v36
    %v39 = vadd.f32 %v31, %v37
    %s40 = sld [smem:[#allocation2 + $0x1]]
    %v41 = vld [vmem:[%s3] sm:$0xff]
    %v42 = vld [vmem:[%s3 + $0x8] sm:$0xff]
    %v43 = vstv %s40
    %v44 = vmul.f32 %v43, %v41
    %v45 = vmul.f32 %v43, %v42
    %v46 = vadd.f32 %v38, %v44
    %v47 = vadd.f32 %v39, %v45
    %48 = vst [vmem:[%s4] sm:$0xff] %v46
    %49 = vst [vmem:[%s4 + $0x8] sm:$0xff] %v47
    // Predicated region
    $region22: #{block_forward.5} parent=1 // pred_check
      _
    $region23: #{block_forward.5} parent=1 // pred_check_branch
      %51 = sbr.rel (0) target = $region25
    $region24: #{block_forward.5} parent=1 // pred_region
      _
    $region25: #{block_forward.5} parent=1 // pred_fallthru
      _
    // Predicated region
    $region26: #{block_forward.5} parent=1 // pred_check
      _
    $region27: #{block_forward.5} parent=1 // pred_check_branch
      %53 = sbr.rel (0) target = $region29
    $region28: #{block_forward.5} parent=1 // pred_region
      _
    $region29: #{block_forward.5} parent=1 // pred_fallthru
      _
    %54 = vsyncpa [#allocation3], 1

// kernel: block_forward.3
$region0: #{block_forward.3}
  #allocation0 [shape = 'u32[]', space=smem, size = 0x4, offset = 0x4, fixed_abs, tag = 'smem constant byte address 0x4 - core index']
  #allocation1 [shape = 'u32[144,128]{1,0:T(1,128)}', space=vmem, size = 0x12000, scoped, tag = 'internal scratch']
  #allocation2 [shape = 'f32[18,18,8]{2,1,0:T(8,128)}', space=vmem, size = 0x36000, scoped, tag = 'scratch operand']
  %s0 = inlined_call_operand.vmem [shape: f32[2,18,18,4], index: 0, kind: input, shape index: {}]
  %s1 = inlined_call_operand.vmem [shape: f32[9,4,8], index: 1, kind: input, shape index: {}]
  %s2 = inlined_call_operand.vmem [shape: f32[1,8], index: 2, kind: input, shape index: {}]
  %s3 = inlined_call_operand.vmem [shape: f32[1,8], index: 3, kind: input, shape index: {}]
  %s4 = inlined_call_operand.vmem [shape: f32[1,8], index: 4, kind: input, shape index: {}]
  %s5 = inlined_call_operand.vmem [shape: f32[9,8,4], index: 5, kind: input, shape index: {}]
  %s6 = inlined_call_operand.vmem [shape: f32[1,4], index: 6, kind: input, shape index: {}]
  %s7 = inlined_call_operand.vmem [shape: f32[2,256,4], index: 7, kind: output, shape index: {}]
  %s8 = sld [smem:[#allocation0]]
  $region61: #{block_forward.3} parent=0
    _
  %s10 = ssub.s32 1, %s8
  %s11 = scalar_select 0, %s10, %s8
  loop: start=0, step=1, limit=4
  $region2: #{block_forward.3} parent=0 // loop_pre_header
    _
  $region3: #{block_forward.3} parent=0 // loop_header
    %s13 = sphi 0, %s17
    %p14 = scmp.ge.s32.totalorder %s13, 4
    %s23 = sphi 0, %s25
    %s26 = sphi 0, %s23
    %s27 = sphi 0, %s26
    %s43 = sphi 0, %s27
    %s47 = sphi 0, %s47
    %s49 = sphi 0, %s47
    %s50 = sphi 0, %s49
    %s64 = sphi 0, %s50
    %s68 = sphi 0, %s68
    %s70 = sphi 0, %s68
    %s71 = sphi 0, %s70
    %s85 = sphi 0, %s71
    %s89 = sphi 0, %s89
    %s91 = sphi 0, %s89
    %s92 = sphi 0, %s91
    %s106 = sphi 0, %s92
    %s110 = sphi 0, %s110
    %s112 = sphi 0, %s110
    %s113 = sphi 0, %s112
    %s127 = sphi 0, %s113
    %s131 = sphi 0, %s131
    %s133 = sphi 0, %s131
    %s134 = sphi 0, %s133
    %s148 = sphi 0, %s134
    %s152 = sphi 0, %s152
    %s154 = sphi 0, %s152
    %s155 = sphi 0, %s154
    %s169 = sphi 0, %s155
    %s175 = sphi 0, %s177
    %s178 = sphi 0, %s175
    %s179 = sphi 0, %s178
    %s195 = sphi 0, %s179
  $region4: #{block_forward.3} parent=0 // loop_header_branch
    %16 = sbr.rel (%p14) target = $region8
  $region5: #{block_forward.3} parent=0 // loop_body
    %s18 = ssub.s32 %s13, 1
    %s19 = ssub.s32 %s13, 2
    %s20 = sadd.s32 %s13, 1
    %s21 = ssub.s32 %s13, %s20
    %p22 = scmp.eq.s32.totalorder %s21, 0
    %s24 = sadd.s32 %s23, 1
    %s25 = scalar_select %p22, %s23, %s24
    %p28 = pneg %p22
    %p29 = scmp.eq.s32.totalorder %s13, 1
    %p30 = por %p28, %p29
    %p31 = scmp.ne.s32.totalorder %s23, %s26
    %p32 = scmp.eq.s32.totalorder %s13, 0
    %p33 = por %p31, %p32
    %p34 = scmp.ne.s32.totalorder %s23, %s26
    %p35 = scmp.eq.s32.totalorder %s18, 1
    %p36 = por %p34, %p35
    %p37 = scmp.ne.s32.totalorder %s26, %s27
    %p38 = scmp.eq.s32.totalorder %s18, 0
    %p39 = por %p37, %p38
    %p40 = scmp.ne.s32.totalorder %s26, %s27
    %p41 = scmp.eq.s32.totalorder %s19, 1
    %p42 = por %p40, %p41
    %p44 = scmp.ne.s32.totalorder %s27, %s43
    %p45 = scmp.eq.s32.totalorder %s19, 0
    %p46 = por %p44, %p45
    %s48 = sadd.s32 %s47, 1
    %p51 = scmp.eq.s32.totalorder %s13, 1
    %p52 = scmp.ne.s32.totalorder %s47, %s49
    %p53 = scmp.eq.s32.totalorder %s13, 0
    %p54 = por %p52, %p53
    %p55 = scmp.ne.s32.totalorder %s47, %s49
    %p56 = scmp.eq.s32.totalorder %s18, 1
    %p57 = por %p55, %p56
    %p58 = scmp.ne.s32.totalorder %s49, %s50
    %p59 = scmp.eq.s32.totalorder %s18, 0
    %p60 = por %p58, %p59
    %p61 = scmp.ne.s32.totalorder %s49, %s50
    %p62 = scmp.eq.s32.totalorder %s19, 1
    %p63 = por %p61, %p62
    %p65 = scmp.ne.s32.totalorder %s50, %s64
    %p66 = scmp.eq.s32.totalorder %s19, 0
    %p67 = por %p65, %p66
    %s69 = sadd.s32 %s68, 1
    %p72 = scmp.eq.s32.totalorder %s13, 1
    %p73 = scmp.ne.s32.totalorder %s68, %s70
    %p74 = scmp.eq.s32.totalorder %s13, 0
    %p75 = por %p73, %p74
    %p76 = scmp.ne.s32.totalorder %s68, %s70
    %p77 = scmp.eq.s32.totalorder %s18, 1
    %p78 = por %p76, %p77
    %p79 = scmp.ne.s32.totalorder %s70, %s71
    %p80 = scmp.eq.s32.totalorder %s18, 0
    %p81 = por %p79, %p80
    %p82 = scmp.ne.s32.totalorder %s70, %s71
    %p83 = scmp.eq.s32.totalorder %s19, 1
    %p84 = por %p82, %p83
    %p86 = scmp.ne.s32.totalorder %s71, %s85
    %p87 = scmp.eq.s32.totalorder %s19, 0
    %p88 = por %p86, %p87
    %s90 = sadd.s32 %s89, 1
    %p93 = scmp.eq.s32.totalorder %s13, 1
    %p94 = scmp.ne.s32.totalorder %s89, %s91
    %p95 = scmp.eq.s32.totalorder %s13, 0
    %p96 = por %p94, %p95
    %p97 = scmp.ne.s32.totalorder %s89, %s91
    %p98 = scmp.eq.s32.totalorder %s18, 1
    %p99 = por %p97, %p98
    %p100 = scmp.ne.s32.totalorder %s91, %s92
    %p101 = scmp.eq.s32.totalorder %s18, 0
    %p102 = por %p100, %p101
    %p103 = scmp.ne.s32.totalorder %s91, %s92
    %p104 = scmp.eq.s32.totalorder %s19, 1
    %p105 = por %p103, %p104
    %p107 = scmp.ne.s32.totalorder %s92, %s106
    %p108 = scmp.eq.s32.totalorder %s19, 0
    %p109 = por %p107, %p108
    %s111 = sadd.s32 %s110, 1
    %p114 = scmp.eq.s32.totalorder %s13, 1
    %p115 = scmp.ne.s32.totalorder %s110, %s112
    %p116 = scmp.eq.s32.totalorder %s13, 0
    %p117 = por %p115, %p116
    %p118 = scmp.ne.s32.totalorder %s110, %s112
    %p119 = scmp.eq.s32.totalorder %s18, 1
    %p120 = por %p118, %p119
    %p121 = scmp.ne.s32.totalorder %s112, %s113
    %p122 = scmp.eq.s32.totalorder %s18, 0
    %p123 = por %p121, %p122
    %p124 = scmp.ne.s32.totalorder %s112, %s113
    %p125 = scmp.eq.s32.totalorder %s19, 1
    %p126 = por %p124, %p125
    %p128 = scmp.ne.s32.totalorder %s113, %s127
    %p129 = scmp.eq.s32.totalorder %s19, 0
    %p130 = por %p128, %p129
    %s132 = sadd.s32 %s131, 1
    %p135 = scmp.eq.s32.totalorder %s13, 1
    %p136 = scmp.ne.s32.totalorder %s131, %s133
    %p137 = scmp.eq.s32.totalorder %s13, 0
    %p138 = por %p136, %p137
    %p139 = scmp.ne.s32.totalorder %s131, %s133
    %p140 = scmp.eq.s32.totalorder %s18, 1
    %p141 = por %p139, %p140
    %p142 = scmp.ne.s32.totalorder %s133, %s134
    %p143 = scmp.eq.s32.totalorder %s18, 0
    %p144 = por %p142, %p143
    %p145 = scmp.ne.s32.totalorder %s133, %s134
    %p146 = scmp.eq.s32.totalorder %s19, 1
    %p147 = por %p145, %p146
    %p149 = scmp.ne.s32.totalorder %s134, %s148
    %p150 = scmp.eq.s32.totalorder %s19, 0
    %p151 = por %p149, %p150
    %s153 = sadd.s32 %s152, 1
    %p156 = scmp.eq.s32.totalorder %s13, 1
    %p157 = scmp.ne.s32.totalorder %s152, %s154
    %p158 = scmp.eq.s32.totalorder %s13, 0
    %p159 = por %p157, %p158
    %p160 = scmp.ne.s32.totalorder %s152, %s154
    %p161 = scmp.eq.s32.totalorder %s18, 1
    %p162 = por %p160, %p161
    %p163 = scmp.ne.s32.totalorder %s154, %s155
    %p164 = scmp.eq.s32.totalorder %s18, 0
    %p165 = por %p163, %p164
    %p166 = scmp.ne.s32.totalorder %s154, %s155
    %p167 = scmp.eq.s32.totalorder %s19, 1
    %p168 = por %p166, %p167
    %p170 = scmp.ne.s32.totalorder %s155, %s169
    %p171 = scmp.eq.s32.totalorder %s19, 0
    %p172 = por %p170, %p171
    %s173 = ssub.s32 %s13, %s20
    %p174 = scmp.eq.s32.totalorder %s173, 0
    %s176 = sadd.s32 %s175, 1
    %s177 = scalar_select %p174, %s175, %s176
    %p180 = pneg %p174
    %p181 = scmp.eq.s32.totalorder %s13, 1
    %p182 = por %p180, %p181
    %p183 = scmp.ne.s32.totalorder %s175, %s178
    %p184 = scmp.eq.s32.totalorder %s13, 0
    %p185 = por %p183, %p184
    %p186 = scmp.ne.s32.totalorder %s175, %s178
    %p187 = scmp.eq.s32.totalorder %s18, 1
    %p188 = por %p186, %p187
    %p189 = scmp.ne.s32.totalorder %s178, %s179
    %p190 = scmp.eq.s32.totalorder %s18, 0
    %p191 = por %p189, %p190
    %p192 = scmp.ne.s32.totalorder %s178, %s179
    %p193 = scmp.eq.s32.totalorder %s19, 1
    %p194 = por %p192, %p193
    %p196 = scmp.ne.s32.totalorder %s179, %s195
    %p197 = scmp.eq.s32.totalorder %s19, 0
    %p198 = por %p196, %p197
    %p199 = scmp.le.s32.totalorder 1, %s13
    %p200 = scmp.lt.s32.totalorder %s13, 3
    %p201 = pnand %p199, %p200
    %p202 = pneg %p201
    // Predicated region
    $region9: #{block_forward.3} parent=5 // pred_check
      _
    $region10: #{block_forward.3} parent=5 // pred_check_branch
      %204 = sbr.rel (%p201) target = $region12
    $region11: #{block_forward.3} parent=5 // pred_region
      %s205 = ssub.s32 %s13, 1
      // Predicated region
      $region13: #{block_forward.3} parent=11 // pred_check
        %p206 = pneg %p60
      $region14: #{block_forward.3} parent=11 // pred_check_branch
        %208 = sbr.rel (%p206) target = $region16
      $region15: #{block_forward.3} parent=11 // pred_region
        _
      $region16: #{block_forward.3} parent=11 // pred_fallthru
        _
      // Predicated region
      $region17: #{block_forward.3} parent=11 // pred_check
        %p209 = pneg %p81
      $region18: #{block_forward.3} parent=11 // pred_check_branch
        %211 = sbr.rel (%p209) target = $region20
      $region19: #{block_forward.3} parent=11 // pred_region
        _
      $region20: #{block_forward.3} parent=11 // pred_fallthru
        _
      // Predicated region
      $region21: #{block_forward.3} parent=11 // pred_check
        %p212 = pneg %p102
      $region22: #{block_forward.3} parent=11 // pred_check_branch
        %214 = sbr.rel (%p212) target = $region24
      $region23: #{block_forward.3} parent=11 // pred_region
        _
      $region24: #{block_forward.3} parent=11 // pred_fallthru
        _
      // Predicated region
      $region25: #{block_forward.3} parent=11 // pred_check
        %p215 = pneg %p123
      $region26: #{block_forward.3} parent=11 // pred_check_branch
        %217 = sbr.rel (%p215) target = $region28
      $region27: #{block_forward.3} parent=11 // pred_region
        _
      $region28: #{block_forward.3} parent=11 // pred_fallthru
        _
      // Predicated region
      $region29: #{block_forward.3} parent=11 // pred_check
        %p218 = pneg %p144
      $region30: #{block_forward.3} parent=11 // pred_check_branch
        %220 = sbr.rel (%p218) target = $region32
      $region31: #{block_forward.3} parent=11 // pred_region
        _
      $region32: #{block_forward.3} parent=11 // pred_fallthru
        _
      // Predicated region
      $region33: #{block_forward.3} parent=11 // pred_check
        %p221 = pneg %p165
      $region34: #{block_forward.3} parent=11 // pred_check_branch
        %223 = sbr.rel (%p221) target = $region36
      $region35: #{block_forward.3} parent=11 // pred_region
        _
      $region36: #{block_forward.3} parent=11 // pred_fallthru
        _
    $region12: #{block_forward.3} parent=5 // pred_fallthru
      _
    %p224 = scmp.lt.s32.totalorder %s13, 2
    // Predicated region
    $region37: #{block_forward.3} parent=5 // pred_check
      %p225 = pneg %p224
    $region38: #{block_forward.3} parent=5 // pred_check_branch
      %227 = sbr.rel (%p225) target = $region40
    $region39: #{block_forward.3} parent=5 // pred_region
      // Predicated region
      $region41: #{block_forward.3} parent=39 // pred_check
        %p228 = pneg %p33
      $region42: #{block_forward.3} parent=39 // pred_check_branch
        %230 = sbr.rel (%p228) target = $region44
      $region43: #{block_forward.3} parent=39 // pred_region
        %p231 = scmp.lt.s32.totalorder %s13, 1
        %s232 = scalar_select %p231, %s13, 1
        %s233 = smul.addr %s232, 54
        %s234 = smul.addr %s233, 8
        %s235 = scalar_lea.vmem %s0, %s234
      $region44: #{block_forward.3} parent=39 // pred_fallthru
        _
    $region40: #{block_forward.3} parent=5 // pred_fallthru
      _
    %p236 = scmp.le.s32.totalorder 1, %s13
    %p237 = scmp.lt.s32.totalorder %s13, 3
    %p238 = pnand %p236, %p237
    %p239 = pneg %p238
    // Predicated region
    $region45: #{block_forward.3} parent=5 // pred_check
      _
    $region46: #{block_forward.3} parent=5 // pred_check_branch
      %241 = sbr.rel (%p238) target = $region48
    $region47: #{block_forward.3} parent=5 // pred_region
      %s242 = ssub.s32 %s13, 1
      %p243 = scmp.lt.s32.totalorder %s18, 1
      %s244 = scalar_select %p243, %s18, 1
      %s245 = smul.addr %s244, 54
      %s246 = smul.addr %s245, 8
      %s247 = scalar_lea.vmem %s0, %s246
      %p248 = pneg %p39
      %p249 = pneg %p36
      %p250 = pneg %p60
      %p251 = pneg %p57
      %p252 = pneg %p81
      %p253 = pneg %p78
      %p254 = pneg %p102
      %p255 = pneg %p99
      %p256 = pneg %p123
      %p257 = pneg %p120
      %p258 = pneg %p144
      %p259 = pneg %p141
      %p260 = pneg %p165
      %p261 = pneg %p162
      %p262 = pneg %p191
      %p263 = pneg %p188
      %p264 = scmp.lt.s32.totalorder %s18, 1
      %s265 = scalar_select %p264, %s18, 1
      %s266 = smul.addr %s265, 32
      %s267 = smul.addr %s266, 8
      %s268 = scalar_lea.vmem %s7, %s267
      %p269 = scmp.lt.s32.totalorder %s18, 1
      %s270 = scalar_select %p269, %s18, 1
      %s271 = smul.addr %s270, 54
      %s272 = smul.addr %s271, 8
      %s273 = scalar_lea.vmem %s0, %s272
      %p274 = scmp.lt.s32.totalorder %s18, 1
      %s275 = scalar_select %p274, %s18, 1
      %s276 = smul.addr %s275, 32
      %s277 = smul.addr %s276, 8
      %s278 = scalar_lea.vmem %s7, %s277
      %v279 = vld [vmem:[%s273] sm:$0xff]
      %v280 = vld [vmem:[%s273 + $0x8] sm:$0xff]
      %v281 = vld [vmem:[%s273 + $0x18] sm:$0xff]
      %v282 = vld [vmem:[%s273 + $0x20] sm:$0xff]
      %v283 = vld [vmem:[%s273 + $0x30] sm:$0xff]
      %v284 = vld [vmem:[%s273 + $0x38] sm:$0xff]
      %v285 = vld [vmem:[%s273 + $0x48] sm:$0xff]
      %v286 = vld [vmem:[%s273 + $0x50] sm:$0xff]
      %v287 = vld [vmem:[%s273 + $0x60] sm:$0xff]
      %v288 = vld [vmem:[%s273 + $0x68] sm:$0xff]
      %v289 = vld [vmem:[%s273 + $0x78] sm:$0xff]
      %v290 = vld [vmem:[%s273 + $0x80] sm:$0xff]
      %v291 = vld [vmem:[%s273 + $0x90] sm:$0xff]
      %v292 = vld [vmem:[%s273 + $0x98] sm:$0xff]
      %v293 = vld [vmem:[%s273 + $0xa8] sm:$0xff]
      %v294 = vld [vmem:[%s273 + $0xb0] sm:$0xff]
      %v295 = vld [vmem:[%s273 + $0xc0] sm:$0xff]
      %v296 = vld [vmem:[%s273 + $0xc8] sm:$0xff]
      %v297 = vld [vmem:[%s273 + $0xd8] sm:$0xff]
      %v298 = vld [vmem:[%s273 + $0xe0] sm:$0xff]
      %v299 = vld [vmem:[%s273 + $0xf0] sm:$0xff]
      %v300 = vld [vmem:[%s273 + $0xf8] sm:$0xff]
      %v301 = vld [vmem:[%s273 + $0x108] sm:$0xff]
      %v302 = vld [vmem:[%s273 + $0x110] sm:$0xff]
      %v303 = vld [vmem:[%s273 + $0x120] sm:$0xff]
      %v304 = vld [vmem:[%s273 + $0x128] sm:$0xff]
      %v305 = vld [vmem:[%s273 + $0x138] sm:$0xff]
      %v306 = vld [vmem:[%s273 + $0x140] sm:$0xff]
      %v307 = vld [vmem:[%s273 + $0x150] sm:$0xff]
      %v308 = vld [vmem:[%s273 + $0x158] sm:$0xff]
      %v309 = vld [vmem:[%s273 + $0x168] sm:$0xff]
      %v310 = vld [vmem:[%s273 + $0x170] sm:$0xff]
      %v311 = vld [vmem:[%s1] sm:$0xf]
      %v312 = vld [vmem:[%s273 + $0x1] sm:$0xff]
      %v313 = vld [vmem:[%s273 + $0x9] sm:$0xff]
      %v314 = vld [vmem:[%s273 + $0x19] sm:$0xff]
      %v315 = vld [vmem:[%s273 + $0x21] sm:$0xff]
      %v316 = vld [vmem:[%s273 + $0x31] sm:$0xff]
      %v317 = vld [vmem:[%s273 + $0x39] sm:$0xff]
      %v318 = vld [vmem:[%s273 + $0x49] sm:$0xff]
      %v319 = vld [vmem:[%s273 + $0x51] sm:$0xff]
      %v320 = vld [vmem:[%s273 + $0x61] sm:$0xff]
      %v321 = vld [vmem:[%s273 + $0x69] sm:$0xff]
      %v322 = vld [vmem:[%s273 + $0x79] sm:$0xff]
      %v323 = vld [vmem:[%s273 + $0x81] sm:$0xff]
      %v324 = vld [vmem:[%s273 + $0x91] sm:$0xff]
      %v325 = vld [vmem:[%s273 + $0x99] sm:$0xff]
      %v326 = vld [vmem:[%s273 + $0xa9] sm:$0xff]
      %v327 = vld [vmem:[%s273 + $0xb1] sm:$0xff]
      %v328 = vld [vmem:[%s273 + $0xc1] sm:$0xff]
      %v329 = vld [vmem:[%s273 + $0xc9] sm:$0xff]
      %v330 = vld [vmem:[%s273 + $0xd9] sm:$0xff]
      %v331 = vld [vmem:[%s273 + $0xe1] sm:$0xff]
      %v332 = vld [vmem:[%s273 + $0xf1] sm:$0xff]
      %v333 = vld [vmem:[%s273 + $0xf9] sm:$0xff]
      %v334 = vld [vmem:[%s273 + $0x109] sm:$0xff]
      %v335 = vld [vmem:[%s273 + $0x111] sm:$0xff]
      %v336 = vld [vmem:[%s273 + $0x121] sm:$0xff]
      %v337 = vld [vmem:[%s273 + $0x129] sm:$0xff]
      %v338 = vld [vmem:[%s273 + $0x139] sm:$0xff]
      %v339 = vld [vmem:[%s273 + $0x141] sm:$0xff]
      %v340 = vld [vmem:[%s273 + $0x151] sm:$0xff]
      %v341 = vld [vmem:[%s273 + $0x159] sm:$0xff]
      %v342 = vld [vmem:[%s273 + $0x169] sm:$0xff]
      %v343 = vld [vmem:[%s273 + $0x171] sm:$0xff]
      %s344 = scalar_lea.vmem %s1, 4
      %v345 = vld [vmem:[%s344] sm:$0xf]
      %vm346 = vcmask 31744
      %v348 = vsel %vm346, %v312, 0
      %v351 = vsel %vm346, %v313, 0
      %v354 = vsel %vm346, %v314, 0
      %v357 = vsel %vm346, %v315, 0
      %v360 = vsel %vm346, %v316, 0
      %v363 = vsel %vm346, %v317, 0
      %v366 = vsel %vm346, %v318, 0
      %v369 = vsel %vm346, %v319, 0
      %v372 = vsel %vm346, %v320, 0
      %v375 = vsel %vm346, %v321, 0
      %v378 = vsel %vm346, %v322, 0
      %v381 = vsel %vm346, %v323, 0
      %v384 = vsel %vm346, %v324, 0
      %v387 = vsel %vm346, %v325, 0
      %v390 = vsel %vm346, %v326, 0
      %v393 = vsel %vm346, %v327, 0
      %v396 = vsel %vm346, %v328, 0
      %v399 = vsel %vm346, %v329, 0
      %v402 = vsel %vm346, %v330, 0
      %v405 = vsel %vm346, %v331, 0
      %v408 = vsel %vm346, %v332, 0
      %v411 = vsel %vm346, %v333, 0
      %v414 = vsel %vm346, %v334, 0
      %v417 = vsel %vm346, %v335, 0
      %v420 = vsel %vm346, %v336, 0
      %v423 = vsel %vm346, %v337, 0
      %v426 = vsel %vm346, %v338, 0
      %v429 = vsel %vm346, %v339, 0
      %v432 = vsel %vm346, %v340, 0
      %v435 = vsel %vm346, %v341, 0
      %v438 = vsel %vm346, %v342, 0
      %v441 = vsel %vm346, %v343, 0
      %vm443 = vcmask 1043456
      %v445 = vsel %vm443, %v345, 0
      %447 = vmatprep.subr.mxu0 0.0
      %448 = vmatpush1.msra.mxu0 0.0
      %449 = vmatprep.subr.mxu0 0.0
      %450 = vmatpush1.msra.mxu0 0.0
      %451 = vmatprep.subr.mxu0 0.0
      %452 = vmatpush1.msra.mxu0 0.0
      %453 = vmatprep.subr.mxu0 0.0
      %454 = vmatpush1.msra.mxu0 0.0
      %455 = vmatprep.subr.mxu0 0.0
      %456 = vmatpush1.msra.mxu0 0.0
      %457 = vmatprep.subr.mxu0 0.0
      %458 = vmatpush1.msra.mxu0 0.0
      %459 = vmatprep.subr.mxu0 0.0
      %460 = vmatpush1.msra.mxu0 0.0
      %461 = vmatprep.subr.mxu0 0.0
      %462 = vmatpush1.msra.mxu0 0.0
      %463 = vmatprep.subr.mxu0 0.0
      %464 = vmatpush1.msra.mxu0 0.0
      %465 = vmatprep.subr.mxu0 0.0
      %466 = vmatpush1.msra.mxu0 0.0
      %467 = vmatprep.subr.mxu0 0.0
      %468 = vmatpush1.msra.mxu0 0.0
      %469 = vmatprep.subr.mxu0 0.0
      %470 = vmatpush1.msra.mxu0 0.0
      %471 = vmatprep.subr.mxu0 0.0
      %472 = vmatpush1.msra.mxu0 0.0
      %473 = vmatprep.subr.mxu0 0.0
      %474 = vmatpush1.msra.mxu0 0.0
      %475 = vmatprep.subr.mxu0 0.0
      %476 = vmatpush1.msra.mxu0 0.0
      %477 = vmatprep.subr.mxu0 0.0
      %478 = vmatpush1.msra.mxu0 %v445
      %479 = vmatprep.subr.mxu0 0.0
      %480 = vmatpush2.msra.mxu0 0.0
      %481 = vmatprep.subr.mxu0 0.0
      %482 = vmatpush2.msra.mxu0 0.0
      %483 = vmatprep.subr.mxu0 0.0
      %484 = vmatpush2.msra.mxu0 0.0
      %485 = vmatprep.subr.mxu0 0.0
      %486 = vmatpush2.msra.mxu0 0.0
      %487 = vmatprep.subr.mxu0 0.0
      %488 = vmatpush2.msra.mxu0 0.0
      %489 = vmatprep.subr.mxu0 0.0
      %490 = vmatpush2.msra.mxu0 0.0
      %491 = vmatprep.subr.mxu0 0.0
      %492 = vmatpush2.msra.mxu0 0.0
      %493 = vmatprep.subr.mxu0 0.0
      %494 = vmatpush2.msra.mxu0 0.0
      %495 = vmatprep.subr.mxu0 0.0
      %496 = vmatpush2.msra.mxu0 0.0
      %497 = vmatprep.subr.mxu0 0.0
      %498 = vmatpush2.msra.mxu0 0.0
      %499 = vmatprep.subr.mxu0 0.0
      %500 = vmatpush2.msra.mxu0 0.0
      %501 = vmatprep.subr.mxu0 0.0
      %502 = vmatpush2.msra.mxu0 0.0
      %503 = vmatprep.subr.mxu0 0.0
      %504 = vmatpush2.msra.mxu0 0.0
      %505 = vmatprep.subr.mxu0 0.0
      %506 = vmatpush2.msra.mxu0 0.0
      %507 = vmatprep.subr.mxu0 0.0
      %508 = vmatpush2.msra.mxu0 0.0
      %509 = vmatprep.subr.mxu0 0.0
      %510 = vmatpush2.msra.mxu0 0.0
      %511 = vmatprep.mubr.f32.mxu0 0.0
      %512 = vmatmul.mubr.f32.gmra.mxu0 %v348
      %v513 = vpop.f32.mrf.mxu0
      %v514 = vadd.f32 0.0, %v513
      %v515 = vpop.f32.mrf.mxu0
      %516 = vmatprep.mubr.f32.mxu0 0.0
      %517 = vmatmul.mubr.f32.gmra.mxu0 %v351
      %v518 = vpop.f32.mrf.mxu0
      %v519 = vadd.f32 0.0, %v518
      %v520 = vpop.f32.mrf.mxu0
      %521 = vmatprep.mubr.f32.mxu0 0.0
      %522 = vmatmul.mubr.f32.gmra.mxu0 %v354
      %v523 = vpop.f32.mrf.mxu0
      %v524 = vadd.f32 0.0, %v523
      %v525 = vpop.f32.mrf.mxu0
      %526 = vmatprep.mubr.f32.mxu0 0.0
      %527 = vmatmul.mubr.f32.gmra.mxu0 %v357
      %v528 = vpop.f32.mrf.mxu0
      %v529 = vadd.f32 0.0, %v528
      %v530 = vpop.f32.mrf.mxu0
      %531 = vmatprep.mubr.f32.mxu0 0.0
      %532 = vmatmul.mubr.f32.gmra.mxu0 %v360
      %v533 = vpop.f32.mrf.mxu0
      %v534 = vadd.f32 0.0, %v533
      %v535 = vpop.f32.mrf.mxu0
      %536 = vmatprep.mubr.f32.mxu0 0.0
      %537 = vmatmul.mubr.f32.gmra.mxu0 %v363
      %v538 = vpop.f32.mrf.mxu0
      %v539 = vadd.f32 0.0, %v538
      %v540 = vpop.f32.mrf.mxu0
      %541 = vmatprep.mubr.f32.mxu0 0.0
      %542 = vmatmul.mubr.f32.gmra.mxu0 %v366
      %v543 = vpop.f32.mrf.mxu0
      %v544 = vadd.f32 0.0, %v543
      %v545 = vpop.f32.mrf.mxu0
      %546 = vmatprep.mubr.f32.mxu0 0.0
      %547 = vmatmul.mubr.f32.gmra.mxu0 %v369
      %v548 = vpop.f32.mrf.mxu0
      %v549 = vadd.f32 0.0, %v548
      %v550 = vpop.f32.mrf.mxu0
      %551 = vmatprep.mubr.f32.mxu0 0.0
      %552 = vmatmul.mubr.f32.gmra.mxu0 %v372
      %v553 = vpop.f32.mrf.mxu0
      %v554 = vadd.f32 0.0, %v553
      %v555 = vpop.f32.mrf.mxu0
      %556 = vmatprep.mubr.f32.mxu0 0.0
      %557 = vmatmul.mubr.f32.gmra.mxu0 %v375
      %v558 = vpop.f32.mrf.mxu0
      %v559 = vadd.f32 0.0, %v558
      %v560 = vpop.f32.mrf.mxu0
      %561 = vmatprep.mubr.f32.mxu0 0.0
      %562 = vmatmul.mubr.f32.gmra.mxu0 %v378
      %v563 = vpop.f32.mrf.mxu0
      %v564 = vadd.f32 0.0, %v563
      %v565 = vpop.f32.mrf.mxu0
      %566 = vmatprep.mubr.f32.mxu0 0.0
      %567 = vmatmul.mubr.f32.gmra.mxu0 %v381
      %v568 = vpop.f32.mrf.mxu0
      %v569 = vadd.f32 0.0, %v568
      %v570 = vpop.f32.mrf.mxu0
      %571 = vmatprep.mubr.f32.mxu0 0.0
      %572 = vmatmul.mubr.f32.gmra.mxu0 %v384
      %v573 = vpop.f32.mrf.mxu0
      %v574 = vadd.f32 0.0, %v573
      %v575 = vpop.f32.mrf.mxu0
      %576 = vmatprep.mubr.f32.mxu0 0.0
      %577 = vmatmul.mubr.f32.gmra.mxu0 %v387
      %v578 = vpop.f32.mrf.mxu0
      %v579 = vadd.f32 0.0, %v578
      %v580 = vpop.f32.mrf.mxu0
      %581 = vmatprep.mubr.f32.mxu0 0.0
      %582 = vmatmul.mubr.f32.gmra.mxu0 %v390
      %v583 = vpop.f32.mrf.mxu0
      %v584 = vadd.f32 0.0, %v583
      %v585 = vpop.f32.mrf.mxu0
      %586 = vmatprep.mubr.f32.mxu0 0.0
      %587 = vmatmul.mubr.f32.gmra.mxu0 %v393
      %v588 = vpop.f32.mrf.mxu0
      %v589 = vadd.f32 0.0, %v588
      %v590 = vpop.f32.mrf.mxu0
      %591 = vmatprep.mubr.f32.mxu0 0.0
      %592 = vmatmul.mubr.f32.gmra.mxu0 %v396
      %v593 = vpop.f32.mrf.mxu0
      %v594 = vadd.f32 0.0, %v593
      %v595 = vpop.f32.mrf.mxu0
      %596 = vmatprep.mubr.f32.mxu0 0.0
      %597 = vmatmul.mubr.f32.gmra.mxu0 %v399
      %v598 = vpop.f32.mrf.mxu0
      %v599 = vadd.f32 0.0, %v598
      %v600 = vpop.f32.mrf.mxu0
      %601 = vmatprep.mubr.f32.mxu0 0.0
      %602 = vmatmul.mubr.f32.gmra.mxu0 %v402
      %v603 = vpop.f32.mrf.mxu0
      %v604 = vadd.f32 0.0, %v603
      %v605 = vpop.f32.mrf.mxu0
      %606 = vmatprep.mubr.f32.mxu0 0.0
      %607 = vmatmul.mubr.f32.gmra.mxu0 %v405
      %v608 = vpop.f32.mrf.mxu0
      %v609 = vadd.f32 0.0, %v608
      %v610 = vpop.f32.mrf.mxu0
      %611 = vmatprep.mubr.f32.mxu0 0.0
      %612 = vmatmul.mubr.f32.gmra.mxu0 %v408
      %v613 = vpop.f32.mrf.mxu0
      %v614 = vadd.f32 0.0, %v613
      %v615 = vpop.f32.mrf.mxu0
      %616 = vmatprep.mubr.f32.mxu0 0.0
      %617 = vmatmul.mubr.f32.gmra.mxu0 %v411
      %v618 = vpop.f32.mrf.mxu0
      %v619 = vadd.f32 0.0, %v618
      %v620 = vpop.f32.mrf.mxu0
      %621 = vmatprep.mubr.f32.mxu0 0.0
      %622 = vmatmul.mubr.f32.gmra.mxu0 %v414
      %v623 = vpop.f32.mrf.mxu0
      %v624 = vadd.f32 0.0, %v623
      %v625 = vpop.f32.mrf.mxu0
      %626 = vmatprep.mubr.f32.mxu0 0.0
      %627 = vmatmul.mubr.f32.gmra.mxu0 %v417
      %v628 = vpop.f32.mrf.mxu0
      %v629 = vadd.f32 0.0, %v628
      %v630 = vpop.f32.mrf.mxu0
      %631 = vmatprep.mubr.f32.mxu0 0.0
      %632 = vmatmul.mubr.f32.gmra.mxu0 %v420
      %v633 = vpop.f32.mrf.mxu0
      %v634 = vadd.f32 0.0, %v633
      %v635 = vpop.f32.mrf.mxu0
      %636 = vmatprep.mubr.f32.mxu0 0.0
      %637 = vmatmul.mubr.f32.gmra.mxu0 %v423
      %v638 = vpop.f32.mrf.mxu0
      %v639 = vadd.f32 0.0, %v638
      %v640 = vpop.f32.mrf.mxu0
      %641 = vmatprep.mubr.f32.mxu0 0.0
      %642 = vmatmul.mubr.f32.gmra.mxu0 %v426
      %v643 = vpop.f32.mrf.mxu0
      %v644 = vadd.f32 0.0, %v643
      %v645 = vpop.f32.mrf.mxu0
      %646 = vmatprep.mubr.f32.mxu0 0.0
      %647 = vmatmul.mubr.f32.gmra.mxu0 %v429
      %v648 = vpop.f32.mrf.mxu0
      %v649 = vadd.f32 0.0, %v648
      %v650 = vpop.f32.mrf.mxu0
      %651 = vmatprep.mubr.f32.mxu0 0.0
      %652 = vmatmul.mubr.f32.gmra.mxu0 %v432
      %v653 = vpop.f32.mrf.mxu0
      %v654 = vadd.f32 0.0, %v653
      %v655 = vpop.f32.mrf.mxu0
      %656 = vmatprep.mubr.f32.mxu0 0.0
      %657 = vmatmul.mubr.f32.gmra.mxu0 %v435
      %v658 = vpop.f32.mrf.mxu0
      %v659 = vadd.f32 0.0, %v658
      %v660 = vpop.f32.mrf.mxu0
      %661 = vmatprep.mubr.f32.mxu0 0.0
      %662 = vmatmul.mubr.f32.gmra.mxu0 %v438
      %v663 = vpop.f32.mrf.mxu0
      %v664 = vadd.f32 0.0, %v663
      %v665 = vpop.f32.mrf.mxu0
      %666 = vmatprep.mubr.f32.mxu0 0.0
      %667 = vmatmul.mubr.f32.gmra.mxu0 %v441
      %v668 = vpop.f32.mrf.mxu0
      %v669 = vadd.f32 0.0, %v668
      %v670 = vpop.f32.mrf.mxu0
      %671 = vdwg.mxu0
      %v673 = vsel %vm346, %v279, 0
      %v676 = vsel %vm346, %v280, 0
      %v679 = vsel %vm346, %v281, 0
      %v682 = vsel %vm346, %v282, 0
      %v685 = vsel %vm346, %v283, 0
      %v688 = vsel %vm346, %v284, 0
      %v691 = vsel %vm346, %v285, 0
      %v694 = vsel %vm346, %v286, 0
      %v697 = vsel %vm346, %v287, 0
      %v700 = vsel %vm346, %v288, 0
      %v703 = vsel %vm346, %v289, 0
      %v706 = vsel %vm346, %v290, 0
      %v709 = vsel %vm346, %v291, 0
      %v712 = vsel %vm346, %v292, 0
      %v715 = vsel %vm346, %v293, 0
      %v718 = vsel %vm346, %v294, 0
      %v721 = vsel %vm346, %v295, 0
      %v724 = vsel %vm346, %v296, 0
      %v727 = vsel %vm346, %v297, 0
      %v730 = vsel %vm346, %v298, 0
      %v733 = vsel %vm346, %v299, 0
      %v736 = vsel %vm346, %v300, 0
      %v739 = vsel %vm346, %v301, 0
      %v742 = vsel %vm346, %v302, 0
      %v745 = vsel %vm346, %v303, 0
      %v748 = vsel %vm346, %v304, 0
      %v751 = vsel %vm346, %v305, 0
      %v754 = vsel %vm346, %v306, 0
      %v757 = vsel %vm346, %v307, 0
      %v760 = vsel %vm346, %v308, 0
      %v763 = vsel %vm346, %v309, 0
      %v766 = vsel %vm346, %v310, 0
      %v769 = vsel %vm443, %v311, 0
      %771 = vmatprep.subr.mxu0 0.0
      %772 = vmatpush1.msra.mxu0 0.0
      %773 = vmatprep.subr.mxu0 0.0
      %774 = vmatpush1.msra.mxu0 0.0
      %775 = vmatprep.subr.mxu0 0.0
      %776 = vmatpush1.msra.mxu0 0.0
      %777 = vmatprep.subr.mxu0 0.0
      %778 = vmatpush1.msra.mxu0 0.0
      %779 = vmatprep.subr.mxu0 0.0
      %780 = vmatpush1.msra.mxu0 0.0
      %781 = vmatprep.subr.mxu0 0.0
      %782 = vmatpush1.msra.mxu0 0.0
      %783 = vmatprep.subr.mxu0 0.0
      %784 = vmatpush1.msra.mxu0 0.0
      %785 = vmatprep.subr.mxu0 0.0
      %786 = vmatpush1.msra.mxu0 0.0
      %787 = vmatprep.subr.mxu0 0.0
      %788 = vmatpush1.msra.mxu0 0.0
      %789 = vmatprep.subr.mxu0 0.0
      %790 = vmatpush1.msra.mxu0 0.0
      %791 = vmatprep.subr.mxu0 0.0
      %792 = vmatpush1.msra.mxu0 0.0
      %793 = vmatprep.subr.mxu0 0.0
      %794 = vmatpush1.msra.mxu0 0.0
      %795 = vmatprep.subr.mxu0 0.0
      %796 = vmatpush1.msra.mxu0 0.0
      %797 = vmatprep.subr.mxu0 0.0
      %798 = vmatpush1.msra.mxu0 0.0
      %799 = vmatprep.subr.mxu0 0.0
      %800 = vmatpush1.msra.mxu0 0.0
      %801 = vmatprep.subr.mxu0 0.0
      %802 = vmatpush1.msra.mxu0 %v769
      %803 = vmatprep.subr.mxu0 0.0
      %804 = vmatpush2.msra.mxu0 0.0
      %805 = vmatprep.subr.mxu0 0.0
      %806 = vmatpush2.msra.mxu0 0.0
      %807 = vmatprep.subr.mxu0 0.0
      %808 = vmatpush2.msra.mxu0 0.0
      %809 = vmatprep.subr.mxu0 0.0
      %810 = vmatpush2.msra.mxu0 0.0
      %811 = vmatprep.subr.mxu0 0.0
      %812 = vmatpush2.msra.mxu0 0.0
      %813 = vmatprep.subr.mxu0 0.0
      %814 = vmatpush2.msra.mxu0 0.0
      %815 = vmatprep.subr.mxu0 0.0
      %816 = vmatpush2.msra.mxu0 0.0
      %817 = vmatprep.subr.mxu0 0.0
      %818 = vmatpush2.msra.mxu0 0.0
      %819 = vmatprep.subr.mxu0 0.0
      %820 = vmatpush2.msra.mxu0 0.0
      %821 = vmatprep.subr.mxu0 0.0
      %822 = vmatpush2.msra.mxu0 0.0
      %823 = vmatprep.subr.mxu0 0.0
      %824 = vmatpush2.msra.mxu0 0.0
      %825 = vmatprep.subr.mxu0 0.0
      %826 = vmatpush2.msra.mxu0 0.0
      %827 = vmatprep.subr.mxu0 0.0
      %828 = vmatpush2.msra.mxu0 0.0
      %829 = vmatprep.subr.mxu0 0.0
      %830 = vmatpush2.msra.mxu0 0.0
      %831 = vmatprep.subr.mxu0 0.0
      %832 = vmatpush2.msra.mxu0 0.0
      %833 = vmatprep.subr.mxu0 0.0
      %834 = vmatpush2.msra.mxu0 0.0
      %835 = vmatprep.mubr.f32.mxu0 0.0
      %836 = vmatmul.mubr.f32.gmra.mxu0 %v673
      %v837 = vpop.f32.mrf.mxu0
      %v838 = vadd.f32 %v514, %v837
      %v839 = vpop.f32.mrf.mxu0
      %840 = vmatprep.mubr.f32.mxu0 0.0
      %841 = vmatmul.mubr.f32.gmra.mxu0 %v676
      %v842 = vpop.f32.mrf.mxu0
      %v843 = vadd.f32 %v519, %v842
      %v844 = vpop.f32.mrf.mxu0
      %845 = vmatprep.mubr.f32.mxu0 0.0
      %846 = vmatmul.mubr.f32.gmra.mxu0 %v679
      %v847 = vpop.f32.mrf.mxu0
      %v848 = vadd.f32 %v524, %v847
      %v849 = vpop.f32.mrf.mxu0
      %850 = vmatprep.mubr.f32.mxu0 0.0
      %851 = vmatmul.mubr.f32.gmra.mxu0 %v682
      %v852 = vpop.f32.mrf.mxu0
      %v853 = vadd.f32 %v529, %v852
      %v854 = vpop.f32.mrf.mxu0
      %855 = vmatprep.mubr.f32.mxu0 0.0
      %856 = vmatmul.mubr.f32.gmra.mxu0 %v685
      %v857 = vpop.f32.mrf.mxu0
      %v858 = vadd.f32 %v534, %v857
      %v859 = vpop.f32.mrf.mxu0
      %860 = vmatprep.mubr.f32.mxu0 0.0
      %861 = vmatmul.mubr.f32.gmra.mxu0 %v688
      %v862 = vpop.f32.mrf.mxu0
      %v863 = vadd.f32 %v539, %v862
      %v864 = vpop.f32.mrf.mxu0
      %865 = vmatprep.mubr.f32.mxu0 0.0
      %866 = vmatmul.mubr.f32.gmra.mxu0 %v691
      %v867 = vpop.f32.mrf.mxu0
      %v868 = vadd.f32 %v544, %v867
      %v869 = vpop.f32.mrf.mxu0
      %870 = vmatprep.mubr.f32.mxu0 0.0
      %871 = vmatmul.mubr.f32.gmra.mxu0 %v694
      %v872 = vpop.f32.mrf.mxu0
      %v873 = vadd.f32 %v549, %v872
      %v874 = vpop.f32.mrf.mxu0
      %875 = vmatprep.mubr.f32.mxu0 0.0
      %876 = vmatmul.mubr.f32.gmra.mxu0 %v697
      %v877 = vpop.f32.mrf.mxu0
      %v878 = vadd.f32 %v554, %v877
      %v879 = vpop.f32.mrf.mxu0
      %880 = vmatprep.mubr.f32.mxu0 0.0
      %881 = vmatmul.mubr.f32.gmra.mxu0 %v700
      %v882 = vpop.f32.mrf.mxu0
      %v883 = vadd.f32 %v559, %v882
      %v884 = vpop.f32.mrf.mxu0
      %885 = vmatprep.mubr.f32.mxu0 0.0
      %886 = vmatmul.mubr.f32.gmra.mxu0 %v703
      %v887 = vpop.f32.mrf.mxu0
      %v888 = vadd.f32 %v564, %v887
      %v889 = vpop.f32.mrf.mxu0
      %890 = vmatprep.mubr.f32.mxu0 0.0
      %891 = vmatmul.mubr.f32.gmra.mxu0 %v706
      %v892 = vpop.f32.mrf.mxu0
      %v893 = vadd.f32 %v569, %v892
      %v894 = vpop.f32.mrf.mxu0
      %895 = vmatprep.mubr.f32.mxu0 0.0
      %896 = vmatmul.mubr.f32.gmra.mxu0 %v709
      %v897 = vpop.f32.mrf.mxu0
      %v898 = vadd.f32 %v574, %v897
      %v899 = vpop.f32.mrf.mxu0
      %900 = vmatprep.mubr.f32.mxu0 0.0
      %901 = vmatmul.mubr.f32.gmra.mxu0 %v712
      %v902 = vpop.f32.mrf.mxu0
      %v903 = vadd.f32 %v579, %v902
      %v904 = vpop.f32.mrf.mxu0
      %905 = vmatprep.mubr.f32.mxu0 0.0
      %906 = vmatmul.mubr.f32.gmra.mxu0 %v715
      %v907 = vpop.f32.mrf.mxu0
      %v908 = vadd.f32 %v584, %v907
      %v909 = vpop.f32.mrf.mxu0
      %910 = vmatprep.mubr.f32.mxu0 0.0
      %911 = vmatmul.mubr.f32.gmra.mxu0 %v718
      %v912 = vpop.f32.mrf.mxu0
      %v913 = vadd.f32 %v589, %v912
      %v914 = vpop.f32.mrf.mxu0
      %915 = vmatprep.mubr.f32.mxu0 0.0
      %916 = vmatmul.mubr.f32.gmra.mxu0 %v721
      %v917 = vpop.f32.mrf.mxu0
      %v918 = vadd.f32 %v594, %v917
      %v919 = vpop.f32.mrf.mxu0
      %920 = vmatprep.mubr.f32.mxu0 0.0
      %921 = vmatmul.mubr.f32.gmra.mxu0 %v724
      %v922 = vpop.f32.mrf.mxu0
      %v923 = vadd.f32 %v599, %v922
      %v924 = vpop.f32.mrf.mxu0
      %925 = vmatprep.mubr.f32.mxu0 0.0
      %926 = vmatmul.mubr.f32.gmra.mxu0 %v727
      %v927 = vpop.f32.mrf.mxu0
      %v928 = vadd.f32 %v604, %v927
      %v929 = vpop.f32.mrf.mxu0
      %930 = vmatprep.mubr.f32.mxu0 0.0
      %931 = vmatmul.mubr.f32.gmra.mxu0 %v730
      %v932 = vpop.f32.mrf.mxu0
      %v933 = vadd.f32 %v609, %v932
      %v934 = vpop.f32.mrf.mxu0
      %935 = vmatprep.mubr.f32.mxu0 0.0
      %936 = vmatmul.mubr.f32.gmra.mxu0 %v733
      %v937 = vpop.f32.mrf.mxu0
      %v938 = vadd.f32 %v614, %v937
      %v939 = vpop.f32.mrf.mxu0
      %940 = vmatprep.mubr.f32.mxu0 0.0
      %941 = vmatmul.mubr.f32.gmra.mxu0 %v736
      %v942 = vpop.f32.mrf.mxu0
      %v943 = vadd.f32 %v619, %v942
      %v944 = vpop.f32.mrf.mxu0
      %945 = vmatprep.mubr.f32.mxu0 0.0
      %946 = vmatmul.mubr.f32.gmra.mxu0 %v739
      %v947 = vpop.f32.mrf.mxu0
      %v948 = vadd.f32 %v624, %v947
      %v949 = vpop.f32.mrf.mxu0
      %950 = vmatprep.mubr.f32.mxu0 0.0
      %951 = vmatmul.mubr.f32.gmra.mxu0 %v742
      %v952 = vpop.f32.mrf.mxu0
      %v953 = vadd.f32 %v629, %v952
      %v954 = vpop.f32.mrf.mxu0
      %955 = vmatprep.mubr.f32.mxu0 0.0
      %956 = vmatmul.mubr.f32.gmra.mxu0 %v745
      %v957 = vpop.f32.mrf.mxu0
      %v958 = vadd.f32 %v634, %v957
      %v959 = vpop.f32.mrf.mxu0
      %960 = vmatprep.mubr.f32.mxu0 0.0
      %961 = vmatmul.mubr.f32.gmra.mxu0 %v748
      %v962 = vpop.f32.mrf.mxu0
      %v963 = vadd.f32 %v639, %v962
      %v964 = vpop.f32.mrf.mxu0
      %965 = vmatprep.mubr.f32.mxu0 0.0
      %966 = vmatmul.mubr.f32.gmra.mxu0 %v751
      %v967 = vpop.f32.mrf.mxu0
      %v968 = vadd.f32 %v644, %v967
      %v969 = vpop.f32.mrf.mxu0
      %970 = vmatprep.mubr.f32.mxu0 0.0
      %971 = vmatmul.mubr.f32.gmra.mxu0 %v754
      %v972 = vpop.f32.mrf.mxu0
      %v973 = vadd.f32 %v649, %v972
      %v974 = vpop.f32.mrf.mxu0
      %975 = vmatprep.mubr.f32.mxu0 0.0
      %976 = vmatmul.mubr.f32.gmra.mxu0 %v757
      %v977 = vpop.f32.mrf.mxu0
      %v978 = vadd.f32 %v654, %v977
      %v979 = vpop.f32.mrf.mxu0
      %980 = vmatprep.mubr.f32.mxu0 0.0
      %981 = vmatmul.mubr.f32.gmra.mxu0 %v760
      %v982 = vpop.f32.mrf.mxu0
      %v983 = vadd.f32 %v659, %v982
      %v984 = vpop.f32.mrf.mxu0
      %985 = vmatprep.mubr.f32.mxu0 0.0
      %986 = vmatmul.mubr.f32.gmra.mxu0 %v763
      %v987 = vpop.f32.mrf.mxu0
      %v988 = vadd.f32 %v664, %v987
      %v989 = vpop.f32.mrf.mxu0
      %990 = vmatprep.mubr.f32.mxu0 0.0
      %991 = vmatmul.mubr.f32.gmra.mxu0 %v766
      %v992 = vpop.f32.mrf.mxu0
      %v993 = vadd.f32 %v669, %v992
      %v994 = vpop.f32.mrf.mxu0
      %995 = vdwg.mxu0
      %v996 = vld [vmem:[%s273 + $0x2] sm:$0xff]
      %v997 = vld [vmem:[%s273 + $0xa] sm:$0xff]
      %v998 = vld [vmem:[%s273 + $0x1a] sm:$0xff]
      %v999 = vld [vmem:[%s273 + $0x22] sm:$0xff]
      %v1000 = vld [vmem:[%s273 + $0x32] sm:$0xff]
      %v1001 = vld [vmem:[%s273 + $0x3a] sm:$0xff]
      %v1002 = vld [vmem:[%s273 + $0x4a] sm:$0xff]
      %v1003 = vld [vmem:[%s273 + $0x52] sm:$0xff]
      %v1004 = vld [vmem:[%s273 + $0x62] sm:$0xff]
      %v1005 = vld [vmem:[%s273 + $0x6a] sm:$0xff]
      %v1006 = vld [vmem:[%s273 + $0x7a] sm:$0xff]
      %v1007 = vld [vmem:[%s273 + $0x82] sm:$0xff]
      %v1008 = vld [vmem:[%s273 + $0x92] sm:$0xff]
      %v1009 = vld [vmem:[%s273 + $0x9a] sm:$0xff]
      %v1010 = vld [vmem:[%s273 + $0xaa] sm:$0xff]
      %v1011 = vld [vmem:[%s273 + $0xb2] sm:$0xff]
      %v1012 = vld [vmem:[%s273 + $0xc2] sm:$0xff]
      %v1013 = vld [vmem:[%s273 + $0xca] sm:$0xff]
      %v1014 = vld [vmem:[%s273 + $0xda] sm:$0xff]
      %v1015 = vld [vmem:[%s273 + $0xe2] sm:$0xff]
      %v1016 = vld [vmem:[%s273 + $0xf2] sm:$0xff]
      %v1017 = vld [vmem:[%s273 + $0xfa] sm:$0xff]
      %v1018 = vld [vmem:[%s273 + $0x10a] sm:$0xff]
      %v1019 = vld [vmem:[%s273 + $0x112] sm:$0xff]
      %v1020 = vld [vmem:[%s273 + $0x122] sm:$0xff]
      %v1021 = vld [vmem:[%s273 + $0x12a] sm:$0xff]
      %v1022 = vld [vmem:[%s273 + $0x13a] sm:$0xff]
      %v1023 = vld [vmem:[%s273 + $0x142] sm:$0xff]
      %v1024 = vld [vmem:[%s273 + $0x152] sm:$0xff]
      %v1025 = vld [vmem:[%s273 + $0x15a] sm:$0xff]
      %v1026 = vld [vmem:[%s273 + $0x16a] sm:$0xff]
      %v1027 = vld [vmem:[%s273 + $0x172] sm:$0xff]
      %s1028 = scalar_lea.vmem %s1, 8
      %v1029 = vld [vmem:[%s1028] sm:$0xf]
      %v1031 = vsel %vm346, %v996, 0
      %v1034 = vsel %vm346, %v997, 0
      %v1037 = vsel %vm346, %v998, 0
      %v1040 = vsel %vm346, %v999, 0
      %v1043 = vsel %vm346, %v1000, 0
      %v1046 = vsel %vm346, %v1001, 0
      %v1049 = vsel %vm346, %v1002, 0
      %v1052 = vsel %vm346, %v1003, 0
      %v1055 = vsel %vm346, %v1004, 0
      %v1058 = vsel %vm346, %v1005, 0
      %v1061 = vsel %vm346, %v1006, 0
      %v1064 = vsel %vm346, %v1007, 0
      %v1067 = vsel %vm346, %v1008, 0
      %v1070 = vsel %vm346, %v1009, 0
      %v1073 = vsel %vm346, %v1010, 0
      %v1076 = vsel %vm346, %v1011, 0
      %v1079 = vsel %vm346, %v1012, 0
      %v1082 = vsel %vm346, %v1013, 0
      %v1085 = vsel %vm346, %v1014, 0
      %v1088 = vsel %vm346, %v1015, 0
      %v1091 = vsel %vm346, %v1016, 0
      %v1094 = vsel %vm346, %v1017, 0
      %v1097 = vsel %vm346, %v1018, 0
      %v1100 = vsel %vm346, %v1019, 0
      %v1103 = vsel %vm346, %v1020, 0
      %v1106 = vsel %vm346, %v1021, 0
      %v1109 = vsel %vm346, %v1022, 0
      %v1112 = vsel %vm346, %v1023, 0
      %v1115 = vsel %vm346, %v1024, 0
      %v1118 = vsel %vm346, %v1025, 0
      %v1121 = vsel %vm346, %v1026, 0
      %v1124 = vsel %vm346, %v1027, 0
      %v1127 = vsel %vm443, %v1029, 0
      %1129 = vmatprep.subr.mxu0 0.0
      %1130 = vmatpush1.msra.mxu0 0.0
      %1131 = vmatprep.subr.mxu0 0.0
      %1132 = vmatpush1.msra.mxu0 0.0
      %1133 = vmatprep.subr.mxu0 0.0
      %1134 = vmatpush1.msra.mxu0 0.0
      %1135 = vmatprep.subr.mxu0 0.0
      %1136 = vmatpush1.msra.mxu0 0.0
      %1137 = vmatprep.subr.mxu0 0.0
      %1138 = vmatpush1.msra.mxu0 0.0
      %1139 = vmatprep.subr.mxu0 0.0
      %1140 = vmatpush1.msra.mxu0 0.0
      %1141 = vmatprep.subr.mxu0 0.0
      %1142 = vmatpush1.msra.mxu0 0.0
      %1143 = vmatprep.subr.mxu0 0.0
      %1144 = vmatpush1.msra.mxu0 0.0
      %1145 = vmatprep.subr.mxu0 0.0
      %1146 = vmatpush1.msra.mxu0 0.0
      %1147 = vmatprep.subr.mxu0 0.0
      %1148 = vmatpush1.msra.mxu0 0.0
      %1149 = vmatprep.subr.mxu0 0.0
      %1150 = vmatpush1.msra.mxu0 0.0
      %1151 = vmatprep.subr.mxu0 0.0
      %1152 = vmatpush1.msra.mxu0 0.0
      %1153 = vmatprep.subr.mxu0 0.0
      %1154 = vmatpush1.msra.mxu0 0.0
      %1155 = vmatprep.subr.mxu0 0.0
      %1156 = vmatpush1.msra.mxu0 0.0
      %1157 = vmatprep.subr.mxu0 0.0
      %1158 = vmatpush1.msra.mxu0 0.0
      %1159 = vmatprep.subr.mxu0 0.0
      %1160 = vmatpush1.msra.mxu0 %v1127
      %1161 = vmatprep.subr.mxu0 0.0
      %1162 = vmatpush2.msra.mxu0 0.0
      %1163 = vmatprep.subr.mxu0 0.0
      %1164 = vmatpush2.msra.mxu0 0.0
      %1165 = vmatprep.subr.mxu0 0.0
      %1166 = vmatpush2.msra.mxu0 0.0
      %1167 = vmatprep.subr.mxu0 0.0
      %1168 = vmatpush2.msra.mxu0 0.0
      %1169 = vmatprep.subr.mxu0 0.0
      %1170 = vmatpush2.msra.mxu0 0.0
      %1171 = vmatprep.subr.mxu0 0.0
      %1172 = vmatpush2.msra.mxu0 0.0
      %1173 = vmatprep.subr.mxu0 0.0
      %1174 = vmatpush2.msra.mxu0 0.0
      %1175 = vmatprep.subr.mxu0 0.0
      %1176 = vmatpush2.msra.mxu0 0.0
      %1177 = vmatprep.subr.mxu0 0.0
      %1178 = vmatpush2.msra.mxu0 0.0
      %1179 = vmatprep.subr.mxu0 0.0
      %1180 = vmatpush2.msra.mxu0 0.0
      %1181 = vmatprep.subr.mxu0 0.0
      %1182 = vmatpush2.msra.mxu0 0.0
      %1183 = vmatprep.subr.mxu0 0.0
      %1184 = vmatpush2.msra.mxu0 0.0
      %1185 = vmatprep.subr.mxu0 0.0
      %1186 = vmatpush2.msra.mxu0 0.0
      %1187 = vmatprep.subr.mxu0 0.0
      %1188 = vmatpush2.msra.mxu0 0.0
      %1189 = vmatprep.subr.mxu0 0.0
      %1190 = vmatpush2.msra.mxu0 0.0
      %1191 = vmatprep.subr.mxu0 0.0
      %1192 = vmatpush2.msra.mxu0 0.0
      %1193 = vmatprep.mubr.f32.mxu0 0.0
      %1194 = vmatmul.mubr.f32.gmra.mxu0 %v1031
      %v1195 = vpop.f32.mrf.mxu0
      %v1196 = vadd.f32 0.0, %v1195
      %v1197 = vpop.f32.mrf.mxu0
      %1198 = vmatprep.mubr.f32.mxu0 0.0
      %1199 = vmatmul.mubr.f32.gmra.mxu0 %v1034
      %v1200 = vpop.f32.mrf.mxu0
      %v1201 = vadd.f32 0.0, %v1200
      %v1202 = vpop.f32.mrf.mxu0
      %1203 = vmatprep.mubr.f32.mxu0 0.0
      %1204 = vmatmul.mubr.f32.gmra.mxu0 %v1037
      %v1205 = vpop.f32.mrf.mxu0
      %v1206 = vadd.f32 0.0, %v1205
      %v1207 = vpop.f32.mrf.mxu0
      %1208 = vmatprep.mubr.f32.mxu0 0.0
      %1209 = vmatmul.mubr.f32.gmra.mxu0 %v1040
      %v1210 = vpop.f32.mrf.mxu0
      %v1211 = vadd.f32 0.0, %v1210
      %v1212 = vpop.f32.mrf.mxu0
      %1213 = vmatprep.mubr.f32.mxu0 0.0
      %1214 = vmatmul.mubr.f32.gmra.mxu0 %v1043
      %v1215 = vpop.f32.mrf.mxu0
      %v1216 = vadd.f32 0.0, %v1215
      %v1217 = vpop.f32.mrf.mxu0
      %1218 = vmatprep.mubr.f32.mxu0 0.0
      %1219 = vmatmul.mubr.f32.gmra.mxu0 %v1046
      %v1220 = vpop.f32.mrf.mxu0
      %v1221 = vadd.f32 0.0, %v1220
      %v1222 = vpop.f32.mrf.mxu0
      %1223 = vmatprep.mubr.f32.mxu0 0.0
      %1224 = vmatmul.mubr.f32.gmra.mxu0 %v1049
      %v1225 = vpop.f32.mrf.mxu0
      %v1226 = vadd.f32 0.0, %v1225
      %v1227 = vpop.f32.mrf.mxu0
      %1228 = vmatprep.mubr.f32.mxu0 0.0
      %1229 = vmatmul.mubr.f32.gmra.mxu0 %v1052
      %v1230 = vpop.f32.mrf.mxu0
      %v1231 = vadd.f32 0.0, %v1230
      %v1232 = vpop.f32.mrf.mxu0
      %1233 = vmatprep.mubr.f32.mxu0 0.0
      %1234 = vmatmul.mubr.f32.gmra.mxu0 %v1055
      %v1235 = vpop.f32.mrf.mxu0
      %v1236 = vadd.f32 0.0, %v1235
      %v1237 = vpop.f32.mrf.mxu0
      %1238 = vmatprep.mubr.f32.mxu0 0.0
      %1239 = vmatmul.mubr.f32.gmra.mxu0 %v1058
      %v1240 = vpop.f32.mrf.mxu0
      %v1241 = vadd.f32 0.0, %v1240
      %v1242 = vpop.f32.mrf.mxu0
      %1243 = vmatprep.mubr.f32.mxu0 0.0
      %1244 = vmatmul.mubr.f32.gmra.mxu0 %v1061
      %v1245 = vpop.f32.mrf.mxu0
      %v1246 = vadd.f32 0.0, %v1245
      %v1247 = vpop.f32.mrf.mxu0
      %1248 = vmatprep.mubr.f32.mxu0 0.0
      %1249 = vmatmul.mubr.f32.gmra.mxu0 %v1064
      %v1250 = vpop.f32.mrf.mxu0
      %v1251 = vadd.f32 0.0, %v1250
      %v1252 = vpop.f32.mrf.mxu0
      %1253 = vmatprep.mubr.f32.mxu0 0.0
      %1254 = vmatmul.mubr.f32.gmra.mxu0 %v1067
      %v1255 = vpop.f32.mrf.mxu0
      %v1256 = vadd.f32 0.0, %v1255
      %v1257 = vpop.f32.mrf.mxu0
      %1258 = vmatprep.mubr.f32.mxu0 0.0
      %1259 = vmatmul.mubr.f32.gmra.mxu0 %v1070
      %v1260 = vpop.f32.mrf.mxu0
      %v1261 = vadd.f32 0.0, %v1260
      %v1262 = vpop.f32.mrf.mxu0
      %1263 = vmatprep.mubr.f32.mxu0 0.0
      %1264 = vmatmul.mubr.f32.gmra.mxu0 %v1073
      %v1265 = vpop.f32.mrf.mxu0
      %v1266 = vadd.f32 0.0, %v1265
      %v1267 = vpop.f32.mrf.mxu0
      %1268 = vmatprep.mubr.f32.mxu0 0.0
      %1269 = vmatmul.mubr.f32.gmra.mxu0 %v1076
      %v1270 = vpop.f32.mrf.mxu0
      %v1271 = vadd.f32 0.0, %v1270
      %v1272 = vpop.f32.mrf.mxu0
      %1273 = vmatprep.mubr.f32.mxu0 0.0
      %1274 = vmatmul.mubr.f32.gmra.mxu0 %v1079
      %v1275 = vpop.f32.mrf.mxu0
      %v1276 = vadd.f32 0.0, %v1275
      %v1277 = vpop.f32.mrf.mxu0
      %1278 = vmatprep.mubr.f32.mxu0 0.0
      %1279 = vmatmul.mubr.f32.gmra.mxu0 %v1082
      %v1280 = vpop.f32.mrf.mxu0
      %v1281 = vadd.f32 0.0, %v1280
      %v1282 = vpop.f32.mrf.mxu0
      %1283 = vmatprep.mubr.f32.mxu0 0.0
      %1284 = vmatmul.mubr.f32.gmra.mxu0 %v1085
      %v1285 = vpop.f32.mrf.mxu0
      %v1286 = vadd.f32 0.0, %v1285
      %v1287 = vpop.f32.mrf.mxu0
      %1288 = vmatprep.mubr.f32.mxu0 0.0
      %1289 = vmatmul.mubr.f32.gmra.mxu0 %v1088
      %v1290 = vpop.f32.mrf.mxu0
      %v1291 = vadd.f32 0.0, %v1290
      %v1292 = vpop.f32.mrf.mxu0
      %1293 = vmatprep.mubr.f32.mxu0 0.0
      %1294 = vmatmul.mubr.f32.gmra.mxu0 %v1091
      %v1295 = vpop.f32.mrf.mxu0
      %v1296 = vadd.f32 0.0, %v1295
      %v1297 = vpop.f32.mrf.mxu0
      %1298 = vmatprep.mubr.f32.mxu0 0.0
      %1299 = vmatmul.mubr.f32.gmra.mxu0 %v1094
      %v1300 = vpop.f32.mrf.mxu0
      %v1301 = vadd.f32 0.0, %v1300
      %v1302 = vpop.f32.mrf.mxu0
      %1303 = vmatprep.mubr.f32.mxu0 0.0
      %1304 = vmatmul.mubr.f32.gmra.mxu0 %v1097
      %v1305 = vpop.f32.mrf.mxu0
      %v1306 = vadd.f32 0.0, %v1305
      %v1307 = vpop.f32.mrf.mxu0
      %1308 = vmatprep.mubr.f32.mxu0 0.0
      %1309 = vmatmul.mubr.f32.gmra.mxu0 %v1100
      %v1310 = vpop.f32.mrf.mxu0
      %v1311 = vadd.f32 0.0, %v1310
      %v1312 = vpop.f32.mrf.mxu0
      %1313 = vmatprep.mubr.f32.mxu0 0.0
      %1314 = vmatmul.mubr.f32.gmra.mxu0 %v1103
      %v1315 = vpop.f32.mrf.mxu0
      %v1316 = vadd.f32 0.0, %v1315
      %v1317 = vpop.f32.mrf.mxu0
      %1318 = vmatprep.mubr.f32.mxu0 0.0
      %1319 = vmatmul.mubr.f32.gmra.mxu0 %v1106
      %v1320 = vpop.f32.mrf.mxu0
      %v1321 = vadd.f32 0.0, %v1320
      %v1322 = vpop.f32.mrf.mxu0
      %1323 = vmatprep.mubr.f32.mxu0 0.0
      %1324 = vmatmul.mubr.f32.gmra.mxu0 %v1109
      %v1325 = vpop.f32.mrf.mxu0
      %v1326 = vadd.f32 0.0, %v1325
      %v1327 = vpop.f32.mrf.mxu0
      %1328 = vmatprep.mubr.f32.mxu0 0.0
      %1329 = vmatmul.mubr.f32.gmra.mxu0 %v1112
      %v1330 = vpop.f32.mrf.mxu0
      %v1331 = vadd.f32 0.0, %v1330
      %v1332 = vpop.f32.mrf.mxu0
      %1333 = vmatprep.mubr.f32.mxu0 0.0
      %1334 = vmatmul.mubr.f32.gmra.mxu0 %v1115
      %v1335 = vpop.f32.mrf.mxu0
      %v1336 = vadd.f32 0.0, %v1335
      %v1337 = vpop.f32.mrf.mxu0
      %1338 = vmatprep.mubr.f32.mxu0 0.0
      %1339 = vmatmul.mubr.f32.gmra.mxu0 %v1118
      %v1340 = vpop.f32.mrf.mxu0
      %v1341 = vadd.f32 0.0, %v1340
      %v1342 = vpop.f32.mrf.mxu0
      %1343 = vmatprep.mubr.f32.mxu0 0.0
      %1344 = vmatmul.mubr.f32.gmra.mxu0 %v1121
      %v1345 = vpop.f32.mrf.mxu0
      %v1346 = vadd.f32 0.0, %v1345
      %v1347 = vpop.f32.mrf.mxu0
      %1348 = vmatprep.mubr.f32.mxu0 0.0
      %1349 = vmatmul.mubr.f32.gmra.mxu0 %v1124
      %v1350 = vpop.f32.mrf.mxu0
      %v1351 = vadd.f32 0.0, %v1350
      %v1352 = vpop.f32.mrf.mxu0
      %1353 = vdwg.mxu0
      %v1354 = vadd.f32 %v838, %v1196
      %v1355 = vadd.f32 %v843, %v1201
      %v1356 = vadd.f32 %v848, %v1206
      %v1357 = vadd.f32 %v853, %v1211
      %v1358 = vadd.f32 %v858, %v1216
      %v1359 = vadd.f32 %v863, %v1221
      %v1360 = vadd.f32 %v868, %v1226
      %v1361 = vadd.f32 %v873, %v1231
      %v1362 = vadd.f32 %v878, %v1236
      %v1363 = vadd.f32 %v883, %v1241
      %v1364 = vadd.f32 %v888, %v1246
      %v1365 = vadd.f32 %v893, %v1251
      %v1366 = vadd.f32 %v898, %v1256
      %v1367 = vadd.f32 %v903, %v1261
      %v1368 = vadd.f32 %v908, %v1266
      %v1369 = vadd.f32 %v913, %v1271
      %v1370 = vadd.f32 %v918, %v1276
      %v1371 = vadd.f32 %v923, %v1281
      %v1372 = vadd.f32 %v928, %v1286
      %v1373 = vadd.f32 %v933, %v1291
      %v1374 = vadd.f32 %v938, %v1296
      %v1375 = vadd.f32 %v943, %v1301
      %v1376 = vadd.f32 %v948, %v1306
      %v1377 = vadd.f32 %v953, %v1311
      %v1378 = vadd.f32 %v958, %v1316
      %v1379 = vadd.f32 %v963, %v1321
      %v1380 = vadd.f32 %v968, %v1326
      %v1381 = vadd.f32 %v973, %v1331
      %v1382 = vadd.f32 %v978, %v1336
      %v1383 = vadd.f32 %v983, %v1341
      %v1384 = vadd.f32 %v988, %v1346
      %v1385 = vadd.f32 %v993, %v1351
      %s1386 = scalar_lea.vmem %s273, 24
      %v1387 = vld [vmem:[%s1386] sm:$0xff]
      %v1388 = vld [vmem:[%s1386 + $0x8] sm:$0xff]
      %v1389 = vld [vmem:[%s1386 + $0x18] sm:$0xff]
      %v1390 = vld [vmem:[%s1386 + $0x20] sm:$0xff]
      %v1391 = vld [vmem:[%s1386 + $0x30] sm:$0xff]
      %v1392 = vld [vmem:[%s1386 + $0x38] sm:$0xff]
      %v1393 = vld [vmem:[%s1386 + $0x48] sm:$0xff]
      %v1394 = vld [vmem:[%s1386 + $0x50] sm:$0xff]
      %v1395 = vld [vmem:[%s1386 + $0x60] sm:$0xff]
      %v1396 = vld [vmem:[%s1386 + $0x68] sm:$0xff]
      %v1397 = vld [vmem:[%s1386 + $0x78] sm:$0xff]
      %v1398 = vld [vmem:[%s1386 + $0x80] sm:$0xff]
      %v1399 = vld [vmem:[%s1386 + $0x90] sm:$0xff]
      %v1400 = vld [vmem:[%s1386 + $0x98] sm:$0xff]
      %v1401 = vld [vmem:[%s1386 + $0xa8] sm:$0xff]
      %v1402 = vld [vmem:[%s1386 + $0xb0] sm:$0xff]
      %v1403 = vld [vmem:[%s1386 + $0xc0] sm:$0xff]
      %v1404 = vld [vmem:[%s1386 + $0xc8] sm:$0xff]
      %v1405 = vld [vmem:[%s1386 + $0xd8] sm:$0xff]
      %v1406 = vld [vmem:[%s1386 + $0xe0] sm:$0xff]
      %v1407 = vld [vmem:[%s1386 + $0xf0] sm:$0xff]
      %v1408 = vld [vmem:[%s1386 + $0xf8] sm:$0xff]
      %v1409 = vld [vmem:[%s1386 + $0x108] sm:$0xff]
      %v1410 = vld [vmem:[%s1386 + $0x110] sm:$0xff]
      %v1411 = vld [vmem:[%s1386 + $0x120] sm:$0xff]
      %v1412 = vld [vmem:[%s1386 + $0x128] sm:$0xff]
      %v1413 = vld [vmem:[%s1386 + $0x138] sm:$0xff]
      %v1414 = vld [vmem:[%s1386 + $0x140] sm:$0xff]
      %v1415 = vld [vmem:[%s1386 + $0x150] sm:$0xff]
      %v1416 = vld [vmem:[%s1386 + $0x158] sm:$0xff]
      %v1417 = vld [vmem:[%s1386 + $0x168] sm:$0xff]
      %v1418 = vld [vmem:[%s1386 + $0x170] sm:$0xff]
      %s1419 = scalar_lea.vmem %s1, 12
      %v1420 = vld [vmem:[%s1419] sm:$0xf]
      %v1422 = vsel %vm346, %v1387, 0
      %v1425 = vsel %vm346, %v1388, 0
      %v1428 = vsel %vm346, %v1389, 0
      %v1431 = vsel %vm346, %v1390, 0
      %v1434 = vsel %vm346, %v1391, 0
      %v1437 = vsel %vm346, %v1392, 0
      %v1440 = vsel %vm346, %v1393, 0
      %v1443 = vsel %vm346, %v1394, 0
      %v1446 = vsel %vm346, %v1395, 0
      %v1449 = vsel %vm346, %v1396, 0
      %v1452 = vsel %vm346, %v1397, 0
      %v1455 = vsel %vm346, %v1398, 0
      %v1458 = vsel %vm346, %v1399, 0
      %v1461 = vsel %vm346, %v1400, 0
      %v1464 = vsel %vm346, %v1401, 0
      %v1467 = vsel %vm346, %v1402, 0
      %v1470 = vsel %vm346, %v1403, 0
      %v1473 = vsel %vm346, %v1404, 0
      %v1476 = vsel %vm346, %v1405, 0
      %v1479 = vsel %vm346, %v1406, 0
      %v1482 = vsel %vm346, %v1407, 0
      %v1485 = vsel %vm346, %v1408, 0
      %v1488 = vsel %vm346, %v1409, 0
      %v1491 = vsel %vm346, %v1410, 0
      %v1494 = vsel %vm346, %v1411, 0
      %v1497 = vsel %vm346, %v1412, 0
      %v1500 = vsel %vm346, %v1413, 0
      %v1503 = vsel %vm346, %v1414, 0
      %v1506 = vsel %vm346, %v1415, 0
      %v1509 = vsel %vm346, %v1416, 0
      %v1512 = vsel %vm346, %v1417, 0
      %v1515 = vsel %vm346, %v1418, 0
      %v1518 = vsel %vm443, %v1420, 0
      %1520 = vmatprep.subr.mxu0 0.0
      %1521 = vmatpush1.msra.mxu0 0.0
      %1522 = vmatprep.subr.mxu0 0.0
      %1523 = vmatpush1.msra.mxu0 0.0
      %1524 = vmatprep.subr.mxu0 0.0
      %1525 = vmatpush1.msra.mxu0 0.0
      %1526 = vmatprep.subr.mxu0 0.0
      %1527 = vmatpush1.msra.mxu0 0.0
      %1528 = vmatprep.subr.mxu0 0.0
      %1529 = vmatpush1.msra.mxu0 0.0
      %1530 = vmatprep.subr.mxu0 0.0
      %1531 = vmatpush1.msra.mxu0 0.0
      %1532 = vmatprep.subr.mxu0 0.0
      %1533 = vmatpush1.msra.mxu0 0.0
      %1534 = vmatprep.subr.mxu0 0.0
      %1535 = vmatpush1.msra.mxu0 0.0
      %1536 = vmatprep.subr.mxu0 0.0
      %1537 = vmatpush1.msra.mxu0 0.0
      %1538 = vmatprep.subr.mxu0 0.0
      %1539 = vmatpush1.msra.mxu0 0.0
      %1540 = vmatprep.subr.mxu0 0.0
      %1541 = vmatpush1.msra.mxu0 0.0
      %1542 = vmatprep.subr.mxu0 0.0
      %1543 = vmatpush1.msra.mxu0 0.0
      %1544 = vmatprep.subr.mxu0 0.0
      %1545 = vmatpush1.msra.mxu0 0.0
      %1546 = vmatprep.subr.mxu0 0.0
      %1547 = vmatpush1.msra.mxu0 0.0
      %1548 = vmatprep.subr.mxu0 0.0
      %1549 = vmatpush1.msra.mxu0 0.0
      %1550 = vmatprep.subr.mxu0 0.0
      %1551 = vmatpush1.msra.mxu0 %v1518
      %1552 = vmatprep.subr.mxu0 0.0
      %1553 = vmatpush2.msra.mxu0 0.0
      %1554 = vmatprep.subr.mxu0 0.0
      %1555 = vmatpush2.msra.mxu0 0.0
      %1556 = vmatprep.subr.mxu0 0.0
      %1557 = vmatpush2.msra.mxu0 0.0
      %1558 = vmatprep.subr.mxu0 0.0
      %1559 = vmatpush2.msra.mxu0 0.0
      %1560 = vmatprep.subr.mxu0 0.0
      %1561 = vmatpush2.msra.mxu0 0.0
      %1562 = vmatprep.subr.mxu0 0.0
      %1563 = vmatpush2.msra.mxu0 0.0
      %1564 = vmatprep.subr.mxu0 0.0
      %1565 = vmatpush2.msra.mxu0 0.0
      %1566 = vmatprep.subr.mxu0 0.0
      %1567 = vmatpush2.msra.mxu0 0.0
      %1568 = vmatprep.subr.mxu0 0.0
      %1569 = vmatpush2.msra.mxu0 0.0
      %1570 = vmatprep.subr.mxu0 0.0
      %1571 = vmatpush2.msra.mxu0 0.0
      %1572 = vmatprep.subr.mxu0 0.0
      %1573 = vmatpush2.msra.mxu0 0.0
      %1574 = vmatprep.subr.mxu0 0.0
      %1575 = vmatpush2.msra.mxu0 0.0
      %1576 = vmatprep.subr.mxu0 0.0
      %1577 = vmatpush2.msra.mxu0 0.0
      %1578 = vmatprep.subr.mxu0 0.0
      %1579 = vmatpush2.msra.mxu0 0.0
      %1580 = vmatprep.subr.mxu0 0.0
      %1581 = vmatpush2.msra.mxu0 0.0
      %1582 = vmatprep.subr.mxu0 0.0
      %1583 = vmatpush2.msra.mxu0 0.0
      %1584 = vmatprep.mubr.f32.mxu0 0.0
      %1585 = vmatmul.mubr.f32.gmra.mxu0 %v1422
      %v1586 = vpop.f32.mrf.mxu0
      %v1587 = vadd.f32 0.0, %v1586
      %v1588 = vpop.f32.mrf.mxu0
      %1589 = vmatprep.mubr.f32.mxu0 0.0
      %1590 = vmatmul.mubr.f32.gmra.mxu0 %v1425
      %v1591 = vpop.f32.mrf.mxu0
      %v1592 = vadd.f32 0.0, %v1591
      %v1593 = vpop.f32.mrf.mxu0
      %1594 = vmatprep.mubr.f32.mxu0 0.0
      %1595 = vmatmul.mubr.f32.gmra.mxu0 %v1428
      %v1596 = vpop.f32.mrf.mxu0
      %v1597 = vadd.f32 0.0, %v1596
      %v1598 = vpop.f32.mrf.mxu0
      %1599 = vmatprep.mubr.f32.mxu0 0.0
      %1600 = vmatmul.mubr.f32.gmra.mxu0 %v1431
      %v1601 = vpop.f32.mrf.mxu0
      %v1602 = vadd.f32 0.0, %v1601
      %v1603 = vpop.f32.mrf.mxu0
      %1604 = vmatprep.mubr.f32.mxu0 0.0
      %1605 = vmatmul.mubr.f32.gmra.mxu0 %v1434
      %v1606 = vpop.f32.mrf.mxu0
      %v1607 = vadd.f32 0.0, %v1606
      %v1608 = vpop.f32.mrf.mxu0
      %1609 = vmatprep.mubr.f32.mxu0 0.0
      %1610 = vmatmul.mubr.f32.gmra.mxu0 %v1437
      %v1611 = vpop.f32.mrf.mxu0
      %v1612 = vadd.f32 0.0, %v1611
      %v1613 = vpop.f32.mrf.mxu0
      %1614 = vmatprep.mubr.f32.mxu0 0.0
      %1615 = vmatmul.mubr.f32.gmra.mxu0 %v1440
      %v1616 = vpop.f32.mrf.mxu0
      %v1617 = vadd.f32 0.0, %v1616
      %v1618 = vpop.f32.mrf.mxu0
      %1619 = vmatprep.mubr.f32.mxu0 0.0
      %1620 = vmatmul.mubr.f32.gmra.mxu0 %v1443
      %v1621 = vpop.f32.mrf.mxu0
      %v1622 = vadd.f32 0.0, %v1621
      %v1623 = vpop.f32.mrf.mxu0
      %1624 = vmatprep.mubr.f32.mxu0 0.0
      %1625 = vmatmul.mubr.f32.gmra.mxu0 %v1446
      %v1626 = vpop.f32.mrf.mxu0
      %v1627 = vadd.f32 0.0, %v1626
      %v1628 = vpop.f32.mrf.mxu0
      %1629 = vmatprep.mubr.f32.mxu0 0.0
      %1630 = vmatmul.mubr.f32.gmra.mxu0 %v1449
      %v1631 = vpop.f32.mrf.mxu0
      %v1632 = vadd.f32 0.0, %v1631
      %v1633 = vpop.f32.mrf.mxu0
      %1634 = vmatprep.mubr.f32.mxu0 0.0
      %1635 = vmatmul.mubr.f32.gmra.mxu0 %v1452
      %v1636 = vpop.f32.mrf.mxu0
      %v1637 = vadd.f32 0.0, %v1636
      %v1638 = vpop.f32.mrf.mxu0
      %1639 = vmatprep.mubr.f32.mxu0 0.0
      %1640 = vmatmul.mubr.f32.gmra.mxu0 %v1455
      %v1641 = vpop.f32.mrf.mxu0
      %v1642 = vadd.f32 0.0, %v1641
      %v1643 = vpop.f32.mrf.mxu0
      %1644 = vmatprep.mubr.f32.mxu0 0.0
      %1645 = vmatmul.mubr.f32.gmra.mxu0 %v1458
      %v1646 = vpop.f32.mrf.mxu0
      %v1647 = vadd.f32 0.0, %v1646
      %v1648 = vpop.f32.mrf.mxu0
      %1649 = vmatprep.mubr.f32.mxu0 0.0
      %1650 = vmatmul.mubr.f32.gmra.mxu0 %v1461
      %v1651 = vpop.f32.mrf.mxu0
      %v1652 = vadd.f32 0.0, %v1651
      %v1653 = vpop.f32.mrf.mxu0
      %1654 = vmatprep.mubr.f32.mxu0 0.0
      %1655 = vmatmul.mubr.f32.gmra.mxu0 %v1464
      %v1656 = vpop.f32.mrf.mxu0
      %v1657 = vadd.f32 0.0, %v1656
      %v1658 = vpop.f32.mrf.mxu0
      %1659 = vmatprep.mubr.f32.mxu0 0.0
      %1660 = vmatmul.mubr.f32.gmra.mxu0 %v1467
      %v1661 = vpop.f32.mrf.mxu0
      %v1662 = vadd.f32 0.0, %v1661
      %v1663 = vpop.f32.mrf.mxu0
      %1664 = vmatprep.mubr.f32.mxu0 0.0
      %1665 = vmatmul.mubr.f32.gmra.mxu0 %v1470
      %v1666 = vpop.f32.mrf.mxu0
      %v1667 = vadd.f32 0.0, %v1666
      %v1668 = vpop.f32.mrf.mxu0
      %1669 = vmatprep.mubr.f32.mxu0 0.0
      %1670 = vmatmul.mubr.f32.gmra.mxu0 %v1473
      %v1671 = vpop.f32.mrf.mxu0
      %v1672 = vadd.f32 0.0, %v1671
      %v1673 = vpop.f32.mrf.mxu0
      %1674 = vmatprep.mubr.f32.mxu0 0.0
      %1675 = vmatmul.mubr.f32.gmra.mxu0 %v1476
      %v1676 = vpop.f32.mrf.mxu0
      %v1677 = vadd.f32 0.0, %v1676
      %v1678 = vpop.f32.mrf.mxu0
      %1679 = vmatprep.mubr.f32.mxu0 0.0
      %1680 = vmatmul.mubr.f32.gmra.mxu0 %v1479
      %v1681 = vpop.f32.mrf.mxu0
      %v1682 = vadd.f32 0.0, %v1681
      %v1683 = vpop.f32.mrf.mxu0
      %1684 = vmatprep.mubr.f32.mxu0 0.0
      %1685 = vmatmul.mubr.f32.gmra.mxu0 %v1482
      %v1686 = vpop.f32.mrf.mxu0
      %v1687 = vadd.f32 0.0, %v1686
      %v1688 = vpop.f32.mrf.mxu0
      %1689 = vmatprep.mubr.f32.mxu0 0.0
      %1690 = vmatmul.mubr.f32.gmra.mxu0 %v1485
      %v1691 = vpop.f32.mrf.mxu0
      %v1692 = vadd.f32 0.0, %v1691
      %v1693 = vpop.f32.mrf.mxu0
      %1694 = vmatprep.mubr.f32.mxu0 0.0
      %1695 = vmatmul.mubr.f32.gmra.mxu0 %v1488
      %v1696 = vpop.f32.mrf.mxu0
      %v1697 = vadd.f32 0.0, %v1696
      %v1698 = vpop.f32.mrf.mxu0
      %1699 = vmatprep.mubr.f32.mxu0 0.0
      %1700 = vmatmul.mubr.f32.gmra.mxu0 %v1491
      %v1701 = vpop.f32.mrf.mxu0
      %v1702 = vadd.f32 0.0, %v1701
      %v1703 = vpop.f32.mrf.mxu0
      %1704 = vmatprep.mubr.f32.mxu0 0.0
      %1705 = vmatmul.mubr.f32.gmra.mxu0 %v1494
      %v1706 = vpop.f32.mrf.mxu0
      %v1707 = vadd.f32 0.0, %v1706
      %v1708 = vpop.f32.mrf.mxu0
      %1709 = vmatprep.mubr.f32.mxu0 0.0
      %1710 = vmatmul.mubr.f32.gmra.mxu0 %v1497
      %v1711 = vpop.f32.mrf.mxu0
      %v1712 = vadd.f32 0.0, %v1711
      %v1713 = vpop.f32.mrf.mxu0
      %1714 = vmatprep.mubr.f32.mxu0 0.0
      %1715 = vmatmul.mubr.f32.gmra.mxu0 %v1500
      %v1716 = vpop.f32.mrf.mxu0
      %v1717 = vadd.f32 0.0, %v1716
      %v1718 = vpop.f32.mrf.mxu0
      %1719 = vmatprep.mubr.f32.mxu0 0.0
      %1720 = vmatmul.mubr.f32.gmra.mxu0 %v1503
      %v1721 = vpop.f32.mrf.mxu0
      %v1722 = vadd.f32 0.0, %v1721
      %v1723 = vpop.f32.mrf.mxu0
      %1724 = vmatprep.mubr.f32.mxu0 0.0
      %1725 = vmatmul.mubr.f32.gmra.mxu0 %v1506
      %v1726 = vpop.f32.mrf.mxu0
      %v1727 = vadd.f32 0.0, %v1726
      %v1728 = vpop.f32.mrf.mxu0
      %1729 = vmatprep.mubr.f32.mxu0 0.0
      %1730 = vmatmul.mubr.f32.gmra.mxu0 %v1509
      %v1731 = vpop.f32.mrf.mxu0
      %v1732 = vadd.f32 0.0, %v1731
      %v1733 = vpop.f32.mrf.mxu0
      %1734 = vmatprep.mubr.f32.mxu0 0.0
      %1735 = vmatmul.mubr.f32.gmra.mxu0 %v1512
      %v1736 = vpop.f32.mrf.mxu0
      %v1737 = vadd.f32 0.0, %v1736
      %v1738 = vpop.f32.mrf.mxu0
      %1739 = vmatprep.mubr.f32.mxu0 0.0
      %1740 = vmatmul.mubr.f32.gmra.mxu0 %v1515
      %v1741 = vpop.f32.mrf.mxu0
      %v1742 = vadd.f32 0.0, %v1741
      %v1743 = vpop.f32.mrf.mxu0
      %1744 = vdwg.mxu0
      %v1745 = vadd.f32 %v1354, %v1587
      %v1746 = vadd.f32 %v1355, %v1592
      %v1747 = vadd.f32 %v1356, %v1597
      %v1748 = vadd.f32 %v1357, %v1602
      %v1749 = vadd.f32 %v1358, %v1607
      %v1750 = vadd.f32 %v1359, %v1612
      %v1751 = vadd.f32 %v1360, %v1617
      %v1752 = vadd.f32 %v1361, %v1622
      %v1753 = vadd.f32 %v1362, %v1627
      %v1754 = vadd.f32 %v1363, %v1632
      %v1755 = vadd.f32 %v1364, %v1637
      %v1756 = vadd.f32 %v1365, %v1642
      %v1757 = vadd.f32 %v1366, %v1647
      %v1758 = vadd.f32 %v1367, %v1652
      %v1759 = vadd.f32 %v1368, %v1657
      %v1760 = vadd.f32 %v1369, %v1662
      %v1761 = vadd.f32 %v1370, %v1667
      %v1762 = vadd.f32 %v1371, %v1672
      %v1763 = vadd.f32 %v1372, %v1677
      %v1764 = vadd.f32 %v1373, %v1682
      %v1765 = vadd.f32 %v1374, %v1687
      %v1766 = vadd.f32 %v1375, %v1692
      %v1767 = vadd.f32 %v1376, %v1697
      %v1768 = vadd.f32 %v1377, %v1702
      %v1769 = vadd.f32 %v1378, %v1707
      %v1770 = vadd.f32 %v1379, %v1712
      %v1771 = vadd.f32 %v1380, %v1717
      %v1772 = vadd.f32 %v1381, %v1722
      %v1773 = vadd.f32 %v1382, %v1727
      %v1774 = vadd.f32 %v1383, %v1732
      %v1775 = vadd.f32 %v1384, %v1737
      %v1776 = vadd.f32 %v1385, %v1742
      %v1777 = vld [vmem:[%s1386 + $0x1] sm:$0xff]
      %v1778 = vld [vmem:[%s1386 + $0x9] sm:$0xff]
      %v1779 = vld [vmem:[%s1386 + $0x19] sm:$0xff]
      %v1780 = vld [vmem:[%s1386 + $0x21] sm:$0xff]
      %v1781 = vld [vmem:[%s1386 + $0x31] sm:$0xff]
      %v1782 = vld [vmem:[%s1386 + $0x39] sm:$0xff]
      %v1783 = vld [vmem:[%s1386 + $0x49] sm:$0xff]
      %v1784 = vld [vmem:[%s1386 + $0x51] sm:$0xff]
      %v1785 = vld [vmem:[%s1386 + $0x61] sm:$0xff]
      %v1786 = vld [vmem:[%s1386 + $0x69] sm:$0xff]
      %v1787 = vld [vmem:[%s1386 + $0x79] sm:$0xff]
      %v1788 = vld [vmem:[%s1386 + $0x81] sm:$0xff]
      %v1789 = vld [vmem:[%s1386 + $0x91] sm:$0xff]
      %v1790 = vld [vmem:[%s1386 + $0x99] sm:$0xff]
      %v1791 = vld [vmem:[%s1386 + $0xa9] sm:$0xff]
      %v1792 = vld [vmem:[%s1386 + $0xb1] sm:$0xff]
      %v1793 = vld [vmem:[%s1386 + $0xc1] sm:$0xff]
      %v1794 = vld [vmem:[%s1386 + $0xc9] sm:$0xff]
      %v1795 = vld [vmem:[%s1386 + $0xd9] sm:$0xff]
      %v1796 = vld [vmem:[%s1386 + $0xe1] sm:$0xff]
      %v1797 = vld [vmem:[%s1386 + $0xf1] sm:$0xff]
      %v1798 = vld [vmem:[%s1386 + $0xf9] sm:$0xff]
      %v1799 = vld [vmem:[%s1386 + $0x109] sm:$0xff]
      %v1800 = vld [vmem:[%s1386 + $0x111] sm:$0xff]
      %v1801 = vld [vmem:[%s1386 + $0x121] sm:$0xff]
      %v1802 = vld [vmem:[%s1386 + $0x129] sm:$0xff]
      %v1803 = vld [vmem:[%s1386 + $0x139] sm:$0xff]
      %v1804 = vld [vmem:[%s1386 + $0x141] sm:$0xff]
      %v1805 = vld [vmem:[%s1386 + $0x151] sm:$0xff]
      %v1806 = vld [vmem:[%s1386 + $0x159] sm:$0xff]
      %v1807 = vld [vmem:[%s1386 + $0x169] sm:$0xff]
      %v1808 = vld [vmem:[%s1386 + $0x171] sm:$0xff]
      %s1809 = scalar_lea.vmem %s1, 16
      %v1810 = vld [vmem:[%s1809] sm:$0xf]
      %v1812 = vsel %vm346, %v1777, 0
      %v1815 = vsel %vm346, %v1778, 0
      %v1818 = vsel %vm346, %v1779, 0
      %v1821 = vsel %vm346, %v1780, 0
      %v1824 = vsel %vm346, %v1781, 0
      %v1827 = vsel %vm346, %v1782, 0
      %v1830 = vsel %vm346, %v1783, 0
      %v1833 = vsel %vm346, %v1784, 0
      %v1836 = vsel %vm346, %v1785, 0
      %v1839 = vsel %vm346, %v1786, 0
      %v1842 = vsel %vm346, %v1787, 0
      %v1845 = vsel %vm346, %v1788, 0
      %v1848 = vsel %vm346, %v1789, 0
      %v1851 = vsel %vm346, %v1790, 0
      %v1854 = vsel %vm346, %v1791, 0
      %v1857 = vsel %vm346, %v1792, 0
      %v1860 = vsel %vm346, %v1793, 0
      %v1863 = vsel %vm346, %v1794, 0
      %v1866 = vsel %vm346, %v1795, 0
      %v1869 = vsel %vm346, %v1796, 0
      %v1872 = vsel %vm346, %v1797, 0
      %v1875 = vsel %vm346, %v1798, 0
      %v1878 = vsel %vm346, %v1799, 0
      %v1881 = vsel %vm346, %v1800, 0
      %v1884 = vsel %vm346, %v1801, 0
      %v1887 = vsel %vm346, %v1802, 0
      %v1890 = vsel %vm346, %v1803, 0
      %v1893 = vsel %vm346, %v1804, 0
      %v1896 = vsel %vm346, %v1805, 0
      %v1899 = vsel %vm346, %v1806, 0
      %v1902 = vsel %vm346, %v1807, 0
      %v1905 = vsel %vm346, %v1808, 0
      %v1908 = vsel %vm443, %v1810, 0
      %1910 = vmatprep.subr.mxu0 0.0
      %1911 = vmatpush1.msra.mxu0 0.0
      %1912 = vmatprep.subr.mxu0 0.0
      %1913 = vmatpush1.msra.mxu0 0.0
      %1914 = vmatprep.subr.mxu0 0.0
      %1915 = vmatpush1.msra.mxu0 0.0
      %1916 = vmatprep.subr.mxu0 0.0
      %1917 = vmatpush1.msra.mxu0 0.0
      %1918 = vmatprep.subr.mxu0 0.0
      %1919 = vmatpush1.msra.mxu0 0.0
      %1920 = vmatprep.subr.mxu0 0.0
      %1921 = vmatpush1.msra.mxu0 0.0
      %1922 = vmatprep.subr.mxu0 0.0
      %1923 = vmatpush1.msra.mxu0 0.0
      %1924 = vmatprep.subr.mxu0 0.0
      %1925 = vmatpush1.msra.mxu0 0.0
      %1926 = vmatprep.subr.mxu0 0.0
      %1927 = vmatpush1.msra.mxu0 0.0
      %1928 = vmatprep.subr.mxu0 0.0
      %1929 = vmatpush1.msra.mxu0 0.0
      %1930 = vmatprep.subr.mxu0 0.0
      %1931 = vmatpush1.msra.mxu0 0.0
      %1932 = vmatprep.subr.mxu0 0.0
      %1933 = vmatpush1.msra.mxu0 0.0
      %1934 = vmatprep.subr.mxu0 0.0
      %1935 = vmatpush1.msra.mxu0 0.0
      %1936 = vmatprep.subr.mxu0 0.0
      %1937 = vmatpush1.msra.mxu0 0.0
      %1938 = vmatprep.subr.mxu0 0.0
      %1939 = vmatpush1.msra.mxu0 0.0
      %1940 = vmatprep.subr.mxu0 0.0
      %1941 = vmatpush1.msra.mxu0 %v1908
      %1942 = vmatprep.subr.mxu0 0.0
      %1943 = vmatpush2.msra.mxu0 0.0
      %1944 = vmatprep.subr.mxu0 0.0
      %1945 = vmatpush2.msra.mxu0 0.0
      %1946 = vmatprep.subr.mxu0 0.0
      %1947 = vmatpush2.msra.mxu0 0.0
      %1948 = vmatprep.subr.mxu0 0.0
      %1949 = vmatpush2.msra.mxu0 0.0
      %1950 = vmatprep.subr.mxu0 0.0
      %1951 = vmatpush2.msra.mxu0 0.0
      %1952 = vmatprep.subr.mxu0 0.0
      %1953 = vmatpush2.msra.mxu0 0.0
      %1954 = vmatprep.subr.mxu0 0.0
      %1955 = vmatpush2.msra.mxu0 0.0
      %1956 = vmatprep.subr.mxu0 0.0
      %1957 = vmatpush2.msra.mxu0 0.0
      %1958 = vmatprep.subr.mxu0 0.0
      %1959 = vmatpush2.msra.mxu0 0.0
      %1960 = vmatprep.subr.mxu0 0.0
      %1961 = vmatpush2.msra.mxu0 0.0
      %1962 = vmatprep.subr.mxu0 0.0
      %1963 = vmatpush2.msra.mxu0 0.0
      %1964 = vmatprep.subr.mxu0 0.0
      %1965 = vmatpush2.msra.mxu0 0.0
      %1966 = vmatprep.subr.mxu0 0.0
      %1967 = vmatpush2.msra.mxu0 0.0
      %1968 = vmatprep.subr.mxu0 0.0
      %1969 = vmatpush2.msra.mxu0 0.0
      %1970 = vmatprep.subr.mxu0 0.0
      %1971 = vmatpush2.msra.mxu0 0.0
      %1972 = vmatprep.subr.mxu0 0.0
      %1973 = vmatpush2.msra.mxu0 0.0
      %1974 = vmatprep.mubr.f32.mxu0 0.0
      %1975 = vmatmul.mubr.f32.gmra.mxu0 %v1812
      %v1976 = vpop.f32.mrf.mxu0
      %v1977 = vadd.f32 0.0, %v1976
      %v1978 = vpop.f32.mrf.mxu0
      %1979 = vmatprep.mubr.f32.mxu0 0.0
      %1980 = vmatmul.mubr.f32.gmra.mxu0 %v1815
      %v1981 = vpop.f32.mrf.mxu0
      %v1982 = vadd.f32 0.0, %v1981
      %v1983 = vpop.f32.mrf.mxu0
      %1984 = vmatprep.mubr.f32.mxu0 0.0
      %1985 = vmatmul.mubr.f32.gmra.mxu0 %v1818
      %v1986 = vpop.f32.mrf.mxu0
      %v1987 = vadd.f32 0.0, %v1986
      %v1988 = vpop.f32.mrf.mxu0
      %1989 = vmatprep.mubr.f32.mxu0 0.0
      %1990 = vmatmul.mubr.f32.gmra.mxu0 %v1821
      %v1991 = vpop.f32.mrf.mxu0
      %v1992 = vadd.f32 0.0, %v1991
      %v1993 = vpop.f32.mrf.mxu0
      %1994 = vmatprep.mubr.f32.mxu0 0.0
      %1995 = vmatmul.mubr.f32.gmra.mxu0 %v1824
      %v1996 = vpop.f32.mrf.mxu0
      %v1997 = vadd.f32 0.0, %v1996
      %v1998 = vpop.f32.mrf.mxu0
      %1999 = vmatprep.mubr.f32.mxu0 0.0
      %2000 = vmatmul.mubr.f32.gmra.mxu0 %v1827
      %v2001 = vpop.f32.mrf.mxu0
      %v2002 = vadd.f32 0.0, %v2001
      %v2003 = vpop.f32.mrf.mxu0
      %2004 = vmatprep.mubr.f32.mxu0 0.0
      %2005 = vmatmul.mubr.f32.gmra.mxu0 %v1830
      %v2006 = vpop.f32.mrf.mxu0
      %v2007 = vadd.f32 0.0, %v2006
      %v2008 = vpop.f32.mrf.mxu0
      %2009 = vmatprep.mubr.f32.mxu0 0.0
      %2010 = vmatmul.mubr.f32.gmra.mxu0 %v1833
      %v2011 = vpop.f32.mrf.mxu0
      %v2012 = vadd.f32 0.0, %v2011
      %v2013 = vpop.f32.mrf.mxu0
      %2014 = vmatprep.mubr.f32.mxu0 0.0
      %2015 = vmatmul.mubr.f32.gmra.mxu0 %v1836
      %v2016 = vpop.f32.mrf.mxu0
      %v2017 = vadd.f32 0.0, %v2016
      %v2018 = vpop.f32.mrf.mxu0
      %2019 = vmatprep.mubr.f32.mxu0 0.0
      %2020 = vmatmul.mubr.f32.gmra.mxu0 %v1839
      %v2021 = vpop.f32.mrf.mxu0
      %v2022 = vadd.f32 0.0, %v2021
      %v2023 = vpop.f32.mrf.mxu0
      %2024 = vmatprep.mubr.f32.mxu0 0.0
      %2025 = vmatmul.mubr.f32.gmra.mxu0 %v1842
      %v2026 = vpop.f32.mrf.mxu0
      %v2027 = vadd.f32 0.0, %v2026
      %v2028 = vpop.f32.mrf.mxu0
      %2029 = vmatprep.mubr.f32.mxu0 0.0
      %2030 = vmatmul.mubr.f32.gmra.mxu0 %v1845
      %v2031 = vpop.f32.mrf.mxu0
      %v2032 = vadd.f32 0.0, %v2031
      %v2033 = vpop.f32.mrf.mxu0
      %2034 = vmatprep.mubr.f32.mxu0 0.0
      %2035 = vmatmul.mubr.f32.gmra.mxu0 %v1848
      %v2036 = vpop.f32.mrf.mxu0
      %v2037 = vadd.f32 0.0, %v2036
      %v2038 = vpop.f32.mrf.mxu0
      %2039 = vmatprep.mubr.f32.mxu0 0.0
      %2040 = vmatmul.mubr.f32.gmra.mxu0 %v1851
      %v2041 = vpop.f32.mrf.mxu0
      %v2042 = vadd.f32 0.0, %v2041
      %v2043 = vpop.f32.mrf.mxu0
      %2044 = vmatprep.mubr.f32.mxu0 0.0
      %2045 = vmatmul.mubr.f32.gmra.mxu0 %v1854
      %v2046 = vpop.f32.mrf.mxu0
      %v2047 = vadd.f32 0.0, %v2046
      %v2048 = vpop.f32.mrf.mxu0
      %2049 = vmatprep.mubr.f32.mxu0 0.0
      %2050 = vmatmul.mubr.f32.gmra.mxu0 %v1857
      %v2051 = vpop.f32.mrf.mxu0
      %v2052 = vadd.f32 0.0, %v2051
      %v2053 = vpop.f32.mrf.mxu0
      %2054 = vmatprep.mubr.f32.mxu0 0.0
      %2055 = vmatmul.mubr.f32.gmra.mxu0 %v1860
      %v2056 = vpop.f32.mrf.mxu0
      %v2057 = vadd.f32 0.0, %v2056
      %v2058 = vpop.f32.mrf.mxu0
      %2059 = vmatprep.mubr.f32.mxu0 0.0
      %2060 = vmatmul.mubr.f32.gmra.mxu0 %v1863
      %v2061 = vpop.f32.mrf.mxu0
      %v2062 = vadd.f32 0.0, %v2061
      %v2063 = vpop.f32.mrf.mxu0
      %2064 = vmatprep.mubr.f32.mxu0 0.0
      %2065 = vmatmul.mubr.f32.gmra.mxu0 %v1866
      %v2066 = vpop.f32.mrf.mxu0
      %v2067 = vadd.f32 0.0, %v2066
      %v2068 = vpop.f32.mrf.mxu0
      %2069 = vmatprep.mubr.f32.mxu0 0.0
      %2070 = vmatmul.mubr.f32.gmra.mxu0 %v1869
      %v2071 = vpop.f32.mrf.mxu0
      %v2072 = vadd.f32 0.0, %v2071
      %v2073 = vpop.f32.mrf.mxu0
      %2074 = vmatprep.mubr.f32.mxu0 0.0
      %2075 = vmatmul.mubr.f32.gmra.mxu0 %v1872
      %v2076 = vpop.f32.mrf.mxu0
      %v2077 = vadd.f32 0.0, %v2076
      %v2078 = vpop.f32.mrf.mxu0
      %2079 = vmatprep.mubr.f32.mxu0 0.0
      %2080 = vmatmul.mubr.f32.gmra.mxu0 %v1875
      %v2081 = vpop.f32.mrf.mxu0
      %v2082 = vadd.f32 0.0, %v2081
      %v2083 = vpop.f32.mrf.mxu0
      %2084 = vmatprep.mubr.f32.mxu0 0.0
      %2085 = vmatmul.mubr.f32.gmra.mxu0 %v1878
      %v2086 = vpop.f32.mrf.mxu0
      %v2087 = vadd.f32 0.0, %v2086
      %v2088 = vpop.f32.mrf.mxu0
      %2089 = vmatprep.mubr.f32.mxu0 0.0
      %2090 = vmatmul.mubr.f32.gmra.mxu0 %v1881
      %v2091 = vpop.f32.mrf.mxu0
      %v2092 = vadd.f32 0.0, %v2091
      %v2093 = vpop.f32.mrf.mxu0
      %2094 = vmatprep.mubr.f32.mxu0 0.0
      %2095 = vmatmul.mubr.f32.gmra.mxu0 %v1884
      %v2096 = vpop.f32.mrf.mxu0
      %v2097 = vadd.f32 0.0, %v2096
      %v2098 = vpop.f32.mrf.mxu0
      %2099 = vmatprep.mubr.f32.mxu0 0.0
      %2100 = vmatmul.mubr.f32.gmra.mxu0 %v1887
      %v2101 = vpop.f32.mrf.mxu0
      %v2102 = vadd.f32 0.0, %v2101
      %v2103 = vpop.f32.mrf.mxu0
      %2104 = vmatprep.mubr.f32.mxu0 0.0
      %2105 = vmatmul.mubr.f32.gmra.mxu0 %v1890
      %v2106 = vpop.f32.mrf.mxu0
      %v2107 = vadd.f32 0.0, %v2106
      %v2108 = vpop.f32.mrf.mxu0
      %2109 = vmatprep.mubr.f32.mxu0 0.0
      %2110 = vmatmul.mubr.f32.gmra.mxu0 %v1893
      %v2111 = vpop.f32.mrf.mxu0
      %v2112 = vadd.f32 0.0, %v2111
      %v2113 = vpop.f32.mrf.mxu0
      %2114 = vmatprep.mubr.f32.mxu0 0.0
      %2115 = vmatmul.mubr.f32.gmra.mxu0 %v1896
      %v2116 = vpop.f32.mrf.mxu0
      %v2117 = vadd.f32 0.0, %v2116
      %v2118 = vpop.f32.mrf.mxu0
      %2119 = vmatprep.mubr.f32.mxu0 0.0
      %2120 = vmatmul.mubr.f32.gmra.mxu0 %v1899
      %v2121 = vpop.f32.mrf.mxu0
      %v2122 = vadd.f32 0.0, %v2121
      %v2123 = vpop.f32.mrf.mxu0
      %2124 = vmatprep.mubr.f32.mxu0 0.0
      %2125 = vmatmul.mubr.f32.gmra.mxu0 %v1902
      %v2126 = vpop.f32.mrf.mxu0
      %v2127 = vadd.f32 0.0, %v2126
      %v2128 = vpop.f32.mrf.mxu0
      %2129 = vmatprep.mubr.f32.mxu0 0.0
      %2130 = vmatmul.mubr.f32.gmra.mxu0 %v1905
      %v2131 = vpop.f32.mrf.mxu0
      %v2132 = vadd.f32 0.0, %v2131
      %v2133 = vpop.f32.mrf.mxu0
      %2134 = vdwg.mxu0
      %v2135 = vadd.f32 %v1745, %v1977
      %v2136 = vadd.f32 %v1746, %v1982
      %v2137 = vadd.f32 %v1747, %v1987
      %v2138 = vadd.f32 %v1748, %v1992
      %v2139 = vadd.f32 %v1749, %v1997
      %v2140 = vadd.f32 %v1750, %v2002
      %v2141 = vadd.f32 %v1751, %v2007
      %v2142 = vadd.f32 %v1752, %v2012
      %v2143 = vadd.f32 %v1753, %v2017
      %v2144 = vadd.f32 %v1754, %v2022
      %v2145 = vadd.f32 %v1755, %v2027
      %v2146 = vadd.f32 %v1756, %v2032
      %v2147 = vadd.f32 %v1757, %v2037
      %v2148 = vadd.f32 %v1758, %v2042
      %v2149 = vadd.f32 %v1759, %v2047
      %v2150 = vadd.f32 %v1760, %v2052
      %v2151 = vadd.f32 %v1761, %v2057
      %v2152 = vadd.f32 %v1762, %v2062
      %v2153 = vadd.f32 %v1763, %v2067
      %v2154 = vadd.f32 %v1764, %v2072
      %v2155 = vadd.f32 %v1765, %v2077
      %v2156 = vadd.f32 %v1766, %v2082
      %v2157 = vadd.f32 %v1767, %v2087
      %v2158 = vadd.f32 %v1768, %v2092
      %v2159 = vadd.f32 %v1769, %v2097
      %v2160 = vadd.f32 %v1770, %v2102
      %v2161 = vadd.f32 %v1771, %v2107
      %v2162 = vadd.f32 %v1772, %v2112
      %v2163 = vadd.f32 %v1773, %v2117
      %v2164 = vadd.f32 %v1774, %v2122
      %v2165 = vadd.f32 %v1775, %v2127
      %v2166 = vadd.f32 %v1776, %v2132
      %v2167 = vld [vmem:[%s1386 + $0x2] sm:$0xff]
      %v2168 = vld [vmem:[%s1386 + $0xa] sm:$0xff]
      %v2169 = vld [vmem:[%s1386 + $0x1a] sm:$0xff]
      %v2170 = vld [vmem:[%s1386 + $0x22] sm:$0xff]
      %v2171 = vld [vmem:[%s1386 + $0x32] sm:$0xff]
      %v2172 = vld [vmem:[%s1386 + $0x3a] sm:$0xff]
      %v2173 = vld [vmem:[%s1386 + $0x4a] sm:$0xff]
      %v2174 = vld [vmem:[%s1386 + $0x52] sm:$0xff]
      %v2175 = vld [vmem:[%s1386 + $0x62] sm:$0xff]
      %v2176 = vld [vmem:[%s1386 + $0x6a] sm:$0xff]
      %v2177 = vld [vmem:[%s1386 + $0x7a] sm:$0xff]
      %v2178 = vld [vmem:[%s1386 + $0x82] sm:$0xff]
      %v2179 = vld [vmem:[%s1386 + $0x92] sm:$0xff]
      %v2180 = vld [vmem:[%s1386 + $0x9a] sm:$0xff]
      %v2181 = vld [vmem:[%s1386 + $0xaa] sm:$0xff]
      %v2182 = vld [vmem:[%s1386 + $0xb2] sm:$0xff]
      %v2183 = vld [vmem:[%s1386 + $0xc2] sm:$0xff]
      %v2184 = vld [vmem:[%s1386 + $0xca] sm:$0xff]
      %v2185 = vld [vmem:[%s1386 + $0xda] sm:$0xff]
      %v2186 = vld [vmem:[%s1386 + $0xe2] sm:$0xff]
      %v2187 = vld [vmem:[%s1386 + $0xf2] sm:$0xff]
      %v2188 = vld [vmem:[%s1386 + $0xfa] sm:$0xff]
      %v2189 = vld [vmem:[%s1386 + $0x10a] sm:$0xff]
      %v2190 = vld [vmem:[%s1386 + $0x112] sm:$0xff]
      %v2191 = vld [vmem:[%s1386 + $0x122] sm:$0xff]
      %v2192 = vld [vmem:[%s1386 + $0x12a] sm:$0xff]
      %v2193 = vld [vmem:[%s1386 + $0x13a] sm:$0xff]
      %v2194 = vld [vmem:[%s1386 + $0x142] sm:$0xff]
      %v2195 = vld [vmem:[%s1386 + $0x152] sm:$0xff]
      %v2196 = vld [vmem:[%s1386 + $0x15a] sm:$0xff]
      %v2197 = vld [vmem:[%s1386 + $0x16a] sm:$0xff]
      %v2198 = vld [vmem:[%s1386 + $0x172] sm:$0xff]
      %s2199 = scalar_lea.vmem %s1, 20
      %v2200 = vld [vmem:[%s2199] sm:$0xf]
      %v2202 = vsel %vm346, %v2167, 0
      %v2205 = vsel %vm346, %v2168, 0
      %v2208 = vsel %vm346, %v2169, 0
      %v2211 = vsel %vm346, %v2170, 0
      %v2214 = vsel %vm346, %v2171, 0
      %v2217 = vsel %vm346, %v2172, 0
      %v2220 = vsel %vm346, %v2173, 0
      %v2223 = vsel %vm346, %v2174, 0
      %v2226 = vsel %vm346, %v2175, 0
      %v2229 = vsel %vm346, %v2176, 0
      %v2232 = vsel %vm346, %v2177, 0
      %v2235 = vsel %vm346, %v2178, 0
      %v2238 = vsel %vm346, %v2179, 0
      %v2241 = vsel %vm346, %v2180, 0
      %v2244 = vsel %vm346, %v2181, 0
      %v2247 = vsel %vm346, %v2182, 0
      %v2250 = vsel %vm346, %v2183, 0
      %v2253 = vsel %vm346, %v2184, 0
      %v2256 = vsel %vm346, %v2185, 0
      %v2259 = vsel %vm346, %v2186, 0
      %v2262 = vsel %vm346, %v2187, 0
      %v2265 = vsel %vm346, %v2188, 0
      %v2268 = vsel %vm346, %v2189, 0
      %v2271 = vsel %vm346, %v2190, 0
      %v2274 = vsel %vm346, %v2191, 0
      %v2277 = vsel %vm346, %v2192, 0
      %v2280 = vsel %vm346, %v2193, 0
      %v2283 = vsel %vm346, %v2194, 0
      %v2286 = vsel %vm346, %v2195, 0
      %v2289 = vsel %vm346, %v2196, 0
      %v2292 = vsel %vm346, %v2197, 0
      %v2295 = vsel %vm346, %v2198, 0
      %v2298 = vsel %vm443, %v2200, 0
      %2300 = vmatprep.subr.mxu0 0.0
      %2301 = vmatpush1.msra.mxu0 0.0
      %2302 = vmatprep.subr.mxu0 0.0
      %2303 = vmatpush1.msra.mxu0 0.0
      %2304 = vmatprep.subr.mxu0 0.0
      %2305 = vmatpush1.msra.mxu0 0.0
      %2306 = vmatprep.subr.mxu0 0.0
      %2307 = vmatpush1.msra.mxu0 0.0
      %2308 = vmatprep.subr.mxu0 0.0
      %2309 = vmatpush1.msra.mxu0 0.0
      %2310 = vmatprep.subr.mxu0 0.0
      %2311 = vmatpush1.msra.mxu0 0.0
      %2312 = vmatprep.subr.mxu0 0.0
      %2313 = vmatpush1.msra.mxu0 0.0
      %2314 = vmatprep.subr.mxu0 0.0
      %2315 = vmatpush1.msra.mxu0 0.0
      %2316 = vmatprep.subr.mxu0 0.0
      %2317 = vmatpush1.msra.mxu0 0.0
      %2318 = vmatprep.subr.mxu0 0.0
      %2319 = vmatpush1.msra.mxu0 0.0
      %2320 = vmatprep.subr.mxu0 0.0
      %2321 = vmatpush1.msra.mxu0 0.0
      %2322 = vmatprep.subr.mxu0 0.0
      %2323 = vmatpush1.msra.mxu0 0.0
      %2324 = vmatprep.subr.mxu0 0.0
      %2325 = vmatpush1.msra.mxu0 0.0
      %2326 = vmatprep.subr.mxu0 0.0
      %2327 = vmatpush1.msra.mxu0 0.0
      %2328 = vmatprep.subr.mxu0 0.0
      %2329 = vmatpush1.msra.mxu0 0.0
      %2330 = vmatprep.subr.mxu0 0.0
      %2331 = vmatpush1.msra.mxu0 %v2298
      %2332 = vmatprep.subr.mxu0 0.0
      %2333 = vmatpush2.msra.mxu0 0.0
      %2334 = vmatprep.subr.mxu0 0.0
      %2335 = vmatpush2.msra.mxu0 0.0
      %2336 = vmatprep.subr.mxu0 0.0
      %2337 = vmatpush2.msra.mxu0 0.0
      %2338 = vmatprep.subr.mxu0 0.0
      %2339 = vmatpush2.msra.mxu0 0.0
      %2340 = vmatprep.subr.mxu0 0.0
      %2341 = vmatpush2.msra.mxu0 0.0
      %2342 = vmatprep.subr.mxu0 0.0
      %2343 = vmatpush2.msra.mxu0 0.0
      %2344 = vmatprep.subr.mxu0 0.0
      %2345 = vmatpush2.msra.mxu0 0.0
      %2346 = vmatprep.subr.mxu0 0.0
      %2347 = vmatpush2.msra.mxu0 0.0
      %2348 = vmatprep.subr.mxu0 0.0
      %2349 = vmatpush2.msra.mxu0 0.0
      %2350 = vmatprep.subr.mxu0 0.0
      %2351 = vmatpush2.msra.mxu0 0.0
      %2352 = vmatprep.subr.mxu0 0.0
      %2353 = vmatpush2.msra.mxu0 0.0
      %2354 = vmatprep.subr.mxu0 0.0
      %2355 = vmatpush2.msra.mxu0 0.0
      %2356 = vmatprep.subr.mxu0 0.0
      %2357 = vmatpush2.msra.mxu0 0.0
      %2358 = vmatprep.subr.mxu0 0.0
      %2359 = vmatpush2.msra.mxu0 0.0
      %2360 = vmatprep.subr.mxu0 0.0
      %2361 = vmatpush2.msra.mxu0 0.0
      %2362 = vmatprep.subr.mxu0 0.0
      %2363 = vmatpush2.msra.mxu0 0.0
      %2364 = vmatprep.mubr.f32.mxu0 0.0
      %2365 = vmatmul.mubr.f32.gmra.mxu0 %v2202
      %v2366 = vpop.f32.mrf.mxu0
      %v2367 = vadd.f32 0.0, %v2366
      %v2368 = vpop.f32.mrf.mxu0
      %2369 = vmatprep.mubr.f32.mxu0 0.0
      %2370 = vmatmul.mubr.f32.gmra.mxu0 %v2205
      %v2371 = vpop.f32.mrf.mxu0
      %v2372 = vadd.f32 0.0, %v2371
      %v2373 = vpop.f32.mrf.mxu0
      %2374 = vmatprep.mubr.f32.mxu0 0.0
      %2375 = vmatmul.mubr.f32.gmra.mxu0 %v2208
      %v2376 = vpop.f32.mrf.mxu0
      %v2377 = vadd.f32 0.0, %v2376
      %v2378 = vpop.f32.mrf.mxu0
      %2379 = vmatprep.mubr.f32.mxu0 0.0
      %2380 = vmatmul.mubr.f32.gmra.mxu0 %v2211
      %v2381 = vpop.f32.mrf.mxu0
      %v2382 = vadd.f32 0.0, %v2381
      %v2383 = vpop.f32.mrf.mxu0
      %2384 = vmatprep.mubr.f32.mxu0 0.0
      %2385 = vmatmul.mubr.f32.gmra.mxu0 %v2214
      %v2386 = vpop.f32.mrf.mxu0
      %v2387 = vadd.f32 0.0, %v2386
      %v2388 = vpop.f32.mrf.mxu0
      %2389 = vmatprep.mubr.f32.mxu0 0.0
      %2390 = vmatmul.mubr.f32.gmra.mxu0 %v2217
      %v2391 = vpop.f32.mrf.mxu0
      %v2392 = vadd.f32 0.0, %v2391
      %v2393 = vpop.f32.mrf.mxu0
      %2394 = vmatprep.mubr.f32.mxu0 0.0
      %2395 = vmatmul.mubr.f32.gmra.mxu0 %v2220
      %v2396 = vpop.f32.mrf.mxu0
      %v2397 = vadd.f32 0.0, %v2396
      %v2398 = vpop.f32.mrf.mxu0
      %2399 = vmatprep.mubr.f32.mxu0 0.0
      %2400 = vmatmul.mubr.f32.gmra.mxu0 %v2223
      %v2401 = vpop.f32.mrf.mxu0
      %v2402 = vadd.f32 0.0, %v2401
      %v2403 = vpop.f32.mrf.mxu0
      %2404 = vmatprep.mubr.f32.mxu0 0.0
      %2405 = vmatmul.mubr.f32.gmra.mxu0 %v2226
      %v2406 = vpop.f32.mrf.mxu0
      %v2407 = vadd.f32 0.0, %v2406
      %v2408 = vpop.f32.mrf.mxu0
      %2409 = vmatprep.mubr.f32.mxu0 0.0
      %2410 = vmatmul.mubr.f32.gmra.mxu0 %v2229
      %v2411 = vpop.f32.mrf.mxu0
      %v2412 = vadd.f32 0.0, %v2411
      %v2413 = vpop.f32.mrf.mxu0
      %2414 = vmatprep.mubr.f32.mxu0 0.0
      %2415 = vmatmul.mubr.f32.gmra.mxu0 %v2232
      %v2416 = vpop.f32.mrf.mxu0
      %v2417 = vadd.f32 0.0, %v2416
      %v2418 = vpop.f32.mrf.mxu0
      %2419 = vmatprep.mubr.f32.mxu0 0.0
      %2420 = vmatmul.mubr.f32.gmra.mxu0 %v2235
      %v2421 = vpop.f32.mrf.mxu0
      %v2422 = vadd.f32 0.0, %v2421
      %v2423 = vpop.f32.mrf.mxu0
      %2424 = vmatprep.mubr.f32.mxu0 0.0
      %2425 = vmatmul.mubr.f32.gmra.mxu0 %v2238
      %v2426 = vpop.f32.mrf.mxu0
      %v2427 = vadd.f32 0.0, %v2426
      %v2428 = vpop.f32.mrf.mxu0
      %2429 = vmatprep.mubr.f32.mxu0 0.0
      %2430 = vmatmul.mubr.f32.gmra.mxu0 %v2241
      %v2431 = vpop.f32.mrf.mxu0
      %v2432 = vadd.f32 0.0, %v2431
      %v2433 = vpop.f32.mrf.mxu0
      %2434 = vmatprep.mubr.f32.mxu0 0.0
      %2435 = vmatmul.mubr.f32.gmra.mxu0 %v2244
      %v2436 = vpop.f32.mrf.mxu0
      %v2437 = vadd.f32 0.0, %v2436
      %v2438 = vpop.f32.mrf.mxu0
      %2439 = vmatprep.mubr.f32.mxu0 0.0
      %2440 = vmatmul.mubr.f32.gmra.mxu0 %v2247
      %v2441 = vpop.f32.mrf.mxu0
      %v2442 = vadd.f32 0.0, %v2441
      %v2443 = vpop.f32.mrf.mxu0
      %2444 = vmatprep.mubr.f32.mxu0 0.0
      %2445 = vmatmul.mubr.f32.gmra.mxu0 %v2250
      %v2446 = vpop.f32.mrf.mxu0
      %v2447 = vadd.f32 0.0, %v2446
      %v2448 = vpop.f32.mrf.mxu0
      %2449 = vmatprep.mubr.f32.mxu0 0.0
      %2450 = vmatmul.mubr.f32.gmra.mxu0 %v2253
      %v2451 = vpop.f32.mrf.mxu0
      %v2452 = vadd.f32 0.0, %v2451
      %v2453 = vpop.f32.mrf.mxu0
      %2454 = vmatprep.mubr.f32.mxu0 0.0
      %2455 = vmatmul.mubr.f32.gmra.mxu0 %v2256
      %v2456 = vpop.f32.mrf.mxu0
      %v2457 = vadd.f32 0.0, %v2456
      %v2458 = vpop.f32.mrf.mxu0
      %2459 = vmatprep.mubr.f32.mxu0 0.0
      %2460 = vmatmul.mubr.f32.gmra.mxu0 %v2259
      %v2461 = vpop.f32.mrf.mxu0
      %v2462 = vadd.f32 0.0, %v2461
      %v2463 = vpop.f32.mrf.mxu0
      %2464 = vmatprep.mubr.f32.mxu0 0.0
      %2465 = vmatmul.mubr.f32.gmra.mxu0 %v2262
      %v2466 = vpop.f32.mrf.mxu0
      %v2467 = vadd.f32 0.0, %v2466
      %v2468 = vpop.f32.mrf.mxu0
      %2469 = vmatprep.mubr.f32.mxu0 0.0
      %2470 = vmatmul.mubr.f32.gmra.mxu0 %v2265
      %v2471 = vpop.f32.mrf.mxu0
      %v2472 = vadd.f32 0.0, %v2471
      %v2473 = vpop.f32.mrf.mxu0
      %2474 = vmatprep.mubr.f32.mxu0 0.0
      %2475 = vmatmul.mubr.f32.gmra.mxu0 %v2268
      %v2476 = vpop.f32.mrf.mxu0
      %v2477 = vadd.f32 0.0, %v2476
      %v2478 = vpop.f32.mrf.mxu0
      %2479 = vmatprep.mubr.f32.mxu0 0.0
      %2480 = vmatmul.mubr.f32.gmra.mxu0 %v2271
      %v2481 = vpop.f32.mrf.mxu0
      %v2482 = vadd.f32 0.0, %v2481
      %v2483 = vpop.f32.mrf.mxu0
      %2484 = vmatprep.mubr.f32.mxu0 0.0
      %2485 = vmatmul.mubr.f32.gmra.mxu0 %v2274
      %v2486 = vpop.f32.mrf.mxu0
      %v2487 = vadd.f32 0.0, %v2486
      %v2488 = vpop.f32.mrf.mxu0
      %2489 = vmatprep.mubr.f32.mxu0 0.0
      %2490 = vmatmul.mubr.f32.gmra.mxu0 %v2277
      %v2491 = vpop.f32.mrf.mxu0
      %v2492 = vadd.f32 0.0, %v2491
      %v2493 = vpop.f32.mrf.mxu0
      %2494 = vmatprep.mubr.f32.mxu0 0.0
      %2495 = vmatmul.mubr.f32.gmra.mxu0 %v2280
      %v2496 = vpop.f32.mrf.mxu0
      %v2497 = vadd.f32 0.0, %v2496
      %v2498 = vpop.f32.mrf.mxu0
      %2499 = vmatprep.mubr.f32.mxu0 0.0
      %2500 = vmatmul.mubr.f32.gmra.mxu0 %v2283
      %v2501 = vpop.f32.mrf.mxu0
      %v2502 = vadd.f32 0.0, %v2501
      %v2503 = vpop.f32.mrf.mxu0
      %2504 = vmatprep.mubr.f32.mxu0 0.0
      %2505 = vmatmul.mubr.f32.gmra.mxu0 %v2286
      %v2506 = vpop.f32.mrf.mxu0
      %v2507 = vadd.f32 0.0, %v2506
      %v2508 = vpop.f32.mrf.mxu0
      %2509 = vmatprep.mubr.f32.mxu0 0.0
      %2510 = vmatmul.mubr.f32.gmra.mxu0 %v2289
      %v2511 = vpop.f32.mrf.mxu0
      %v2512 = vadd.f32 0.0, %v2511
      %v2513 = vpop.f32.mrf.mxu0
      %2514 = vmatprep.mubr.f32.mxu0 0.0
      %2515 = vmatmul.mubr.f32.gmra.mxu0 %v2292
      %v2516 = vpop.f32.mrf.mxu0
      %v2517 = vadd.f32 0.0, %v2516
      %v2518 = vpop.f32.mrf.mxu0
      %2519 = vmatprep.mubr.f32.mxu0 0.0
      %2520 = vmatmul.mubr.f32.gmra.mxu0 %v2295
      %v2521 = vpop.f32.mrf.mxu0
      %v2522 = vadd.f32 0.0, %v2521
      %v2523 = vpop.f32.mrf.mxu0
      %2524 = vdwg.mxu0
      %v2525 = vadd.f32 %v2135, %v2367
      %v2526 = vadd.f32 %v2136, %v2372
      %v2527 = vadd.f32 %v2137, %v2377
      %v2528 = vadd.f32 %v2138, %v2382
      %v2529 = vadd.f32 %v2139, %v2387
      %v2530 = vadd.f32 %v2140, %v2392
      %v2531 = vadd.f32 %v2141, %v2397
      %v2532 = vadd.f32 %v2142, %v2402
      %v2533 = vadd.f32 %v2143, %v2407
      %v2534 = vadd.f32 %v2144, %v2412
      %v2535 = vadd.f32 %v2145, %v2417
      %v2536 = vadd.f32 %v2146, %v2422
      %v2537 = vadd.f32 %v2147, %v2427
      %v2538 = vadd.f32 %v2148, %v2432
      %v2539 = vadd.f32 %v2149, %v2437
      %v2540 = vadd.f32 %v2150, %v2442
      %v2541 = vadd.f32 %v2151, %v2447
      %v2542 = vadd.f32 %v2152, %v2452
      %v2543 = vadd.f32 %v2153, %v2457
      %v2544 = vadd.f32 %v2154, %v2462
      %v2545 = vadd.f32 %v2155, %v2467
      %v2546 = vadd.f32 %v2156, %v2472
      %v2547 = vadd.f32 %v2157, %v2477
      %v2548 = vadd.f32 %v2158, %v2482
      %v2549 = vadd.f32 %v2159, %v2487
      %v2550 = vadd.f32 %v2160, %v2492
      %v2551 = vadd.f32 %v2161, %v2497
      %v2552 = vadd.f32 %v2162, %v2502
      %v2553 = vadd.f32 %v2163, %v2507
      %v2554 = vadd.f32 %v2164, %v2512
      %v2555 = vadd.f32 %v2165, %v2517
      %v2556 = vadd.f32 %v2166, %v2522
      %s2557 = scalar_lea.vmem %s273, 48
      %v2558 = vld [vmem:[%s2557] sm:$0xff]
      %v2559 = vld [vmem:[%s2557 + $0x8] sm:$0xff]
      %v2560 = vld [vmem:[%s2557 + $0x18] sm:$0xff]
      %v2561 = vld [vmem:[%s2557 + $0x20] sm:$0xff]
      %v2562 = vld [vmem:[%s2557 + $0x30] sm:$0xff]
      %v2563 = vld [vmem:[%s2557 + $0x38] sm:$0xff]
      %v2564 = vld [vmem:[%s2557 + $0x48] sm:$0xff]
      %v2565 = vld [vmem:[%s2557 + $0x50] sm:$0xff]
      %v2566 = vld [vmem:[%s2557 + $0x60] sm:$0xff]
      %v2567 = vld [vmem:[%s2557 + $0x68] sm:$0xff]
      %v2568 = vld [vmem:[%s2557 + $0x78] sm:$0xff]
      %v2569 = vld [vmem:[%s2557 + $0x80] sm:$0xff]
      %v2570 = vld [vmem:[%s2557 + $0x90] sm:$0xff]
      %v2571 = vld [vmem:[%s2557 + $0x98] sm:$0xff]
      %v2572 = vld [vmem:[%s2557 + $0xa8] sm:$0xff]
      %v2573 = vld [vmem:[%s2557 + $0xb0] sm:$0xff]
      %v2574 = vld [vmem:[%s2557 + $0xc0] sm:$0xff]
      %v2575 = vld [vmem:[%s2557 + $0xc8] sm:$0xff]
      %v2576 = vld [vmem:[%s2557 + $0xd8] sm:$0xff]
      %v2577 = vld [vmem:[%s2557 + $0xe0] sm:$0xff]
      %v2578 = vld [vmem:[%s2557 + $0xf0] sm:$0xff]
      %v2579 = vld [vmem:[%s2557 + $0xf8] sm:$0xff]
      %v2580 = vld [vmem:[%s2557 + $0x108] sm:$0xff]
      %v2581 = vld [vmem:[%s2557 + $0x110] sm:$0xff]
      %v2582 = vld [vmem:[%s2557 + $0x120] sm:$0xff]
      %v2583 = vld [vmem:[%s2557 + $0x128] sm:$0xff]
      %v2584 = vld [vmem:[%s2557 + $0x138] sm:$0xff]
      %v2585 = vld [vmem:[%s2557 + $0x140] sm:$0xff]
      %v2586 = vld [vmem:[%s2557 + $0x150] sm:$0xff]
      %v2587 = vld [vmem:[%s2557 + $0x158] sm:$0xff]
      %v2588 = vld [vmem:[%s2557 + $0x168] sm:$0xff]
      %v2589 = vld [vmem:[%s2557 + $0x170] sm:$0xff]
      %s2590 = scalar_lea.vmem %s1, 24
      %v2591 = vld [vmem:[%s2590] sm:$0xf]
      %v2593 = vsel %vm346, %v2558, 0
      %v2596 = vsel %vm346, %v2559, 0
      %v2599 = vsel %vm346, %v2560, 0
      %v2602 = vsel %vm346, %v2561, 0
      %v2605 = vsel %vm346, %v2562, 0
      %v2608 = vsel %vm346, %v2563, 0
      %v2611 = vsel %vm346, %v2564, 0
      %v2614 = vsel %vm346, %v2565, 0
      %v2617 = vsel %vm346, %v2566, 0
      %v2620 = vsel %vm346, %v2567, 0
      %v2623 = vsel %vm346, %v2568, 0
      %v2626 = vsel %vm346, %v2569, 0
      %v2629 = vsel %vm346, %v2570, 0
      %v2632 = vsel %vm346, %v2571, 0
      %v2635 = vsel %vm346, %v2572, 0
      %v2638 = vsel %vm346, %v2573, 0
      %v2641 = vsel %vm346, %v2574, 0
      %v2644 = vsel %vm346, %v2575, 0
      %v2647 = vsel %vm346, %v2576, 0
      %v2650 = vsel %vm346, %v2577, 0
      %v2653 = vsel %vm346, %v2578, 0
      %v2656 = vsel %vm346, %v2579, 0
      %v2659 = vsel %vm346, %v2580, 0
      %v2662 = vsel %vm346, %v2581, 0
      %v2665 = vsel %vm346, %v2582, 0
      %v2668 = vsel %vm346, %v2583, 0
      %v2671 = vsel %vm346, %v2584, 0
      %v2674 = vsel %vm346, %v2585, 0
      %v2677 = vsel %vm346, %v2586, 0
      %v2680 = vsel %vm346, %v2587, 0
      %v2683 = vsel %vm346, %v2588, 0
      %v2686 = vsel %vm346, %v2589, 0
      %v2689 = vsel %vm443, %v2591, 0
      %2691 = vmatprep.subr.mxu0 0.0
      %2692 = vmatpush1.msra.mxu0 0.0
      %2693 = vmatprep.subr.mxu0 0.0
      %2694 = vmatpush1.msra.mxu0 0.0
      %2695 = vmatprep.subr.mxu0 0.0
      %2696 = vmatpush1.msra.mxu0 0.0
      %2697 = vmatprep.subr.mxu0 0.0
      %2698 = vmatpush1.msra.mxu0 0.0
      %2699 = vmatprep.subr.mxu0 0.0
      %2700 = vmatpush1.msra.mxu0 0.0
      %2701 = vmatprep.subr.mxu0 0.0
      %2702 = vmatpush1.msra.mxu0 0.0
      %2703 = vmatprep.subr.mxu0 0.0
      %2704 = vmatpush1.msra.mxu0 0.0
      %2705 = vmatprep.subr.mxu0 0.0
      %2706 = vmatpush1.msra.mxu0 0.0
      %2707 = vmatprep.subr.mxu0 0.0
      %2708 = vmatpush1.msra.mxu0 0.0
      %2709 = vmatprep.subr.mxu0 0.0
      %2710 = vmatpush1.msra.mxu0 0.0
      %2711 = vmatprep.subr.mxu0 0.0
      %2712 = vmatpush1.msra.mxu0 0.0
      %2713 = vmatprep.subr.mxu0 0.0
      %2714 = vmatpush1.msra.mxu0 0.0
      %2715 = vmatprep.subr.mxu0 0.0
      %2716 = vmatpush1.msra.mxu0 0.0
      %2717 = vmatprep.subr.mxu0 0.0
      %2718 = vmatpush1.msra.mxu0 0.0
      %2719 = vmatprep.subr.mxu0 0.0
      %2720 = vmatpush1.msra.mxu0 0.0
      %2721 = vmatprep.subr.mxu0 0.0
      %2722 = vmatpush1.msra.mxu0 %v2689
      %2723 = vmatprep.subr.mxu0 0.0
      %2724 = vmatpush2.msra.mxu0 0.0
      %2725 = vmatprep.subr.mxu0 0.0
      %2726 = vmatpush2.msra.mxu0 0.0
      %2727 = vmatprep.subr.mxu0 0.0
      %2728 = vmatpush2.msra.mxu0 0.0
      %2729 = vmatprep.subr.mxu0 0.0
      %2730 = vmatpush2.msra.mxu0 0.0
      %2731 = vmatprep.subr.mxu0 0.0
      %2732 = vmatpush2.msra.mxu0 0.0
      %2733 = vmatprep.subr.mxu0 0.0
      %2734 = vmatpush2.msra.mxu0 0.0
      %2735 = vmatprep.subr.mxu0 0.0
      %2736 = vmatpush2.msra.mxu0 0.0
      %2737 = vmatprep.subr.mxu0 0.0
      %2738 = vmatpush2.msra.mxu0 0.0
      %2739 = vmatprep.subr.mxu0 0.0
      %2740 = vmatpush2.msra.mxu0 0.0
      %2741 = vmatprep.subr.mxu0 0.0
      %2742 = vmatpush2.msra.mxu0 0.0
      %2743 = vmatprep.subr.mxu0 0.0
      %2744 = vmatpush2.msra.mxu0 0.0
      %2745 = vmatprep.subr.mxu0 0.0
      %2746 = vmatpush2.msra.mxu0 0.0
      %2747 = vmatprep.subr.mxu0 0.0
      %2748 = vmatpush2.msra.mxu0 0.0
      %2749 = vmatprep.subr.mxu0 0.0
      %2750 = vmatpush2.msra.mxu0 0.0
      %2751 = vmatprep.subr.mxu0 0.0
      %2752 = vmatpush2.msra.mxu0 0.0
      %2753 = vmatprep.subr.mxu0 0.0
      %2754 = vmatpush2.msra.mxu0 0.0
      %2755 = vmatprep.mubr.f32.mxu0 0.0
      %2756 = vmatmul.mubr.f32.gmra.mxu0 %v2593
      %v2757 = vpop.f32.mrf.mxu0
      %v2758 = vadd.f32 0.0, %v2757
      %v2759 = vpop.f32.mrf.mxu0
      %2760 = vmatprep.mubr.f32.mxu0 0.0
      %2761 = vmatmul.mubr.f32.gmra.mxu0 %v2596
      %v2762 = vpop.f32.mrf.mxu0
      %v2763 = vadd.f32 0.0, %v2762
      %v2764 = vpop.f32.mrf.mxu0
      %2765 = vmatprep.mubr.f32.mxu0 0.0
      %2766 = vmatmul.mubr.f32.gmra.mxu0 %v2599
      %v2767 = vpop.f32.mrf.mxu0
      %v2768 = vadd.f32 0.0, %v2767
      %v2769 = vpop.f32.mrf.mxu0
      %2770 = vmatprep.mubr.f32.mxu0 0.0
      %2771 = vmatmul.mubr.f32.gmra.mxu0 %v2602
      %v2772 = vpop.f32.mrf.mxu0
      %v2773 = vadd.f32 0.0, %v2772
      %v2774 = vpop.f32.mrf.mxu0
      %2775 = vmatprep.mubr.f32.mxu0 0.0
      %2776 = vmatmul.mubr.f32.gmra.mxu0 %v2605
      %v2777 = vpop.f32.mrf.mxu0
      %v2778 = vadd.f32 0.0, %v2777
      %v2779 = vpop.f32.mrf.mxu0
      %2780 = vmatprep.mubr.f32.mxu0 0.0
      %2781 = vmatmul.mubr.f32.gmra.mxu0 %v2608
      %v2782 = vpop.f32.mrf.mxu0
      %v2783 = vadd.f32 0.0, %v2782
      %v2784 = vpop.f32.mrf.mxu0
      %2785 = vmatprep.mubr.f32.mxu0 0.0
      %2786 = vmatmul.mubr.f32.gmra.mxu0 %v2611
      %v2787 = vpop.f32.mrf.mxu0
      %v2788 = vadd.f32 0.0, %v2787
      %v2789 = vpop.f32.mrf.mxu0
      %2790 = vmatprep.mubr.f32.mxu0 0.0
      %2791 = vmatmul.mubr.f32.gmra.mxu0 %v2614
      %v2792 = vpop.f32.mrf.mxu0
      %v2793 = vadd.f32 0.0, %v2792
      %v2794 = vpop.f32.mrf.mxu0
      %2795 = vmatprep.mubr.f32.mxu0 0.0
      %2796 = vmatmul.mubr.f32.gmra.mxu0 %v2617
      %v2797 = vpop.f32.mrf.mxu0
      %v2798 = vadd.f32 0.0, %v2797
      %v2799 = vpop.f32.mrf.mxu0
      %2800 = vmatprep.mubr.f32.mxu0 0.0
      %2801 = vmatmul.mubr.f32.gmra.mxu0 %v2620
      %v2802 = vpop.f32.mrf.mxu0
      %v2803 = vadd.f32 0.0, %v2802
      %v2804 = vpop.f32.mrf.mxu0
      %2805 = vmatprep.mubr.f32.mxu0 0.0
      %2806 = vmatmul.mubr.f32.gmra.mxu0 %v2623
      %v2807 = vpop.f32.mrf.mxu0
      %v2808 = vadd.f32 0.0, %v2807
      %v2809 = vpop.f32.mrf.mxu0
      %2810 = vmatprep.mubr.f32.mxu0 0.0
      %2811 = vmatmul.mubr.f32.gmra.mxu0 %v2626
      %v2812 = vpop.f32.mrf.mxu0
      %v2813 = vadd.f32 0.0, %v2812
      %v2814 = vpop.f32.mrf.mxu0
      %2815 = vmatprep.mubr.f32.mxu0 0.0
      %2816 = vmatmul.mubr.f32.gmra.mxu0 %v2629
      %v2817 = vpop.f32.mrf.mxu0
      %v2818 = vadd.f32 0.0, %v2817
      %v2819 = vpop.f32.mrf.mxu0
      %2820 = vmatprep.mubr.f32.mxu0 0.0
      %2821 = vmatmul.mubr.f32.gmra.mxu0 %v2632
      %v2822 = vpop.f32.mrf.mxu0
      %v2823 = vadd.f32 0.0, %v2822
      %v2824 = vpop.f32.mrf.mxu0
      %2825 = vmatprep.mubr.f32.mxu0 0.0
      %2826 = vmatmul.mubr.f32.gmra.mxu0 %v2635
      %v2827 = vpop.f32.mrf.mxu0
      %v2828 = vadd.f32 0.0, %v2827
      %v2829 = vpop.f32.mrf.mxu0
      %2830 = vmatprep.mubr.f32.mxu0 0.0
      %2831 = vmatmul.mubr.f32.gmra.mxu0 %v2638
      %v2832 = vpop.f32.mrf.mxu0
      %v2833 = vadd.f32 0.0, %v2832
      %v2834 = vpop.f32.mrf.mxu0
      %2835 = vmatprep.mubr.f32.mxu0 0.0
      %2836 = vmatmul.mubr.f32.gmra.mxu0 %v2641
      %v2837 = vpop.f32.mrf.mxu0
      %v2838 = vadd.f32 0.0, %v2837
      %v2839 = vpop.f32.mrf.mxu0
      %2840 = vmatprep.mubr.f32.mxu0 0.0
      %2841 = vmatmul.mubr.f32.gmra.mxu0 %v2644
      %v2842 = vpop.f32.mrf.mxu0
      %v2843 = vadd.f32 0.0, %v2842
      %v2844 = vpop.f32.mrf.mxu0
      %2845 = vmatprep.mubr.f32.mxu0 0.0
      %2846 = vmatmul.mubr.f32.gmra.mxu0 %v2647
      %v2847 = vpop.f32.mrf.mxu0
      %v2848 = vadd.f32 0.0, %v2847
      %v2849 = vpop.f32.mrf.mxu0
      %2850 = vmatprep.mubr.f32.mxu0 0.0
      %2851 = vmatmul.mubr.f32.gmra.mxu0 %v2650
      %v2852 = vpop.f32.mrf.mxu0
      %v2853 = vadd.f32 0.0, %v2852
      %v2854 = vpop.f32.mrf.mxu0
      %2855 = vmatprep.mubr.f32.mxu0 0.0
      %2856 = vmatmul.mubr.f32.gmra.mxu0 %v2653
      %v2857 = vpop.f32.mrf.mxu0
      %v2858 = vadd.f32 0.0, %v2857
      %v2859 = vpop.f32.mrf.mxu0
      %2860 = vmatprep.mubr.f32.mxu0 0.0
      %2861 = vmatmul.mubr.f32.gmra.mxu0 %v2656
      %v2862 = vpop.f32.mrf.mxu0
      %v2863 = vadd.f32 0.0, %v2862
      %v2864 = vpop.f32.mrf.mxu0
      %2865 = vmatprep.mubr.f32.mxu0 0.0
      %2866 = vmatmul.mubr.f32.gmra.mxu0 %v2659
      %v2867 = vpop.f32.mrf.mxu0
      %v2868 = vadd.f32 0.0, %v2867
      %v2869 = vpop.f32.mrf.mxu0
      %2870 = vmatprep.mubr.f32.mxu0 0.0
      %2871 = vmatmul.mubr.f32.gmra.mxu0 %v2662
      %v2872 = vpop.f32.mrf.mxu0
      %v2873 = vadd.f32 0.0, %v2872
      %v2874 = vpop.f32.mrf.mxu0
      %2875 = vmatprep.mubr.f32.mxu0 0.0
      %2876 = vmatmul.mubr.f32.gmra.mxu0 %v2665
      %v2877 = vpop.f32.mrf.mxu0
      %v2878 = vadd.f32 0.0, %v2877
      %v2879 = vpop.f32.mrf.mxu0
      %2880 = vmatprep.mubr.f32.mxu0 0.0
      %2881 = vmatmul.mubr.f32.gmra.mxu0 %v2668
      %v2882 = vpop.f32.mrf.mxu0
      %v2883 = vadd.f32 0.0, %v2882
      %v2884 = vpop.f32.mrf.mxu0
      %2885 = vmatprep.mubr.f32.mxu0 0.0
      %2886 = vmatmul.mubr.f32.gmra.mxu0 %v2671
      %v2887 = vpop.f32.mrf.mxu0
      %v2888 = vadd.f32 0.0, %v2887
      %v2889 = vpop.f32.mrf.mxu0
      %2890 = vmatprep.mubr.f32.mxu0 0.0
      %2891 = vmatmul.mubr.f32.gmra.mxu0 %v2674
      %v2892 = vpop.f32.mrf.mxu0
      %v2893 = vadd.f32 0.0, %v2892
      %v2894 = vpop.f32.mrf.mxu0
      %2895 = vmatprep.mubr.f32.mxu0 0.0
      %2896 = vmatmul.mubr.f32.gmra.mxu0 %v2677
      %v2897 = vpop.f32.mrf.mxu0
      %v2898 = vadd.f32 0.0, %v2897
      %v2899 = vpop.f32.mrf.mxu0
      %2900 = vmatprep.mubr.f32.mxu0 0.0
      %2901 = vmatmul.mubr.f32.gmra.mxu0 %v2680
      %v2902 = vpop.f32.mrf.mxu0
      %v2903 = vadd.f32 0.0, %v2902
      %v2904 = vpop.f32.mrf.mxu0
      %2905 = vmatprep.mubr.f32.mxu0 0.0
      %2906 = vmatmul.mubr.f32.gmra.mxu0 %v2683
      %v2907 = vpop.f32.mrf.mxu0
      %v2908 = vadd.f32 0.0, %v2907
      %v2909 = vpop.f32.mrf.mxu0
      %2910 = vmatprep.mubr.f32.mxu0 0.0
      %2911 = vmatmul.mubr.f32.gmra.mxu0 %v2686
      %v2912 = vpop.f32.mrf.mxu0
      %v2913 = vadd.f32 0.0, %v2912
      %v2914 = vpop.f32.mrf.mxu0
      %2915 = vdwg.mxu0
      %v2916 = vadd.f32 %v2525, %v2758
      %v2917 = vadd.f32 %v2526, %v2763
      %v2918 = vadd.f32 %v2527, %v2768
      %v2919 = vadd.f32 %v2528, %v2773
      %v2920 = vadd.f32 %v2529, %v2778
      %v2921 = vadd.f32 %v2530, %v2783
      %v2922 = vadd.f32 %v2531, %v2788
      %v2923 = vadd.f32 %v2532, %v2793
      %v2924 = vadd.f32 %v2533, %v2798
      %v2925 = vadd.f32 %v2534, %v2803
      %v2926 = vadd.f32 %v2535, %v2808
      %v2927 = vadd.f32 %v2536, %v2813
      %v2928 = vadd.f32 %v2537, %v2818
      %v2929 = vadd.f32 %v2538, %v2823
      %v2930 = vadd.f32 %v2539, %v2828
      %v2931 = vadd.f32 %v2540, %v2833
      %v2932 = vadd.f32 %v2541, %v2838
      %v2933 = vadd.f32 %v2542, %v2843
      %v2934 = vadd.f32 %v2543, %v2848
      %v2935 = vadd.f32 %v2544, %v2853
      %v2936 = vadd.f32 %v2545, %v2858
      %v2937 = vadd.f32 %v2546, %v2863
      %v2938 = vadd.f32 %v2547, %v2868
      %v2939 = vadd.f32 %v2548, %v2873
      %v2940 = vadd.f32 %v2549, %v2878
      %v2941 = vadd.f32 %v2550, %v2883
      %v2942 = vadd.f32 %v2551, %v2888
      %v2943 = vadd.f32 %v2552, %v2893
      %v2944 = vadd.f32 %v2553, %v2898
      %v2945 = vadd.f32 %v2554, %v2903
      %v2946 = vadd.f32 %v2555, %v2908
      %v2947 = vadd.f32 %v2556, %v2913
      %v2948 = vld [vmem:[%s2557 + $0x1] sm:$0xff]
      %v2949 = vld [vmem:[%s2557 + $0x9] sm:$0xff]
      %v2950 = vld [vmem:[%s2557 + $0x19] sm:$0xff]
      %v2951 = vld [vmem:[%s2557 + $0x21] sm:$0xff]
      %v2952 = vld [vmem:[%s2557 + $0x31] sm:$0xff]
      %v2953 = vld [vmem:[%s2557 + $0x39] sm:$0xff]
      %v2954 = vld [vmem:[%s2557 + $0x49] sm:$0xff]
      %v2955 = vld [vmem:[%s2557 + $0x51] sm:$0xff]
      %v2956 = vld [vmem:[%s2557 + $0x61] sm:$0xff]
      %v2957 = vld [vmem:[%s2557 + $0x69] sm:$0xff]
      %v2958 = vld [vmem:[%s2557 + $0x79] sm:$0xff]
      %v2959 = vld [vmem:[%s2557 + $0x81] sm:$0xff]
      %v2960 = vld [vmem:[%s2557 + $0x91] sm:$0xff]
      %v2961 = vld [vmem:[%s2557 + $0x99] sm:$0xff]
      %v2962 = vld [vmem:[%s2557 + $0xa9] sm:$0xff]
      %v2963 = vld [vmem:[%s2557 + $0xb1] sm:$0xff]
      %v2964 = vld [vmem:[%s2557 + $0xc1] sm:$0xff]
      %v2965 = vld [vmem:[%s2557 + $0xc9] sm:$0xff]
      %v2966 = vld [vmem:[%s2557 + $0xd9] sm:$0xff]
      %v2967 = vld [vmem:[%s2557 + $0xe1] sm:$0xff]
      %v2968 = vld [vmem:[%s2557 + $0xf1] sm:$0xff]
      %v2969 = vld [vmem:[%s2557 + $0xf9] sm:$0xff]
      %v2970 = vld [vmem:[%s2557 + $0x109] sm:$0xff]
      %v2971 = vld [vmem:[%s2557 + $0x111] sm:$0xff]
      %v2972 = vld [vmem:[%s2557 + $0x121] sm:$0xff]
      %v2973 = vld [vmem:[%s2557 + $0x129] sm:$0xff]
      %v2974 = vld [vmem:[%s2557 + $0x139] sm:$0xff]
      %v2975 = vld [vmem:[%s2557 + $0x141] sm:$0xff]
      %v2976 = vld [vmem:[%s2557 + $0x151] sm:$0xff]
      %v2977 = vld [vmem:[%s2557 + $0x159] sm:$0xff]
      %v2978 = vld [vmem:[%s2557 + $0x169] sm:$0xff]
      %v2979 = vld [vmem:[%s2557 + $0x171] sm:$0xff]
      %s2980 = scalar_lea.vmem %s1, 28
      %v2981 = vld [vmem:[%s2980] sm:$0xf]
      %v2983 = vsel %vm346, %v2948, 0
      %v2986 = vsel %vm346, %v2949, 0
      %v2989 = vsel %vm346, %v2950, 0
      %v2992 = vsel %vm346, %v2951, 0
      %v2995 = vsel %vm346, %v2952, 0
      %v2998 = vsel %vm346, %v2953, 0
      %v3001 = vsel %vm346, %v2954, 0
      %v3004 = vsel %vm346, %v2955, 0
      %v3007 = vsel %vm346, %v2956, 0
      %v3010 = vsel %vm346, %v2957, 0
      %v3013 = vsel %vm346, %v2958, 0
      %v3016 = vsel %vm346, %v2959, 0
      %v3019 = vsel %vm346, %v2960, 0
      %v3022 = vsel %vm346, %v2961, 0
      %v3025 = vsel %vm346, %v2962, 0
      %v3028 = vsel %vm346, %v2963, 0
      %v3031 = vsel %vm346, %v2964, 0
      %v3034 = vsel %vm346, %v2965, 0
      %v3037 = vsel %vm346, %v2966, 0
      %v3040 = vsel %vm346, %v2967, 0
      %v3043 = vsel %vm346, %v2968, 0
      %v3046 = vsel %vm346, %v2969, 0
      %v3049 = vsel %vm346, %v2970, 0
      %v3052 = vsel %vm346, %v2971, 0
      %v3055 = vsel %vm346, %v2972, 0
      %v3058 = vsel %vm346, %v2973, 0
      %v3061 = vsel %vm346, %v2974, 0
      %v3064 = vsel %vm346, %v2975, 0
      %v3067 = vsel %vm346, %v2976, 0
      %v3070 = vsel %vm346, %v2977, 0
      %v3073 = vsel %vm346, %v2978, 0
      %v3076 = vsel %vm346, %v2979, 0
      %v3079 = vsel %vm443, %v2981, 0
      %3081 = vmatprep.subr.mxu0 0.0
      %3082 = vmatpush1.msra.mxu0 0.0
      %3083 = vmatprep.subr.mxu0 0.0
      %3084 = vmatpush1.msra.mxu0 0.0
      %3085 = vmatprep.subr.mxu0 0.0
      %3086 = vmatpush1.msra.mxu0 0.0
      %3087 = vmatprep.subr.mxu0 0.0
      %3088 = vmatpush1.msra.mxu0 0.0
      %3089 = vmatprep.subr.mxu0 0.0
      %3090 = vmatpush1.msra.mxu0 0.0
      %3091 = vmatprep.subr.mxu0 0.0
      %3092 = vmatpush1.msra.mxu0 0.0
      %3093 = vmatprep.subr.mxu0 0.0
      %3094 = vmatpush1.msra.mxu0 0.0
      %3095 = vmatprep.subr.mxu0 0.0
      %3096 = vmatpush1.msra.mxu0 0.0
      %3097 = vmatprep.subr.mxu0 0.0
      %3098 = vmatpush1.msra.mxu0 0.0
      %3099 = vmatprep.subr.mxu0 0.0
      %3100 = vmatpush1.msra.mxu0 0.0
      %3101 = vmatprep.subr.mxu0 0.0
      %3102 = vmatpush1.msra.mxu0 0.0
      %3103 = vmatprep.subr.mxu0 0.0
      %3104 = vmatpush1.msra.mxu0 0.0
      %3105 = vmatprep.subr.mxu0 0.0
      %3106 = vmatpush1.msra.mxu0 0.0
      %3107 = vmatprep.subr.mxu0 0.0
      %3108 = vmatpush1.msra.mxu0 0.0
      %3109 = vmatprep.subr.mxu0 0.0
      %3110 = vmatpush1.msra.mxu0 0.0
      %3111 = vmatprep.subr.mxu0 0.0
      %3112 = vmatpush1.msra.mxu0 %v3079
      %3113 = vmatprep.subr.mxu0 0.0
      %3114 = vmatpush2.msra.mxu0 0.0
      %3115 = vmatprep.subr.mxu0 0.0
      %3116 = vmatpush2.msra.mxu0 0.0
      %3117 = vmatprep.subr.mxu0 0.0
      %3118 = vmatpush2.msra.mxu0 0.0
      %3119 = vmatprep.subr.mxu0 0.0
      %3120 = vmatpush2.msra.mxu0 0.0
      %3121 = vmatprep.subr.mxu0 0.0
      %3122 = vmatpush2.msra.mxu0 0.0
      %3123 = vmatprep.subr.mxu0 0.0
      %3124 = vmatpush2.msra.mxu0 0.0
      %3125 = vmatprep.subr.mxu0 0.0
      %3126 = vmatpush2.msra.mxu0 0.0
      %3127 = vmatprep.subr.mxu0 0.0
      %3128 = vmatpush2.msra.mxu0 0.0
      %3129 = vmatprep.subr.mxu0 0.0
      %3130 = vmatpush2.msra.mxu0 0.0
      %3131 = vmatprep.subr.mxu0 0.0
      %3132 = vmatpush2.msra.mxu0 0.0
      %3133 = vmatprep.subr.mxu0 0.0
      %3134 = vmatpush2.msra.mxu0 0.0
      %3135 = vmatprep.subr.mxu0 0.0
      %3136 = vmatpush2.msra.mxu0 0.0
      %3137 = vmatprep.subr.mxu0 0.0
      %3138 = vmatpush2.msra.mxu0 0.0
      %3139 = vmatprep.subr.mxu0 0.0
      %3140 = vmatpush2.msra.mxu0 0.0
      %3141 = vmatprep.subr.mxu0 0.0
      %3142 = vmatpush2.msra.mxu0 0.0
      %3143 = vmatprep.subr.mxu0 0.0
      %3144 = vmatpush2.msra.mxu0 0.0
      %3145 = vmatprep.mubr.f32.mxu0 0.0
      %3146 = vmatmul.mubr.f32.gmra.mxu0 %v2983
      %v3147 = vpop.f32.mrf.mxu0
      %v3148 = vadd.f32 0.0, %v3147
      %v3149 = vpop.f32.mrf.mxu0
      %3150 = vmatprep.mubr.f32.mxu0 0.0
      %3151 = vmatmul.mubr.f32.gmra.mxu0 %v2986
      %v3152 = vpop.f32.mrf.mxu0
      %v3153 = vadd.f32 0.0, %v3152
      %v3154 = vpop.f32.mrf.mxu0
      %3155 = vmatprep.mubr.f32.mxu0 0.0
      %3156 = vmatmul.mubr.f32.gmra.mxu0 %v2989
      %v3157 = vpop.f32.mrf.mxu0
      %v3158 = vadd.f32 0.0, %v3157
      %v3159 = vpop.f32.mrf.mxu0
      %3160 = vmatprep.mubr.f32.mxu0 0.0
      %3161 = vmatmul.mubr.f32.gmra.mxu0 %v2992
      %v3162 = vpop.f32.mrf.mxu0
      %v3163 = vadd.f32 0.0, %v3162
      %v3164 = vpop.f32.mrf.mxu0
      %3165 = vmatprep.mubr.f32.mxu0 0.0
      %3166 = vmatmul.mubr.f32.gmra.mxu0 %v2995
      %v3167 = vpop.f32.mrf.mxu0
      %v3168 = vadd.f32 0.0, %v3167
      %v3169 = vpop.f32.mrf.mxu0
      %3170 = vmatprep.mubr.f32.mxu0 0.0
      %3171 = vmatmul.mubr.f32.gmra.mxu0 %v2998
      %v3172 = vpop.f32.mrf.mxu0
      %v3173 = vadd.f32 0.0, %v3172
      %v3174 = vpop.f32.mrf.mxu0
      %3175 = vmatprep.mubr.f32.mxu0 0.0
      %3176 = vmatmul.mubr.f32.gmra.mxu0 %v3001
      %v3177 = vpop.f32.mrf.mxu0
      %v3178 = vadd.f32 0.0, %v3177
      %v3179 = vpop.f32.mrf.mxu0
      %3180 = vmatprep.mubr.f32.mxu0 0.0
      %3181 = vmatmul.mubr.f32.gmra.mxu0 %v3004
      %v3182 = vpop.f32.mrf.mxu0
      %v3183 = vadd.f32 0.0, %v3182
      %v3184 = vpop.f32.mrf.mxu0
      %3185 = vmatprep.mubr.f32.mxu0 0.0
      %3186 = vmatmul.mubr.f32.gmra.mxu0 %v3007
      %v3187 = vpop.f32.mrf.mxu0
      %v3188 = vadd.f32 0.0, %v3187
      %v3189 = vpop.f32.mrf.mxu0
      %3190 = vmatprep.mubr.f32.mxu0 0.0
      %3191 = vmatmul.mubr.f32.gmra.mxu0 %v3010
      %v3192 = vpop.f32.mrf.mxu0
      %v3193 = vadd.f32 0.0, %v3192
      %v3194 = vpop.f32.mrf.mxu0
      %3195 = vmatprep.mubr.f32.mxu0 0.0
      %3196 = vmatmul.mubr.f32.gmra.mxu0 %v3013
      %v3197 = vpop.f32.mrf.mxu0
      %v3198 = vadd.f32 0.0, %v3197
      %v3199 = vpop.f32.mrf.mxu0
      %3200 = vmatprep.mubr.f32.mxu0 0.0
      %3201 = vmatmul.mubr.f32.gmra.mxu0 %v3016
      %v3202 = vpop.f32.mrf.mxu0
      %v3203 = vadd.f32 0.0, %v3202
      %v3204 = vpop.f32.mrf.mxu0
      %3205 = vmatprep.mubr.f32.mxu0 0.0
      %3206 = vmatmul.mubr.f32.gmra.mxu0 %v3019
      %v3207 = vpop.f32.mrf.mxu0
      %v3208 = vadd.f32 0.0, %v3207
      %v3209 = vpop.f32.mrf.mxu0
      %3210 = vmatprep.mubr.f32.mxu0 0.0
      %3211 = vmatmul.mubr.f32.gmra.mxu0 %v3022
      %v3212 = vpop.f32.mrf.mxu0
      %v3213 = vadd.f32 0.0, %v3212
      %v3214 = vpop.f32.mrf.mxu0
      %3215 = vmatprep.mubr.f32.mxu0 0.0
      %3216 = vmatmul.mubr.f32.gmra.mxu0 %v3025
      %v3217 = vpop.f32.mrf.mxu0
      %v3218 = vadd.f32 0.0, %v3217
      %v3219 = vpop.f32.mrf.mxu0
      %3220 = vmatprep.mubr.f32.mxu0 0.0
      %3221 = vmatmul.mubr.f32.gmra.mxu0 %v3028
      %v3222 = vpop.f32.mrf.mxu0
      %v3223 = vadd.f32 0.0, %v3222
      %v3224 = vpop.f32.mrf.mxu0
      %3225 = vmatprep.mubr.f32.mxu0 0.0
      %3226 = vmatmul.mubr.f32.gmra.mxu0 %v3031
      %v3227 = vpop.f32.mrf.mxu0
      %v3228 = vadd.f32 0.0, %v3227
      %v3229 = vpop.f32.mrf.mxu0
      %3230 = vmatprep.mubr.f32.mxu0 0.0
      %3231 = vmatmul.mubr.f32.gmra.mxu0 %v3034
      %v3232 = vpop.f32.mrf.mxu0
      %v3233 = vadd.f32 0.0, %v3232
      %v3234 = vpop.f32.mrf.mxu0
      %3235 = vmatprep.mubr.f32.mxu0 0.0
      %3236 = vmatmul.mubr.f32.gmra.mxu0 %v3037
      %v3237 = vpop.f32.mrf.mxu0
      %v3238 = vadd.f32 0.0, %v3237
      %v3239 = vpop.f32.mrf.mxu0
      %3240 = vmatprep.mubr.f32.mxu0 0.0
      %3241 = vmatmul.mubr.f32.gmra.mxu0 %v3040
      %v3242 = vpop.f32.mrf.mxu0
      %v3243 = vadd.f32 0.0, %v3242
      %v3244 = vpop.f32.mrf.mxu0
      %3245 = vmatprep.mubr.f32.mxu0 0.0
      %3246 = vmatmul.mubr.f32.gmra.mxu0 %v3043
      %v3247 = vpop.f32.mrf.mxu0
      %v3248 = vadd.f32 0.0, %v3247
      %v3249 = vpop.f32.mrf.mxu0
      %3250 = vmatprep.mubr.f32.mxu0 0.0
      %3251 = vmatmul.mubr.f32.gmra.mxu0 %v3046
      %v3252 = vpop.f32.mrf.mxu0
      %v3253 = vadd.f32 0.0, %v3252
      %v3254 = vpop.f32.mrf.mxu0
      %3255 = vmatprep.mubr.f32.mxu0 0.0
      %3256 = vmatmul.mubr.f32.gmra.mxu0 %v3049
      %v3257 = vpop.f32.mrf.mxu0
      %v3258 = vadd.f32 0.0, %v3257
      %v3259 = vpop.f32.mrf.mxu0
      %3260 = vmatprep.mubr.f32.mxu0 0.0
      %3261 = vmatmul.mubr.f32.gmra.mxu0 %v3052
      %v3262 = vpop.f32.mrf.mxu0
      %v3263 = vadd.f32 0.0, %v3262
      %v3264 = vpop.f32.mrf.mxu0
      %3265 = vmatprep.mubr.f32.mxu0 0.0
      %3266 = vmatmul.mubr.f32.gmra.mxu0 %v3055
      %v3267 = vpop.f32.mrf.mxu0
      %v3268 = vadd.f32 0.0, %v3267
      %v3269 = vpop.f32.mrf.mxu0
      %3270 = vmatprep.mubr.f32.mxu0 0.0
      %3271 = vmatmul.mubr.f32.gmra.mxu0 %v3058
      %v3272 = vpop.f32.mrf.mxu0
      %v3273 = vadd.f32 0.0, %v3272
      %v3274 = vpop.f32.mrf.mxu0
      %3275 = vmatprep.mubr.f32.mxu0 0.0
      %3276 = vmatmul.mubr.f32.gmra.mxu0 %v3061
      %v3277 = vpop.f32.mrf.mxu0
      %v3278 = vadd.f32 0.0, %v3277
      %v3279 = vpop.f32.mrf.mxu0
      %3280 = vmatprep.mubr.f32.mxu0 0.0
      %3281 = vmatmul.mubr.f32.gmra.mxu0 %v3064
      %v3282 = vpop.f32.mrf.mxu0
      %v3283 = vadd.f32 0.0, %v3282
      %v3284 = vpop.f32.mrf.mxu0
      %3285 = vmatprep.mubr.f32.mxu0 0.0
      %3286 = vmatmul.mubr.f32.gmra.mxu0 %v3067
      %v3287 = vpop.f32.mrf.mxu0
      %v3288 = vadd.f32 0.0, %v3287
      %v3289 = vpop.f32.mrf.mxu0
      %3290 = vmatprep.mubr.f32.mxu0 0.0
      %3291 = vmatmul.mubr.f32.gmra.mxu0 %v3070
      %v3292 = vpop.f32.mrf.mxu0
      %v3293 = vadd.f32 0.0, %v3292
      %v3294 = vpop.f32.mrf.mxu0
      %3295 = vmatprep.mubr.f32.mxu0 0.0
      %3296 = vmatmul.mubr.f32.gmra.mxu0 %v3073
      %v3297 = vpop.f32.mrf.mxu0
      %v3298 = vadd.f32 0.0, %v3297
      %v3299 = vpop.f32.mrf.mxu0
      %3300 = vmatprep.mubr.f32.mxu0 0.0
      %3301 = vmatmul.mubr.f32.gmra.mxu0 %v3076
      %v3302 = vpop.f32.mrf.mxu0
      %v3303 = vadd.f32 0.0, %v3302
      %v3304 = vpop.f32.mrf.mxu0
      %3305 = vdwg.mxu0
      %v3306 = vadd.f32 %v2916, %v3148
      %v3307 = vadd.f32 %v2917, %v3153
      %v3308 = vadd.f32 %v2918, %v3158
      %v3309 = vadd.f32 %v2919, %v3163
      %v3310 = vadd.f32 %v2920, %v3168
      %v3311 = vadd.f32 %v2921, %v3173
      %v3312 = vadd.f32 %v2922, %v3178
      %v3313 = vadd.f32 %v2923, %v3183
      %v3314 = vadd.f32 %v2924, %v3188
      %v3315 = vadd.f32 %v2925, %v3193
      %v3316 = vadd.f32 %v2926, %v3198
      %v3317 = vadd.f32 %v2927, %v3203
      %v3318 = vadd.f32 %v2928, %v3208
      %v3319 = vadd.f32 %v2929, %v3213
      %v3320 = vadd.f32 %v2930, %v3218
      %v3321 = vadd.f32 %v2931, %v3223
      %v3322 = vadd.f32 %v2932, %v3228
      %v3323 = vadd.f32 %v2933, %v3233
      %v3324 = vadd.f32 %v2934, %v3238
      %v3325 = vadd.f32 %v2935, %v3243
      %v3326 = vadd.f32 %v2936, %v3248
      %v3327 = vadd.f32 %v2937, %v3253
      %v3328 = vadd.f32 %v2938, %v3258
      %v3329 = vadd.f32 %v2939, %v3263
      %v3330 = vadd.f32 %v2940, %v3268
      %v3331 = vadd.f32 %v2941, %v3273
      %v3332 = vadd.f32 %v2942, %v3278
      %v3333 = vadd.f32 %v2943, %v3283
      %v3334 = vadd.f32 %v2944, %v3288
      %v3335 = vadd.f32 %v2945, %v3293
      %v3336 = vadd.f32 %v2946, %v3298
      %v3337 = vadd.f32 %v2947, %v3303
      %v3338 = vld [vmem:[%s2557 + $0x2] sm:$0xff]
      %v3339 = vld [vmem:[%s2557 + $0xa] sm:$0xff]
      %v3340 = vld [vmem:[%s2557 + $0x1a] sm:$0xff]
      %v3341 = vld [vmem:[%s2557 + $0x22] sm:$0xff]
      %v3342 = vld [vmem:[%s2557 + $0x32] sm:$0xff]
      %v3343 = vld [vmem:[%s2557 + $0x3a] sm:$0xff]
      %v3344 = vld [vmem:[%s2557 + $0x4a] sm:$0xff]
      %v3345 = vld [vmem:[%s2557 + $0x52] sm:$0xff]
      %v3346 = vld [vmem:[%s2557 + $0x62] sm:$0xff]
      %v3347 = vld [vmem:[%s2557 + $0x6a] sm:$0xff]
      %v3348 = vld [vmem:[%s2557 + $0x7a] sm:$0xff]
      %v3349 = vld [vmem:[%s2557 + $0x82] sm:$0xff]
      %v3350 = vld [vmem:[%s2557 + $0x92] sm:$0xff]
      %v3351 = vld [vmem:[%s2557 + $0x9a] sm:$0xff]
      %v3352 = vld [vmem:[%s2557 + $0xaa] sm:$0xff]
      %v3353 = vld [vmem:[%s2557 + $0xb2] sm:$0xff]
      %v3354 = vld [vmem:[%s2557 + $0xc2] sm:$0xff]
      %v3355 = vld [vmem:[%s2557 + $0xca] sm:$0xff]
      %v3356 = vld [vmem:[%s2557 + $0xda] sm:$0xff]
      %v3357 = vld [vmem:[%s2557 + $0xe2] sm:$0xff]
      %v3358 = vld [vmem:[%s2557 + $0xf2] sm:$0xff]
      %v3359 = vld [vmem:[%s2557 + $0xfa] sm:$0xff]
      %v3360 = vld [vmem:[%s2557 + $0x10a] sm:$0xff]
      %v3361 = vld [vmem:[%s2557 + $0x112] sm:$0xff]
      %v3362 = vld [vmem:[%s2557 + $0x122] sm:$0xff]
      %v3363 = vld [vmem:[%s2557 + $0x12a] sm:$0xff]
      %v3364 = vld [vmem:[%s2557 + $0x13a] sm:$0xff]
      %v3365 = vld [vmem:[%s2557 + $0x142] sm:$0xff]
      %v3366 = vld [vmem:[%s2557 + $0x152] sm:$0xff]
      %v3367 = vld [vmem:[%s2557 + $0x15a] sm:$0xff]
      %v3368 = vld [vmem:[%s2557 + $0x16a] sm:$0xff]
      %v3369 = vld [vmem:[%s2557 + $0x172] sm:$0xff]
      %s3370 = scalar_lea.vmem %s1, 32
      %v3371 = vld [vmem:[%s3370] sm:$0xf]
      %v3373 = vsel %vm346, %v3338, 0
      %v3376 = vsel %vm346, %v3339, 0
      %v3379 = vsel %vm346, %v3340, 0
      %v3382 = vsel %vm346, %v3341, 0
      %v3385 = vsel %vm346, %v3342, 0
      %v3388 = vsel %vm346, %v3343, 0
      %v3391 = vsel %vm346, %v3344, 0
      %v3394 = vsel %vm346, %v3345, 0
      %v3397 = vsel %vm346, %v3346, 0
      %v3400 = vsel %vm346, %v3347, 0
      %v3403 = vsel %vm346, %v3348, 0
      %v3406 = vsel %vm346, %v3349, 0
      %v3409 = vsel %vm346, %v3350, 0
      %v3412 = vsel %vm346, %v3351, 0
      %v3415 = vsel %vm346, %v3352, 0
      %v3418 = vsel %vm346, %v3353, 0
      %v3421 = vsel %vm346, %v3354, 0
      %v3424 = vsel %vm346, %v3355, 0
      %v3427 = vsel %vm346, %v3356, 0
      %v3430 = vsel %vm346, %v3357, 0
      %v3433 = vsel %vm346, %v3358, 0
      %v3436 = vsel %vm346, %v3359, 0
      %v3439 = vsel %vm346, %v3360, 0
      %v3442 = vsel %vm346, %v3361, 0
      %v3445 = vsel %vm346, %v3362, 0
      %v3448 = vsel %vm346, %v3363, 0
      %v3451 = vsel %vm346, %v3364, 0
      %v3454 = vsel %vm346, %v3365, 0
      %v3457 = vsel %vm346, %v3366, 0
      %v3460 = vsel %vm346, %v3367, 0
      %v3463 = vsel %vm346, %v3368, 0
      %v3466 = vsel %vm346, %v3369, 0
      %v3469 = vsel %vm443, %v3371, 0
      %3471 = vmatprep.subr.mxu0 0.0
      %3472 = vmatpush1.msra.mxu0 0.0
      %3473 = vmatprep.subr.mxu0 0.0
      %3474 = vmatpush1.msra.mxu0 0.0
      %3475 = vmatprep.subr.mxu0 0.0
      %3476 = vmatpush1.msra.mxu0 0.0
      %3477 = vmatprep.subr.mxu0 0.0
      %3478 = vmatpush1.msra.mxu0 0.0
      %3479 = vmatprep.subr.mxu0 0.0
      %3480 = vmatpush1.msra.mxu0 0.0
      %3481 = vmatprep.subr.mxu0 0.0
      %3482 = vmatpush1.msra.mxu0 0.0
      %3483 = vmatprep.subr.mxu0 0.0
      %3484 = vmatpush1.msra.mxu0 0.0
      %3485 = vmatprep.subr.mxu0 0.0
      %3486 = vmatpush1.msra.mxu0 0.0
      %3487 = vmatprep.subr.mxu0 0.0
      %3488 = vmatpush1.msra.mxu0 0.0
      %3489 = vmatprep.subr.mxu0 0.0
      %3490 = vmatpush1.msra.mxu0 0.0
      %3491 = vmatprep.subr.mxu0 0.0
      %3492 = vmatpush1.msra.mxu0 0.0
      %3493 = vmatprep.subr.mxu0 0.0
      %3494 = vmatpush1.msra.mxu0 0.0
      %3495 = vmatprep.subr.mxu0 0.0
      %3496 = vmatpush1.msra.mxu0 0.0
      %3497 = vmatprep.subr.mxu0 0.0
      %3498 = vmatpush1.msra.mxu0 0.0
      %3499 = vmatprep.subr.mxu0 0.0
      %3500 = vmatpush1.msra.mxu0 0.0
      %3501 = vmatprep.subr.mxu0 0.0
      %3502 = vmatpush1.msra.mxu0 %v3469
      %3503 = vmatprep.subr.mxu0 0.0
      %3504 = vmatpush2.msra.mxu0 0.0
      %3505 = vmatprep.subr.mxu0 0.0
      %3506 = vmatpush2.msra.mxu0 0.0
      %3507 = vmatprep.subr.mxu0 0.0
      %3508 = vmatpush2.msra.mxu0 0.0
      %3509 = vmatprep.subr.mxu0 0.0
      %3510 = vmatpush2.msra.mxu0 0.0
      %3511 = vmatprep.subr.mxu0 0.0
      %3512 = vmatpush2.msra.mxu0 0.0
      %3513 = vmatprep.subr.mxu0 0.0
      %3514 = vmatpush2.msra.mxu0 0.0
      %3515 = vmatprep.subr.mxu0 0.0
      %3516 = vmatpush2.msra.mxu0 0.0
      %3517 = vmatprep.subr.mxu0 0.0
      %3518 = vmatpush2.msra.mxu0 0.0
      %3519 = vmatprep.subr.mxu0 0.0
      %3520 = vmatpush2.msra.mxu0 0.0
      %3521 = vmatprep.subr.mxu0 0.0
      %3522 = vmatpush2.msra.mxu0 0.0
      %3523 = vmatprep.subr.mxu0 0.0
      %3524 = vmatpush2.msra.mxu0 0.0
      %3525 = vmatprep.subr.mxu0 0.0
      %3526 = vmatpush2.msra.mxu0 0.0
      %3527 = vmatprep.subr.mxu0 0.0
      %3528 = vmatpush2.msra.mxu0 0.0
      %3529 = vmatprep.subr.mxu0 0.0
      %3530 = vmatpush2.msra.mxu0 0.0
      %3531 = vmatprep.subr.mxu0 0.0
      %3532 = vmatpush2.msra.mxu0 0.0
      %3533 = vmatprep.subr.mxu0 0.0
      %3534 = vmatpush2.msra.mxu0 0.0
      %3535 = vmatprep.mubr.f32.mxu0 0.0
      %3536 = vmatmul.mubr.f32.gmra.mxu0 %v3373
      %v3537 = vpop.f32.mrf.mxu0
      %v3538 = vadd.f32 0.0, %v3537
      %v3539 = vpop.f32.mrf.mxu0
      %3540 = vmatprep.mubr.f32.mxu0 0.0
      %3541 = vmatmul.mubr.f32.gmra.mxu0 %v3376
      %v3542 = vpop.f32.mrf.mxu0
      %v3543 = vadd.f32 0.0, %v3542
      %v3544 = vpop.f32.mrf.mxu0
      %3545 = vmatprep.mubr.f32.mxu0 0.0
      %3546 = vmatmul.mubr.f32.gmra.mxu0 %v3379
      %v3547 = vpop.f32.mrf.mxu0
      %v3548 = vadd.f32 0.0, %v3547
      %v3549 = vpop.f32.mrf.mxu0
      %3550 = vmatprep.mubr.f32.mxu0 0.0
      %3551 = vmatmul.mubr.f32.gmra.mxu0 %v3382
      %v3552 = vpop.f32.mrf.mxu0
      %v3553 = vadd.f32 0.0, %v3552
      %v3554 = vpop.f32.mrf.mxu0
      %3555 = vmatprep.mubr.f32.mxu0 0.0
      %3556 = vmatmul.mubr.f32.gmra.mxu0 %v3385
      %v3557 = vpop.f32.mrf.mxu0
      %v3558 = vadd.f32 0.0, %v3557
      %v3559 = vpop.f32.mrf.mxu0
      %3560 = vmatprep.mubr.f32.mxu0 0.0
      %3561 = vmatmul.mubr.f32.gmra.mxu0 %v3388
      %v3562 = vpop.f32.mrf.mxu0
      %v3563 = vadd.f32 0.0, %v3562
      %v3564 = vpop.f32.mrf.mxu0
      %3565 = vmatprep.mubr.f32.mxu0 0.0
      %3566 = vmatmul.mubr.f32.gmra.mxu0 %v3391
      %v3567 = vpop.f32.mrf.mxu0
      %v3568 = vadd.f32 0.0, %v3567
      %v3569 = vpop.f32.mrf.mxu0
      %3570 = vmatprep.mubr.f32.mxu0 0.0
      %3571 = vmatmul.mubr.f32.gmra.mxu0 %v3394
      %v3572 = vpop.f32.mrf.mxu0
      %v3573 = vadd.f32 0.0, %v3572
      %v3574 = vpop.f32.mrf.mxu0
      %3575 = vmatprep.mubr.f32.mxu0 0.0
      %3576 = vmatmul.mubr.f32.gmra.mxu0 %v3397
      %v3577 = vpop.f32.mrf.mxu0
      %v3578 = vadd.f32 0.0, %v3577
      %v3579 = vpop.f32.mrf.mxu0
      %3580 = vmatprep.mubr.f32.mxu0 0.0
      %3581 = vmatmul.mubr.f32.gmra.mxu0 %v3400
      %v3582 = vpop.f32.mrf.mxu0
      %v3583 = vadd.f32 0.0, %v3582
      %v3584 = vpop.f32.mrf.mxu0
      %3585 = vmatprep.mubr.f32.mxu0 0.0
      %3586 = vmatmul.mubr.f32.gmra.mxu0 %v3403
      %v3587 = vpop.f32.mrf.mxu0
      %v3588 = vadd.f32 0.0, %v3587
      %v3589 = vpop.f32.mrf.mxu0
      %3590 = vmatprep.mubr.f32.mxu0 0.0
      %3591 = vmatmul.mubr.f32.gmra.mxu0 %v3406
      %v3592 = vpop.f32.mrf.mxu0
      %v3593 = vadd.f32 0.0, %v3592
      %v3594 = vpop.f32.mrf.mxu0
      %3595 = vmatprep.mubr.f32.mxu0 0.0
      %3596 = vmatmul.mubr.f32.gmra.mxu0 %v3409
      %v3597 = vpop.f32.mrf.mxu0
      %v3598 = vadd.f32 0.0, %v3597
      %v3599 = vpop.f32.mrf.mxu0
      %3600 = vmatprep.mubr.f32.mxu0 0.0
      %3601 = vmatmul.mubr.f32.gmra.mxu0 %v3412
      %v3602 = vpop.f32.mrf.mxu0
      %v3603 = vadd.f32 0.0, %v3602
      %v3604 = vpop.f32.mrf.mxu0
      %3605 = vmatprep.mubr.f32.mxu0 0.0
      %3606 = vmatmul.mubr.f32.gmra.mxu0 %v3415
      %v3607 = vpop.f32.mrf.mxu0
      %v3608 = vadd.f32 0.0, %v3607
      %v3609 = vpop.f32.mrf.mxu0
      %3610 = vmatprep.mubr.f32.mxu0 0.0
      %3611 = vmatmul.mubr.f32.gmra.mxu0 %v3418
      %v3612 = vpop.f32.mrf.mxu0
      %v3613 = vadd.f32 0.0, %v3612
      %v3614 = vpop.f32.mrf.mxu0
      %3615 = vmatprep.mubr.f32.mxu0 0.0
      %3616 = vmatmul.mubr.f32.gmra.mxu0 %v3421
      %v3617 = vpop.f32.mrf.mxu0
      %v3618 = vadd.f32 0.0, %v3617
      %v3619 = vpop.f32.mrf.mxu0
      %3620 = vmatprep.mubr.f32.mxu0 0.0
      %3621 = vmatmul.mubr.f32.gmra.mxu0 %v3424
      %v3622 = vpop.f32.mrf.mxu0
      %v3623 = vadd.f32 0.0, %v3622
      %v3624 = vpop.f32.mrf.mxu0
      %3625 = vmatprep.mubr.f32.mxu0 0.0
      %3626 = vmatmul.mubr.f32.gmra.mxu0 %v3427
      %v3627 = vpop.f32.mrf.mxu0
      %v3628 = vadd.f32 0.0, %v3627
      %v3629 = vpop.f32.mrf.mxu0
      %3630 = vmatprep.mubr.f32.mxu0 0.0
      %3631 = vmatmul.mubr.f32.gmra.mxu0 %v3430
      %v3632 = vpop.f32.mrf.mxu0
      %v3633 = vadd.f32 0.0, %v3632
      %v3634 = vpop.f32.mrf.mxu0
      %3635 = vmatprep.mubr.f32.mxu0 0.0
      %3636 = vmatmul.mubr.f32.gmra.mxu0 %v3433
      %v3637 = vpop.f32.mrf.mxu0
      %v3638 = vadd.f32 0.0, %v3637
      %v3639 = vpop.f32.mrf.mxu0
      %3640 = vmatprep.mubr.f32.mxu0 0.0
      %3641 = vmatmul.mubr.f32.gmra.mxu0 %v3436
      %v3642 = vpop.f32.mrf.mxu0
      %v3643 = vadd.f32 0.0, %v3642
      %v3644 = vpop.f32.mrf.mxu0
      %3645 = vmatprep.mubr.f32.mxu0 0.0
      %3646 = vmatmul.mubr.f32.gmra.mxu0 %v3439
      %v3647 = vpop.f32.mrf.mxu0
      %v3648 = vadd.f32 0.0, %v3647
      %v3649 = vpop.f32.mrf.mxu0
      %3650 = vmatprep.mubr.f32.mxu0 0.0
      %3651 = vmatmul.mubr.f32.gmra.mxu0 %v3442
      %v3652 = vpop.f32.mrf.mxu0
      %v3653 = vadd.f32 0.0, %v3652
      %v3654 = vpop.f32.mrf.mxu0
      %3655 = vmatprep.mubr.f32.mxu0 0.0
      %3656 = vmatmul.mubr.f32.gmra.mxu0 %v3445
      %v3657 = vpop.f32.mrf.mxu0
      %v3658 = vadd.f32 0.0, %v3657
      %v3659 = vpop.f32.mrf.mxu0
      %3660 = vmatprep.mubr.f32.mxu0 0.0
      %3661 = vmatmul.mubr.f32.gmra.mxu0 %v3448
      %v3662 = vpop.f32.mrf.mxu0
      %v3663 = vadd.f32 0.0, %v3662
      %v3664 = vpop.f32.mrf.mxu0
      %3665 = vmatprep.mubr.f32.mxu0 0.0
      %3666 = vmatmul.mubr.f32.gmra.mxu0 %v3451
      %v3667 = vpop.f32.mrf.mxu0
      %v3668 = vadd.f32 0.0, %v3667
      %v3669 = vpop.f32.mrf.mxu0
      %3670 = vmatprep.mubr.f32.mxu0 0.0
      %3671 = vmatmul.mubr.f32.gmra.mxu0 %v3454
      %v3672 = vpop.f32.mrf.mxu0
      %v3673 = vadd.f32 0.0, %v3672
      %v3674 = vpop.f32.mrf.mxu0
      %3675 = vmatprep.mubr.f32.mxu0 0.0
      %3676 = vmatmul.mubr.f32.gmra.mxu0 %v3457
      %v3677 = vpop.f32.mrf.mxu0
      %v3678 = vadd.f32 0.0, %v3677
      %v3679 = vpop.f32.mrf.mxu0
      %3680 = vmatprep.mubr.f32.mxu0 0.0
      %3681 = vmatmul.mubr.f32.gmra.mxu0 %v3460
      %v3682 = vpop.f32.mrf.mxu0
      %v3683 = vadd.f32 0.0, %v3682
      %v3684 = vpop.f32.mrf.mxu0
      %3685 = vmatprep.mubr.f32.mxu0 0.0
      %3686 = vmatmul.mubr.f32.gmra.mxu0 %v3463
      %v3687 = vpop.f32.mrf.mxu0
      %v3688 = vadd.f32 0.0, %v3687
      %v3689 = vpop.f32.mrf.mxu0
      %3690 = vmatprep.mubr.f32.mxu0 0.0
      %3691 = vmatmul.mubr.f32.gmra.mxu0 %v3466
      %v3692 = vpop.f32.mrf.mxu0
      %v3693 = vadd.f32 0.0, %v3692
      %v3694 = vpop.f32.mrf.mxu0
      %3695 = vdwg.mxu0
      %v3696 = vadd.f32 %v3306, %v3538
      %v3697 = vadd.f32 %v3307, %v3543
      %v3698 = vadd.f32 %v3308, %v3548
      %v3699 = vadd.f32 %v3309, %v3553
      %v3700 = vadd.f32 %v3310, %v3558
      %v3701 = vadd.f32 %v3311, %v3563
      %v3702 = vadd.f32 %v3312, %v3568
      %v3703 = vadd.f32 %v3313, %v3573
      %v3704 = vadd.f32 %v3314, %v3578
      %v3705 = vadd.f32 %v3315, %v3583
      %v3706 = vadd.f32 %v3316, %v3588
      %v3707 = vadd.f32 %v3317, %v3593
      %v3708 = vadd.f32 %v3318, %v3598
      %v3709 = vadd.f32 %v3319, %v3603
      %v3710 = vadd.f32 %v3320, %v3608
      %v3711 = vadd.f32 %v3321, %v3613
      %v3712 = vadd.f32 %v3322, %v3618
      %v3713 = vadd.f32 %v3323, %v3623
      %v3714 = vadd.f32 %v3324, %v3628
      %v3715 = vadd.f32 %v3325, %v3633
      %v3716 = vadd.f32 %v3326, %v3638
      %v3717 = vadd.f32 %v3327, %v3643
      %v3718 = vadd.f32 %v3328, %v3648
      %v3719 = vadd.f32 %v3329, %v3653
      %v3720 = vadd.f32 %v3330, %v3658
      %v3721 = vadd.f32 %v3331, %v3663
      %v3722 = vadd.f32 %v3332, %v3668
      %v3723 = vadd.f32 %v3333, %v3673
      %v3724 = vadd.f32 %v3334, %v3678
      %v3725 = vadd.f32 %v3335, %v3683
      %v3726 = vadd.f32 %v3336, %v3688
      %v3727 = vadd.f32 %v3337, %v3693
      %v3728 = vld [vmem:[%s2] sm:$0x1]
      %v3730 = vlaneseq
      %v3731 = vshrl.u32 %v3730, 7
      %v3732 = vsub.s32 0, %v3731
      %v3733 = vrot.slane %v3728, %v3732
      %v3735 = vadd.f32 %v3696, %v3733
      %v3736 = vadd.f32 %v3697, %v3733
      %v3737 = vadd.f32 %v3698, %v3733
      %v3738 = vadd.f32 %v3699, %v3733
      %v3739 = vadd.f32 %v3700, %v3733
      %v3740 = vadd.f32 %v3701, %v3733
      %v3741 = vadd.f32 %v3702, %v3733
      %v3742 = vadd.f32 %v3703, %v3733
      %v3743 = vadd.f32 %v3704, %v3733
      %v3744 = vadd.f32 %v3705, %v3733
      %v3745 = vadd.f32 %v3706, %v3733
      %v3746 = vadd.f32 %v3707, %v3733
      %v3747 = vadd.f32 %v3708, %v3733
      %v3748 = vadd.f32 %v3709, %v3733
      %v3749 = vadd.f32 %v3710, %v3733
      %v3750 = vadd.f32 %v3711, %v3733
      %v3751 = vadd.f32 %v3712, %v3733
      %v3752 = vadd.f32 %v3713, %v3733
      %v3753 = vadd.f32 %v3714, %v3733
      %v3754 = vadd.f32 %v3715, %v3733
      %v3755 = vadd.f32 %v3716, %v3733
      %v3756 = vadd.f32 %v3717, %v3733
      %v3757 = vadd.f32 %v3718, %v3733
      %v3758 = vadd.f32 %v3719, %v3733
      %v3759 = vadd.f32 %v3720, %v3733
      %v3760 = vadd.f32 %v3721, %v3733
      %v3761 = vadd.f32 %v3722, %v3733
      %v3762 = vadd.f32 %v3723, %v3733
      %v3763 = vadd.f32 %v3724, %v3733
      %v3764 = vadd.f32 %v3725, %v3733
      %v3765 = vadd.f32 %v3726, %v3733
      %v3766 = vadd.f32 %v3727, %v3733
      %v3767 = vmax.f32 %v3735, 0.0
      %v3768 = vmax.f32 %v3736, 0.0
      %v3769 = vmax.f32 %v3737, 0.0
      %v3770 = vmax.f32 %v3738, 0.0
      %v3771 = vmax.f32 %v3739, 0.0
      %v3772 = vmax.f32 %v3740, 0.0
      %v3773 = vmax.f32 %v3741, 0.0
      %v3774 = vmax.f32 %v3742, 0.0
      %v3775 = vmax.f32 %v3743, 0.0
      %v3776 = vmax.f32 %v3744, 0.0
      %v3777 = vmax.f32 %v3745, 0.0
      %v3778 = vmax.f32 %v3746, 0.0
      %v3779 = vmax.f32 %v3747, 0.0
      %v3780 = vmax.f32 %v3748, 0.0
      %v3781 = vmax.f32 %v3749, 0.0
      %v3782 = vmax.f32 %v3750, 0.0
      %v3783 = vmax.f32 %v3751, 0.0
      %v3784 = vmax.f32 %v3752, 0.0
      %v3785 = vmax.f32 %v3753, 0.0
      %v3786 = vmax.f32 %v3754, 0.0
      %v3787 = vmax.f32 %v3755, 0.0
      %v3788 = vmax.f32 %v3756, 0.0
      %v3789 = vmax.f32 %v3757, 0.0
      %v3790 = vmax.f32 %v3758, 0.0
      %v3791 = vmax.f32 %v3759, 0.0
      %v3792 = vmax.f32 %v3760, 0.0
      %v3793 = vmax.f32 %v3761, 0.0
      %v3794 = vmax.f32 %v3762, 0.0
      %v3795 = vmax.f32 %v3763, 0.0
      %v3796 = vmax.f32 %v3764, 0.0
      %v3797 = vmax.f32 %v3765, 0.0
      %v3798 = vmax.f32 %v3766, 0.0
      %v3799 = vld [vmem:[%s3] sm:$0x1]
      %v3801 = vlaneseq
      %v3802 = vshrl.u32 %v3801, 7
      %v3803 = vsub.s32 0, %v3802
      %v3804 = vrot.slane %v3799, %v3803
      %v3806 = vmul.f32 %v3767, %v3804
      %v3807 = vmul.f32 %v3768, %v3804
      %v3808 = vmul.f32 %v3769, %v3804
      %v3809 = vmul.f32 %v3770, %v3804
      %v3810 = vmul.f32 %v3771, %v3804
      %v3811 = vmul.f32 %v3772, %v3804
      %v3812 = vmul.f32 %v3773, %v3804
      %v3813 = vmul.f32 %v3774, %v3804
      %v3814 = vmul.f32 %v3775, %v3804
      %v3815 = vmul.f32 %v3776, %v3804
      %v3816 = vmul.f32 %v3777, %v3804
      %v3817 = vmul.f32 %v3778, %v3804
      %v3818 = vmul.f32 %v3779, %v3804
      %v3819 = vmul.f32 %v3780, %v3804
      %v3820 = vmul.f32 %v3781, %v3804
      %v3821 = vmul.f32 %v3782, %v3804
      %v3822 = vmul.f32 %v3783, %v3804
      %v3823 = vmul.f32 %v3784, %v3804
      %v3824 = vmul.f32 %v3785, %v3804
      %v3825 = vmul.f32 %v3786, %v3804
      %v3826 = vmul.f32 %v3787, %v3804
      %v3827 = vmul.f32 %v3788, %v3804
      %v3828 = vmul.f32 %v3789, %v3804
      %v3829 = vmul.f32 %v3790, %v3804
      %v3830 = vmul.f32 %v3791, %v3804
      %v3831 = vmul.f32 %v3792, %v3804
      %v3832 = vmul.f32 %v3793, %v3804
      %v3833 = vmul.f32 %v3794, %v3804
      %v3834 = vmul.f32 %v3795, %v3804
      %v3835 = vmul.f32 %v3796, %v3804
      %v3836 = vmul.f32 %v3797, %v3804
      %v3837 = vmul.f32 %v3798, %v3804
      %v3838 = vld [vmem:[%s4] sm:$0x1]
      %v3840 = vlaneseq
      %v3841 = vshrl.u32 %v3840, 7
      %v3842 = vsub.s32 0, %v3841
      %v3843 = vrot.slane %v3838, %v3842
      %v3845 = vadd.f32 %v3806, %v3843
      %v3846 = vadd.f32 %v3807, %v3843
      %v3847 = vadd.f32 %v3808, %v3843
      %v3848 = vadd.f32 %v3809, %v3843
      %v3849 = vadd.f32 %v3810, %v3843
      %v3850 = vadd.f32 %v3811, %v3843
      %v3851 = vadd.f32 %v3812, %v3843
      %v3852 = vadd.f32 %v3813, %v3843
      %v3853 = vadd.f32 %v3814, %v3843
      %v3854 = vadd.f32 %v3815, %v3843
      %v3855 = vadd.f32 %v3816, %v3843
      %v3856 = vadd.f32 %v3817, %v3843
      %v3857 = vadd.f32 %v3818, %v3843
      %v3858 = vadd.f32 %v3819, %v3843
      %v3859 = vadd.f32 %v3820, %v3843
      %v3860 = vadd.f32 %v3821, %v3843
      %v3861 = vadd.f32 %v3822, %v3843
      %v3862 = vadd.f32 %v3823, %v3843
      %v3863 = vadd.f32 %v3824, %v3843
      %v3864 = vadd.f32 %v3825, %v3843
      %v3865 = vadd.f32 %v3826, %v3843
      %v3866 = vadd.f32 %v3827, %v3843
      %v3867 = vadd.f32 %v3828, %v3843
      %v3868 = vadd.f32 %v3829, %v3843
      %v3869 = vadd.f32 %v3830, %v3843
      %v3870 = vadd.f32 %v3831, %v3843
      %v3871 = vadd.f32 %v3832, %v3843
      %v3872 = vadd.f32 %v3833, %v3843
      %v3873 = vadd.f32 %v3834, %v3843
      %v3874 = vadd.f32 %v3835, %v3843
      %v3875 = vadd.f32 %v3836, %v3843
      %v3876 = vadd.f32 %v3837, %v3843
      %vm3877 = vcmask 64512
      %3878 = vst.msk [vmem:[#allocation2] sm:$0xff] %vm3877, 0.0
      %3879 = vst.msk [vmem:[#allocation2 + $0x8] sm:$0xff] %vm3877, 0.0
      %vm3880 = vcmask 58368
      %3881 = vst.msk [vmem:[#allocation2 + $0x10] sm:$0x3] %vm3880, 0.0
      %3882 = vst.msk [vmem:[#allocation2 + $0x18] sm:$0xff] %vm3877, 0.0
      %3883 = vst.msk [vmem:[#allocation2 + $0x20] sm:$0xff] %vm3877, 0.0
      %3884 = vst.msk [vmem:[#allocation2 + $0x28] sm:$0x3] %vm3880, 0.0
      %3885 = vst.msk [vmem:[#allocation2 + $0x30] sm:$0xff] %vm3877, 0.0
      %3886 = vst.msk [vmem:[#allocation2 + $0x38] sm:$0xff] %vm3877, 0.0
      %3887 = vst.msk [vmem:[#allocation2 + $0x40] sm:$0x3] %vm3880, 0.0
      %3888 = vst.msk [vmem:[#allocation2 + $0x48] sm:$0xff] %vm3877, 0.0
      %3889 = vst.msk [vmem:[#allocation2 + $0x50] sm:$0xff] %vm3877, 0.0
      %3890 = vst.msk [vmem:[#allocation2 + $0x58] sm:$0x3] %vm3880, 0.0
      %3891 = vst.msk [vmem:[#allocation2 + $0x60] sm:$0xff] %vm3877, 0.0
      %3892 = vst.msk [vmem:[#allocation2 + $0x68] sm:$0xff] %vm3877, 0.0
      %3893 = vst.msk [vmem:[#allocation2 + $0x70] sm:$0x3] %vm3880, 0.0
      %3894 = vst.msk [vmem:[#allocation2 + $0x78] sm:$0xff] %vm3877, 0.0
      %3895 = vst.msk [vmem:[#allocation2 + $0x80] sm:$0xff] %vm3877, 0.0
      %3896 = vst.msk [vmem:[#allocation2 + $0x88] sm:$0x3] %vm3880, 0.0
      %3897 = vst.msk [vmem:[#allocation2 + $0x90] sm:$0xff] %vm3877, 0.0
      %3898 = vst.msk [vmem:[#allocation2 + $0x98] sm:$0xff] %vm3877, 0.0
      %3899 = vst.msk [vmem:[#allocation2 + $0xa0] sm:$0x3] %vm3880, 0.0
      %3900 = vst.msk [vmem:[#allocation2 + $0xa8] sm:$0xff] %vm3877, 0.0
      %3901 = vst.msk [vmem:[#allocation2 + $0xb0] sm:$0xff] %vm3877, 0.0
      %3902 = vst.msk [vmem:[#allocation2 + $0xb8] sm:$0x3] %vm3880, 0.0
      %3903 = vst.msk [vmem:[#allocation2 + $0xc0] sm:$0xff] %vm3877, 0.0
      %3904 = vst.msk [vmem:[#allocation2 + $0xc8] sm:$0xff] %vm3877, 0.0
      %3905 = vst.msk [vmem:[#allocation2 + $0xd0] sm:$0x3] %vm3880, 0.0
      %3906 = vst.msk [vmem:[#allocation2 + $0xd8] sm:$0xff] %vm3877, 0.0
      %3907 = vst.msk [vmem:[#allocation2 + $0xe0] sm:$0xff] %vm3877, 0.0
      %3908 = vst.msk [vmem:[#allocation2 + $0xe8] sm:$0x3] %vm3880, 0.0
      %3909 = vst.msk [vmem:[#allocation2 + $0xf0] sm:$0xff] %vm3877, 0.0
      %3910 = vst.msk [vmem:[#allocation2 + $0xf8] sm:$0xff] %vm3877, 0.0
      %3911 = vst.msk [vmem:[#allocation2 + $0x100] sm:$0x3] %vm3880, 0.0
      %3912 = vst.msk [vmem:[#allocation2 + $0x108] sm:$0xff] %vm3877, 0.0
      %3913 = vst.msk [vmem:[#allocation2 + $0x110] sm:$0xff] %vm3877, 0.0
      %3914 = vst.msk [vmem:[#allocation2 + $0x118] sm:$0x3] %vm3880, 0.0
      %3915 = vst.msk [vmem:[#allocation2 + $0x120] sm:$0xff] %vm3877, 0.0
      %3916 = vst.msk [vmem:[#allocation2 + $0x128] sm:$0xff] %vm3877, 0.0
      %3917 = vst.msk [vmem:[#allocation2 + $0x130] sm:$0x3] %vm3880, 0.0
      %3918 = vst.msk [vmem:[#allocation2 + $0x138] sm:$0xff] %vm3877, 0.0
      %3919 = vst.msk [vmem:[#allocation2 + $0x140] sm:$0xff] %vm3877, 0.0
      %3920 = vst.msk [vmem:[#allocation2 + $0x148] sm:$0x3] %vm3880, 0.0
      %3921 = vst.msk [vmem:[#allocation2 + $0x150] sm:$0xff] %vm3877, 0.0
      %3922 = vst.msk [vmem:[#allocation2 + $0x158] sm:$0xff] %vm3877, 0.0
      %3923 = vst.msk [vmem:[#allocation2 + $0x160] sm:$0x3] %vm3880, 0.0
      %3924 = vst.msk [vmem:[#allocation2 + $0x168] sm:$0xff] %vm3877, 0.0
      %3925 = vst.msk [vmem:[#allocation2 + $0x170] sm:$0xff] %vm3877, 0.0
      %3926 = vst.msk [vmem:[#allocation2 + $0x178] sm:$0x3] %vm3880, 0.0
      %3927 = vst.msk [vmem:[#allocation2 + $0x180] sm:$0xff] %vm3877, 0.0
      %3928 = vst.msk [vmem:[#allocation2 + $0x188] sm:$0xff] %vm3877, 0.0
      %3929 = vst.msk [vmem:[#allocation2 + $0x190] sm:$0x3] %vm3880, 0.0
      %3930 = vst.msk [vmem:[#allocation2 + $0x198] sm:$0xff] %vm3877, 0.0
      %3931 = vst.msk [vmem:[#allocation2 + $0x1a0] sm:$0xff] %vm3877, 0.0
      %3932 = vst.msk [vmem:[#allocation2 + $0x1a8] sm:$0x3] %vm3880, 0.0
      %s3933 = scalar_lea.vmem [#allocation2], 24
      %3934 = vst.msk [vmem:[%s3933 + $0x1] sm:$0xff] %vm3877, %v3845
      %3935 = vst.msk [vmem:[%s3933 + $0x9] sm:$0xff] %vm3877, %v3846
      %3936 = vst.msk [vmem:[%s3933 + $0x19] sm:$0xff] %vm3877, %v3847
      %3937 = vst.msk [vmem:[%s3933 + $0x21] sm:$0xff] %vm3877, %v3848
      %3938 = vst.msk [vmem:[%s3933 + $0x31] sm:$0xff] %vm3877, %v3849
      %3939 = vst.msk [vmem:[%s3933 + $0x39] sm:$0xff] %vm3877, %v3850
      %3940 = vst.msk [vmem:[%s3933 + $0x49] sm:$0xff] %vm3877, %v3851
      %3941 = vst.msk [vmem:[%s3933 + $0x51] sm:$0xff] %vm3877, %v3852
      %3942 = vst.msk [vmem:[%s3933 + $0x61] sm:$0xff] %vm3877, %v3853
      %3943 = vst.msk [vmem:[%s3933 + $0x69] sm:$0xff] %vm3877, %v3854
      %3944 = vst.msk [vmem:[%s3933 + $0x79] sm:$0xff] %vm3877, %v3855
      %3945 = vst.msk [vmem:[%s3933 + $0x81] sm:$0xff] %vm3877, %v3856
      %3946 = vst.msk [vmem:[%s3933 + $0x91] sm:$0xff] %vm3877, %v3857
      %3947 = vst.msk [vmem:[%s3933 + $0x99] sm:$0xff] %vm3877, %v3858
      %3948 = vst.msk [vmem:[%s3933 + $0xa9] sm:$0xff] %vm3877, %v3859
      %3949 = vst.msk [vmem:[%s3933 + $0xb1] sm:$0xff] %vm3877, %v3860
      %3950 = vst.msk [vmem:[%s3933 + $0xc1] sm:$0xff] %vm3877, %v3861
      %3951 = vst.msk [vmem:[%s3933 + $0xc9] sm:$0xff] %vm3877, %v3862
      %3952 = vst.msk [vmem:[%s3933 + $0xd9] sm:$0xff] %vm3877, %v3863
      %3953 = vst.msk [vmem:[%s3933 + $0xe1] sm:$0xff] %vm3877, %v3864
      %3954 = vst.msk [vmem:[%s3933 + $0xf1] sm:$0xff] %vm3877, %v3865
      %3955 = vst.msk [vmem:[%s3933 + $0xf9] sm:$0xff] %vm3877, %v3866
      %3956 = vst.msk [vmem:[%s3933 + $0x109] sm:$0xff] %vm3877, %v3867
      %3957 = vst.msk [vmem:[%s3933 + $0x111] sm:$0xff] %vm3877, %v3868
      %3958 = vst.msk [vmem:[%s3933 + $0x121] sm:$0xff] %vm3877, %v3869
      %3959 = vst.msk [vmem:[%s3933 + $0x129] sm:$0xff] %vm3877, %v3870
      %3960 = vst.msk [vmem:[%s3933 + $0x139] sm:$0xff] %vm3877, %v3871
      %3961 = vst.msk [vmem:[%s3933 + $0x141] sm:$0xff] %vm3877, %v3872
      %3962 = vst.msk [vmem:[%s3933 + $0x151] sm:$0xff] %vm3877, %v3873
      %3963 = vst.msk [vmem:[%s3933 + $0x159] sm:$0xff] %vm3877, %v3874
      %3964 = vst.msk [vmem:[%s3933 + $0x169] sm:$0xff] %vm3877, %v3875
      %3965 = vst.msk [vmem:[%s3933 + $0x171] sm:$0xff] %vm3877, %v3876
      %v3966 = vld [vmem:[#allocation2] sm:$0xff]
      %v3967 = vld [vmem:[#allocation2 + $0x8] sm:$0xff]
      %v3968 = vld [vmem:[#allocation2 + $0x18] sm:$0xff]
      %v3969 = vld [vmem:[#allocation2 + $0x20] sm:$0xff]
      %v3970 = vld [vmem:[#allocation2 + $0x30] sm:$0xff]
      %v3971 = vld [vmem:[#allocation2 + $0x38] sm:$0xff]
      %v3972 = vld [vmem:[#allocation2 + $0x48] sm:$0xff]
      %v3973 = vld [vmem:[#allocation2 + $0x50] sm:$0xff]
      %v3974 = vld [vmem:[#allocation2 + $0x60] sm:$0xff]
      %v3975 = vld [vmem:[#allocation2 + $0x68] sm:$0xff]
      %v3976 = vld [vmem:[#allocation2 + $0x78] sm:$0xff]
      %v3977 = vld [vmem:[#allocation2 + $0x80] sm:$0xff]
      %v3978 = vld [vmem:[#allocation2 + $0x90] sm:$0xff]
      %v3979 = vld [vmem:[#allocation2 + $0x98] sm:$0xff]
      %v3980 = vld [vmem:[#allocation2 + $0xa8] sm:$0xff]
      %v3981 = vld [vmem:[#allocation2 + $0xb0] sm:$0xff]
      %v3982 = vld [vmem:[#allocation2 + $0xc0] sm:$0xff]
      %v3983 = vld [vmem:[#allocation2 + $0xc8] sm:$0xff]
      %v3984 = vld [vmem:[#allocation2 + $0xd8] sm:$0xff]
      %v3985 = vld [vmem:[#allocation2 + $0xe0] sm:$0xff]
      %v3986 = vld [vmem:[#allocation2 + $0xf0] sm:$0xff]
      %v3987 = vld [vmem:[#allocation2 + $0xf8] sm:$0xff]
      %v3988 = vld [vmem:[#allocation2 + $0x108] sm:$0xff]
      %v3989 = vld [vmem:[#allocation2 + $0x110] sm:$0xff]
      %v3990 = vld [vmem:[#allocation2 + $0x120] sm:$0xff]
      %v3991 = vld [vmem:[#allocation2 + $0x128] sm:$0xff]
      %v3992 = vld [vmem:[#allocation2 + $0x138] sm:$0xff]
      %v3993 = vld [vmem:[#allocation2 + $0x140] sm:$0xff]
      %v3994 = vld [vmem:[#allocation2 + $0x150] sm:$0xff]
      %v3995 = vld [vmem:[#allocation2 + $0x158] sm:$0xff]
      %v3996 = vld [vmem:[#allocation2 + $0x168] sm:$0xff]
      %v3997 = vld [vmem:[#allocation2 + $0x170] sm:$0xff]
      %v3998 = vld [vmem:[%s5] sm:$0xff]
      %v3999 = vld [vmem:[#allocation2 + $0x1] sm:$0xff]
      %v4000 = vld [vmem:[#allocation2 + $0x9] sm:$0xff]
      %v4001 = vld [vmem:[#allocation2 + $0x19] sm:$0xff]
      %v4002 = vld [vmem:[#allocation2 + $0x21] sm:$0xff]
      %v4003 = vld [vmem:[#allocation2 + $0x31] sm:$0xff]
      %v4004 = vld [vmem:[#allocation2 + $0x39] sm:$0xff]
      %v4005 = vld [vmem:[#allocation2 + $0x49] sm:$0xff]
      %v4006 = vld [vmem:[#allocation2 + $0x51] sm:$0xff]
      %v4007 = vld [vmem:[#allocation2 + $0x61] sm:$0xff]
      %v4008 = vld [vmem:[#allocation2 + $0x69] sm:$0xff]
      %v4009 = vld [vmem:[#allocation2 + $0x79] sm:$0xff]
      %v4010 = vld [vmem:[#allocation2 + $0x81] sm:$0xff]
      %v4011 = vld [vmem:[#allocation2 + $0x91] sm:$0xff]
      %v4012 = vld [vmem:[#allocation2 + $0x99] sm:$0xff]
      %v4013 = vld [vmem:[#allocation2 + $0xa9] sm:$0xff]
      %v4014 = vld [vmem:[#allocation2 + $0xb1] sm:$0xff]
      %v4015 = vld [vmem:[#allocation2 + $0xc1] sm:$0xff]
      %v4016 = vld [vmem:[#allocation2 + $0xc9] sm:$0xff]
      %v4017 = vld [vmem:[#allocation2 + $0xd9] sm:$0xff]
      %v4018 = vld [vmem:[#allocation2 + $0xe1] sm:$0xff]
      %v4019 = vld [vmem:[#allocation2 + $0xf1] sm:$0xff]
      %v4020 = vld [vmem:[#allocation2 + $0xf9] sm:$0xff]
      %v4021 = vld [vmem:[#allocation2 + $0x109] sm:$0xff]
      %v4022 = vld [vmem:[#allocation2 + $0x111] sm:$0xff]
      %v4023 = vld [vmem:[#allocation2 + $0x121] sm:$0xff]
      %v4024 = vld [vmem:[#allocation2 + $0x129] sm:$0xff]
      %v4025 = vld [vmem:[#allocation2 + $0x139] sm:$0xff]
      %v4026 = vld [vmem:[#allocation2 + $0x141] sm:$0xff]
      %v4027 = vld [vmem:[#allocation2 + $0x151] sm:$0xff]
      %v4028 = vld [vmem:[#allocation2 + $0x159] sm:$0xff]
      %v4029 = vld [vmem:[#allocation2 + $0x169] sm:$0xff]
      %v4030 = vld [vmem:[#allocation2 + $0x171] sm:$0xff]
      %s4031 = scalar_lea.vmem %s5, 8
      %v4032 = vld [vmem:[%s4031] sm:$0xff]
      %v4034 = vsel %vm3877, %v3999, 0
      %v4037 = vsel %vm3877, %v4000, 0
      %v4040 = vsel %vm3877, %v4001, 0
      %v4043 = vsel %vm3877, %v4002, 0
      %v4046 = vsel %vm3877, %v4003, 0
      %v4049 = vsel %vm3877, %v4004, 0
      %v4052 = vsel %vm3877, %v4005, 0
      %v4055 = vsel %vm3877, %v4006, 0
      %v4058 = vsel %vm3877, %v4007, 0
      %v4061 = vsel %vm3877, %v4008, 0
      %v4064 = vsel %vm3877, %v4009, 0
      %v4067 = vsel %vm3877, %v4010, 0
      %v4070 = vsel %vm3877, %v4011, 0
      %v4073 = vsel %vm3877, %v4012, 0
      %v4076 = vsel %vm3877, %v4013, 0
      %v4079 = vsel %vm3877, %v4014, 0
      %v4082 = vsel %vm3877, %v4015, 0
      %v4085 = vsel %vm3877, %v4016, 0
      %v4088 = vsel %vm3877, %v4017, 0
      %v4091 = vsel %vm3877, %v4018, 0
      %v4094 = vsel %vm3877, %v4019, 0
      %v4097 = vsel %vm3877, %v4020, 0
      %v4100 = vsel %vm3877, %v4021, 0
      %v4103 = vsel %vm3877, %v4022, 0
      %v4106 = vsel %vm3877, %v4023, 0
      %v4109 = vsel %vm3877, %v4024, 0
      %v4112 = vsel %vm3877, %v4025, 0
      %v4115 = vsel %vm3877, %v4026, 0
      %v4118 = vsel %vm3877, %v4027, 0
      %v4121 = vsel %vm3877, %v4028, 0
      %v4124 = vsel %vm3877, %v4029, 0
      %v4127 = vsel %vm3877, %v4030, 0
      %4129 = vmatprep.subr.mxu0 0.0
      %4130 = vmatpush1.msra.mxu0 0.0
      %4131 = vmatprep.subr.mxu0 0.0
      %4132 = vmatpush1.msra.mxu0 0.0
      %4133 = vmatprep.subr.mxu0 0.0
      %4134 = vmatpush1.msra.mxu0 0.0
      %4135 = vmatprep.subr.mxu0 0.0
      %4136 = vmatpush1.msra.mxu0 0.0
      %4137 = vmatprep.subr.mxu0 0.0
      %4138 = vmatpush1.msra.mxu0 0.0
      %4139 = vmatprep.subr.mxu0 0.0
      %4140 = vmatpush1.msra.mxu0 0.0
      %4141 = vmatprep.subr.mxu0 0.0
      %4142 = vmatpush1.msra.mxu0 0.0
      %4143 = vmatprep.subr.mxu0 0.0
      %4144 = vmatpush1.msra.mxu0 0.0
      %4145 = vmatprep.subr.mxu0 0.0
      %4146 = vmatpush1.msra.mxu0 0.0
      %4147 = vmatprep.subr.mxu0 0.0
      %4148 = vmatpush1.msra.mxu0 0.0
      %4149 = vmatprep.subr.mxu0 0.0
      %4150 = vmatpush1.msra.mxu0 0.0
      %4151 = vmatprep.subr.mxu0 0.0
      %4152 = vmatpush1.msra.mxu0 0.0
      %4153 = vmatprep.subr.mxu0 0.0
      %4154 = vmatpush1.msra.mxu0 0.0
      %4155 = vmatprep.subr.mxu0 0.0
      %4156 = vmatpush1.msra.mxu0 0.0
      %4157 = vmatprep.subr.mxu0 0.0
      %4158 = vmatpush1.msra.mxu0 0.0
      %4159 = vmatprep.subr.mxu0 0.0
      %4160 = vmatpush1.msra.mxu0 %v4032
      %4161 = vmatprep.subr.mxu0 0.0
      %4162 = vmatpush2.msra.mxu0 0.0
      %4163 = vmatprep.subr.mxu0 0.0
      %4164 = vmatpush2.msra.mxu0 0.0
      %4165 = vmatprep.subr.mxu0 0.0
      %4166 = vmatpush2.msra.mxu0 0.0
      %4167 = vmatprep.subr.mxu0 0.0
      %4168 = vmatpush2.msra.mxu0 0.0
      %4169 = vmatprep.subr.mxu0 0.0
      %4170 = vmatpush2.msra.mxu0 0.0
      %4171 = vmatprep.subr.mxu0 0.0
      %4172 = vmatpush2.msra.mxu0 0.0
      %4173 = vmatprep.subr.mxu0 0.0
      %4174 = vmatpush2.msra.mxu0 0.0
      %4175 = vmatprep.subr.mxu0 0.0
      %4176 = vmatpush2.msra.mxu0 0.0
      %4177 = vmatprep.subr.mxu0 0.0
      %4178 = vmatpush2.msra.mxu0 0.0
      %4179 = vmatprep.subr.mxu0 0.0
      %4180 = vmatpush2.msra.mxu0 0.0
      %4181 = vmatprep.subr.mxu0 0.0
      %4182 = vmatpush2.msra.mxu0 0.0
      %4183 = vmatprep.subr.mxu0 0.0
      %4184 = vmatpush2.msra.mxu0 0.0
      %4185 = vmatprep.subr.mxu0 0.0
      %4186 = vmatpush2.msra.mxu0 0.0
      %4187 = vmatprep.subr.mxu0 0.0
      %4188 = vmatpush2.msra.mxu0 0.0
      %4189 = vmatprep.subr.mxu0 0.0
      %4190 = vmatpush2.msra.mxu0 0.0
      %4191 = vmatprep.subr.mxu0 0.0
      %4192 = vmatpush2.msra.mxu0 0.0
      %4193 = vmatprep.mubr.f32.mxu0 0.0
      %4194 = vmatmul.mubr.f32.gmra.mxu0 %v4034
      %v4195 = vpop.f32.mrf.mxu0
      %v4196 = vadd.f32 0.0, %v4195
      %v4197 = vpop.f32.mrf.mxu0
      %4198 = vmatprep.mubr.f32.mxu0 0.0
      %4199 = vmatmul.mubr.f32.gmra.mxu0 %v4037
      %v4200 = vpop.f32.mrf.mxu0
      %v4201 = vadd.f32 0.0, %v4200
      %v4202 = vpop.f32.mrf.mxu0
      %4203 = vmatprep.mubr.f32.mxu0 0.0
      %4204 = vmatmul.mubr.f32.gmra.mxu0 %v4040
      %v4205 = vpop.f32.mrf.mxu0
      %v4206 = vadd.f32 0.0, %v4205
      %v4207 = vpop.f32.mrf.mxu0
      %4208 = vmatprep.mubr.f32.mxu0 0.0
      %4209 = vmatmul.mubr.f32.gmra.mxu0 %v4043
      %v4210 = vpop.f32.mrf.mxu0
      %v4211 = vadd.f32 0.0, %v4210
      %v4212 = vpop.f32.mrf.mxu0
      %4213 = vmatprep.mubr.f32.mxu0 0.0
      %4214 = vmatmul.mubr.f32.gmra.mxu0 %v4046
      %v4215 = vpop.f32.mrf.mxu0
      %v4216 = vadd.f32 0.0, %v4215
      %v4217 = vpop.f32.mrf.mxu0
      %4218 = vmatprep.mubr.f32.mxu0 0.0
      %4219 = vmatmul.mubr.f32.gmra.mxu0 %v4049
      %v4220 = vpop.f32.mrf.mxu0
      %v4221 = vadd.f32 0.0, %v4220
      %v4222 = vpop.f32.mrf.mxu0
      %4223 = vmatprep.mubr.f32.mxu0 0.0
      %4224 = vmatmul.mubr.f32.gmra.mxu0 %v4052
      %v4225 = vpop.f32.mrf.mxu0
      %v4226 = vadd.f32 0.0, %v4225
      %v4227 = vpop.f32.mrf.mxu0
      %4228 = vmatprep.mubr.f32.mxu0 0.0
      %4229 = vmatmul.mubr.f32.gmra.mxu0 %v4055
      %v4230 = vpop.f32.mrf.mxu0
      %v4231 = vadd.f32 0.0, %v4230
      %v4232 = vpop.f32.mrf.mxu0
      %4233 = vmatprep.mubr.f32.mxu0 0.0
      %4234 = vmatmul.mubr.f32.gmra.mxu0 %v4058
      %v4235 = vpop.f32.mrf.mxu0
      %v4236 = vadd.f32 0.0, %v4235
      %v4237 = vpop.f32.mrf.mxu0
      %4238 = vmatprep.mubr.f32.mxu0 0.0
      %4239 = vmatmul.mubr.f32.gmra.mxu0 %v4061
      %v4240 = vpop.f32.mrf.mxu0
      %v4241 = vadd.f32 0.0, %v4240
      %v4242 = vpop.f32.mrf.mxu0
      %4243 = vmatprep.mubr.f32.mxu0 0.0
      %4244 = vmatmul.mubr.f32.gmra.mxu0 %v4064
      %v4245 = vpop.f32.mrf.mxu0
      %v4246 = vadd.f32 0.0, %v4245
      %v4247 = vpop.f32.mrf.mxu0
      %4248 = vmatprep.mubr.f32.mxu0 0.0
      %4249 = vmatmul.mubr.f32.gmra.mxu0 %v4067
      %v4250 = vpop.f32.mrf.mxu0
      %v4251 = vadd.f32 0.0, %v4250
      %v4252 = vpop.f32.mrf.mxu0
      %4253 = vmatprep.mubr.f32.mxu0 0.0
      %4254 = vmatmul.mubr.f32.gmra.mxu0 %v4070
      %v4255 = vpop.f32.mrf.mxu0
      %v4256 = vadd.f32 0.0, %v4255
      %v4257 = vpop.f32.mrf.mxu0
      %4258 = vmatprep.mubr.f32.mxu0 0.0
      %4259 = vmatmul.mubr.f32.gmra.mxu0 %v4073
      %v4260 = vpop.f32.mrf.mxu0
      %v4261 = vadd.f32 0.0, %v4260
      %v4262 = vpop.f32.mrf.mxu0
      %4263 = vmatprep.mubr.f32.mxu0 0.0
      %4264 = vmatmul.mubr.f32.gmra.mxu0 %v4076
      %v4265 = vpop.f32.mrf.mxu0
      %v4266 = vadd.f32 0.0, %v4265
      %v4267 = vpop.f32.mrf.mxu0
      %4268 = vmatprep.mubr.f32.mxu0 0.0
      %4269 = vmatmul.mubr.f32.gmra.mxu0 %v4079
      %v4270 = vpop.f32.mrf.mxu0
      %v4271 = vadd.f32 0.0, %v4270
      %v4272 = vpop.f32.mrf.mxu0
      %4273 = vmatprep.mubr.f32.mxu0 0.0
      %4274 = vmatmul.mubr.f32.gmra.mxu0 %v4082
      %v4275 = vpop.f32.mrf.mxu0
      %v4276 = vadd.f32 0.0, %v4275
      %v4277 = vpop.f32.mrf.mxu0
      %4278 = vmatprep.mubr.f32.mxu0 0.0
      %4279 = vmatmul.mubr.f32.gmra.mxu0 %v4085
      %v4280 = vpop.f32.mrf.mxu0
      %v4281 = vadd.f32 0.0, %v4280
      %v4282 = vpop.f32.mrf.mxu0
      %4283 = vmatprep.mubr.f32.mxu0 0.0
      %4284 = vmatmul.mubr.f32.gmra.mxu0 %v4088
      %v4285 = vpop.f32.mrf.mxu0
      %v4286 = vadd.f32 0.0, %v4285
      %v4287 = vpop.f32.mrf.mxu0
      %4288 = vmatprep.mubr.f32.mxu0 0.0
      %4289 = vmatmul.mubr.f32.gmra.mxu0 %v4091
      %v4290 = vpop.f32.mrf.mxu0
      %v4291 = vadd.f32 0.0, %v4290
      %v4292 = vpop.f32.mrf.mxu0
      %4293 = vmatprep.mubr.f32.mxu0 0.0
      %4294 = vmatmul.mubr.f32.gmra.mxu0 %v4094
      %v4295 = vpop.f32.mrf.mxu0
      %v4296 = vadd.f32 0.0, %v4295
      %v4297 = vpop.f32.mrf.mxu0
      %4298 = vmatprep.mubr.f32.mxu0 0.0
      %4299 = vmatmul.mubr.f32.gmra.mxu0 %v4097
      %v4300 = vpop.f32.mrf.mxu0
      %v4301 = vadd.f32 0.0, %v4300
      %v4302 = vpop.f32.mrf.mxu0
      %4303 = vmatprep.mubr.f32.mxu0 0.0
      %4304 = vmatmul.mubr.f32.gmra.mxu0 %v4100
      %v4305 = vpop.f32.mrf.mxu0
      %v4306 = vadd.f32 0.0, %v4305
      %v4307 = vpop.f32.mrf.mxu0
      %4308 = vmatprep.mubr.f32.mxu0 0.0
      %4309 = vmatmul.mubr.f32.gmra.mxu0 %v4103
      %v4310 = vpop.f32.mrf.mxu0
      %v4311 = vadd.f32 0.0, %v4310
      %v4312 = vpop.f32.mrf.mxu0
      %4313 = vmatprep.mubr.f32.mxu0 0.0
      %4314 = vmatmul.mubr.f32.gmra.mxu0 %v4106
      %v4315 = vpop.f32.mrf.mxu0
      %v4316 = vadd.f32 0.0, %v4315
      %v4317 = vpop.f32.mrf.mxu0
      %4318 = vmatprep.mubr.f32.mxu0 0.0
      %4319 = vmatmul.mubr.f32.gmra.mxu0 %v4109
      %v4320 = vpop.f32.mrf.mxu0
      %v4321 = vadd.f32 0.0, %v4320
      %v4322 = vpop.f32.mrf.mxu0
      %4323 = vmatprep.mubr.f32.mxu0 0.0
      %4324 = vmatmul.mubr.f32.gmra.mxu0 %v4112
      %v4325 = vpop.f32.mrf.mxu0
      %v4326 = vadd.f32 0.0, %v4325
      %v4327 = vpop.f32.mrf.mxu0
      %4328 = vmatprep.mubr.f32.mxu0 0.0
      %4329 = vmatmul.mubr.f32.gmra.mxu0 %v4115
      %v4330 = vpop.f32.mrf.mxu0
      %v4331 = vadd.f32 0.0, %v4330
      %v4332 = vpop.f32.mrf.mxu0
      %4333 = vmatprep.mubr.f32.mxu0 0.0
      %4334 = vmatmul.mubr.f32.gmra.mxu0 %v4118
      %v4335 = vpop.f32.mrf.mxu0
      %v4336 = vadd.f32 0.0, %v4335
      %v4337 = vpop.f32.mrf.mxu0
      %4338 = vmatprep.mubr.f32.mxu0 0.0
      %4339 = vmatmul.mubr.f32.gmra.mxu0 %v4121
      %v4340 = vpop.f32.mrf.mxu0
      %v4341 = vadd.f32 0.0, %v4340
      %v4342 = vpop.f32.mrf.mxu0
      %4343 = vmatprep.mubr.f32.mxu0 0.0
      %4344 = vmatmul.mubr.f32.gmra.mxu0 %v4124
      %v4345 = vpop.f32.mrf.mxu0
      %v4346 = vadd.f32 0.0, %v4345
      %v4347 = vpop.f32.mrf.mxu0
      %4348 = vmatprep.mubr.f32.mxu0 0.0
      %4349 = vmatmul.mubr.f32.gmra.mxu0 %v4127
      %v4350 = vpop.f32.mrf.mxu0
      %v4351 = vadd.f32 0.0, %v4350
      %v4352 = vpop.f32.mrf.mxu0
      %4353 = vdwg.mxu0
      %v4355 = vsel %vm3877, %v3966, 0
      %v4358 = vsel %vm3877, %v3967, 0
      %v4361 = vsel %vm3877, %v3968, 0
      %v4364 = vsel %vm3877, %v3969, 0
      %v4367 = vsel %vm3877, %v3970, 0
      %v4370 = vsel %vm3877, %v3971, 0
      %v4373 = vsel %vm3877, %v3972, 0
      %v4376 = vsel %vm3877, %v3973, 0
      %v4379 = vsel %vm3877, %v3974, 0
      %v4382 = vsel %vm3877, %v3975, 0
      %v4385 = vsel %vm3877, %v3976, 0
      %v4388 = vsel %vm3877, %v3977, 0
      %v4391 = vsel %vm3877, %v3978, 0
      %v4394 = vsel %vm3877, %v3979, 0
      %v4397 = vsel %vm3877, %v3980, 0
      %v4400 = vsel %vm3877, %v3981, 0
      %v4403 = vsel %vm3877, %v3982, 0
      %v4406 = vsel %vm3877, %v3983, 0
      %v4409 = vsel %vm3877, %v3984, 0
      %v4412 = vsel %vm3877, %v3985, 0
      %v4415 = vsel %vm3877, %v3986, 0
      %v4418 = vsel %vm3877, %v3987, 0
      %v4421 = vsel %vm3877, %v3988, 0
      %v4424 = vsel %vm3877, %v3989, 0
      %v4427 = vsel %vm3877, %v3990, 0
      %v4430 = vsel %vm3877, %v3991, 0
      %v4433 = vsel %vm3877, %v3992, 0
      %v4436 = vsel %vm3877, %v3993, 0
      %v4439 = vsel %vm3877, %v3994, 0
      %v4442 = vsel %vm3877, %v3995, 0
      %v4445 = vsel %vm3877, %v3996, 0
      %v4448 = vsel %vm3877, %v3997, 0
      %4450 = vmatprep.subr.mxu0 0.0
      %4451 = vmatpush1.msra.mxu0 0.0
      %4452 = vmatprep.subr.mxu0 0.0
      %4453 = vmatpush1.msra.mxu0 0.0
      %4454 = vmatprep.subr.mxu0 0.0
      %4455 = vmatpush1.msra.mxu0 0.0
      %4456 = vmatprep.subr.mxu0 0.0
      %4457 = vmatpush1.msra.mxu0 0.0
      %4458 = vmatprep.subr.mxu0 0.0
      %4459 = vmatpush1.msra.mxu0 0.0
      %4460 = vmatprep.subr.mxu0 0.0
      %4461 = vmatpush1.msra.mxu0 0.0
      %4462 = vmatprep.subr.mxu0 0.0
      %4463 = vmatpush1.msra.mxu0 0.0
      %4464 = vmatprep.subr.mxu0 0.0
      %4465 = vmatpush1.msra.mxu0 0.0
      %4466 = vmatprep.subr.mxu0 0.0
      %4467 = vmatpush1.msra.mxu0 0.0
      %4468 = vmatprep.subr.mxu0 0.0
      %4469 = vmatpush1.msra.mxu0 0.0
      %4470 = vmatprep.subr.mxu0 0.0
      %4471 = vmatpush1.msra.mxu0 0.0
      %4472 = vmatprep.subr.mxu0 0.0
      %4473 = vmatpush1.msra.mxu0 0.0
      %4474 = vmatprep.subr.mxu0 0.0
      %4475 = vmatpush1.msra.mxu0 0.0
      %4476 = vmatprep.subr.mxu0 0.0
      %4477 = vmatpush1.msra.mxu0 0.0
      %4478 = vmatprep.subr.mxu0 0.0
      %4479 = vmatpush1.msra.mxu0 0.0
      %4480 = vmatprep.subr.mxu0 0.0
      %4481 = vmatpush1.msra.mxu0 %v3998
      %4482 = vmatprep.subr.mxu0 0.0
      %4483 = vmatpush2.msra.mxu0 0.0
      %4484 = vmatprep.subr.mxu0 0.0
      %4485 = vmatpush2.msra.mxu0 0.0
      %4486 = vmatprep.subr.mxu0 0.0
      %4487 = vmatpush2.msra.mxu0 0.0
      %4488 = vmatprep.subr.mxu0 0.0
      %4489 = vmatpush2.msra.mxu0 0.0
      %4490 = vmatprep.subr.mxu0 0.0
      %4491 = vmatpush2.msra.mxu0 0.0
      %4492 = vmatprep.subr.mxu0 0.0
      %4493 = vmatpush2.msra.mxu0 0.0
      %4494 = vmatprep.subr.mxu0 0.0
      %4495 = vmatpush2.msra.mxu0 0.0
      %4496 = vmatprep.subr.mxu0 0.0
      %4497 = vmatpush2.msra.mxu0 0.0
      %4498 = vmatprep.subr.mxu0 0.0
      %4499 = vmatpush2.msra.mxu0 0.0
      %4500 = vmatprep.subr.mxu0 0.0
      %4501 = vmatpush2.msra.mxu0 0.0
      %4502 = vmatprep.subr.mxu0 0.0
      %4503 = vmatpush2.msra.mxu0 0.0
      %4504 = vmatprep.subr.mxu0 0.0
      %4505 = vmatpush2.msra.mxu0 0.0
      %4506 = vmatprep.subr.mxu0 0.0
      %4507 = vmatpush2.msra.mxu0 0.0
      %4508 = vmatprep.subr.mxu0 0.0
      %4509 = vmatpush2.msra.mxu0 0.0
      %4510 = vmatprep.subr.mxu0 0.0
      %4511 = vmatpush2.msra.mxu0 0.0
      %4512 = vmatprep.subr.mxu0 0.0
      %4513 = vmatpush2.msra.mxu0 0.0
      %4514 = vmatprep.mubr.f32.mxu0 0.0
      %4515 = vmatmul.mubr.f32.gmra.mxu0 %v4355
      %v4516 = vpop.f32.mrf.mxu0
      %v4517 = vadd.f32 %v4196, %v4516
      %v4518 = vpop.f32.mrf.mxu0
      %4519 = vmatprep.mubr.f32.mxu0 0.0
      %4520 = vmatmul.mubr.f32.gmra.mxu0 %v4358
      %v4521 = vpop.f32.mrf.mxu0
      %v4522 = vadd.f32 %v4201, %v4521
      %v4523 = vpop.f32.mrf.mxu0
      %4524 = vmatprep.mubr.f32.mxu0 0.0
      %4525 = vmatmul.mubr.f32.gmra.mxu0 %v4361
      %v4526 = vpop.f32.mrf.mxu0
      %v4527 = vadd.f32 %v4206, %v4526
      %v4528 = vpop.f32.mrf.mxu0
      %4529 = vmatprep.mubr.f32.mxu0 0.0
      %4530 = vmatmul.mubr.f32.gmra.mxu0 %v4364
      %v4531 = vpop.f32.mrf.mxu0
      %v4532 = vadd.f32 %v4211, %v4531
      %v4533 = vpop.f32.mrf.mxu0
      %4534 = vmatprep.mubr.f32.mxu0 0.0
      %4535 = vmatmul.mubr.f32.gmra.mxu0 %v4367
      %v4536 = vpop.f32.mrf.mxu0
      %v4537 = vadd.f32 %v4216, %v4536
      %v4538 = vpop.f32.mrf.mxu0
      %4539 = vmatprep.mubr.f32.mxu0 0.0
      %4540 = vmatmul.mubr.f32.gmra.mxu0 %v4370
      %v4541 = vpop.f32.mrf.mxu0
      %v4542 = vadd.f32 %v4221, %v4541
      %v4543 = vpop.f32.mrf.mxu0
      %4544 = vmatprep.mubr.f32.mxu0 0.0
      %4545 = vmatmul.mubr.f32.gmra.mxu0 %v4373
      %v4546 = vpop.f32.mrf.mxu0
      %v4547 = vadd.f32 %v4226, %v4546
      %v4548 = vpop.f32.mrf.mxu0
      %4549 = vmatprep.mubr.f32.mxu0 0.0
      %4550 = vmatmul.mubr.f32.gmra.mxu0 %v4376
      %v4551 = vpop.f32.mrf.mxu0
      %v4552 = vadd.f32 %v4231, %v4551
      %v4553 = vpop.f32.mrf.mxu0
      %4554 = vmatprep.mubr.f32.mxu0 0.0
      %4555 = vmatmul.mubr.f32.gmra.mxu0 %v4379
      %v4556 = vpop.f32.mrf.mxu0
      %v4557 = vadd.f32 %v4236, %v4556
      %v4558 = vpop.f32.mrf.mxu0
      %4559 = vmatprep.mubr.f32.mxu0 0.0
      %4560 = vmatmul.mubr.f32.gmra.mxu0 %v4382
      %v4561 = vpop.f32.mrf.mxu0
      %v4562 = vadd.f32 %v4241, %v4561
      %v4563 = vpop.f32.mrf.mxu0
      %4564 = vmatprep.mubr.f32.mxu0 0.0
      %4565 = vmatmul.mubr.f32.gmra.mxu0 %v4385
      %v4566 = vpop.f32.mrf.mxu0
      %v4567 = vadd.f32 %v4246, %v4566
      %v4568 = vpop.f32.mrf.mxu0
      %4569 = vmatprep.mubr.f32.mxu0 0.0
      %4570 = vmatmul.mubr.f32.gmra.mxu0 %v4388
      %v4571 = vpop.f32.mrf.mxu0
      %v4572 = vadd.f32 %v4251, %v4571
      %v4573 = vpop.f32.mrf.mxu0
      %4574 = vmatprep.mubr.f32.mxu0 0.0
      %4575 = vmatmul.mubr.f32.gmra.mxu0 %v4391
      %v4576 = vpop.f32.mrf.mxu0
      %v4577 = vadd.f32 %v4256, %v4576
      %v4578 = vpop.f32.mrf.mxu0
      %4579 = vmatprep.mubr.f32.mxu0 0.0
      %4580 = vmatmul.mubr.f32.gmra.mxu0 %v4394
      %v4581 = vpop.f32.mrf.mxu0
      %v4582 = vadd.f32 %v4261, %v4581
      %v4583 = vpop.f32.mrf.mxu0
      %4584 = vmatprep.mubr.f32.mxu0 0.0
      %4585 = vmatmul.mubr.f32.gmra.mxu0 %v4397
      %v4586 = vpop.f32.mrf.mxu0
      %v4587 = vadd.f32 %v4266, %v4586
      %v4588 = vpop.f32.mrf.mxu0
      %4589 = vmatprep.mubr.f32.mxu0 0.0
      %4590 = vmatmul.mubr.f32.gmra.mxu0 %v4400
      %v4591 = vpop.f32.mrf.mxu0
      %v4592 = vadd.f32 %v4271, %v4591
      %v4593 = vpop.f32.mrf.mxu0
      %4594 = vmatprep.mubr.f32.mxu0 0.0
      %4595 = vmatmul.mubr.f32.gmra.mxu0 %v4403
      %v4596 = vpop.f32.mrf.mxu0
      %v4597 = vadd.f32 %v4276, %v4596
      %v4598 = vpop.f32.mrf.mxu0
      %4599 = vmatprep.mubr.f32.mxu0 0.0
      %4600 = vmatmul.mubr.f32.gmra.mxu0 %v4406
      %v4601 = vpop.f32.mrf.mxu0
      %v4602 = vadd.f32 %v4281, %v4601
      %v4603 = vpop.f32.mrf.mxu0
      %4604 = vmatprep.mubr.f32.mxu0 0.0
      %4605 = vmatmul.mubr.f32.gmra.mxu0 %v4409
      %v4606 = vpop.f32.mrf.mxu0
      %v4607 = vadd.f32 %v4286, %v4606
      %v4608 = vpop.f32.mrf.mxu0
      %4609 = vmatprep.mubr.f32.mxu0 0.0
      %4610 = vmatmul.mubr.f32.gmra.mxu0 %v4412
      %v4611 = vpop.f32.mrf.mxu0
      %v4612 = vadd.f32 %v4291, %v4611
      %v4613 = vpop.f32.mrf.mxu0
      %4614 = vmatprep.mubr.f32.mxu0 0.0
      %4615 = vmatmul.mubr.f32.gmra.mxu0 %v4415
      %v4616 = vpop.f32.mrf.mxu0
      %v4617 = vadd.f32 %v4296, %v4616
      %v4618 = vpop.f32.mrf.mxu0
      %4619 = vmatprep.mubr.f32.mxu0 0.0
      %4620 = vmatmul.mubr.f32.gmra.mxu0 %v4418
      %v4621 = vpop.f32.mrf.mxu0
      %v4622 = vadd.f32 %v4301, %v4621
      %v4623 = vpop.f32.mrf.mxu0
      %4624 = vmatprep.mubr.f32.mxu0 0.0
      %4625 = vmatmul.mubr.f32.gmra.mxu0 %v4421
      %v4626 = vpop.f32.mrf.mxu0
      %v4627 = vadd.f32 %v4306, %v4626
      %v4628 = vpop.f32.mrf.mxu0
      %4629 = vmatprep.mubr.f32.mxu0 0.0
      %4630 = vmatmul.mubr.f32.gmra.mxu0 %v4424
      %v4631 = vpop.f32.mrf.mxu0
      %v4632 = vadd.f32 %v4311, %v4631
      %v4633 = vpop.f32.mrf.mxu0
      %4634 = vmatprep.mubr.f32.mxu0 0.0
      %4635 = vmatmul.mubr.f32.gmra.mxu0 %v4427
      %v4636 = vpop.f32.mrf.mxu0
      %v4637 = vadd.f32 %v4316, %v4636
      %v4638 = vpop.f32.mrf.mxu0
      %4639 = vmatprep.mubr.f32.mxu0 0.0
      %4640 = vmatmul.mubr.f32.gmra.mxu0 %v4430
      %v4641 = vpop.f32.mrf.mxu0
      %v4642 = vadd.f32 %v4321, %v4641
      %v4643 = vpop.f32.mrf.mxu0
      %4644 = vmatprep.mubr.f32.mxu0 0.0
      %4645 = vmatmul.mubr.f32.gmra.mxu0 %v4433
      %v4646 = vpop.f32.mrf.mxu0
      %v4647 = vadd.f32 %v4326, %v4646
      %v4648 = vpop.f32.mrf.mxu0
      %4649 = vmatprep.mubr.f32.mxu0 0.0
      %4650 = vmatmul.mubr.f32.gmra.mxu0 %v4436
      %v4651 = vpop.f32.mrf.mxu0
      %v4652 = vadd.f32 %v4331, %v4651
      %v4653 = vpop.f32.mrf.mxu0
      %4654 = vmatprep.mubr.f32.mxu0 0.0
      %4655 = vmatmul.mubr.f32.gmra.mxu0 %v4439
      %v4656 = vpop.f32.mrf.mxu0
      %v4657 = vadd.f32 %v4336, %v4656
      %v4658 = vpop.f32.mrf.mxu0
      %4659 = vmatprep.mubr.f32.mxu0 0.0
      %4660 = vmatmul.mubr.f32.gmra.mxu0 %v4442
      %v4661 = vpop.f32.mrf.mxu0
      %v4662 = vadd.f32 %v4341, %v4661
      %v4663 = vpop.f32.mrf.mxu0
      %4664 = vmatprep.mubr.f32.mxu0 0.0
      %4665 = vmatmul.mubr.f32.gmra.mxu0 %v4445
      %v4666 = vpop.f32.mrf.mxu0
      %v4667 = vadd.f32 %v4346, %v4666
      %v4668 = vpop.f32.mrf.mxu0
      %4669 = vmatprep.mubr.f32.mxu0 0.0
      %4670 = vmatmul.mubr.f32.gmra.mxu0 %v4448
      %v4671 = vpop.f32.mrf.mxu0
      %v4672 = vadd.f32 %v4351, %v4671
      %v4673 = vpop.f32.mrf.mxu0
      %4674 = vdwg.mxu0
      %v4675 = vld [vmem:[#allocation2 + $0x2] sm:$0xff]
      %v4676 = vld [vmem:[#allocation2 + $0xa] sm:$0xff]
      %v4677 = vld [vmem:[#allocation2 + $0x1a] sm:$0xff]
      %v4678 = vld [vmem:[#allocation2 + $0x22] sm:$0xff]
      %v4679 = vld [vmem:[#allocation2 + $0x32] sm:$0xff]
      %v4680 = vld [vmem:[#allocation2 + $0x3a] sm:$0xff]
      %v4681 = vld [vmem:[#allocation2 + $0x4a] sm:$0xff]
      %v4682 = vld [vmem:[#allocation2 + $0x52] sm:$0xff]
      %v4683 = vld [vmem:[#allocation2 + $0x62] sm:$0xff]
      %v4684 = vld [vmem:[#allocation2 + $0x6a] sm:$0xff]
      %v4685 = vld [vmem:[#allocation2 + $0x7a] sm:$0xff]
      %v4686 = vld [vmem:[#allocation2 + $0x82] sm:$0xff]
      %v4687 = vld [vmem:[#allocation2 + $0x92] sm:$0xff]
      %v4688 = vld [vmem:[#allocation2 + $0x9a] sm:$0xff]
      %v4689 = vld [vmem:[#allocation2 + $0xaa] sm:$0xff]
      %v4690 = vld [vmem:[#allocation2 + $0xb2] sm:$0xff]
      %v4691 = vld [vmem:[#allocation2 + $0xc2] sm:$0xff]
      %v4692 = vld [vmem:[#allocation2 + $0xca] sm:$0xff]
      %v4693 = vld [vmem:[#allocation2 + $0xda] sm:$0xff]
      %v4694 = vld [vmem:[#allocation2 + $0xe2] sm:$0xff]
      %v4695 = vld [vmem:[#allocation2 + $0xf2] sm:$0xff]
      %v4696 = vld [vmem:[#allocation2 + $0xfa] sm:$0xff]
      %v4697 = vld [vmem:[#allocation2 + $0x10a] sm:$0xff]
      %v4698 = vld [vmem:[#allocation2 + $0x112] sm:$0xff]
      %v4699 = vld [vmem:[#allocation2 + $0x122] sm:$0xff]
      %v4700 = vld [vmem:[#allocation2 + $0x12a] sm:$0xff]
      %v4701 = vld [vmem:[#allocation2 + $0x13a] sm:$0xff]
      %v4702 = vld [vmem:[#allocation2 + $0x142] sm:$0xff]
      %v4703 = vld [vmem:[#allocation2 + $0x152] sm:$0xff]
      %v4704 = vld [vmem:[#allocation2 + $0x15a] sm:$0xff]
      %v4705 = vld [vmem:[#allocation2 + $0x16a] sm:$0xff]
      %v4706 = vld [vmem:[#allocation2 + $0x172] sm:$0xff]
      %s4707 = scalar_lea.vmem %s5, 16
      %v4708 = vld [vmem:[%s4707] sm:$0xff]
      %v4710 = vsel %vm3877, %v4675, 0
      %v4713 = vsel %vm3877, %v4676, 0
      %v4716 = vsel %vm3877, %v4677, 0
      %v4719 = vsel %vm3877, %v4678, 0
      %v4722 = vsel %vm3877, %v4679, 0
      %v4725 = vsel %vm3877, %v4680, 0
      %v4728 = vsel %vm3877, %v4681, 0
      %v4731 = vsel %vm3877, %v4682, 0
      %v4734 = vsel %vm3877, %v4683, 0
      %v4737 = vsel %vm3877, %v4684, 0
      %v4740 = vsel %vm3877, %v4685, 0
      %v4743 = vsel %vm3877, %v4686, 0
      %v4746 = vsel %vm3877, %v4687, 0
      %v4749 = vsel %vm3877, %v4688, 0
      %v4752 = vsel %vm3877, %v4689, 0
      %v4755 = vsel %vm3877, %v4690, 0
      %v4758 = vsel %vm3877, %v4691, 0
      %v4761 = vsel %vm3877, %v4692, 0
      %v4764 = vsel %vm3877, %v4693, 0
      %v4767 = vsel %vm3877, %v4694, 0
      %v4770 = vsel %vm3877, %v4695, 0
      %v4773 = vsel %vm3877, %v4696, 0
      %v4776 = vsel %vm3877, %v4697, 0
      %v4779 = vsel %vm3877, %v4698, 0
      %v4782 = vsel %vm3877, %v4699, 0
      %v4785 = vsel %vm3877, %v4700, 0
      %v4788 = vsel %vm3877, %v4701, 0
      %v4791 = vsel %vm3877, %v4702, 0
      %v4794 = vsel %vm3877, %v4703, 0
      %v4797 = vsel %vm3877, %v4704, 0
      %v4800 = vsel %vm3877, %v4705, 0
      %v4803 = vsel %vm3877, %v4706, 0
      %4805 = vmatprep.subr.mxu0 0.0
      %4806 = vmatpush1.msra.mxu0 0.0
      %4807 = vmatprep.subr.mxu0 0.0
      %4808 = vmatpush1.msra.mxu0 0.0
      %4809 = vmatprep.subr.mxu0 0.0
      %4810 = vmatpush1.msra.mxu0 0.0
      %4811 = vmatprep.subr.mxu0 0.0
      %4812 = vmatpush1.msra.mxu0 0.0
      %4813 = vmatprep.subr.mxu0 0.0
      %4814 = vmatpush1.msra.mxu0 0.0
      %4815 = vmatprep.subr.mxu0 0.0
      %4816 = vmatpush1.msra.mxu0 0.0
      %4817 = vmatprep.subr.mxu0 0.0
      %4818 = vmatpush1.msra.mxu0 0.0
      %4819 = vmatprep.subr.mxu0 0.0
      %4820 = vmatpush1.msra.mxu0 0.0
      %4821 = vmatprep.subr.mxu0 0.0
      %4822 = vmatpush1.msra.mxu0 0.0
      %4823 = vmatprep.subr.mxu0 0.0
      %4824 = vmatpush1.msra.mxu0 0.0
      %4825 = vmatprep.subr.mxu0 0.0
      %4826 = vmatpush1.msra.mxu0 0.0
      %4827 = vmatprep.subr.mxu0 0.0
      %4828 = vmatpush1.msra.mxu0 0.0
      %4829 = vmatprep.subr.mxu0 0.0
      %4830 = vmatpush1.msra.mxu0 0.0
      %4831 = vmatprep.subr.mxu0 0.0
      %4832 = vmatpush1.msra.mxu0 0.0
      %4833 = vmatprep.subr.mxu0 0.0
      %4834 = vmatpush1.msra.mxu0 0.0
      %4835 = vmatprep.subr.mxu0 0.0
      %4836 = vmatpush1.msra.mxu0 %v4708
      %4837 = vmatprep.subr.mxu0 0.0
      %4838 = vmatpush2.msra.mxu0 0.0
      %4839 = vmatprep.subr.mxu0 0.0
      %4840 = vmatpush2.msra.mxu0 0.0
      %4841 = vmatprep.subr.mxu0 0.0
      %4842 = vmatpush2.msra.mxu0 0.0
      %4843 = vmatprep.subr.mxu0 0.0
      %4844 = vmatpush2.msra.mxu0 0.0
      %4845 = vmatprep.subr.mxu0 0.0
      %4846 = vmatpush2.msra.mxu0 0.0
      %4847 = vmatprep.subr.mxu0 0.0
      %4848 = vmatpush2.msra.mxu0 0.0
      %4849 = vmatprep.subr.mxu0 0.0
      %4850 = vmatpush2.msra.mxu0 0.0
      %4851 = vmatprep.subr.mxu0 0.0
      %4852 = vmatpush2.msra.mxu0 0.0
      %4853 = vmatprep.subr.mxu0 0.0
      %4854 = vmatpush2.msra.mxu0 0.0
      %4855 = vmatprep.subr.mxu0 0.0
      %4856 = vmatpush2.msra.mxu0 0.0
      %4857 = vmatprep.subr.mxu0 0.0
      %4858 = vmatpush2.msra.mxu0 0.0
      %4859 = vmatprep.subr.mxu0 0.0
      %4860 = vmatpush2.msra.mxu0 0.0
      %4861 = vmatprep.subr.mxu0 0.0
      %4862 = vmatpush2.msra.mxu0 0.0
      %4863 = vmatprep.subr.mxu0 0.0
      %4864 = vmatpush2.msra.mxu0 0.0
      %4865 = vmatprep.subr.mxu0 0.0
      %4866 = vmatpush2.msra.mxu0 0.0
      %4867 = vmatprep.subr.mxu0 0.0
      %4868 = vmatpush2.msra.mxu0 0.0
      %4869 = vmatprep.mubr.f32.mxu0 0.0
      %4870 = vmatmul.mubr.f32.gmra.mxu0 %v4710
      %v4871 = vpop.f32.mrf.mxu0
      %v4872 = vadd.f32 0.0, %v4871
      %v4873 = vpop.f32.mrf.mxu0
      %4874 = vmatprep.mubr.f32.mxu0 0.0
      %4875 = vmatmul.mubr.f32.gmra.mxu0 %v4713
      %v4876 = vpop.f32.mrf.mxu0
      %v4877 = vadd.f32 0.0, %v4876
      %v4878 = vpop.f32.mrf.mxu0
      %4879 = vmatprep.mubr.f32.mxu0 0.0
      %4880 = vmatmul.mubr.f32.gmra.mxu0 %v4716
      %v4881 = vpop.f32.mrf.mxu0
      %v4882 = vadd.f32 0.0, %v4881
      %v4883 = vpop.f32.mrf.mxu0
      %4884 = vmatprep.mubr.f32.mxu0 0.0
      %4885 = vmatmul.mubr.f32.gmra.mxu0 %v4719
      %v4886 = vpop.f32.mrf.mxu0
      %v4887 = vadd.f32 0.0, %v4886
      %v4888 = vpop.f32.mrf.mxu0
      %4889 = vmatprep.mubr.f32.mxu0 0.0
      %4890 = vmatmul.mubr.f32.gmra.mxu0 %v4722
      %v4891 = vpop.f32.mrf.mxu0
      %v4892 = vadd.f32 0.0, %v4891
      %v4893 = vpop.f32.mrf.mxu0
      %4894 = vmatprep.mubr.f32.mxu0 0.0
      %4895 = vmatmul.mubr.f32.gmra.mxu0 %v4725
      %v4896 = vpop.f32.mrf.mxu0
      %v4897 = vadd.f32 0.0, %v4896
      %v4898 = vpop.f32.mrf.mxu0
      %4899 = vmatprep.mubr.f32.mxu0 0.0
      %4900 = vmatmul.mubr.f32.gmra.mxu0 %v4728
      %v4901 = vpop.f32.mrf.mxu0
      %v4902 = vadd.f32 0.0, %v4901
      %v4903 = vpop.f32.mrf.mxu0
      %4904 = vmatprep.mubr.f32.mxu0 0.0
      %4905 = vmatmul.mubr.f32.gmra.mxu0 %v4731
      %v4906 = vpop.f32.mrf.mxu0
      %v4907 = vadd.f32 0.0, %v4906
      %v4908 = vpop.f32.mrf.mxu0
      %4909 = vmatprep.mubr.f32.mxu0 0.0
      %4910 = vmatmul.mubr.f32.gmra.mxu0 %v4734
      %v4911 = vpop.f32.mrf.mxu0
      %v4912 = vadd.f32 0.0, %v4911
      %v4913 = vpop.f32.mrf.mxu0
      %4914 = vmatprep.mubr.f32.mxu0 0.0
      %4915 = vmatmul.mubr.f32.gmra.mxu0 %v4737
      %v4916 = vpop.f32.mrf.mxu0
      %v4917 = vadd.f32 0.0, %v4916
      %v4918 = vpop.f32.mrf.mxu0
      %4919 = vmatprep.mubr.f32.mxu0 0.0
      %4920 = vmatmul.mubr.f32.gmra.mxu0 %v4740
      %v4921 = vpop.f32.mrf.mxu0
      %v4922 = vadd.f32 0.0, %v4921
      %v4923 = vpop.f32.mrf.mxu0
      %4924 = vmatprep.mubr.f32.mxu0 0.0
      %4925 = vmatmul.mubr.f32.gmra.mxu0 %v4743
      %v4926 = vpop.f32.mrf.mxu0
      %v4927 = vadd.f32 0.0, %v4926
      %v4928 = vpop.f32.mrf.mxu0
      %4929 = vmatprep.mubr.f32.mxu0 0.0
      %4930 = vmatmul.mubr.f32.gmra.mxu0 %v4746
      %v4931 = vpop.f32.mrf.mxu0
      %v4932 = vadd.f32 0.0, %v4931
      %v4933 = vpop.f32.mrf.mxu0
      %4934 = vmatprep.mubr.f32.mxu0 0.0
      %4935 = vmatmul.mubr.f32.gmra.mxu0 %v4749
      %v4936 = vpop.f32.mrf.mxu0
      %v4937 = vadd.f32 0.0, %v4936
      %v4938 = vpop.f32.mrf.mxu0
      %4939 = vmatprep.mubr.f32.mxu0 0.0
      %4940 = vmatmul.mubr.f32.gmra.mxu0 %v4752
      %v4941 = vpop.f32.mrf.mxu0
      %v4942 = vadd.f32 0.0, %v4941
      %v4943 = vpop.f32.mrf.mxu0
      %4944 = vmatprep.mubr.f32.mxu0 0.0
      %4945 = vmatmul.mubr.f32.gmra.mxu0 %v4755
      %v4946 = vpop.f32.mrf.mxu0
      %v4947 = vadd.f32 0.0, %v4946
      %v4948 = vpop.f32.mrf.mxu0
      %4949 = vmatprep.mubr.f32.mxu0 0.0
      %4950 = vmatmul.mubr.f32.gmra.mxu0 %v4758
      %v4951 = vpop.f32.mrf.mxu0
      %v4952 = vadd.f32 0.0, %v4951
      %v4953 = vpop.f32.mrf.mxu0
      %4954 = vmatprep.mubr.f32.mxu0 0.0
      %4955 = vmatmul.mubr.f32.gmra.mxu0 %v4761
      %v4956 = vpop.f32.mrf.mxu0
      %v4957 = vadd.f32 0.0, %v4956
      %v4958 = vpop.f32.mrf.mxu0
      %4959 = vmatprep.mubr.f32.mxu0 0.0
      %4960 = vmatmul.mubr.f32.gmra.mxu0 %v4764
      %v4961 = vpop.f32.mrf.mxu0
      %v4962 = vadd.f32 0.0, %v4961
      %v4963 = vpop.f32.mrf.mxu0
      %4964 = vmatprep.mubr.f32.mxu0 0.0
      %4965 = vmatmul.mubr.f32.gmra.mxu0 %v4767
      %v4966 = vpop.f32.mrf.mxu0
      %v4967 = vadd.f32 0.0, %v4966
      %v4968 = vpop.f32.mrf.mxu0
      %4969 = vmatprep.mubr.f32.mxu0 0.0
      %4970 = vmatmul.mubr.f32.gmra.mxu0 %v4770
      %v4971 = vpop.f32.mrf.mxu0
      %v4972 = vadd.f32 0.0, %v4971
      %v4973 = vpop.f32.mrf.mxu0
      %4974 = vmatprep.mubr.f32.mxu0 0.0
      %4975 = vmatmul.mubr.f32.gmra.mxu0 %v4773
      %v4976 = vpop.f32.mrf.mxu0
      %v4977 = vadd.f32 0.0, %v4976
      %v4978 = vpop.f32.mrf.mxu0
      %4979 = vmatprep.mubr.f32.mxu0 0.0
      %4980 = vmatmul.mubr.f32.gmra.mxu0 %v4776
      %v4981 = vpop.f32.mrf.mxu0
      %v4982 = vadd.f32 0.0, %v4981
      %v4983 = vpop.f32.mrf.mxu0
      %4984 = vmatprep.mubr.f32.mxu0 0.0
      %4985 = vmatmul.mubr.f32.gmra.mxu0 %v4779
      %v4986 = vpop.f32.mrf.mxu0
      %v4987 = vadd.f32 0.0, %v4986
      %v4988 = vpop.f32.mrf.mxu0
      %4989 = vmatprep.mubr.f32.mxu0 0.0
      %4990 = vmatmul.mubr.f32.gmra.mxu0 %v4782
      %v4991 = vpop.f32.mrf.mxu0
      %v4992 = vadd.f32 0.0, %v4991
      %v4993 = vpop.f32.mrf.mxu0
      %4994 = vmatprep.mubr.f32.mxu0 0.0
      %4995 = vmatmul.mubr.f32.gmra.mxu0 %v4785
      %v4996 = vpop.f32.mrf.mxu0
      %v4997 = vadd.f32 0.0, %v4996
      %v4998 = vpop.f32.mrf.mxu0
      %4999 = vmatprep.mubr.f32.mxu0 0.0
      %5000 = vmatmul.mubr.f32.gmra.mxu0 %v4788
      %v5001 = vpop.f32.mrf.mxu0
      %v5002 = vadd.f32 0.0, %v5001
      %v5003 = vpop.f32.mrf.mxu0
      %5004 = vmatprep.mubr.f32.mxu0 0.0
      %5005 = vmatmul.mubr.f32.gmra.mxu0 %v4791
      %v5006 = vpop.f32.mrf.mxu0
      %v5007 = vadd.f32 0.0, %v5006
      %v5008 = vpop.f32.mrf.mxu0
      %5009 = vmatprep.mubr.f32.mxu0 0.0
      %5010 = vmatmul.mubr.f32.gmra.mxu0 %v4794
      %v5011 = vpop.f32.mrf.mxu0
      %v5012 = vadd.f32 0.0, %v5011
      %v5013 = vpop.f32.mrf.mxu0
      %5014 = vmatprep.mubr.f32.mxu0 0.0
      %5015 = vmatmul.mubr.f32.gmra.mxu0 %v4797
      %v5016 = vpop.f32.mrf.mxu0
      %v5017 = vadd.f32 0.0, %v5016
      %v5018 = vpop.f32.mrf.mxu0
      %5019 = vmatprep.mubr.f32.mxu0 0.0
      %5020 = vmatmul.mubr.f32.gmra.mxu0 %v4800
      %v5021 = vpop.f32.mrf.mxu0
      %v5022 = vadd.f32 0.0, %v5021
      %v5023 = vpop.f32.mrf.mxu0
      %5024 = vmatprep.mubr.f32.mxu0 0.0
      %5025 = vmatmul.mubr.f32.gmra.mxu0 %v4803
      %v5026 = vpop.f32.mrf.mxu0
      %v5027 = vadd.f32 0.0, %v5026
      %v5028 = vpop.f32.mrf.mxu0
      %5029 = vdwg.mxu0
      %v5030 = vadd.f32 %v4517, %v4872
      %v5031 = vadd.f32 %v4522, %v4877
      %v5032 = vadd.f32 %v4527, %v4882
      %v5033 = vadd.f32 %v4532, %v4887
      %v5034 = vadd.f32 %v4537, %v4892
      %v5035 = vadd.f32 %v4542, %v4897
      %v5036 = vadd.f32 %v4547, %v4902
      %v5037 = vadd.f32 %v4552, %v4907
      %v5038 = vadd.f32 %v4557, %v4912
      %v5039 = vadd.f32 %v4562, %v4917
      %v5040 = vadd.f32 %v4567, %v4922
      %v5041 = vadd.f32 %v4572, %v4927
      %v5042 = vadd.f32 %v4577, %v4932
      %v5043 = vadd.f32 %v4582, %v4937
      %v5044 = vadd.f32 %v4587, %v4942
      %v5045 = vadd.f32 %v4592, %v4947
      %v5046 = vadd.f32 %v4597, %v4952
      %v5047 = vadd.f32 %v4602, %v4957
      %v5048 = vadd.f32 %v4607, %v4962
      %v5049 = vadd.f32 %v4612, %v4967
      %v5050 = vadd.f32 %v4617, %v4972
      %v5051 = vadd.f32 %v4622, %v4977
      %v5052 = vadd.f32 %v4627, %v4982
      %v5053 = vadd.f32 %v4632, %v4987
      %v5054 = vadd.f32 %v4637, %v4992
      %v5055 = vadd.f32 %v4642, %v4997
      %v5056 = vadd.f32 %v4647, %v5002
      %v5057 = vadd.f32 %v4652, %v5007
      %v5058 = vadd.f32 %v4657, %v5012
      %v5059 = vadd.f32 %v4662, %v5017
      %v5060 = vadd.f32 %v4667, %v5022
      %v5061 = vadd.f32 %v4672, %v5027
      %v5062 = vld [vmem:[%s3933] sm:$0xff]
      %v5063 = vld [vmem:[%s3933 + $0x8] sm:$0xff]
      %v5064 = vld [vmem:[%s3933 + $0x18] sm:$0xff]
      %v5065 = vld [vmem:[%s3933 + $0x20] sm:$0xff]
      %v5066 = vld [vmem:[%s3933 + $0x30] sm:$0xff]
      %v5067 = vld [vmem:[%s3933 + $0x38] sm:$0xff]
      %v5068 = vld [vmem:[%s3933 + $0x48] sm:$0xff]
      %v5069 = vld [vmem:[%s3933 + $0x50] sm:$0xff]
      %v5070 = vld [vmem:[%s3933 + $0x60] sm:$0xff]
      %v5071 = vld [vmem:[%s3933 + $0x68] sm:$0xff]
      %v5072 = vld [vmem:[%s3933 + $0x78] sm:$0xff]
      %v5073 = vld [vmem:[%s3933 + $0x80] sm:$0xff]
      %v5074 = vld [vmem:[%s3933 + $0x90] sm:$0xff]
      %v5075 = vld [vmem:[%s3933 + $0x98] sm:$0xff]
      %v5076 = vld [vmem:[%s3933 + $0xa8] sm:$0xff]
      %v5077 = vld [vmem:[%s3933 + $0xb0] sm:$0xff]
      %v5078 = vld [vmem:[%s3933 + $0xc0] sm:$0xff]
      %v5079 = vld [vmem:[%s3933 + $0xc8] sm:$0xff]
      %v5080 = vld [vmem:[%s3933 + $0xd8] sm:$0xff]
      %v5081 = vld [vmem:[%s3933 + $0xe0] sm:$0xff]
      %v5082 = vld [vmem:[%s3933 + $0xf0] sm:$0xff]
      %v5083 = vld [vmem:[%s3933 + $0xf8] sm:$0xff]
      %v5084 = vld [vmem:[%s3933 + $0x108] sm:$0xff]
      %v5085 = vld [vmem:[%s3933 + $0x110] sm:$0xff]
      %v5086 = vld [vmem:[%s3933 + $0x120] sm:$0xff]
      %v5087 = vld [vmem:[%s3933 + $0x128] sm:$0xff]
      %v5088 = vld [vmem:[%s3933 + $0x138] sm:$0xff]
      %v5089 = vld [vmem:[%s3933 + $0x140] sm:$0xff]
      %v5090 = vld [vmem:[%s3933 + $0x150] sm:$0xff]
      %v5091 = vld [vmem:[%s3933 + $0x158] sm:$0xff]
      %v5092 = vld [vmem:[%s3933 + $0x168] sm:$0xff]
      %v5093 = vld [vmem:[%s3933 + $0x170] sm:$0xff]
      %s5094 = scalar_lea.vmem %s5, 24
      %v5095 = vld [vmem:[%s5094] sm:$0xff]
      %v5097 = vsel %vm3877, %v5062, 0
      %v5100 = vsel %vm3877, %v5063, 0
      %v5103 = vsel %vm3877, %v5064, 0
      %v5106 = vsel %vm3877, %v5065, 0
      %v5109 = vsel %vm3877, %v5066, 0
      %v5112 = vsel %vm3877, %v5067, 0
      %v5115 = vsel %vm3877, %v5068, 0
      %v5118 = vsel %vm3877, %v5069, 0
      %v5121 = vsel %vm3877, %v5070, 0
      %v5124 = vsel %vm3877, %v5071, 0
      %v5127 = vsel %vm3877, %v5072, 0
      %v5130 = vsel %vm3877, %v5073, 0
      %v5133 = vsel %vm3877, %v5074, 0
      %v5136 = vsel %vm3877, %v5075, 0
      %v5139 = vsel %vm3877, %v5076, 0
      %v5142 = vsel %vm3877, %v5077, 0
      %v5145 = vsel %vm3877, %v5078, 0
      %v5148 = vsel %vm3877, %v5079, 0
      %v5151 = vsel %vm3877, %v5080, 0
      %v5154 = vsel %vm3877, %v5081, 0
      %v5157 = vsel %vm3877, %v5082, 0
      %v5160 = vsel %vm3877, %v5083, 0
      %v5163 = vsel %vm3877, %v5084, 0
      %v5166 = vsel %vm3877, %v5085, 0
      %v5169 = vsel %vm3877, %v5086, 0
      %v5172 = vsel %vm3877, %v5087, 0
      %v5175 = vsel %vm3877, %v5088, 0
      %v5178 = vsel %vm3877, %v5089, 0
      %v5181 = vsel %vm3877, %v5090, 0
      %v5184 = vsel %vm3877, %v5091, 0
      %v5187 = vsel %vm3877, %v5092, 0
      %v5190 = vsel %vm3877, %v5093, 0
      %5192 = vmatprep.subr.mxu0 0.0
      %5193 = vmatpush1.msra.mxu0 0.0
      %5194 = vmatprep.subr.mxu0 0.0
      %5195 = vmatpush1.msra.mxu0 0.0
      %5196 = vmatprep.subr.mxu0 0.0
      %5197 = vmatpush1.msra.mxu0 0.0
      %5198 = vmatprep.subr.mxu0 0.0
      %5199 = vmatpush1.msra.mxu0 0.0
      %5200 = vmatprep.subr.mxu0 0.0
      %5201 = vmatpush1.msra.mxu0 0.0
      %5202 = vmatprep.subr.mxu0 0.0
      %5203 = vmatpush1.msra.mxu0 0.0
      %5204 = vmatprep.subr.mxu0 0.0
      %5205 = vmatpush1.msra.mxu0 0.0
      %5206 = vmatprep.subr.mxu0 0.0
      %5207 = vmatpush1.msra.mxu0 0.0
      %5208 = vmatprep.subr.mxu0 0.0
      %5209 = vmatpush1.msra.mxu0 0.0
      %5210 = vmatprep.subr.mxu0 0.0
      %5211 = vmatpush1.msra.mxu0 0.0
      %5212 = vmatprep.subr.mxu0 0.0
      %5213 = vmatpush1.msra.mxu0 0.0
      %5214 = vmatprep.subr.mxu0 0.0
      %5215 = vmatpush1.msra.mxu0 0.0
      %5216 = vmatprep.subr.mxu0 0.0
      %5217 = vmatpush1.msra.mxu0 0.0
      %5218 = vmatprep.subr.mxu0 0.0
      %5219 = vmatpush1.msra.mxu0 0.0
      %5220 = vmatprep.subr.mxu0 0.0
      %5221 = vmatpush1.msra.mxu0 0.0
      %5222 = vmatprep.subr.mxu0 0.0
      %5223 = vmatpush1.msra.mxu0 %v5095
      %5224 = vmatprep.subr.mxu0 0.0
      %5225 = vmatpush2.msra.mxu0 0.0
      %5226 = vmatprep.subr.mxu0 0.0
      %5227 = vmatpush2.msra.mxu0 0.0
      %5228 = vmatprep.subr.mxu0 0.0
      %5229 = vmatpush2.msra.mxu0 0.0
      %5230 = vmatprep.subr.mxu0 0.0
      %5231 = vmatpush2.msra.mxu0 0.0
      %5232 = vmatprep.subr.mxu0 0.0
      %5233 = vmatpush2.msra.mxu0 0.0
      %5234 = vmatprep.subr.mxu0 0.0
      %5235 = vmatpush2.msra.mxu0 0.0
      %5236 = vmatprep.subr.mxu0 0.0
      %5237 = vmatpush2.msra.mxu0 0.0
      %5238 = vmatprep.subr.mxu0 0.0
      %5239 = vmatpush2.msra.mxu0 0.0
      %5240 = vmatprep.subr.mxu0 0.0
      %5241 = vmatpush2.msra.mxu0 0.0
      %5242 = vmatprep.subr.mxu0 0.0
      %5243 = vmatpush2.msra.mxu0 0.0
      %5244 = vmatprep.subr.mxu0 0.0
      %5245 = vmatpush2.msra.mxu0 0.0
      %5246 = vmatprep.subr.mxu0 0.0
      %5247 = vmatpush2.msra.mxu0 0.0
      %5248 = vmatprep.subr.mxu0 0.0
      %5249 = vmatpush2.msra.mxu0 0.0
      %5250 = vmatprep.subr.mxu0 0.0
      %5251 = vmatpush2.msra.mxu0 0.0
      %5252 = vmatprep.subr.mxu0 0.0
      %5253 = vmatpush2.msra.mxu0 0.0
      %5254 = vmatprep.subr.mxu0 0.0
      %5255 = vmatpush2.msra.mxu0 0.0
      %5256 = vmatprep.mubr.f32.mxu0 0.0
      %5257 = vmatmul.mubr.f32.gmra.mxu0 %v5097
      %v5258 = vpop.f32.mrf.mxu0
      %v5259 = vadd.f32 0.0, %v5258
      %v5260 = vpop.f32.mrf.mxu0
      %5261 = vmatprep.mubr.f32.mxu0 0.0
      %5262 = vmatmul.mubr.f32.gmra.mxu0 %v5100
      %v5263 = vpop.f32.mrf.mxu0
      %v5264 = vadd.f32 0.0, %v5263
      %v5265 = vpop.f32.mrf.mxu0
      %5266 = vmatprep.mubr.f32.mxu0 0.0
      %5267 = vmatmul.mubr.f32.gmra.mxu0 %v5103
      %v5268 = vpop.f32.mrf.mxu0
      %v5269 = vadd.f32 0.0, %v5268
      %v5270 = vpop.f32.mrf.mxu0
      %5271 = vmatprep.mubr.f32.mxu0 0.0
      %5272 = vmatmul.mubr.f32.gmra.mxu0 %v5106
      %v5273 = vpop.f32.mrf.mxu0
      %v5274 = vadd.f32 0.0, %v5273
      %v5275 = vpop.f32.mrf.mxu0
      %5276 = vmatprep.mubr.f32.mxu0 0.0
      %5277 = vmatmul.mubr.f32.gmra.mxu0 %v5109
      %v5278 = vpop.f32.mrf.mxu0
      %v5279 = vadd.f32 0.0, %v5278
      %v5280 = vpop.f32.mrf.mxu0
      %5281 = vmatprep.mubr.f32.mxu0 0.0
      %5282 = vmatmul.mubr.f32.gmra.mxu0 %v5112
      %v5283 = vpop.f32.mrf.mxu0
      %v5284 = vadd.f32 0.0, %v5283
      %v5285 = vpop.f32.mrf.mxu0
      %5286 = vmatprep.mubr.f32.mxu0 0.0
      %5287 = vmatmul.mubr.f32.gmra.mxu0 %v5115
      %v5288 = vpop.f32.mrf.mxu0
      %v5289 = vadd.f32 0.0, %v5288
      %v5290 = vpop.f32.mrf.mxu0
      %5291 = vmatprep.mubr.f32.mxu0 0.0
      %5292 = vmatmul.mubr.f32.gmra.mxu0 %v5118
      %v5293 = vpop.f32.mrf.mxu0
      %v5294 = vadd.f32 0.0, %v5293
      %v5295 = vpop.f32.mrf.mxu0
      %5296 = vmatprep.mubr.f32.mxu0 0.0
      %5297 = vmatmul.mubr.f32.gmra.mxu0 %v5121
      %v5298 = vpop.f32.mrf.mxu0
      %v5299 = vadd.f32 0.0, %v5298
      %v5300 = vpop.f32.mrf.mxu0
      %5301 = vmatprep.mubr.f32.mxu0 0.0
      %5302 = vmatmul.mubr.f32.gmra.mxu0 %v5124
      %v5303 = vpop.f32.mrf.mxu0
      %v5304 = vadd.f32 0.0, %v5303
      %v5305 = vpop.f32.mrf.mxu0
      %5306 = vmatprep.mubr.f32.mxu0 0.0
      %5307 = vmatmul.mubr.f32.gmra.mxu0 %v5127
      %v5308 = vpop.f32.mrf.mxu0
      %v5309 = vadd.f32 0.0, %v5308
      %v5310 = vpop.f32.mrf.mxu0
      %5311 = vmatprep.mubr.f32.mxu0 0.0
      %5312 = vmatmul.mubr.f32.gmra.mxu0 %v5130
      %v5313 = vpop.f32.mrf.mxu0
      %v5314 = vadd.f32 0.0, %v5313
      %v5315 = vpop.f32.mrf.mxu0
      %5316 = vmatprep.mubr.f32.mxu0 0.0
      %5317 = vmatmul.mubr.f32.gmra.mxu0 %v5133
      %v5318 = vpop.f32.mrf.mxu0
      %v5319 = vadd.f32 0.0, %v5318
      %v5320 = vpop.f32.mrf.mxu0
      %5321 = vmatprep.mubr.f32.mxu0 0.0
      %5322 = vmatmul.mubr.f32.gmra.mxu0 %v5136
      %v5323 = vpop.f32.mrf.mxu0
      %v5324 = vadd.f32 0.0, %v5323
      %v5325 = vpop.f32.mrf.mxu0
      %5326 = vmatprep.mubr.f32.mxu0 0.0
      %5327 = vmatmul.mubr.f32.gmra.mxu0 %v5139
      %v5328 = vpop.f32.mrf.mxu0
      %v5329 = vadd.f32 0.0, %v5328
      %v5330 = vpop.f32.mrf.mxu0
      %5331 = vmatprep.mubr.f32.mxu0 0.0
      %5332 = vmatmul.mubr.f32.gmra.mxu0 %v5142
      %v5333 = vpop.f32.mrf.mxu0
      %v5334 = vadd.f32 0.0, %v5333
      %v5335 = vpop.f32.mrf.mxu0
      %5336 = vmatprep.mubr.f32.mxu0 0.0
      %5337 = vmatmul.mubr.f32.gmra.mxu0 %v5145
      %v5338 = vpop.f32.mrf.mxu0
      %v5339 = vadd.f32 0.0, %v5338
      %v5340 = vpop.f32.mrf.mxu0
      %5341 = vmatprep.mubr.f32.mxu0 0.0
      %5342 = vmatmul.mubr.f32.gmra.mxu0 %v5148
      %v5343 = vpop.f32.mrf.mxu0
      %v5344 = vadd.f32 0.0, %v5343
      %v5345 = vpop.f32.mrf.mxu0
      %5346 = vmatprep.mubr.f32.mxu0 0.0
      %5347 = vmatmul.mubr.f32.gmra.mxu0 %v5151
      %v5348 = vpop.f32.mrf.mxu0
      %v5349 = vadd.f32 0.0, %v5348
      %v5350 = vpop.f32.mrf.mxu0
      %5351 = vmatprep.mubr.f32.mxu0 0.0
      %5352 = vmatmul.mubr.f32.gmra.mxu0 %v5154
      %v5353 = vpop.f32.mrf.mxu0
      %v5354 = vadd.f32 0.0, %v5353
      %v5355 = vpop.f32.mrf.mxu0
      %5356 = vmatprep.mubr.f32.mxu0 0.0
      %5357 = vmatmul.mubr.f32.gmra.mxu0 %v5157
      %v5358 = vpop.f32.mrf.mxu0
      %v5359 = vadd.f32 0.0, %v5358
      %v5360 = vpop.f32.mrf.mxu0
      %5361 = vmatprep.mubr.f32.mxu0 0.0
      %5362 = vmatmul.mubr.f32.gmra.mxu0 %v5160
      %v5363 = vpop.f32.mrf.mxu0
      %v5364 = vadd.f32 0.0, %v5363
      %v5365 = vpop.f32.mrf.mxu0
      %5366 = vmatprep.mubr.f32.mxu0 0.0
      %5367 = vmatmul.mubr.f32.gmra.mxu0 %v5163
      %v5368 = vpop.f32.mrf.mxu0
      %v5369 = vadd.f32 0.0, %v5368
      %v5370 = vpop.f32.mrf.mxu0
      %5371 = vmatprep.mubr.f32.mxu0 0.0
      %5372 = vmatmul.mubr.f32.gmra.mxu0 %v5166
      %v5373 = vpop.f32.mrf.mxu0
      %v5374 = vadd.f32 0.0, %v5373
      %v5375 = vpop.f32.mrf.mxu0
      %5376 = vmatprep.mubr.f32.mxu0 0.0
      %5377 = vmatmul.mubr.f32.gmra.mxu0 %v5169
      %v5378 = vpop.f32.mrf.mxu0
      %v5379 = vadd.f32 0.0, %v5378
      %v5380 = vpop.f32.mrf.mxu0
      %5381 = vmatprep.mubr.f32.mxu0 0.0
      %5382 = vmatmul.mubr.f32.gmra.mxu0 %v5172
      %v5383 = vpop.f32.mrf.mxu0
      %v5384 = vadd.f32 0.0, %v5383
      %v5385 = vpop.f32.mrf.mxu0
      %5386 = vmatprep.mubr.f32.mxu0 0.0
      %5387 = vmatmul.mubr.f32.gmra.mxu0 %v5175
      %v5388 = vpop.f32.mrf.mxu0
      %v5389 = vadd.f32 0.0, %v5388
      %v5390 = vpop.f32.mrf.mxu0
      %5391 = vmatprep.mubr.f32.mxu0 0.0
      %5392 = vmatmul.mubr.f32.gmra.mxu0 %v5178
      %v5393 = vpop.f32.mrf.mxu0
      %v5394 = vadd.f32 0.0, %v5393
      %v5395 = vpop.f32.mrf.mxu0
      %5396 = vmatprep.mubr.f32.mxu0 0.0
      %5397 = vmatmul.mubr.f32.gmra.mxu0 %v5181
      %v5398 = vpop.f32.mrf.mxu0
      %v5399 = vadd.f32 0.0, %v5398
      %v5400 = vpop.f32.mrf.mxu0
      %5401 = vmatprep.mubr.f32.mxu0 0.0
      %5402 = vmatmul.mubr.f32.gmra.mxu0 %v5184
      %v5403 = vpop.f32.mrf.mxu0
      %v5404 = vadd.f32 0.0, %v5403
      %v5405 = vpop.f32.mrf.mxu0
      %5406 = vmatprep.mubr.f32.mxu0 0.0
      %5407 = vmatmul.mubr.f32.gmra.mxu0 %v5187
      %v5408 = vpop.f32.mrf.mxu0
      %v5409 = vadd.f32 0.0, %v5408
      %v5410 = vpop.f32.mrf.mxu0
      %5411 = vmatprep.mubr.f32.mxu0 0.0
      %5412 = vmatmul.mubr.f32.gmra.mxu0 %v5190
      %v5413 = vpop.f32.mrf.mxu0
      %v5414 = vadd.f32 0.0, %v5413
      %v5415 = vpop.f32.mrf.mxu0
      %5416 = vdwg.mxu0
      %v5417 = vadd.f32 %v5030, %v5259
      %v5418 = vadd.f32 %v5031, %v5264
      %v5419 = vadd.f32 %v5032, %v5269
      %v5420 = vadd.f32 %v5033, %v5274
      %v5421 = vadd.f32 %v5034, %v5279
      %v5422 = vadd.f32 %v5035, %v5284
      %v5423 = vadd.f32 %v5036, %v5289
      %v5424 = vadd.f32 %v5037, %v5294
      %v5425 = vadd.f32 %v5038, %v5299
      %v5426 = vadd.f32 %v5039, %v5304
      %v5427 = vadd.f32 %v5040, %v5309
      %v5428 = vadd.f32 %v5041, %v5314
      %v5429 = vadd.f32 %v5042, %v5319
      %v5430 = vadd.f32 %v5043, %v5324
      %v5431 = vadd.f32 %v5044, %v5329
      %v5432 = vadd.f32 %v5045, %v5334
      %v5433 = vadd.f32 %v5046, %v5339
      %v5434 = vadd.f32 %v5047, %v5344
      %v5435 = vadd.f32 %v5048, %v5349
      %v5436 = vadd.f32 %v5049, %v5354
      %v5437 = vadd.f32 %v5050, %v5359
      %v5438 = vadd.f32 %v5051, %v5364
      %v5439 = vadd.f32 %v5052, %v5369
      %v5440 = vadd.f32 %v5053, %v5374
      %v5441 = vadd.f32 %v5054, %v5379
      %v5442 = vadd.f32 %v5055, %v5384
      %v5443 = vadd.f32 %v5056, %v5389
      %v5444 = vadd.f32 %v5057, %v5394
      %v5445 = vadd.f32 %v5058, %v5399
      %v5446 = vadd.f32 %v5059, %v5404
      %v5447 = vadd.f32 %v5060, %v5409
      %v5448 = vadd.f32 %v5061, %v5414
      %v5449 = vld [vmem:[%s3933 + $0x1] sm:$0xff]
      %v5450 = vld [vmem:[%s3933 + $0x9] sm:$0xff]
      %v5451 = vld [vmem:[%s3933 + $0x19] sm:$0xff]
      %v5452 = vld [vmem:[%s3933 + $0x21] sm:$0xff]
      %v5453 = vld [vmem:[%s3933 + $0x31] sm:$0xff]
      %v5454 = vld [vmem:[%s3933 + $0x39] sm:$0xff]
      %v5455 = vld [vmem:[%s3933 + $0x49] sm:$0xff]
      %v5456 = vld [vmem:[%s3933 + $0x51] sm:$0xff]
      %v5457 = vld [vmem:[%s3933 + $0x61] sm:$0xff]
      %v5458 = vld [vmem:[%s3933 + $0x69] sm:$0xff]
      %v5459 = vld [vmem:[%s3933 + $0x79] sm:$0xff]
      %v5460 = vld [vmem:[%s3933 + $0x81] sm:$0xff]
      %v5461 = vld [vmem:[%s3933 + $0x91] sm:$0xff]
      %v5462 = vld [vmem:[%s3933 + $0x99] sm:$0xff]
      %v5463 = vld [vmem:[%s3933 + $0xa9] sm:$0xff]
      %v5464 = vld [vmem:[%s3933 + $0xb1] sm:$0xff]
      %v5465 = vld [vmem:[%s3933 + $0xc1] sm:$0xff]
      %v5466 = vld [vmem:[%s3933 + $0xc9] sm:$0xff]
      %v5467 = vld [vmem:[%s3933 + $0xd9] sm:$0xff]
      %v5468 = vld [vmem:[%s3933 + $0xe1] sm:$0xff]
      %v5469 = vld [vmem:[%s3933 + $0xf1] sm:$0xff]
      %v5470 = vld [vmem:[%s3933 + $0xf9] sm:$0xff]
      %v5471 = vld [vmem:[%s3933 + $0x109] sm:$0xff]
      %v5472 = vld [vmem:[%s3933 + $0x111] sm:$0xff]
      %v5473 = vld [vmem:[%s3933 + $0x121] sm:$0xff]
      %v5474 = vld [vmem:[%s3933 + $0x129] sm:$0xff]
      %v5475 = vld [vmem:[%s3933 + $0x139] sm:$0xff]
      %v5476 = vld [vmem:[%s3933 + $0x141] sm:$0xff]
      %v5477 = vld [vmem:[%s3933 + $0x151] sm:$0xff]
      %v5478 = vld [vmem:[%s3933 + $0x159] sm:$0xff]
      %v5479 = vld [vmem:[%s3933 + $0x169] sm:$0xff]
      %v5480 = vld [vmem:[%s3933 + $0x171] sm:$0xff]
      %s5481 = scalar_lea.vmem %s5, 32
      %v5482 = vld [vmem:[%s5481] sm:$0xff]
      %v5484 = vsel %vm3877, %v5449, 0
      %v5487 = vsel %vm3877, %v5450, 0
      %v5490 = vsel %vm3877, %v5451, 0
      %v5493 = vsel %vm3877, %v5452, 0
      %v5496 = vsel %vm3877, %v5453, 0
      %v5499 = vsel %vm3877, %v5454, 0
      %v5502 = vsel %vm3877, %v5455, 0
      %v5505 = vsel %vm3877, %v5456, 0
      %v5508 = vsel %vm3877, %v5457, 0
      %v5511 = vsel %vm3877, %v5458, 0
      %v5514 = vsel %vm3877, %v5459, 0
      %v5517 = vsel %vm3877, %v5460, 0
      %v5520 = vsel %vm3877, %v5461, 0
      %v5523 = vsel %vm3877, %v5462, 0
      %v5526 = vsel %vm3877, %v5463, 0
      %v5529 = vsel %vm3877, %v5464, 0
      %v5532 = vsel %vm3877, %v5465, 0
      %v5535 = vsel %vm3877, %v5466, 0
      %v5538 = vsel %vm3877, %v5467, 0
      %v5541 = vsel %vm3877, %v5468, 0
      %v5544 = vsel %vm3877, %v5469, 0
      %v5547 = vsel %vm3877, %v5470, 0
      %v5550 = vsel %vm3877, %v5471, 0
      %v5553 = vsel %vm3877, %v5472, 0
      %v5556 = vsel %vm3877, %v5473, 0
      %v5559 = vsel %vm3877, %v5474, 0
      %v5562 = vsel %vm3877, %v5475, 0
      %v5565 = vsel %vm3877, %v5476, 0
      %v5568 = vsel %vm3877, %v5477, 0
      %v5571 = vsel %vm3877, %v5478, 0
      %v5574 = vsel %vm3877, %v5479, 0
      %v5577 = vsel %vm3877, %v5480, 0
      %5579 = vmatprep.subr.mxu0 0.0
      %5580 = vmatpush1.msra.mxu0 0.0
      %5581 = vmatprep.subr.mxu0 0.0
      %5582 = vmatpush1.msra.mxu0 0.0
      %5583 = vmatprep.subr.mxu0 0.0
      %5584 = vmatpush1.msra.mxu0 0.0
      %5585 = vmatprep.subr.mxu0 0.0
      %5586 = vmatpush1.msra.mxu0 0.0
      %5587 = vmatprep.subr.mxu0 0.0
      %5588 = vmatpush1.msra.mxu0 0.0
      %5589 = vmatprep.subr.mxu0 0.0
      %5590 = vmatpush1.msra.mxu0 0.0
      %5591 = vmatprep.subr.mxu0 0.0
      %5592 = vmatpush1.msra.mxu0 0.0
      %5593 = vmatprep.subr.mxu0 0.0
      %5594 = vmatpush1.msra.mxu0 0.0
      %5595 = vmatprep.subr.mxu0 0.0
      %5596 = vmatpush1.msra.mxu0 0.0
      %5597 = vmatprep.subr.mxu0 0.0
      %5598 = vmatpush1.msra.mxu0 0.0
      %5599 = vmatprep.subr.mxu0 0.0
      %5600 = vmatpush1.msra.mxu0 0.0
      %5601 = vmatprep.subr.mxu0 0.0
      %5602 = vmatpush1.msra.mxu0 0.0
      %5603 = vmatprep.subr.mxu0 0.0
      %5604 = vmatpush1.msra.mxu0 0.0
      %5605 = vmatprep.subr.mxu0 0.0
      %5606 = vmatpush1.msra.mxu0 0.0
      %5607 = vmatprep.subr.mxu0 0.0
      %5608 = vmatpush1.msra.mxu0 0.0
      %5609 = vmatprep.subr.mxu0 0.0
      %5610 = vmatpush1.msra.mxu0 %v5482
      %5611 = vmatprep.subr.mxu0 0.0
      %5612 = vmatpush2.msra.mxu0 0.0
      %5613 = vmatprep.subr.mxu0 0.0
      %5614 = vmatpush2.msra.mxu0 0.0
      %5615 = vmatprep.subr.mxu0 0.0
      %5616 = vmatpush2.msra.mxu0 0.0
      %5617 = vmatprep.subr.mxu0 0.0
      %5618 = vmatpush2.msra.mxu0 0.0
      %5619 = vmatprep.subr.mxu0 0.0
      %5620 = vmatpush2.msra.mxu0 0.0
      %5621 = vmatprep.subr.mxu0 0.0
      %5622 = vmatpush2.msra.mxu0 0.0
      %5623 = vmatprep.subr.mxu0 0.0
      %5624 = vmatpush2.msra.mxu0 0.0
      %5625 = vmatprep.subr.mxu0 0.0
      %5626 = vmatpush2.msra.mxu0 0.0
      %5627 = vmatprep.subr.mxu0 0.0
      %5628 = vmatpush2.msra.mxu0 0.0
      %5629 = vmatprep.subr.mxu0 0.0
      %5630 = vmatpush2.msra.mxu0 0.0
      %5631 = vmatprep.subr.mxu0 0.0
      %5632 = vmatpush2.msra.mxu0 0.0
      %5633 = vmatprep.subr.mxu0 0.0
      %5634 = vmatpush2.msra.mxu0 0.0
      %5635 = vmatprep.subr.mxu0 0.0
      %5636 = vmatpush2.msra.mxu0 0.0
      %5637 = vmatprep.subr.mxu0 0.0
      %5638 = vmatpush2.msra.mxu0 0.0
      %5639 = vmatprep.subr.mxu0 0.0
      %5640 = vmatpush2.msra.mxu0 0.0
      %5641 = vmatprep.subr.mxu0 0.0
      %5642 = vmatpush2.msra.mxu0 0.0
      %5643 = vmatprep.mubr.f32.mxu0 0.0
      %5644 = vmatmul.mubr.f32.gmra.mxu0 %v5484
      %v5645 = vpop.f32.mrf.mxu0
      %v5646 = vadd.f32 0.0, %v5645
      %v5647 = vpop.f32.mrf.mxu0
      %5648 = vmatprep.mubr.f32.mxu0 0.0
      %5649 = vmatmul.mubr.f32.gmra.mxu0 %v5487
      %v5650 = vpop.f32.mrf.mxu0
      %v5651 = vadd.f32 0.0, %v5650
      %v5652 = vpop.f32.mrf.mxu0
      %5653 = vmatprep.mubr.f32.mxu0 0.0
      %5654 = vmatmul.mubr.f32.gmra.mxu0 %v5490
      %v5655 = vpop.f32.mrf.mxu0
      %v5656 = vadd.f32 0.0, %v5655
      %v5657 = vpop.f32.mrf.mxu0
      %5658 = vmatprep.mubr.f32.mxu0 0.0
      %5659 = vmatmul.mubr.f32.gmra.mxu0 %v5493
      %v5660 = vpop.f32.mrf.mxu0
      %v5661 = vadd.f32 0.0, %v5660
      %v5662 = vpop.f32.mrf.mxu0
      %5663 = vmatprep.mubr.f32.mxu0 0.0
      %5664 = vmatmul.mubr.f32.gmra.mxu0 %v5496
      %v5665 = vpop.f32.mrf.mxu0
      %v5666 = vadd.f32 0.0, %v5665
      %v5667 = vpop.f32.mrf.mxu0
      %5668 = vmatprep.mubr.f32.mxu0 0.0
      %5669 = vmatmul.mubr.f32.gmra.mxu0 %v5499
      %v5670 = vpop.f32.mrf.mxu0
      %v5671 = vadd.f32 0.0, %v5670
      %v5672 = vpop.f32.mrf.mxu0
      %5673 = vmatprep.mubr.f32.mxu0 0.0
      %5674 = vmatmul.mubr.f32.gmra.mxu0 %v5502
      %v5675 = vpop.f32.mrf.mxu0
      %v5676 = vadd.f32 0.0, %v5675
      %v5677 = vpop.f32.mrf.mxu0
      %5678 = vmatprep.mubr.f32.mxu0 0.0
      %5679 = vmatmul.mubr.f32.gmra.mxu0 %v5505
      %v5680 = vpop.f32.mrf.mxu0
      %v5681 = vadd.f32 0.0, %v5680
      %v5682 = vpop.f32.mrf.mxu0
      %5683 = vmatprep.mubr.f32.mxu0 0.0
      %5684 = vmatmul.mubr.f32.gmra.mxu0 %v5508
      %v5685 = vpop.f32.mrf.mxu0
      %v5686 = vadd.f32 0.0, %v5685
      %v5687 = vpop.f32.mrf.mxu0
      %5688 = vmatprep.mubr.f32.mxu0 0.0
      %5689 = vmatmul.mubr.f32.gmra.mxu0 %v5511
      %v5690 = vpop.f32.mrf.mxu0
      %v5691 = vadd.f32 0.0, %v5690
      %v5692 = vpop.f32.mrf.mxu0
      %5693 = vmatprep.mubr.f32.mxu0 0.0
      %5694 = vmatmul.mubr.f32.gmra.mxu0 %v5514
      %v5695 = vpop.f32.mrf.mxu0
      %v5696 = vadd.f32 0.0, %v5695
      %v5697 = vpop.f32.mrf.mxu0
      %5698 = vmatprep.mubr.f32.mxu0 0.0
      %5699 = vmatmul.mubr.f32.gmra.mxu0 %v5517
      %v5700 = vpop.f32.mrf.mxu0
      %v5701 = vadd.f32 0.0, %v5700
      %v5702 = vpop.f32.mrf.mxu0
      %5703 = vmatprep.mubr.f32.mxu0 0.0
      %5704 = vmatmul.mubr.f32.gmra.mxu0 %v5520
      %v5705 = vpop.f32.mrf.mxu0
      %v5706 = vadd.f32 0.0, %v5705
      %v5707 = vpop.f32.mrf.mxu0
      %5708 = vmatprep.mubr.f32.mxu0 0.0
      %5709 = vmatmul.mubr.f32.gmra.mxu0 %v5523
      %v5710 = vpop.f32.mrf.mxu0
      %v5711 = vadd.f32 0.0, %v5710
      %v5712 = vpop.f32.mrf.mxu0
      %5713 = vmatprep.mubr.f32.mxu0 0.0
      %5714 = vmatmul.mubr.f32.gmra.mxu0 %v5526
      %v5715 = vpop.f32.mrf.mxu0
      %v5716 = vadd.f32 0.0, %v5715
      %v5717 = vpop.f32.mrf.mxu0
      %5718 = vmatprep.mubr.f32.mxu0 0.0
      %5719 = vmatmul.mubr.f32.gmra.mxu0 %v5529
      %v5720 = vpop.f32.mrf.mxu0
      %v5721 = vadd.f32 0.0, %v5720
      %v5722 = vpop.f32.mrf.mxu0
      %5723 = vmatprep.mubr.f32.mxu0 0.0
      %5724 = vmatmul.mubr.f32.gmra.mxu0 %v5532
      %v5725 = vpop.f32.mrf.mxu0
      %v5726 = vadd.f32 0.0, %v5725
      %v5727 = vpop.f32.mrf.mxu0
      %5728 = vmatprep.mubr.f32.mxu0 0.0
      %5729 = vmatmul.mubr.f32.gmra.mxu0 %v5535
      %v5730 = vpop.f32.mrf.mxu0
      %v5731 = vadd.f32 0.0, %v5730
      %v5732 = vpop.f32.mrf.mxu0
      %5733 = vmatprep.mubr.f32.mxu0 0.0
      %5734 = vmatmul.mubr.f32.gmra.mxu0 %v5538
      %v5735 = vpop.f32.mrf.mxu0
      %v5736 = vadd.f32 0.0, %v5735
      %v5737 = vpop.f32.mrf.mxu0
      %5738 = vmatprep.mubr.f32.mxu0 0.0
      %5739 = vmatmul.mubr.f32.gmra.mxu0 %v5541
      %v5740 = vpop.f32.mrf.mxu0
      %v5741 = vadd.f32 0.0, %v5740
      %v5742 = vpop.f32.mrf.mxu0
      %5743 = vmatprep.mubr.f32.mxu0 0.0
      %5744 = vmatmul.mubr.f32.gmra.mxu0 %v5544
      %v5745 = vpop.f32.mrf.mxu0
      %v5746 = vadd.f32 0.0, %v5745
      %v5747 = vpop.f32.mrf.mxu0
      %5748 = vmatprep.mubr.f32.mxu0 0.0
      %5749 = vmatmul.mubr.f32.gmra.mxu0 %v5547
      %v5750 = vpop.f32.mrf.mxu0
      %v5751 = vadd.f32 0.0, %v5750
      %v5752 = vpop.f32.mrf.mxu0
      %5753 = vmatprep.mubr.f32.mxu0 0.0
      %5754 = vmatmul.mubr.f32.gmra.mxu0 %v5550
      %v5755 = vpop.f32.mrf.mxu0
      %v5756 = vadd.f32 0.0, %v5755
      %v5757 = vpop.f32.mrf.mxu0
      %5758 = vmatprep.mubr.f32.mxu0 0.0
      %5759 = vmatmul.mubr.f32.gmra.mxu0 %v5553
      %v5760 = vpop.f32.mrf.mxu0
      %v5761 = vadd.f32 0.0, %v5760
      %v5762 = vpop.f32.mrf.mxu0
      %5763 = vmatprep.mubr.f32.mxu0 0.0
      %5764 = vmatmul.mubr.f32.gmra.mxu0 %v5556
      %v5765 = vpop.f32.mrf.mxu0
      %v5766 = vadd.f32 0.0, %v5765
      %v5767 = vpop.f32.mrf.mxu0
      %5768 = vmatprep.mubr.f32.mxu0 0.0
      %5769 = vmatmul.mubr.f32.gmra.mxu0 %v5559
      %v5770 = vpop.f32.mrf.mxu0
      %v5771 = vadd.f32 0.0, %v5770
      %v5772 = vpop.f32.mrf.mxu0
      %5773 = vmatprep.mubr.f32.mxu0 0.0
      %5774 = vmatmul.mubr.f32.gmra.mxu0 %v5562
      %v5775 = vpop.f32.mrf.mxu0
      %v5776 = vadd.f32 0.0, %v5775
      %v5777 = vpop.f32.mrf.mxu0
      %5778 = vmatprep.mubr.f32.mxu0 0.0
      %5779 = vmatmul.mubr.f32.gmra.mxu0 %v5565
      %v5780 = vpop.f32.mrf.mxu0
      %v5781 = vadd.f32 0.0, %v5780
      %v5782 = vpop.f32.mrf.mxu0
      %5783 = vmatprep.mubr.f32.mxu0 0.0
      %5784 = vmatmul.mubr.f32.gmra.mxu0 %v5568
      %v5785 = vpop.f32.mrf.mxu0
      %v5786 = vadd.f32 0.0, %v5785
      %v5787 = vpop.f32.mrf.mxu0
      %5788 = vmatprep.mubr.f32.mxu0 0.0
      %5789 = vmatmul.mubr.f32.gmra.mxu0 %v5571
      %v5790 = vpop.f32.mrf.mxu0
      %v5791 = vadd.f32 0.0, %v5790
      %v5792 = vpop.f32.mrf.mxu0
      %5793 = vmatprep.mubr.f32.mxu0 0.0
      %5794 = vmatmul.mubr.f32.gmra.mxu0 %v5574
      %v5795 = vpop.f32.mrf.mxu0
      %v5796 = vadd.f32 0.0, %v5795
      %v5797 = vpop.f32.mrf.mxu0
      %5798 = vmatprep.mubr.f32.mxu0 0.0
      %5799 = vmatmul.mubr.f32.gmra.mxu0 %v5577
      %v5800 = vpop.f32.mrf.mxu0
      %v5801 = vadd.f32 0.0, %v5800
      %v5802 = vpop.f32.mrf.mxu0
      %5803 = vdwg.mxu0
      %v5804 = vadd.f32 %v5417, %v5646
      %v5805 = vadd.f32 %v5418, %v5651
      %v5806 = vadd.f32 %v5419, %v5656
      %v5807 = vadd.f32 %v5420, %v5661
      %v5808 = vadd.f32 %v5421, %v5666
      %v5809 = vadd.f32 %v5422, %v5671
      %v5810 = vadd.f32 %v5423, %v5676
      %v5811 = vadd.f32 %v5424, %v5681
      %v5812 = vadd.f32 %v5425, %v5686
      %v5813 = vadd.f32 %v5426, %v5691
      %v5814 = vadd.f32 %v5427, %v5696
      %v5815 = vadd.f32 %v5428, %v5701
      %v5816 = vadd.f32 %v5429, %v5706
      %v5817 = vadd.f32 %v5430, %v5711
      %v5818 = vadd.f32 %v5431, %v5716
      %v5819 = vadd.f32 %v5432, %v5721
      %v5820 = vadd.f32 %v5433, %v5726
      %v5821 = vadd.f32 %v5434, %v5731
      %v5822 = vadd.f32 %v5435, %v5736
      %v5823 = vadd.f32 %v5436, %v5741
      %v5824 = vadd.f32 %v5437, %v5746
      %v5825 = vadd.f32 %v5438, %v5751
      %v5826 = vadd.f32 %v5439, %v5756
      %v5827 = vadd.f32 %v5440, %v5761
      %v5828 = vadd.f32 %v5441, %v5766
      %v5829 = vadd.f32 %v5442, %v5771
      %v5830 = vadd.f32 %v5443, %v5776
      %v5831 = vadd.f32 %v5444, %v5781
      %v5832 = vadd.f32 %v5445, %v5786
      %v5833 = vadd.f32 %v5446, %v5791
      %v5834 = vadd.f32 %v5447, %v5796
      %v5835 = vadd.f32 %v5448, %v5801
      %v5836 = vld [vmem:[%s3933 + $0x2] sm:$0xff]
      %v5837 = vld [vmem:[%s3933 + $0xa] sm:$0xff]
      %v5838 = vld [vmem:[%s3933 + $0x1a] sm:$0xff]
      %v5839 = vld [vmem:[%s3933 + $0x22] sm:$0xff]
      %v5840 = vld [vmem:[%s3933 + $0x32] sm:$0xff]
      %v5841 = vld [vmem:[%s3933 + $0x3a] sm:$0xff]
      %v5842 = vld [vmem:[%s3933 + $0x4a] sm:$0xff]
      %v5843 = vld [vmem:[%s3933 + $0x52] sm:$0xff]
      %v5844 = vld [vmem:[%s3933 + $0x62] sm:$0xff]
      %v5845 = vld [vmem:[%s3933 + $0x6a] sm:$0xff]
      %v5846 = vld [vmem:[%s3933 + $0x7a] sm:$0xff]
      %v5847 = vld [vmem:[%s3933 + $0x82] sm:$0xff]
      %v5848 = vld [vmem:[%s3933 + $0x92] sm:$0xff]
      %v5849 = vld [vmem:[%s3933 + $0x9a] sm:$0xff]
      %v5850 = vld [vmem:[%s3933 + $0xaa] sm:$0xff]
      %v5851 = vld [vmem:[%s3933 + $0xb2] sm:$0xff]
      %v5852 = vld [vmem:[%s3933 + $0xc2] sm:$0xff]
      %v5853 = vld [vmem:[%s3933 + $0xca] sm:$0xff]
      %v5854 = vld [vmem:[%s3933 + $0xda] sm:$0xff]
      %v5855 = vld [vmem:[%s3933 + $0xe2] sm:$0xff]
      %v5856 = vld [vmem:[%s3933 + $0xf2] sm:$0xff]
      %v5857 = vld [vmem:[%s3933 + $0xfa] sm:$0xff]
      %v5858 = vld [vmem:[%s3933 + $0x10a] sm:$0xff]
      %v5859 = vld [vmem:[%s3933 + $0x112] sm:$0xff]
      %v5860 = vld [vmem:[%s3933 + $0x122] sm:$0xff]
      %v5861 = vld [vmem:[%s3933 + $0x12a] sm:$0xff]
      %v5862 = vld [vmem:[%s3933 + $0x13a] sm:$0xff]
      %v5863 = vld [vmem:[%s3933 + $0x142] sm:$0xff]
      %v5864 = vld [vmem:[%s3933 + $0x152] sm:$0xff]
      %v5865 = vld [vmem:[%s3933 + $0x15a] sm:$0xff]
      %v5866 = vld [vmem:[%s3933 + $0x16a] sm:$0xff]
      %v5867 = vld [vmem:[%s3933 + $0x172] sm:$0xff]
      %s5868 = scalar_lea.vmem %s5, 40
      %v5869 = vld [vmem:[%s5868] sm:$0xff]
      %v5871 = vsel %vm3877, %v5836, 0
      %v5874 = vsel %vm3877, %v5837, 0
      %v5877 = vsel %vm3877, %v5838, 0
      %v5880 = vsel %vm3877, %v5839, 0
      %v5883 = vsel %vm3877, %v5840, 0
      %v5886 = vsel %vm3877, %v5841, 0
      %v5889 = vsel %vm3877, %v5842, 0
      %v5892 = vsel %vm3877, %v5843, 0
      %v5895 = vsel %vm3877, %v5844, 0
      %v5898 = vsel %vm3877, %v5845, 0
      %v5901 = vsel %vm3877, %v5846, 0
      %v5904 = vsel %vm3877, %v5847, 0
      %v5907 = vsel %vm3877, %v5848, 0
      %v5910 = vsel %vm3877, %v5849, 0
      %v5913 = vsel %vm3877, %v5850, 0
      %v5916 = vsel %vm3877, %v5851, 0
      %v5919 = vsel %vm3877, %v5852, 0
      %v5922 = vsel %vm3877, %v5853, 0
      %v5925 = vsel %vm3877, %v5854, 0
      %v5928 = vsel %vm3877, %v5855, 0
      %v5931 = vsel %vm3877, %v5856, 0
      %v5934 = vsel %vm3877, %v5857, 0
      %v5937 = vsel %vm3877, %v5858, 0
      %v5940 = vsel %vm3877, %v5859, 0
      %v5943 = vsel %vm3877, %v5860, 0
      %v5946 = vsel %vm3877, %v5861, 0
      %v5949 = vsel %vm3877, %v5862, 0
      %v5952 = vsel %vm3877, %v5863, 0
      %v5955 = vsel %vm3877, %v5864, 0
      %v5958 = vsel %vm3877, %v5865, 0
      %v5961 = vsel %vm3877, %v5866, 0
      %v5964 = vsel %vm3877, %v5867, 0
      %5966 = vmatprep.subr.mxu0 0.0
      %5967 = vmatpush1.msra.mxu0 0.0
      %5968 = vmatprep.subr.mxu0 0.0
      %5969 = vmatpush1.msra.mxu0 0.0
      %5970 = vmatprep.subr.mxu0 0.0
      %5971 = vmatpush1.msra.mxu0 0.0
      %5972 = vmatprep.subr.mxu0 0.0
      %5973 = vmatpush1.msra.mxu0 0.0
      %5974 = vmatprep.subr.mxu0 0.0
      %5975 = vmatpush1.msra.mxu0 0.0
      %5976 = vmatprep.subr.mxu0 0.0
      %5977 = vmatpush1.msra.mxu0 0.0
      %5978 = vmatprep.subr.mxu0 0.0
      %5979 = vmatpush1.msra.mxu0 0.0
      %5980 = vmatprep.subr.mxu0 0.0
      %5981 = vmatpush1.msra.mxu0 0.0
      %5982 = vmatprep.subr.mxu0 0.0
      %5983 = vmatpush1.msra.mxu0 0.0
      %5984 = vmatprep.subr.mxu0 0.0
      %5985 = vmatpush1.msra.mxu0 0.0
      %5986 = vmatprep.subr.mxu0 0.0
      %5987 = vmatpush1.msra.mxu0 0.0
      %5988 = vmatprep.subr.mxu0 0.0
      %5989 = vmatpush1.msra.mxu0 0.0
      %5990 = vmatprep.subr.mxu0 0.0
      %5991 = vmatpush1.msra.mxu0 0.0
      %5992 = vmatprep.subr.mxu0 0.0
      %5993 = vmatpush1.msra.mxu0 0.0
      %5994 = vmatprep.subr.mxu0 0.0
      %5995 = vmatpush1.msra.mxu0 0.0
      %5996 = vmatprep.subr.mxu0 0.0
      %5997 = vmatpush1.msra.mxu0 %v5869
      %5998 = vmatprep.subr.mxu0 0.0
      %5999 = vmatpush2.msra.mxu0 0.0
      %6000 = vmatprep.subr.mxu0 0.0
      %6001 = vmatpush2.msra.mxu0 0.0
      %6002 = vmatprep.subr.mxu0 0.0
      %6003 = vmatpush2.msra.mxu0 0.0
      %6004 = vmatprep.subr.mxu0 0.0
      %6005 = vmatpush2.msra.mxu0 0.0
      %6006 = vmatprep.subr.mxu0 0.0
      %6007 = vmatpush2.msra.mxu0 0.0
      %6008 = vmatprep.subr.mxu0 0.0
      %6009 = vmatpush2.msra.mxu0 0.0
      %6010 = vmatprep.subr.mxu0 0.0
      %6011 = vmatpush2.msra.mxu0 0.0
      %6012 = vmatprep.subr.mxu0 0.0
      %6013 = vmatpush2.msra.mxu0 0.0
      %6014 = vmatprep.subr.mxu0 0.0
      %6015 = vmatpush2.msra.mxu0 0.0
      %6016 = vmatprep.subr.mxu0 0.0
      %6017 = vmatpush2.msra.mxu0 0.0
      %6018 = vmatprep.subr.mxu0 0.0
      %6019 = vmatpush2.msra.mxu0 0.0
      %6020 = vmatprep.subr.mxu0 0.0
      %6021 = vmatpush2.msra.mxu0 0.0
      %6022 = vmatprep.subr.mxu0 0.0
      %6023 = vmatpush2.msra.mxu0 0.0
      %6024 = vmatprep.subr.mxu0 0.0
      %6025 = vmatpush2.msra.mxu0 0.0
      %6026 = vmatprep.subr.mxu0 0.0
      %6027 = vmatpush2.msra.mxu0 0.0
      %6028 = vmatprep.subr.mxu0 0.0
      %6029 = vmatpush2.msra.mxu0 0.0
      %6030 = vmatprep.mubr.f32.mxu0 0.0
      %6031 = vmatmul.mubr.f32.gmra.mxu0 %v5871
      %v6032 = vpop.f32.mrf.mxu0
      %v6033 = vadd.f32 0.0, %v6032
      %v6034 = vpop.f32.mrf.mxu0
      %6035 = vmatprep.mubr.f32.mxu0 0.0
      %6036 = vmatmul.mubr.f32.gmra.mxu0 %v5874
      %v6037 = vpop.f32.mrf.mxu0
      %v6038 = vadd.f32 0.0, %v6037
      %v6039 = vpop.f32.mrf.mxu0
      %6040 = vmatprep.mubr.f32.mxu0 0.0
      %6041 = vmatmul.mubr.f32.gmra.mxu0 %v5877
      %v6042 = vpop.f32.mrf.mxu0
      %v6043 = vadd.f32 0.0, %v6042
      %v6044 = vpop.f32.mrf.mxu0
      %6045 = vmatprep.mubr.f32.mxu0 0.0
      %6046 = vmatmul.mubr.f32.gmra.mxu0 %v5880
      %v6047 = vpop.f32.mrf.mxu0
      %v6048 = vadd.f32 0.0, %v6047
      %v6049 = vpop.f32.mrf.mxu0
      %6050 = vmatprep.mubr.f32.mxu0 0.0
      %6051 = vmatmul.mubr.f32.gmra.mxu0 %v5883
      %v6052 = vpop.f32.mrf.mxu0
      %v6053 = vadd.f32 0.0, %v6052
      %v6054 = vpop.f32.mrf.mxu0
      %6055 = vmatprep.mubr.f32.mxu0 0.0
      %6056 = vmatmul.mubr.f32.gmra.mxu0 %v5886
      %v6057 = vpop.f32.mrf.mxu0
      %v6058 = vadd.f32 0.0, %v6057
      %v6059 = vpop.f32.mrf.mxu0
      %6060 = vmatprep.mubr.f32.mxu0 0.0
      %6061 = vmatmul.mubr.f32.gmra.mxu0 %v5889
      %v6062 = vpop.f32.mrf.mxu0
      %v6063 = vadd.f32 0.0, %v6062
      %v6064 = vpop.f32.mrf.mxu0
      %6065 = vmatprep.mubr.f32.mxu0 0.0
      %6066 = vmatmul.mubr.f32.gmra.mxu0 %v5892
      %v6067 = vpop.f32.mrf.mxu0
      %v6068 = vadd.f32 0.0, %v6067
      %v6069 = vpop.f32.mrf.mxu0
      %6070 = vmatprep.mubr.f32.mxu0 0.0
      %6071 = vmatmul.mubr.f32.gmra.mxu0 %v5895
      %v6072 = vpop.f32.mrf.mxu0
      %v6073 = vadd.f32 0.0, %v6072
      %v6074 = vpop.f32.mrf.mxu0
      %6075 = vmatprep.mubr.f32.mxu0 0.0
      %6076 = vmatmul.mubr.f32.gmra.mxu0 %v5898
      %v6077 = vpop.f32.mrf.mxu0
      %v6078 = vadd.f32 0.0, %v6077
      %v6079 = vpop.f32.mrf.mxu0
      %6080 = vmatprep.mubr.f32.mxu0 0.0
      %6081 = vmatmul.mubr.f32.gmra.mxu0 %v5901
      %v6082 = vpop.f32.mrf.mxu0
      %v6083 = vadd.f32 0.0, %v6082
      %v6084 = vpop.f32.mrf.mxu0
      %6085 = vmatprep.mubr.f32.mxu0 0.0
      %6086 = vmatmul.mubr.f32.gmra.mxu0 %v5904
      %v6087 = vpop.f32.mrf.mxu0
      %v6088 = vadd.f32 0.0, %v6087
      %v6089 = vpop.f32.mrf.mxu0
      %6090 = vmatprep.mubr.f32.mxu0 0.0
      %6091 = vmatmul.mubr.f32.gmra.mxu0 %v5907
      %v6092 = vpop.f32.mrf.mxu0
      %v6093 = vadd.f32 0.0, %v6092
      %v6094 = vpop.f32.mrf.mxu0
      %6095 = vmatprep.mubr.f32.mxu0 0.0
      %6096 = vmatmul.mubr.f32.gmra.mxu0 %v5910
      %v6097 = vpop.f32.mrf.mxu0
      %v6098 = vadd.f32 0.0, %v6097
      %v6099 = vpop.f32.mrf.mxu0
      %6100 = vmatprep.mubr.f32.mxu0 0.0
      %6101 = vmatmul.mubr.f32.gmra.mxu0 %v5913
      %v6102 = vpop.f32.mrf.mxu0
      %v6103 = vadd.f32 0.0, %v6102
      %v6104 = vpop.f32.mrf.mxu0
      %6105 = vmatprep.mubr.f32.mxu0 0.0
      %6106 = vmatmul.mubr.f32.gmra.mxu0 %v5916
      %v6107 = vpop.f32.mrf.mxu0
      %v6108 = vadd.f32 0.0, %v6107
      %v6109 = vpop.f32.mrf.mxu0
      %6110 = vmatprep.mubr.f32.mxu0 0.0
      %6111 = vmatmul.mubr.f32.gmra.mxu0 %v5919
      %v6112 = vpop.f32.mrf.mxu0
      %v6113 = vadd.f32 0.0, %v6112
      %v6114 = vpop.f32.mrf.mxu0
      %6115 = vmatprep.mubr.f32.mxu0 0.0
      %6116 = vmatmul.mubr.f32.gmra.mxu0 %v5922
      %v6117 = vpop.f32.mrf.mxu0
      %v6118 = vadd.f32 0.0, %v6117
      %v6119 = vpop.f32.mrf.mxu0
      %6120 = vmatprep.mubr.f32.mxu0 0.0
      %6121 = vmatmul.mubr.f32.gmra.mxu0 %v5925
      %v6122 = vpop.f32.mrf.mxu0
      %v6123 = vadd.f32 0.0, %v6122
      %v6124 = vpop.f32.mrf.mxu0
      %6125 = vmatprep.mubr.f32.mxu0 0.0
      %6126 = vmatmul.mubr.f32.gmra.mxu0 %v5928
      %v6127 = vpop.f32.mrf.mxu0
      %v6128 = vadd.f32 0.0, %v6127
      %v6129 = vpop.f32.mrf.mxu0
      %6130 = vmatprep.mubr.f32.mxu0 0.0
      %6131 = vmatmul.mubr.f32.gmra.mxu0 %v5931
      %v6132 = vpop.f32.mrf.mxu0
      %v6133 = vadd.f32 0.0, %v6132
      %v6134 = vpop.f32.mrf.mxu0
      %6135 = vmatprep.mubr.f32.mxu0 0.0
      %6136 = vmatmul.mubr.f32.gmra.mxu0 %v5934
      %v6137 = vpop.f32.mrf.mxu0
      %v6138 = vadd.f32 0.0, %v6137
      %v6139 = vpop.f32.mrf.mxu0
      %6140 = vmatprep.mubr.f32.mxu0 0.0
      %6141 = vmatmul.mubr.f32.gmra.mxu0 %v5937
      %v6142 = vpop.f32.mrf.mxu0
      %v6143 = vadd.f32 0.0, %v6142
      %v6144 = vpop.f32.mrf.mxu0
      %6145 = vmatprep.mubr.f32.mxu0 0.0
      %6146 = vmatmul.mubr.f32.gmra.mxu0 %v5940
      %v6147 = vpop.f32.mrf.mxu0
      %v6148 = vadd.f32 0.0, %v6147
      %v6149 = vpop.f32.mrf.mxu0
      %6150 = vmatprep.mubr.f32.mxu0 0.0
      %6151 = vmatmul.mubr.f32.gmra.mxu0 %v5943
      %v6152 = vpop.f32.mrf.mxu0
      %v6153 = vadd.f32 0.0, %v6152
      %v6154 = vpop.f32.mrf.mxu0
      %6155 = vmatprep.mubr.f32.mxu0 0.0
      %6156 = vmatmul.mubr.f32.gmra.mxu0 %v5946
      %v6157 = vpop.f32.mrf.mxu0
      %v6158 = vadd.f32 0.0, %v6157
      %v6159 = vpop.f32.mrf.mxu0
      %6160 = vmatprep.mubr.f32.mxu0 0.0
      %6161 = vmatmul.mubr.f32.gmra.mxu0 %v5949
      %v6162 = vpop.f32.mrf.mxu0
      %v6163 = vadd.f32 0.0, %v6162
      %v6164 = vpop.f32.mrf.mxu0
      %6165 = vmatprep.mubr.f32.mxu0 0.0
      %6166 = vmatmul.mubr.f32.gmra.mxu0 %v5952
      %v6167 = vpop.f32.mrf.mxu0
      %v6168 = vadd.f32 0.0, %v6167
      %v6169 = vpop.f32.mrf.mxu0
      %6170 = vmatprep.mubr.f32.mxu0 0.0
      %6171 = vmatmul.mubr.f32.gmra.mxu0 %v5955
      %v6172 = vpop.f32.mrf.mxu0
      %v6173 = vadd.f32 0.0, %v6172
      %v6174 = vpop.f32.mrf.mxu0
      %6175 = vmatprep.mubr.f32.mxu0 0.0
      %6176 = vmatmul.mubr.f32.gmra.mxu0 %v5958
      %v6177 = vpop.f32.mrf.mxu0
      %v6178 = vadd.f32 0.0, %v6177
      %v6179 = vpop.f32.mrf.mxu0
      %6180 = vmatprep.mubr.f32.mxu0 0.0
      %6181 = vmatmul.mubr.f32.gmra.mxu0 %v5961
      %v6182 = vpop.f32.mrf.mxu0
      %v6183 = vadd.f32 0.0, %v6182
      %v6184 = vpop.f32.mrf.mxu0
      %6185 = vmatprep.mubr.f32.mxu0 0.0
      %6186 = vmatmul.mubr.f32.gmra.mxu0 %v5964
      %v6187 = vpop.f32.mrf.mxu0
      %v6188 = vadd.f32 0.0, %v6187
      %v6189 = vpop.f32.mrf.mxu0
      %6190 = vdwg.mxu0
      %v6191 = vadd.f32 %v5804, %v6033
      %v6192 = vadd.f32 %v5805, %v6038
      %v6193 = vadd.f32 %v5806, %v6043
      %v6194 = vadd.f32 %v5807, %v6048
      %v6195 = vadd.f32 %v5808, %v6053
      %v6196 = vadd.f32 %v5809, %v6058
      %v6197 = vadd.f32 %v5810, %v6063
      %v6198 = vadd.f32 %v5811, %v6068
      %v6199 = vadd.f32 %v5812, %v6073
      %v6200 = vadd.f32 %v5813, %v6078
      %v6201 = vadd.f32 %v5814, %v6083
      %v6202 = vadd.f32 %v5815, %v6088
      %v6203 = vadd.f32 %v5816, %v6093
      %v6204 = vadd.f32 %v5817, %v6098
      %v6205 = vadd.f32 %v5818, %v6103
      %v6206 = vadd.f32 %v5819, %v6108
      %v6207 = vadd.f32 %v5820, %v6113
      %v6208 = vadd.f32 %v5821, %v6118
      %v6209 = vadd.f32 %v5822, %v6123
      %v6210 = vadd.f32 %v5823, %v6128
      %v6211 = vadd.f32 %v5824, %v6133
      %v6212 = vadd.f32 %v5825, %v6138
      %v6213 = vadd.f32 %v5826, %v6143
      %v6214 = vadd.f32 %v5827, %v6148
      %v6215 = vadd.f32 %v5828, %v6153
      %v6216 = vadd.f32 %v5829, %v6158
      %v6217 = vadd.f32 %v5830, %v6163
      %v6218 = vadd.f32 %v5831, %v6168
      %v6219 = vadd.f32 %v5832, %v6173
      %v6220 = vadd.f32 %v5833, %v6178
      %v6221 = vadd.f32 %v5834, %v6183
      %v6222 = vadd.f32 %v5835, %v6188
      %s6223 = scalar_lea.vmem [#allocation2], 48
      %v6224 = vld [vmem:[%s6223] sm:$0xff]
      %v6225 = vld [vmem:[%s6223 + $0x8] sm:$0xff]
      %v6226 = vld [vmem:[%s6223 + $0x18] sm:$0xff]
      %v6227 = vld [vmem:[%s6223 + $0x20] sm:$0xff]
      %v6228 = vld [vmem:[%s6223 + $0x30] sm:$0xff]
      %v6229 = vld [vmem:[%s6223 + $0x38] sm:$0xff]
      %v6230 = vld [vmem:[%s6223 + $0x48] sm:$0xff]
      %v6231 = vld [vmem:[%s6223 + $0x50] sm:$0xff]
      %v6232 = vld [vmem:[%s6223 + $0x60] sm:$0xff]
      %v6233 = vld [vmem:[%s6223 + $0x68] sm:$0xff]
      %v6234 = vld [vmem:[%s6223 + $0x78] sm:$0xff]
      %v6235 = vld [vmem:[%s6223 + $0x80] sm:$0xff]
      %v6236 = vld [vmem:[%s6223 + $0x90] sm:$0xff]
      %v6237 = vld [vmem:[%s6223 + $0x98] sm:$0xff]
      %v6238 = vld [vmem:[%s6223 + $0xa8] sm:$0xff]
      %v6239 = vld [vmem:[%s6223 + $0xb0] sm:$0xff]
      %v6240 = vld [vmem:[%s6223 + $0xc0] sm:$0xff]
      %v6241 = vld [vmem:[%s6223 + $0xc8] sm:$0xff]
      %v6242 = vld [vmem:[%s6223 + $0xd8] sm:$0xff]
      %v6243 = vld [vmem:[%s6223 + $0xe0] sm:$0xff]
      %v6244 = vld [vmem:[%s6223 + $0xf0] sm:$0xff]
      %v6245 = vld [vmem:[%s6223 + $0xf8] sm:$0xff]
      %v6246 = vld [vmem:[%s6223 + $0x108] sm:$0xff]
      %v6247 = vld [vmem:[%s6223 + $0x110] sm:$0xff]
      %v6248 = vld [vmem:[%s6223 + $0x120] sm:$0xff]
      %v6249 = vld [vmem:[%s6223 + $0x128] sm:$0xff]
      %v6250 = vld [vmem:[%s6223 + $0x138] sm:$0xff]
      %v6251 = vld [vmem:[%s6223 + $0x140] sm:$0xff]
      %v6252 = vld [vmem:[%s6223 + $0x150] sm:$0xff]
      %v6253 = vld [vmem:[%s6223 + $0x158] sm:$0xff]
      %v6254 = vld [vmem:[%s6223 + $0x168] sm:$0xff]
      %v6255 = vld [vmem:[%s6223 + $0x170] sm:$0xff]
      %s6256 = scalar_lea.vmem %s5, 48
      %v6257 = vld [vmem:[%s6256] sm:$0xff]
      %v6259 = vsel %vm3877, %v6224, 0
      %v6262 = vsel %vm3877, %v6225, 0
      %v6265 = vsel %vm3877, %v6226, 0
      %v6268 = vsel %vm3877, %v6227, 0
      %v6271 = vsel %vm3877, %v6228, 0
      %v6274 = vsel %vm3877, %v6229, 0
      %v6277 = vsel %vm3877, %v6230, 0
      %v6280 = vsel %vm3877, %v6231, 0
      %v6283 = vsel %vm3877, %v6232, 0
      %v6286 = vsel %vm3877, %v6233, 0
      %v6289 = vsel %vm3877, %v6234, 0
      %v6292 = vsel %vm3877, %v6235, 0
      %v6295 = vsel %vm3877, %v6236, 0
      %v6298 = vsel %vm3877, %v6237, 0
      %v6301 = vsel %vm3877, %v6238, 0
      %v6304 = vsel %vm3877, %v6239, 0
      %v6307 = vsel %vm3877, %v6240, 0
      %v6310 = vsel %vm3877, %v6241, 0
      %v6313 = vsel %vm3877, %v6242, 0
      %v6316 = vsel %vm3877, %v6243, 0
      %v6319 = vsel %vm3877, %v6244, 0
      %v6322 = vsel %vm3877, %v6245, 0
      %v6325 = vsel %vm3877, %v6246, 0
      %v6328 = vsel %vm3877, %v6247, 0
      %v6331 = vsel %vm3877, %v6248, 0
      %v6334 = vsel %vm3877, %v6249, 0
      %v6337 = vsel %vm3877, %v6250, 0
      %v6340 = vsel %vm3877, %v6251, 0
      %v6343 = vsel %vm3877, %v6252, 0
      %v6346 = vsel %vm3877, %v6253, 0
      %v6349 = vsel %vm3877, %v6254, 0
      %v6352 = vsel %vm3877, %v6255, 0
      %6354 = vmatprep.subr.mxu0 0.0
      %6355 = vmatpush1.msra.mxu0 0.0
      %6356 = vmatprep.subr.mxu0 0.0
      %6357 = vmatpush1.msra.mxu0 0.0
      %6358 = vmatprep.subr.mxu0 0.0
      %6359 = vmatpush1.msra.mxu0 0.0
      %6360 = vmatprep.subr.mxu0 0.0
      %6361 = vmatpush1.msra.mxu0 0.0
      %6362 = vmatprep.subr.mxu0 0.0
      %6363 = vmatpush1.msra.mxu0 0.0
      %6364 = vmatprep.subr.mxu0 0.0
      %6365 = vmatpush1.msra.mxu0 0.0
      %6366 = vmatprep.subr.mxu0 0.0
      %6367 = vmatpush1.msra.mxu0 0.0
      %6368 = vmatprep.subr.mxu0 0.0
      %6369 = vmatpush1.msra.mxu0 0.0
      %6370 = vmatprep.subr.mxu0 0.0
      %6371 = vmatpush1.msra.mxu0 0.0
      %6372 = vmatprep.subr.mxu0 0.0
      %6373 = vmatpush1.msra.mxu0 0.0
      %6374 = vmatprep.subr.mxu0 0.0
      %6375 = vmatpush1.msra.mxu0 0.0
      %6376 = vmatprep.subr.mxu0 0.0
      %6377 = vmatpush1.msra.mxu0 0.0
      %6378 = vmatprep.subr.mxu0 0.0
      %6379 = vmatpush1.msra.mxu0 0.0
      %6380 = vmatprep.subr.mxu0 0.0
      %6381 = vmatpush1.msra.mxu0 0.0
      %6382 = vmatprep.subr.mxu0 0.0
      %6383 = vmatpush1.msra.mxu0 0.0
      %6384 = vmatprep.subr.mxu0 0.0
      %6385 = vmatpush1.msra.mxu0 %v6257
      %6386 = vmatprep.subr.mxu0 0.0
      %6387 = vmatpush2.msra.mxu0 0.0
      %6388 = vmatprep.subr.mxu0 0.0
      %6389 = vmatpush2.msra.mxu0 0.0
      %6390 = vmatprep.subr.mxu0 0.0
      %6391 = vmatpush2.msra.mxu0 0.0
      %6392 = vmatprep.subr.mxu0 0.0
      %6393 = vmatpush2.msra.mxu0 0.0
      %6394 = vmatprep.subr.mxu0 0.0
      %6395 = vmatpush2.msra.mxu0 0.0
      %6396 = vmatprep.subr.mxu0 0.0
      %6397 = vmatpush2.msra.mxu0 0.0
      %6398 = vmatprep.subr.mxu0 0.0
      %6399 = vmatpush2.msra.mxu0 0.0
      %6400 = vmatprep.subr.mxu0 0.0
      %6401 = vmatpush2.msra.mxu0 0.0
      %6402 = vmatprep.subr.mxu0 0.0
      %6403 = vmatpush2.msra.mxu0 0.0
      %6404 = vmatprep.subr.mxu0 0.0
      %6405 = vmatpush2.msra.mxu0 0.0
      %6406 = vmatprep.subr.mxu0 0.0
      %6407 = vmatpush2.msra.mxu0 0.0
      %6408 = vmatprep.subr.mxu0 0.0
      %6409 = vmatpush2.msra.mxu0 0.0
      %6410 = vmatprep.subr.mxu0 0.0
      %6411 = vmatpush2.msra.mxu0 0.0
      %6412 = vmatprep.subr.mxu0 0.0
      %6413 = vmatpush2.msra.mxu0 0.0
      %6414 = vmatprep.subr.mxu0 0.0
      %6415 = vmatpush2.msra.mxu0 0.0
      %6416 = vmatprep.subr.mxu0 0.0
      %6417 = vmatpush2.msra.mxu0 0.0
      %6418 = vmatprep.mubr.f32.mxu0 0.0
      %6419 = vmatmul.mubr.f32.gmra.mxu0 %v6259
      %v6420 = vpop.f32.mrf.mxu0
      %v6421 = vadd.f32 0.0, %v6420
      %v6422 = vpop.f32.mrf.mxu0
      %6423 = vmatprep.mubr.f32.mxu0 0.0
      %6424 = vmatmul.mubr.f32.gmra.mxu0 %v6262
      %v6425 = vpop.f32.mrf.mxu0
      %v6426 = vadd.f32 0.0, %v6425
      %v6427 = vpop.f32.mrf.mxu0
      %6428 = vmatprep.mubr.f32.mxu0 0.0
      %6429 = vmatmul.mubr.f32.gmra.mxu0 %v6265
      %v6430 = vpop.f32.mrf.mxu0
      %v6431 = vadd.f32 0.0, %v6430
      %v6432 = vpop.f32.mrf.mxu0
      %6433 = vmatprep.mubr.f32.mxu0 0.0
      %6434 = vmatmul.mubr.f32.gmra.mxu0 %v6268
      %v6435 = vpop.f32.mrf.mxu0
      %v6436 = vadd.f32 0.0, %v6435
      %v6437 = vpop.f32.mrf.mxu0
      %6438 = vmatprep.mubr.f32.mxu0 0.0
      %6439 = vmatmul.mubr.f32.gmra.mxu0 %v6271
      %v6440 = vpop.f32.mrf.mxu0
      %v6441 = vadd.f32 0.0, %v6440
      %v6442 = vpop.f32.mrf.mxu0
      %6443 = vmatprep.mubr.f32.mxu0 0.0
      %6444 = vmatmul.mubr.f32.gmra.mxu0 %v6274
      %v6445 = vpop.f32.mrf.mxu0
      %v6446 = vadd.f32 0.0, %v6445
      %v6447 = vpop.f32.mrf.mxu0
      %6448 = vmatprep.mubr.f32.mxu0 0.0
      %6449 = vmatmul.mubr.f32.gmra.mxu0 %v6277
      %v6450 = vpop.f32.mrf.mxu0
      %v6451 = vadd.f32 0.0, %v6450
      %v6452 = vpop.f32.mrf.mxu0
      %6453 = vmatprep.mubr.f32.mxu0 0.0
      %6454 = vmatmul.mubr.f32.gmra.mxu0 %v6280
      %v6455 = vpop.f32.mrf.mxu0
      %v6456 = vadd.f32 0.0, %v6455
      %v6457 = vpop.f32.mrf.mxu0
      %6458 = vmatprep.mubr.f32.mxu0 0.0
      %6459 = vmatmul.mubr.f32.gmra.mxu0 %v6283
      %v6460 = vpop.f32.mrf.mxu0
      %v6461 = vadd.f32 0.0, %v6460
      %v6462 = vpop.f32.mrf.mxu0
      %6463 = vmatprep.mubr.f32.mxu0 0.0
      %6464 = vmatmul.mubr.f32.gmra.mxu0 %v6286
      %v6465 = vpop.f32.mrf.mxu0
      %v6466 = vadd.f32 0.0, %v6465
      %v6467 = vpop.f32.mrf.mxu0
      %6468 = vmatprep.mubr.f32.mxu0 0.0
      %6469 = vmatmul.mubr.f32.gmra.mxu0 %v6289
      %v6470 = vpop.f32.mrf.mxu0
      %v6471 = vadd.f32 0.0, %v6470
      %v6472 = vpop.f32.mrf.mxu0
      %6473 = vmatprep.mubr.f32.mxu0 0.0
      %6474 = vmatmul.mubr.f32.gmra.mxu0 %v6292
      %v6475 = vpop.f32.mrf.mxu0
      %v6476 = vadd.f32 0.0, %v6475
      %v6477 = vpop.f32.mrf.mxu0
      %6478 = vmatprep.mubr.f32.mxu0 0.0
      %6479 = vmatmul.mubr.f32.gmra.mxu0 %v6295
      %v6480 = vpop.f32.mrf.mxu0
      %v6481 = vadd.f32 0.0, %v6480
      %v6482 = vpop.f32.mrf.mxu0
      %6483 = vmatprep.mubr.f32.mxu0 0.0
      %6484 = vmatmul.mubr.f32.gmra.mxu0 %v6298
      %v6485 = vpop.f32.mrf.mxu0
      %v6486 = vadd.f32 0.0, %v6485
      %v6487 = vpop.f32.mrf.mxu0
      %6488 = vmatprep.mubr.f32.mxu0 0.0
      %6489 = vmatmul.mubr.f32.gmra.mxu0 %v6301
      %v6490 = vpop.f32.mrf.mxu0
      %v6491 = vadd.f32 0.0, %v6490
      %v6492 = vpop.f32.mrf.mxu0
      %6493 = vmatprep.mubr.f32.mxu0 0.0
      %6494 = vmatmul.mubr.f32.gmra.mxu0 %v6304
      %v6495 = vpop.f32.mrf.mxu0
      %v6496 = vadd.f32 0.0, %v6495
      %v6497 = vpop.f32.mrf.mxu0
      %6498 = vmatprep.mubr.f32.mxu0 0.0
      %6499 = vmatmul.mubr.f32.gmra.mxu0 %v6307
      %v6500 = vpop.f32.mrf.mxu0
      %v6501 = vadd.f32 0.0, %v6500
      %v6502 = vpop.f32.mrf.mxu0
      %6503 = vmatprep.mubr.f32.mxu0 0.0
      %6504 = vmatmul.mubr.f32.gmra.mxu0 %v6310
      %v6505 = vpop.f32.mrf.mxu0
      %v6506 = vadd.f32 0.0, %v6505
      %v6507 = vpop.f32.mrf.mxu0
      %6508 = vmatprep.mubr.f32.mxu0 0.0
      %6509 = vmatmul.mubr.f32.gmra.mxu0 %v6313
      %v6510 = vpop.f32.mrf.mxu0
      %v6511 = vadd.f32 0.0, %v6510
      %v6512 = vpop.f32.mrf.mxu0
      %6513 = vmatprep.mubr.f32.mxu0 0.0
      %6514 = vmatmul.mubr.f32.gmra.mxu0 %v6316
      %v6515 = vpop.f32.mrf.mxu0
      %v6516 = vadd.f32 0.0, %v6515
      %v6517 = vpop.f32.mrf.mxu0
      %6518 = vmatprep.mubr.f32.mxu0 0.0
      %6519 = vmatmul.mubr.f32.gmra.mxu0 %v6319
      %v6520 = vpop.f32.mrf.mxu0
      %v6521 = vadd.f32 0.0, %v6520
      %v6522 = vpop.f32.mrf.mxu0
      %6523 = vmatprep.mubr.f32.mxu0 0.0
      %6524 = vmatmul.mubr.f32.gmra.mxu0 %v6322
      %v6525 = vpop.f32.mrf.mxu0
      %v6526 = vadd.f32 0.0, %v6525
      %v6527 = vpop.f32.mrf.mxu0
      %6528 = vmatprep.mubr.f32.mxu0 0.0
      %6529 = vmatmul.mubr.f32.gmra.mxu0 %v6325
      %v6530 = vpop.f32.mrf.mxu0
      %v6531 = vadd.f32 0.0, %v6530
      %v6532 = vpop.f32.mrf.mxu0
      %6533 = vmatprep.mubr.f32.mxu0 0.0
      %6534 = vmatmul.mubr.f32.gmra.mxu0 %v6328
      %v6535 = vpop.f32.mrf.mxu0
      %v6536 = vadd.f32 0.0, %v6535
      %v6537 = vpop.f32.mrf.mxu0
      %6538 = vmatprep.mubr.f32.mxu0 0.0
      %6539 = vmatmul.mubr.f32.gmra.mxu0 %v6331
      %v6540 = vpop.f32.mrf.mxu0
      %v6541 = vadd.f32 0.0, %v6540
      %v6542 = vpop.f32.mrf.mxu0
      %6543 = vmatprep.mubr.f32.mxu0 0.0
      %6544 = vmatmul.mubr.f32.gmra.mxu0 %v6334
      %v6545 = vpop.f32.mrf.mxu0
      %v6546 = vadd.f32 0.0, %v6545
      %v6547 = vpop.f32.mrf.mxu0
      %6548 = vmatprep.mubr.f32.mxu0 0.0
      %6549 = vmatmul.mubr.f32.gmra.mxu0 %v6337
      %v6550 = vpop.f32.mrf.mxu0
      %v6551 = vadd.f32 0.0, %v6550
      %v6552 = vpop.f32.mrf.mxu0
      %6553 = vmatprep.mubr.f32.mxu0 0.0
      %6554 = vmatmul.mubr.f32.gmra.mxu0 %v6340
      %v6555 = vpop.f32.mrf.mxu0
      %v6556 = vadd.f32 0.0, %v6555
      %v6557 = vpop.f32.mrf.mxu0
      %6558 = vmatprep.mubr.f32.mxu0 0.0
      %6559 = vmatmul.mubr.f32.gmra.mxu0 %v6343
      %v6560 = vpop.f32.mrf.mxu0
      %v6561 = vadd.f32 0.0, %v6560
      %v6562 = vpop.f32.mrf.mxu0
      %6563 = vmatprep.mubr.f32.mxu0 0.0
      %6564 = vmatmul.mubr.f32.gmra.mxu0 %v6346
      %v6565 = vpop.f32.mrf.mxu0
      %v6566 = vadd.f32 0.0, %v6565
      %v6567 = vpop.f32.mrf.mxu0
      %6568 = vmatprep.mubr.f32.mxu0 0.0
      %6569 = vmatmul.mubr.f32.gmra.mxu0 %v6349
      %v6570 = vpop.f32.mrf.mxu0
      %v6571 = vadd.f32 0.0, %v6570
      %v6572 = vpop.f32.mrf.mxu0
      %6573 = vmatprep.mubr.f32.mxu0 0.0
      %6574 = vmatmul.mubr.f32.gmra.mxu0 %v6352
      %v6575 = vpop.f32.mrf.mxu0
      %v6576 = vadd.f32 0.0, %v6575
      %v6577 = vpop.f32.mrf.mxu0
      %6578 = vdwg.mxu0
      %v6579 = vadd.f32 %v6191, %v6421
      %v6580 = vadd.f32 %v6192, %v6426
      %v6581 = vadd.f32 %v6193, %v6431
      %v6582 = vadd.f32 %v6194, %v6436
      %v6583 = vadd.f32 %v6195, %v6441
      %v6584 = vadd.f32 %v6196, %v6446
      %v6585 = vadd.f32 %v6197, %v6451
      %v6586 = vadd.f32 %v6198, %v6456
      %v6587 = vadd.f32 %v6199, %v6461
      %v6588 = vadd.f32 %v6200, %v6466
      %v6589 = vadd.f32 %v6201, %v6471
      %v6590 = vadd.f32 %v6202, %v6476
      %v6591 = vadd.f32 %v6203, %v6481
      %v6592 = vadd.f32 %v6204, %v6486
      %v6593 = vadd.f32 %v6205, %v6491
      %v6594 = vadd.f32 %v6206, %v6496
      %v6595 = vadd.f32 %v6207, %v6501
      %v6596 = vadd.f32 %v6208, %v6506
      %v6597 = vadd.f32 %v6209, %v6511
      %v6598 = vadd.f32 %v6210, %v6516
      %v6599 = vadd.f32 %v6211, %v6521
      %v6600 = vadd.f32 %v6212, %v6526
      %v6601 = vadd.f32 %v6213, %v6531
      %v6602 = vadd.f32 %v6214, %v6536
      %v6603 = vadd.f32 %v6215, %v6541
      %v6604 = vadd.f32 %v6216, %v6546
      %v6605 = vadd.f32 %v6217, %v6551
      %v6606 = vadd.f32 %v6218, %v6556
      %v6607 = vadd.f32 %v6219, %v6561
      %v6608 = vadd.f32 %v6220, %v6566
      %v6609 = vadd.f32 %v6221, %v6571
      %v6610 = vadd.f32 %v6222, %v6576
      %v6611 = vld [vmem:[%s6223 + $0x1] sm:$0xff]
      %v6612 = vld [vmem:[%s6223 + $0x9] sm:$0xff]
      %v6613 = vld [vmem:[%s6223 + $0x19] sm:$0xff]
      %v6614 = vld [vmem:[%s6223 + $0x21] sm:$0xff]
      %v6615 = vld [vmem:[%s6223 + $0x31] sm:$0xff]
      %v6616 = vld [vmem:[%s6223 + $0x39] sm:$0xff]
      %v6617 = vld [vmem:[%s6223 + $0x49] sm:$0xff]
      %v6618 = vld [vmem:[%s6223 + $0x51] sm:$0xff]
      %v6619 = vld [vmem:[%s6223 + $0x61] sm:$0xff]
      %v6620 = vld [vmem:[%s6223 + $0x69] sm:$0xff]
      %v6621 = vld [vmem:[%s6223 + $0x79] sm:$0xff]
      %v6622 = vld [vmem:[%s6223 + $0x81] sm:$0xff]
      %v6623 = vld [vmem:[%s6223 + $0x91] sm:$0xff]
      %v6624 = vld [vmem:[%s6223 + $0x99] sm:$0xff]
      %v6625 = vld [vmem:[%s6223 + $0xa9] sm:$0xff]
      %v6626 = vld [vmem:[%s6223 + $0xb1] sm:$0xff]
      %v6627 = vld [vmem:[%s6223 + $0xc1] sm:$0xff]
      %v6628 = vld [vmem:[%s6223 + $0xc9] sm:$0xff]
      %v6629 = vld [vmem:[%s6223 + $0xd9] sm:$0xff]
      %v6630 = vld [vmem:[%s6223 + $0xe1] sm:$0xff]
      %v6631 = vld [vmem:[%s6223 + $0xf1] sm:$0xff]
      %v6632 = vld [vmem:[%s6223 + $0xf9] sm:$0xff]
      %v6633 = vld [vmem:[%s6223 + $0x109] sm:$0xff]
      %v6634 = vld [vmem:[%s6223 + $0x111] sm:$0xff]
      %v6635 = vld [vmem:[%s6223 + $0x121] sm:$0xff]
      %v6636 = vld [vmem:[%s6223 + $0x129] sm:$0xff]
      %v6637 = vld [vmem:[%s6223 + $0x139] sm:$0xff]
      %v6638 = vld [vmem:[%s6223 + $0x141] sm:$0xff]
      %v6639 = vld [vmem:[%s6223 + $0x151] sm:$0xff]
      %v6640 = vld [vmem:[%s6223 + $0x159] sm:$0xff]
      %v6641 = vld [vmem:[%s6223 + $0x169] sm:$0xff]
      %v6642 = vld [vmem:[%s6223 + $0x171] sm:$0xff]
      %s6643 = scalar_lea.vmem %s5, 56
      %v6644 = vld [vmem:[%s6643] sm:$0xff]
      %v6646 = vsel %vm3877, %v6611, 0
      %v6649 = vsel %vm3877, %v6612, 0
      %v6652 = vsel %vm3877, %v6613, 0
      %v6655 = vsel %vm3877, %v6614, 0
      %v6658 = vsel %vm3877, %v6615, 0
      %v6661 = vsel %vm3877, %v6616, 0
      %v6664 = vsel %vm3877, %v6617, 0
      %v6667 = vsel %vm3877, %v6618, 0
      %v6670 = vsel %vm3877, %v6619, 0
      %v6673 = vsel %vm3877, %v6620, 0
      %v6676 = vsel %vm3877, %v6621, 0
      %v6679 = vsel %vm3877, %v6622, 0
      %v6682 = vsel %vm3877, %v6623, 0
      %v6685 = vsel %vm3877, %v6624, 0
      %v6688 = vsel %vm3877, %v6625, 0
      %v6691 = vsel %vm3877, %v6626, 0
      %v6694 = vsel %vm3877, %v6627, 0
      %v6697 = vsel %vm3877, %v6628, 0
      %v6700 = vsel %vm3877, %v6629, 0
      %v6703 = vsel %vm3877, %v6630, 0
      %v6706 = vsel %vm3877, %v6631, 0
      %v6709 = vsel %vm3877, %v6632, 0
      %v6712 = vsel %vm3877, %v6633, 0
      %v6715 = vsel %vm3877, %v6634, 0
      %v6718 = vsel %vm3877, %v6635, 0
      %v6721 = vsel %vm3877, %v6636, 0
      %v6724 = vsel %vm3877, %v6637, 0
      %v6727 = vsel %vm3877, %v6638, 0
      %v6730 = vsel %vm3877, %v6639, 0
      %v6733 = vsel %vm3877, %v6640, 0
      %v6736 = vsel %vm3877, %v6641, 0
      %v6739 = vsel %vm3877, %v6642, 0
      %6741 = vmatprep.subr.mxu0 0.0
      %6742 = vmatpush1.msra.mxu0 0.0
      %6743 = vmatprep.subr.mxu0 0.0
      %6744 = vmatpush1.msra.mxu0 0.0
      %6745 = vmatprep.subr.mxu0 0.0
      %6746 = vmatpush1.msra.mxu0 0.0
      %6747 = vmatprep.subr.mxu0 0.0
      %6748 = vmatpush1.msra.mxu0 0.0
      %6749 = vmatprep.subr.mxu0 0.0
      %6750 = vmatpush1.msra.mxu0 0.0
      %6751 = vmatprep.subr.mxu0 0.0
      %6752 = vmatpush1.msra.mxu0 0.0
      %6753 = vmatprep.subr.mxu0 0.0
      %6754 = vmatpush1.msra.mxu0 0.0
      %6755 = vmatprep.subr.mxu0 0.0
      %6756 = vmatpush1.msra.mxu0 0.0
      %6757 = vmatprep.subr.mxu0 0.0
      %6758 = vmatpush1.msra.mxu0 0.0
      %6759 = vmatprep.subr.mxu0 0.0
      %6760 = vmatpush1.msra.mxu0 0.0
      %6761 = vmatprep.subr.mxu0 0.0
      %6762 = vmatpush1.msra.mxu0 0.0
      %6763 = vmatprep.subr.mxu0 0.0
      %6764 = vmatpush1.msra.mxu0 0.0
      %6765 = vmatprep.subr.mxu0 0.0
      %6766 = vmatpush1.msra.mxu0 0.0
      %6767 = vmatprep.subr.mxu0 0.0
      %6768 = vmatpush1.msra.mxu0 0.0
      %6769 = vmatprep.subr.mxu0 0.0
      %6770 = vmatpush1.msra.mxu0 0.0
      %6771 = vmatprep.subr.mxu0 0.0
      %6772 = vmatpush1.msra.mxu0 %v6644
      %6773 = vmatprep.subr.mxu0 0.0
      %6774 = vmatpush2.msra.mxu0 0.0
      %6775 = vmatprep.subr.mxu0 0.0
      %6776 = vmatpush2.msra.mxu0 0.0
      %6777 = vmatprep.subr.mxu0 0.0
      %6778 = vmatpush2.msra.mxu0 0.0
      %6779 = vmatprep.subr.mxu0 0.0
      %6780 = vmatpush2.msra.mxu0 0.0
      %6781 = vmatprep.subr.mxu0 0.0
      %6782 = vmatpush2.msra.mxu0 0.0
      %6783 = vmatprep.subr.mxu0 0.0
      %6784 = vmatpush2.msra.mxu0 0.0
      %6785 = vmatprep.subr.mxu0 0.0
      %6786 = vmatpush2.msra.mxu0 0.0
      %6787 = vmatprep.subr.mxu0 0.0
      %6788 = vmatpush2.msra.mxu0 0.0
      %6789 = vmatprep.subr.mxu0 0.0
      %6790 = vmatpush2.msra.mxu0 0.0
      %6791 = vmatprep.subr.mxu0 0.0
      %6792 = vmatpush2.msra.mxu0 0.0
      %6793 = vmatprep.subr.mxu0 0.0
      %6794 = vmatpush2.msra.mxu0 0.0
      %6795 = vmatprep.subr.mxu0 0.0
      %6796 = vmatpush2.msra.mxu0 0.0
      %6797 = vmatprep.subr.mxu0 0.0
      %6798 = vmatpush2.msra.mxu0 0.0
      %6799 = vmatprep.subr.mxu0 0.0
      %6800 = vmatpush2.msra.mxu0 0.0
      %6801 = vmatprep.subr.mxu0 0.0
      %6802 = vmatpush2.msra.mxu0 0.0
      %6803 = vmatprep.subr.mxu0 0.0
      %6804 = vmatpush2.msra.mxu0 0.0
      %6805 = vmatprep.mubr.f32.mxu0 0.0
      %6806 = vmatmul.mubr.f32.gmra.mxu0 %v6646
      %v6807 = vpop.f32.mrf.mxu0
      %v6808 = vadd.f32 0.0, %v6807
      %v6809 = vpop.f32.mrf.mxu0
      %6810 = vmatprep.mubr.f32.mxu0 0.0
      %6811 = vmatmul.mubr.f32.gmra.mxu0 %v6649
      %v6812 = vpop.f32.mrf.mxu0
      %v6813 = vadd.f32 0.0, %v6812
      %v6814 = vpop.f32.mrf.mxu0
      %6815 = vmatprep.mubr.f32.mxu0 0.0
      %6816 = vmatmul.mubr.f32.gmra.mxu0 %v6652
      %v6817 = vpop.f32.mrf.mxu0
      %v6818 = vadd.f32 0.0, %v6817
      %v6819 = vpop.f32.mrf.mxu0
      %6820 = vmatprep.mubr.f32.mxu0 0.0
      %6821 = vmatmul.mubr.f32.gmra.mxu0 %v6655
      %v6822 = vpop.f32.mrf.mxu0
      %v6823 = vadd.f32 0.0, %v6822
      %v6824 = vpop.f32.mrf.mxu0
      %6825 = vmatprep.mubr.f32.mxu0 0.0
      %6826 = vmatmul.mubr.f32.gmra.mxu0 %v6658
      %v6827 = vpop.f32.mrf.mxu0
      %v6828 = vadd.f32 0.0, %v6827
      %v6829 = vpop.f32.mrf.mxu0
      %6830 = vmatprep.mubr.f32.mxu0 0.0
      %6831 = vmatmul.mubr.f32.gmra.mxu0 %v6661
      %v6832 = vpop.f32.mrf.mxu0
      %v6833 = vadd.f32 0.0, %v6832
      %v6834 = vpop.f32.mrf.mxu0
      %6835 = vmatprep.mubr.f32.mxu0 0.0
      %6836 = vmatmul.mubr.f32.gmra.mxu0 %v6664
      %v6837 = vpop.f32.mrf.mxu0
      %v6838 = vadd.f32 0.0, %v6837
      %v6839 = vpop.f32.mrf.mxu0
      %6840 = vmatprep.mubr.f32.mxu0 0.0
      %6841 = vmatmul.mubr.f32.gmra.mxu0 %v6667
      %v6842 = vpop.f32.mrf.mxu0
      %v6843 = vadd.f32 0.0, %v6842
      %v6844 = vpop.f32.mrf.mxu0
      %6845 = vmatprep.mubr.f32.mxu0 0.0
      %6846 = vmatmul.mubr.f32.gmra.mxu0 %v6670
      %v6847 = vpop.f32.mrf.mxu0
      %v6848 = vadd.f32 0.0, %v6847
      %v6849 = vpop.f32.mrf.mxu0
      %6850 = vmatprep.mubr.f32.mxu0 0.0
      %6851 = vmatmul.mubr.f32.gmra.mxu0 %v6673
      %v6852 = vpop.f32.mrf.mxu0
      %v6853 = vadd.f32 0.0, %v6852
      %v6854 = vpop.f32.mrf.mxu0
      %6855 = vmatprep.mubr.f32.mxu0 0.0
      %6856 = vmatmul.mubr.f32.gmra.mxu0 %v6676
      %v6857 = vpop.f32.mrf.mxu0
      %v6858 = vadd.f32 0.0, %v6857
      %v6859 = vpop.f32.mrf.mxu0
      %6860 = vmatprep.mubr.f32.mxu0 0.0
      %6861 = vmatmul.mubr.f32.gmra.mxu0 %v6679
      %v6862 = vpop.f32.mrf.mxu0
      %v6863 = vadd.f32 0.0, %v6862
      %v6864 = vpop.f32.mrf.mxu0
      %6865 = vmatprep.mubr.f32.mxu0 0.0
      %6866 = vmatmul.mubr.f32.gmra.mxu0 %v6682
      %v6867 = vpop.f32.mrf.mxu0
      %v6868 = vadd.f32 0.0, %v6867
      %v6869 = vpop.f32.mrf.mxu0
      %6870 = vmatprep.mubr.f32.mxu0 0.0
      %6871 = vmatmul.mubr.f32.gmra.mxu0 %v6685
      %v6872 = vpop.f32.mrf.mxu0
      %v6873 = vadd.f32 0.0, %v6872
      %v6874 = vpop.f32.mrf.mxu0
      %6875 = vmatprep.mubr.f32.mxu0 0.0
      %6876 = vmatmul.mubr.f32.gmra.mxu0 %v6688
      %v6877 = vpop.f32.mrf.mxu0
      %v6878 = vadd.f32 0.0, %v6877
      %v6879 = vpop.f32.mrf.mxu0
      %6880 = vmatprep.mubr.f32.mxu0 0.0
      %6881 = vmatmul.mubr.f32.gmra.mxu0 %v6691
      %v6882 = vpop.f32.mrf.mxu0
      %v6883 = vadd.f32 0.0, %v6882
      %v6884 = vpop.f32.mrf.mxu0
      %6885 = vmatprep.mubr.f32.mxu0 0.0
      %6886 = vmatmul.mubr.f32.gmra.mxu0 %v6694
      %v6887 = vpop.f32.mrf.mxu0
      %v6888 = vadd.f32 0.0, %v6887
      %v6889 = vpop.f32.mrf.mxu0
      %6890 = vmatprep.mubr.f32.mxu0 0.0
      %6891 = vmatmul.mubr.f32.gmra.mxu0 %v6697
      %v6892 = vpop.f32.mrf.mxu0
      %v6893 = vadd.f32 0.0, %v6892
      %v6894 = vpop.f32.mrf.mxu0
      %6895 = vmatprep.mubr.f32.mxu0 0.0
      %6896 = vmatmul.mubr.f32.gmra.mxu0 %v6700
      %v6897 = vpop.f32.mrf.mxu0
      %v6898 = vadd.f32 0.0, %v6897
      %v6899 = vpop.f32.mrf.mxu0
      %6900 = vmatprep.mubr.f32.mxu0 0.0
      %6901 = vmatmul.mubr.f32.gmra.mxu0 %v6703
      %v6902 = vpop.f32.mrf.mxu0
      %v6903 = vadd.f32 0.0, %v6902
      %v6904 = vpop.f32.mrf.mxu0
      %6905 = vmatprep.mubr.f32.mxu0 0.0
      %6906 = vmatmul.mubr.f32.gmra.mxu0 %v6706
      %v6907 = vpop.f32.mrf.mxu0
      %v6908 = vadd.f32 0.0, %v6907
      %v6909 = vpop.f32.mrf.mxu0
      %6910 = vmatprep.mubr.f32.mxu0 0.0
      %6911 = vmatmul.mubr.f32.gmra.mxu0 %v6709
      %v6912 = vpop.f32.mrf.mxu0
      %v6913 = vadd.f32 0.0, %v6912
      %v6914 = vpop.f32.mrf.mxu0
      %6915 = vmatprep.mubr.f32.mxu0 0.0
      %6916 = vmatmul.mubr.f32.gmra.mxu0 %v6712
      %v6917 = vpop.f32.mrf.mxu0
      %v6918 = vadd.f32 0.0, %v6917
      %v6919 = vpop.f32.mrf.mxu0
      %6920 = vmatprep.mubr.f32.mxu0 0.0
      %6921 = vmatmul.mubr.f32.gmra.mxu0 %v6715
      %v6922 = vpop.f32.mrf.mxu0
      %v6923 = vadd.f32 0.0, %v6922
      %v6924 = vpop.f32.mrf.mxu0
      %6925 = vmatprep.mubr.f32.mxu0 0.0
      %6926 = vmatmul.mubr.f32.gmra.mxu0 %v6718
      %v6927 = vpop.f32.mrf.mxu0
      %v6928 = vadd.f32 0.0, %v6927
      %v6929 = vpop.f32.mrf.mxu0
      %6930 = vmatprep.mubr.f32.mxu0 0.0
      %6931 = vmatmul.mubr.f32.gmra.mxu0 %v6721
      %v6932 = vpop.f32.mrf.mxu0
      %v6933 = vadd.f32 0.0, %v6932
      %v6934 = vpop.f32.mrf.mxu0
      %6935 = vmatprep.mubr.f32.mxu0 0.0
      %6936 = vmatmul.mubr.f32.gmra.mxu0 %v6724
      %v6937 = vpop.f32.mrf.mxu0
      %v6938 = vadd.f32 0.0, %v6937
      %v6939 = vpop.f32.mrf.mxu0
      %6940 = vmatprep.mubr.f32.mxu0 0.0
      %6941 = vmatmul.mubr.f32.gmra.mxu0 %v6727
      %v6942 = vpop.f32.mrf.mxu0
      %v6943 = vadd.f32 0.0, %v6942
      %v6944 = vpop.f32.mrf.mxu0
      %6945 = vmatprep.mubr.f32.mxu0 0.0
      %6946 = vmatmul.mubr.f32.gmra.mxu0 %v6730
      %v6947 = vpop.f32.mrf.mxu0
      %v6948 = vadd.f32 0.0, %v6947
      %v6949 = vpop.f32.mrf.mxu0
      %6950 = vmatprep.mubr.f32.mxu0 0.0
      %6951 = vmatmul.mubr.f32.gmra.mxu0 %v6733
      %v6952 = vpop.f32.mrf.mxu0
      %v6953 = vadd.f32 0.0, %v6952
      %v6954 = vpop.f32.mrf.mxu0
      %6955 = vmatprep.mubr.f32.mxu0 0.0
      %6956 = vmatmul.mubr.f32.gmra.mxu0 %v6736
      %v6957 = vpop.f32.mrf.mxu0
      %v6958 = vadd.f32 0.0, %v6957
      %v6959 = vpop.f32.mrf.mxu0
      %6960 = vmatprep.mubr.f32.mxu0 0.0
      %6961 = vmatmul.mubr.f32.gmra.mxu0 %v6739
      %v6962 = vpop.f32.mrf.mxu0
      %v6963 = vadd.f32 0.0, %v6962
      %v6964 = vpop.f32.mrf.mxu0
      %6965 = vdwg.mxu0
      %v6966 = vadd.f32 %v6579, %v6808
      %v6967 = vadd.f32 %v6580, %v6813
      %v6968 = vadd.f32 %v6581, %v6818
      %v6969 = vadd.f32 %v6582, %v6823
      %v6970 = vadd.f32 %v6583, %v6828
      %v6971 = vadd.f32 %v6584, %v6833
      %v6972 = vadd.f32 %v6585, %v6838
      %v6973 = vadd.f32 %v6586, %v6843
      %v6974 = vadd.f32 %v6587, %v6848
      %v6975 = vadd.f32 %v6588, %v6853
      %v6976 = vadd.f32 %v6589, %v6858
      %v6977 = vadd.f32 %v6590, %v6863
      %v6978 = vadd.f32 %v6591, %v6868
      %v6979 = vadd.f32 %v6592, %v6873
      %v6980 = vadd.f32 %v6593, %v6878
      %v6981 = vadd.f32 %v6594, %v6883
      %v6982 = vadd.f32 %v6595, %v6888
      %v6983 = vadd.f32 %v6596, %v6893
      %v6984 = vadd.f32 %v6597, %v6898
      %v6985 = vadd.f32 %v6598, %v6903
      %v6986 = vadd.f32 %v6599, %v6908
      %v6987 = vadd.f32 %v6600, %v6913
      %v6988 = vadd.f32 %v6601, %v6918
      %v6989 = vadd.f32 %v6602, %v6923
      %v6990 = vadd.f32 %v6603, %v6928
      %v6991 = vadd.f32 %v6604, %v6933
      %v6992 = vadd.f32 %v6605, %v6938
      %v6993 = vadd.f32 %v6606, %v6943
      %v6994 = vadd.f32 %v6607, %v6948
      %v6995 = vadd.f32 %v6608, %v6953
      %v6996 = vadd.f32 %v6609, %v6958
      %v6997 = vadd.f32 %v6610, %v6963
      %v6998 = vld [vmem:[%s6223 + $0x2] sm:$0xff]
      %v6999 = vld [vmem:[%s6223 + $0xa] sm:$0xff]
      %v7000 = vld [vmem:[%s6223 + $0x1a] sm:$0xff]
      %v7001 = vld [vmem:[%s6223 + $0x22] sm:$0xff]
      %v7002 = vld [vmem:[%s6223 + $0x32] sm:$0xff]
      %v7003 = vld [vmem:[%s6223 + $0x3a] sm:$0xff]
      %v7004 = vld [vmem:[%s6223 + $0x4a] sm:$0xff]
      %v7005 = vld [vmem:[%s6223 + $0x52] sm:$0xff]
      %v7006 = vld [vmem:[%s6223 + $0x62] sm:$0xff]
      %v7007 = vld [vmem:[%s6223 + $0x6a] sm:$0xff]
      %v7008 = vld [vmem:[%s6223 + $0x7a] sm:$0xff]
      %v7009 = vld [vmem:[%s6223 + $0x82] sm:$0xff]
      %v7010 = vld [vmem:[%s6223 + $0x92] sm:$0xff]
      %v7011 = vld [vmem:[%s6223 + $0x9a] sm:$0xff]
      %v7012 = vld [vmem:[%s6223 + $0xaa] sm:$0xff]
      %v7013 = vld [vmem:[%s6223 + $0xb2] sm:$0xff]
      %v7014 = vld [vmem:[%s6223 + $0xc2] sm:$0xff]
      %v7015 = vld [vmem:[%s6223 + $0xca] sm:$0xff]
      %v7016 = vld [vmem:[%s6223 + $0xda] sm:$0xff]
      %v7017 = vld [vmem:[%s6223 + $0xe2] sm:$0xff]
      %v7018 = vld [vmem:[%s6223 + $0xf2] sm:$0xff]
      %v7019 = vld [vmem:[%s6223 + $0xfa] sm:$0xff]
      %v7020 = vld [vmem:[%s6223 + $0x10a] sm:$0xff]
      %v7021 = vld [vmem:[%s6223 + $0x112] sm:$0xff]
      %v7022 = vld [vmem:[%s6223 + $0x122] sm:$0xff]
      %v7023 = vld [vmem:[%s6223 + $0x12a] sm:$0xff]
      %v7024 = vld [vmem:[%s6223 + $0x13a] sm:$0xff]
      %v7025 = vld [vmem:[%s6223 + $0x142] sm:$0xff]
      %v7026 = vld [vmem:[%s6223 + $0x152] sm:$0xff]
      %v7027 = vld [vmem:[%s6223 + $0x15a] sm:$0xff]
      %v7028 = vld [vmem:[%s6223 + $0x16a] sm:$0xff]
      %v7029 = vld [vmem:[%s6223 + $0x172] sm:$0xff]
      %s7030 = scalar_lea.vmem %s5, 64
      %v7031 = vld [vmem:[%s7030] sm:$0xff]
      %v7033 = vsel %vm3877, %v6998, 0
      %v7036 = vsel %vm3877, %v6999, 0
      %v7039 = vsel %vm3877, %v7000, 0
      %v7042 = vsel %vm3877, %v7001, 0
      %v7045 = vsel %vm3877, %v7002, 0
      %v7048 = vsel %vm3877, %v7003, 0
      %v7051 = vsel %vm3877, %v7004, 0
      %v7054 = vsel %vm3877, %v7005, 0
      %v7057 = vsel %vm3877, %v7006, 0
      %v7060 = vsel %vm3877, %v7007, 0
      %v7063 = vsel %vm3877, %v7008, 0
      %v7066 = vsel %vm3877, %v7009, 0
      %v7069 = vsel %vm3877, %v7010, 0
      %v7072 = vsel %vm3877, %v7011, 0
      %v7075 = vsel %vm3877, %v7012, 0
      %v7078 = vsel %vm3877, %v7013, 0
      %v7081 = vsel %vm3877, %v7014, 0
      %v7084 = vsel %vm3877, %v7015, 0
      %v7087 = vsel %vm3877, %v7016, 0
      %v7090 = vsel %vm3877, %v7017, 0
      %v7093 = vsel %vm3877, %v7018, 0
      %v7096 = vsel %vm3877, %v7019, 0
      %v7099 = vsel %vm3877, %v7020, 0
      %v7102 = vsel %vm3877, %v7021, 0
      %v7105 = vsel %vm3877, %v7022, 0
      %v7108 = vsel %vm3877, %v7023, 0
      %v7111 = vsel %vm3877, %v7024, 0
      %v7114 = vsel %vm3877, %v7025, 0
      %v7117 = vsel %vm3877, %v7026, 0
      %v7120 = vsel %vm3877, %v7027, 0
      %v7123 = vsel %vm3877, %v7028, 0
      %v7126 = vsel %vm3877, %v7029, 0
      %7128 = vmatprep.subr.mxu0 0.0
      %7129 = vmatpush1.msra.mxu0 0.0
      %7130 = vmatprep.subr.mxu0 0.0
      %7131 = vmatpush1.msra.mxu0 0.0
      %7132 = vmatprep.subr.mxu0 0.0
      %7133 = vmatpush1.msra.mxu0 0.0
      %7134 = vmatprep.subr.mxu0 0.0
      %7135 = vmatpush1.msra.mxu0 0.0
      %7136 = vmatprep.subr.mxu0 0.0
      %7137 = vmatpush1.msra.mxu0 0.0
      %7138 = vmatprep.subr.mxu0 0.0
      %7139 = vmatpush1.msra.mxu0 0.0
      %7140 = vmatprep.subr.mxu0 0.0
      %7141 = vmatpush1.msra.mxu0 0.0
      %7142 = vmatprep.subr.mxu0 0.0
      %7143 = vmatpush1.msra.mxu0 0.0
      %7144 = vmatprep.subr.mxu0 0.0
      %7145 = vmatpush1.msra.mxu0 0.0
      %7146 = vmatprep.subr.mxu0 0.0
      %7147 = vmatpush1.msra.mxu0 0.0
      %7148 = vmatprep.subr.mxu0 0.0
      %7149 = vmatpush1.msra.mxu0 0.0
      %7150 = vmatprep.subr.mxu0 0.0
      %7151 = vmatpush1.msra.mxu0 0.0
      %7152 = vmatprep.subr.mxu0 0.0
      %7153 = vmatpush1.msra.mxu0 0.0
      %7154 = vmatprep.subr.mxu0 0.0
      %7155 = vmatpush1.msra.mxu0 0.0
      %7156 = vmatprep.subr.mxu0 0.0
      %7157 = vmatpush1.msra.mxu0 0.0
      %7158 = vmatprep.subr.mxu0 0.0
      %7159 = vmatpush1.msra.mxu0 %v7031
      %7160 = vmatprep.subr.mxu0 0.0
      %7161 = vmatpush2.msra.mxu0 0.0
      %7162 = vmatprep.subr.mxu0 0.0
      %7163 = vmatpush2.msra.mxu0 0.0
      %7164 = vmatprep.subr.mxu0 0.0
      %7165 = vmatpush2.msra.mxu0 0.0
      %7166 = vmatprep.subr.mxu0 0.0
      %7167 = vmatpush2.msra.mxu0 0.0
      %7168 = vmatprep.subr.mxu0 0.0
      %7169 = vmatpush2.msra.mxu0 0.0
      %7170 = vmatprep.subr.mxu0 0.0
      %7171 = vmatpush2.msra.mxu0 0.0
      %7172 = vmatprep.subr.mxu0 0.0
      %7173 = vmatpush2.msra.mxu0 0.0
      %7174 = vmatprep.subr.mxu0 0.0
      %7175 = vmatpush2.msra.mxu0 0.0
      %7176 = vmatprep.subr.mxu0 0.0
      %7177 = vmatpush2.msra.mxu0 0.0
      %7178 = vmatprep.subr.mxu0 0.0
      %7179 = vmatpush2.msra.mxu0 0.0
      %7180 = vmatprep.subr.mxu0 0.0
      %7181 = vmatpush2.msra.mxu0 0.0
      %7182 = vmatprep.subr.mxu0 0.0
      %7183 = vmatpush2.msra.mxu0 0.0
      %7184 = vmatprep.subr.mxu0 0.0
      %7185 = vmatpush2.msra.mxu0 0.0
      %7186 = vmatprep.subr.mxu0 0.0
      %7187 = vmatpush2.msra.mxu0 0.0
      %7188 = vmatprep.subr.mxu0 0.0
      %7189 = vmatpush2.msra.mxu0 0.0
      %7190 = vmatprep.subr.mxu0 0.0
      %7191 = vmatpush2.msra.mxu0 0.0
      %7192 = vmatprep.mubr.f32.mxu0 0.0
      %7193 = vmatmul.mubr.f32.gmra.mxu0 %v7033
      %v7194 = vpop.f32.mrf.mxu0
      %v7195 = vadd.f32 0.0, %v7194
      %v7196 = vpop.f32.mrf.mxu0
      %7197 = vmatprep.mubr.f32.mxu0 0.0
      %7198 = vmatmul.mubr.f32.gmra.mxu0 %v7036
      %v7199 = vpop.f32.mrf.mxu0
      %v7200 = vadd.f32 0.0, %v7199
      %v7201 = vpop.f32.mrf.mxu0
      %7202 = vmatprep.mubr.f32.mxu0 0.0
      %7203 = vmatmul.mubr.f32.gmra.mxu0 %v7039
      %v7204 = vpop.f32.mrf.mxu0
      %v7205 = vadd.f32 0.0, %v7204
      %v7206 = vpop.f32.mrf.mxu0
      %7207 = vmatprep.mubr.f32.mxu0 0.0
      %7208 = vmatmul.mubr.f32.gmra.mxu0 %v7042
      %v7209 = vpop.f32.mrf.mxu0
      %v7210 = vadd.f32 0.0, %v7209
      %v7211 = vpop.f32.mrf.mxu0
      %7212 = vmatprep.mubr.f32.mxu0 0.0
      %7213 = vmatmul.mubr.f32.gmra.mxu0 %v7045
      %v7214 = vpop.f32.mrf.mxu0
      %v7215 = vadd.f32 0.0, %v7214
      %v7216 = vpop.f32.mrf.mxu0
      %7217 = vmatprep.mubr.f32.mxu0 0.0
      %7218 = vmatmul.mubr.f32.gmra.mxu0 %v7048
      %v7219 = vpop.f32.mrf.mxu0
      %v7220 = vadd.f32 0.0, %v7219
      %v7221 = vpop.f32.mrf.mxu0
      %7222 = vmatprep.mubr.f32.mxu0 0.0
      %7223 = vmatmul.mubr.f32.gmra.mxu0 %v7051
      %v7224 = vpop.f32.mrf.mxu0
      %v7225 = vadd.f32 0.0, %v7224
      %v7226 = vpop.f32.mrf.mxu0
      %7227 = vmatprep.mubr.f32.mxu0 0.0
      %7228 = vmatmul.mubr.f32.gmra.mxu0 %v7054
      %v7229 = vpop.f32.mrf.mxu0
      %v7230 = vadd.f32 0.0, %v7229
      %v7231 = vpop.f32.mrf.mxu0
      %7232 = vmatprep.mubr.f32.mxu0 0.0
      %7233 = vmatmul.mubr.f32.gmra.mxu0 %v7057
      %v7234 = vpop.f32.mrf.mxu0
      %v7235 = vadd.f32 0.0, %v7234
      %v7236 = vpop.f32.mrf.mxu0
      %7237 = vmatprep.mubr.f32.mxu0 0.0
      %7238 = vmatmul.mubr.f32.gmra.mxu0 %v7060
      %v7239 = vpop.f32.mrf.mxu0
      %v7240 = vadd.f32 0.0, %v7239
      %v7241 = vpop.f32.mrf.mxu0
      %7242 = vmatprep.mubr.f32.mxu0 0.0
      %7243 = vmatmul.mubr.f32.gmra.mxu0 %v7063
      %v7244 = vpop.f32.mrf.mxu0
      %v7245 = vadd.f32 0.0, %v7244
      %v7246 = vpop.f32.mrf.mxu0
      %7247 = vmatprep.mubr.f32.mxu0 0.0
      %7248 = vmatmul.mubr.f32.gmra.mxu0 %v7066
      %v7249 = vpop.f32.mrf.mxu0
      %v7250 = vadd.f32 0.0, %v7249
      %v7251 = vpop.f32.mrf.mxu0
      %7252 = vmatprep.mubr.f32.mxu0 0.0
      %7253 = vmatmul.mubr.f32.gmra.mxu0 %v7069
      %v7254 = vpop.f32.mrf.mxu0
      %v7255 = vadd.f32 0.0, %v7254
      %v7256 = vpop.f32.mrf.mxu0
      %7257 = vmatprep.mubr.f32.mxu0 0.0
      %7258 = vmatmul.mubr.f32.gmra.mxu0 %v7072
      %v7259 = vpop.f32.mrf.mxu0
      %v7260 = vadd.f32 0.0, %v7259
      %v7261 = vpop.f32.mrf.mxu0
      %7262 = vmatprep.mubr.f32.mxu0 0.0
      %7263 = vmatmul.mubr.f32.gmra.mxu0 %v7075
      %v7264 = vpop.f32.mrf.mxu0
      %v7265 = vadd.f32 0.0, %v7264
      %v7266 = vpop.f32.mrf.mxu0
      %7267 = vmatprep.mubr.f32.mxu0 0.0
      %7268 = vmatmul.mubr.f32.gmra.mxu0 %v7078
      %v7269 = vpop.f32.mrf.mxu0
      %v7270 = vadd.f32 0.0, %v7269
      %v7271 = vpop.f32.mrf.mxu0
      %7272 = vmatprep.mubr.f32.mxu0 0.0
      %7273 = vmatmul.mubr.f32.gmra.mxu0 %v7081
      %v7274 = vpop.f32.mrf.mxu0
      %v7275 = vadd.f32 0.0, %v7274
      %v7276 = vpop.f32.mrf.mxu0
      %7277 = vmatprep.mubr.f32.mxu0 0.0
      %7278 = vmatmul.mubr.f32.gmra.mxu0 %v7084
      %v7279 = vpop.f32.mrf.mxu0
      %v7280 = vadd.f32 0.0, %v7279
      %v7281 = vpop.f32.mrf.mxu0
      %7282 = vmatprep.mubr.f32.mxu0 0.0
      %7283 = vmatmul.mubr.f32.gmra.mxu0 %v7087
      %v7284 = vpop.f32.mrf.mxu0
      %v7285 = vadd.f32 0.0, %v7284
      %v7286 = vpop.f32.mrf.mxu0
      %7287 = vmatprep.mubr.f32.mxu0 0.0
      %7288 = vmatmul.mubr.f32.gmra.mxu0 %v7090
      %v7289 = vpop.f32.mrf.mxu0
      %v7290 = vadd.f32 0.0, %v7289
      %v7291 = vpop.f32.mrf.mxu0
      %7292 = vmatprep.mubr.f32.mxu0 0.0
      %7293 = vmatmul.mubr.f32.gmra.mxu0 %v7093
      %v7294 = vpop.f32.mrf.mxu0
      %v7295 = vadd.f32 0.0, %v7294
      %v7296 = vpop.f32.mrf.mxu0
      %7297 = vmatprep.mubr.f32.mxu0 0.0
      %7298 = vmatmul.mubr.f32.gmra.mxu0 %v7096
      %v7299 = vpop.f32.mrf.mxu0
      %v7300 = vadd.f32 0.0, %v7299
      %v7301 = vpop.f32.mrf.mxu0
      %7302 = vmatprep.mubr.f32.mxu0 0.0
      %7303 = vmatmul.mubr.f32.gmra.mxu0 %v7099
      %v7304 = vpop.f32.mrf.mxu0
      %v7305 = vadd.f32 0.0, %v7304
      %v7306 = vpop.f32.mrf.mxu0
      %7307 = vmatprep.mubr.f32.mxu0 0.0
      %7308 = vmatmul.mubr.f32.gmra.mxu0 %v7102
      %v7309 = vpop.f32.mrf.mxu0
      %v7310 = vadd.f32 0.0, %v7309
      %v7311 = vpop.f32.mrf.mxu0
      %7312 = vmatprep.mubr.f32.mxu0 0.0
      %7313 = vmatmul.mubr.f32.gmra.mxu0 %v7105
      %v7314 = vpop.f32.mrf.mxu0
      %v7315 = vadd.f32 0.0, %v7314
      %v7316 = vpop.f32.mrf.mxu0
      %7317 = vmatprep.mubr.f32.mxu0 0.0
      %7318 = vmatmul.mubr.f32.gmra.mxu0 %v7108
      %v7319 = vpop.f32.mrf.mxu0
      %v7320 = vadd.f32 0.0, %v7319
      %v7321 = vpop.f32.mrf.mxu0
      %7322 = vmatprep.mubr.f32.mxu0 0.0
      %7323 = vmatmul.mubr.f32.gmra.mxu0 %v7111
      %v7324 = vpop.f32.mrf.mxu0
      %v7325 = vadd.f32 0.0, %v7324
      %v7326 = vpop.f32.mrf.mxu0
      %7327 = vmatprep.mubr.f32.mxu0 0.0
      %7328 = vmatmul.mubr.f32.gmra.mxu0 %v7114
      %v7329 = vpop.f32.mrf.mxu0
      %v7330 = vadd.f32 0.0, %v7329
      %v7331 = vpop.f32.mrf.mxu0
      %7332 = vmatprep.mubr.f32.mxu0 0.0
      %7333 = vmatmul.mubr.f32.gmra.mxu0 %v7117
      %v7334 = vpop.f32.mrf.mxu0
      %v7335 = vadd.f32 0.0, %v7334
      %v7336 = vpop.f32.mrf.mxu0
      %7337 = vmatprep.mubr.f32.mxu0 0.0
      %7338 = vmatmul.mubr.f32.gmra.mxu0 %v7120
      %v7339 = vpop.f32.mrf.mxu0
      %v7340 = vadd.f32 0.0, %v7339
      %v7341 = vpop.f32.mrf.mxu0
      %7342 = vmatprep.mubr.f32.mxu0 0.0
      %7343 = vmatmul.mubr.f32.gmra.mxu0 %v7123
      %v7344 = vpop.f32.mrf.mxu0
      %v7345 = vadd.f32 0.0, %v7344
      %v7346 = vpop.f32.mrf.mxu0
      %7347 = vmatprep.mubr.f32.mxu0 0.0
      %7348 = vmatmul.mubr.f32.gmra.mxu0 %v7126
      %v7349 = vpop.f32.mrf.mxu0
      %v7350 = vadd.f32 0.0, %v7349
      %v7351 = vpop.f32.mrf.mxu0
      %7352 = vdwg.mxu0
      %v7353 = vadd.f32 %v6966, %v7195
      %v7354 = vadd.f32 %v6967, %v7200
      %v7355 = vadd.f32 %v6968, %v7205
      %v7356 = vadd.f32 %v6969, %v7210
      %v7357 = vadd.f32 %v6970, %v7215
      %v7358 = vadd.f32 %v6971, %v7220
      %v7359 = vadd.f32 %v6972, %v7225
      %v7360 = vadd.f32 %v6973, %v7230
      %v7361 = vadd.f32 %v6974, %v7235
      %v7362 = vadd.f32 %v6975, %v7240
      %v7363 = vadd.f32 %v6976, %v7245
      %v7364 = vadd.f32 %v6977, %v7250
      %v7365 = vadd.f32 %v6978, %v7255
      %v7366 = vadd.f32 %v6979, %v7260
      %v7367 = vadd.f32 %v6980, %v7265
      %v7368 = vadd.f32 %v6981, %v7270
      %v7369 = vadd.f32 %v6982, %v7275
      %v7370 = vadd.f32 %v6983, %v7280
      %v7371 = vadd.f32 %v6984, %v7285
      %v7372 = vadd.f32 %v6985, %v7290
      %v7373 = vadd.f32 %v6986, %v7295
      %v7374 = vadd.f32 %v6987, %v7300
      %v7375 = vadd.f32 %v6988, %v7305
      %v7376 = vadd.f32 %v6989, %v7310
      %v7377 = vadd.f32 %v6990, %v7315
      %v7378 = vadd.f32 %v6991, %v7320
      %v7379 = vadd.f32 %v6992, %v7325
      %v7380 = vadd.f32 %v6993, %v7330
      %v7381 = vadd.f32 %v6994, %v7335
      %v7382 = vadd.f32 %v6995, %v7340
      %v7383 = vadd.f32 %v6996, %v7345
      %v7384 = vadd.f32 %v6997, %v7350
      %v7385 = vld [vmem:[%s6] sm:$0x1]
      %v7387 = vlaneseq
      %v7388 = vshrl.u32 %v7387, 7
      %v7389 = vsub.s32 0, %v7388
      %v7390 = vrot.slane %v7385, %v7389
      %v7392 = vadd.f32 %v7353, %v7390
      %v7393 = vadd.f32 %v7354, %v7390
      %v7394 = vadd.f32 %v7355, %v7390
      %v7395 = vadd.f32 %v7356, %v7390
      %v7396 = vadd.f32 %v7357, %v7390
      %v7397 = vadd.f32 %v7358, %v7390
      %v7398 = vadd.f32 %v7359, %v7390
      %v7399 = vadd.f32 %v7360, %v7390
      %v7400 = vadd.f32 %v7361, %v7390
      %v7401 = vadd.f32 %v7362, %v7390
      %v7402 = vadd.f32 %v7363, %v7390
      %v7403 = vadd.f32 %v7364, %v7390
      %v7404 = vadd.f32 %v7365, %v7390
      %v7405 = vadd.f32 %v7366, %v7390
      %v7406 = vadd.f32 %v7367, %v7390
      %v7407 = vadd.f32 %v7368, %v7390
      %v7408 = vadd.f32 %v7369, %v7390
      %v7409 = vadd.f32 %v7370, %v7390
      %v7410 = vadd.f32 %v7371, %v7390
      %v7411 = vadd.f32 %v7372, %v7390
      %v7412 = vadd.f32 %v7373, %v7390
      %v7413 = vadd.f32 %v7374, %v7390
      %v7414 = vadd.f32 %v7375, %v7390
      %v7415 = vadd.f32 %v7376, %v7390
      %v7416 = vadd.f32 %v7377, %v7390
      %v7417 = vadd.f32 %v7378, %v7390
      %v7418 = vadd.f32 %v7379, %v7390
      %v7419 = vadd.f32 %v7380, %v7390
      %v7420 = vadd.f32 %v7381, %v7390
      %v7421 = vadd.f32 %v7382, %v7390
      %v7422 = vadd.f32 %v7383, %v7390
      %v7423 = vadd.f32 %v7384, %v7390
      %7424 = vst.msk [vmem:[%s278] sm:$0xff] %vm346, %v7392
      %7425 = vst.msk [vmem:[%s278 + $0x8] sm:$0xff] %vm346, %v7393
      %7426 = vst.msk [vmem:[%s278 + $0x10] sm:$0xff] %vm346, %v7394
      %7427 = vst.msk [vmem:[%s278 + $0x18] sm:$0xff] %vm346, %v7395
      %7428 = vst.msk [vmem:[%s278 + $0x20] sm:$0xff] %vm346, %v7396
      %7429 = vst.msk [vmem:[%s278 + $0x28] sm:$0xff] %vm346, %v7397
      %7430 = vst.msk [vmem:[%s278 + $0x30] sm:$0xff] %vm346, %v7398
      %7431 = vst.msk [vmem:[%s278 + $0x38] sm:$0xff] %vm346, %v7399
      %7432 = vst.msk [vmem:[%s278 + $0x40] sm:$0xff] %vm346, %v7400
      %7433 = vst.msk [vmem:[%s278 + $0x48] sm:$0xff] %vm346, %v7401
      %7434 = vst.msk [vmem:[%s278 + $0x50] sm:$0xff] %vm346, %v7402
      %7435 = vst.msk [vmem:[%s278 + $0x58] sm:$0xff] %vm346, %v7403
      %7436 = vst.msk [vmem:[%s278 + $0x60] sm:$0xff] %vm346, %v7404
      %7437 = vst.msk [vmem:[%s278 + $0x68] sm:$0xff] %vm346, %v7405
      %7438 = vst.msk [vmem:[%s278 + $0x70] sm:$0xff] %vm346, %v7406
      %7439 = vst.msk [vmem:[%s278 + $0x78] sm:$0xff] %vm346, %v7407
      %7440 = vst.msk [vmem:[%s278 + $0x80] sm:$0xff] %vm346, %v7408
      %7441 = vst.msk [vmem:[%s278 + $0x88] sm:$0xff] %vm346, %v7409
      %7442 = vst.msk [vmem:[%s278 + $0x90] sm:$0xff] %vm346, %v7410
      %7443 = vst.msk [vmem:[%s278 + $0x98] sm:$0xff] %vm346, %v7411
      %7444 = vst.msk [vmem:[%s278 + $0xa0] sm:$0xff] %vm346, %v7412
      %7445 = vst.msk [vmem:[%s278 + $0xa8] sm:$0xff] %vm346, %v7413
      %7446 = vst.msk [vmem:[%s278 + $0xb0] sm:$0xff] %vm346, %v7414
      %7447 = vst.msk [vmem:[%s278 + $0xb8] sm:$0xff] %vm346, %v7415
      %7448 = vst.msk [vmem:[%s278 + $0xc0] sm:$0xff] %vm346, %v7416
      %7449 = vst.msk [vmem:[%s278 + $0xc8] sm:$0xff] %vm346, %v7417
      %7450 = vst.msk [vmem:[%s278 + $0xd0] sm:$0xff] %vm346, %v7418
      %7451 = vst.msk [vmem:[%s278 + $0xd8] sm:$0xff] %vm346, %v7419
      %7452 = vst.msk [vmem:[%s278 + $0xe0] sm:$0xff] %vm346, %v7420
      %7453 = vst.msk [vmem:[%s278 + $0xe8] sm:$0xff] %vm346, %v7421
      %7454 = vst.msk [vmem:[%s278 + $0xf0] sm:$0xff] %vm346, %v7422
      %7455 = vst.msk [vmem:[%s278 + $0xf8] sm:$0xff] %vm346, %v7423
      %p7456 = scmp.lt.s32.totalorder %s18, 1
      %s7457 = scalar_select %p7456, %s18, 1
      %s7458 = smul.addr %s7457, 32
      %s7459 = smul.addr %s7458, 8
      %s7460 = scalar_lea.vmem %s7, %s7459
      // Predicated region
      $region49: #{block_forward.3} parent=47 // pred_check
        %p7461 = pneg %p188
      $region50: #{block_forward.3} parent=47 // pred_check_branch
        %7463 = sbr.rel (%p7461) target = $region52
      $region51: #{block_forward.3} parent=47 // pred_region
        _
      $region52: #{block_forward.3} parent=47 // pred_fallthru
        _
    $region48: #{block_forward.3} parent=5 // pred_fallthru
      _
    %p7464 = scmp.le.s32.totalorder 2, %s13
    // Predicated region
    $region53: #{block_forward.3} parent=5 // pred_check
      %p7465 = pneg %p7464
    $region54: #{block_forward.3} parent=5 // pred_check_branch
      %7467 = sbr.rel (%p7465) target = $region56
    $region55: #{block_forward.3} parent=5 // pred_region
      %s7468 = ssub.s32 %s13, 2
      // Predicated region
      $region57: #{block_forward.3} parent=55 // pred_check
        %p7469 = pneg %p194
      $region58: #{block_forward.3} parent=55 // pred_check_branch
        %7471 = sbr.rel (%p7469) target = $region60
      $region59: #{block_forward.3} parent=55 // pred_region
        %p7472 = scmp.lt.s32.totalorder %s19, 1
        %s7473 = scalar_select %p7472, %s19, 1
        %s7474 = smul.addr %s7473, 32
        %s7475 = smul.addr %s7474, 8
        %s7476 = scalar_lea.vmem %s7, %s7475
      $region60: #{block_forward.3} parent=55 // pred_fallthru
        _
    $region56: #{block_forward.3} parent=5 // pred_fallthru
      _
  $region6: #{block_forward.3} parent=0 // loop_footer
    %s17 = sadd.s32 1, %s13
  $region7: #{block_forward.3} parent=0 // loop_footer_branch
    %12 = sbr.rel target = $region3
  $region8: #{block_forward.3} parent=0 // loop_exit
    _

</llo_original>
